<compile_context>
chip_gen: v7x
topology: tpu7x:2x2x1
jax: 0.10.0
libtpu: 0.0.40
codegen_flags: <defaults>
</compile_context>

<pallas_src>
import functools

import jax
import jax.numpy as jnp
from jax import lax
from jax.experimental import pallas as pl
from jax.experimental.pallas import tpu as pltpu

_PAD_L = 8   # sublane-aligned left (W-axis) offset of the image in the scratch
_PAD_T = 3   # top (H-axis) offset; H is an untiled major axis, any offset ok


def _erf(z):
    """erf via Abramowitz & Stegun 7.1.26 (|error| <= 1.5e-7).

    Uses only mul/add/div/exp/where so it always lowers in Mosaic; matches
    torch's exact (erf-based) nn.GELU() to float32 precision.
    """
    az = jnp.abs(z)
    t = 1.0 / (1.0 + 0.3275911 * az)
    poly = t * (0.254829592 + t * (-0.284496736 + t * (1.421413741
               + t * (-1.453152027 + t * 1.061405429))))
    e = 1.0 - poly * jnp.exp(-az * az)
    return jnp.where(z < 0.0, -e, e)


def _srganext_kernel(BB, H, W, C,
                     x_ref, wd_ref, bd_ref, lnw_ref, lnb_ref,
                     w1_ref, b1_ref, w2_ref, b2_ref, g_ref,
                     o_ref, xp_ref):
    # x_ref : (BB, H, W, C)  f32   input block (also the residual shortcut)
    # wd_ref: (49, C)        f32   depthwise weights, row k = kh*7 + kw
    # bd/lnw/lnb/b2/g_ref: (1, C), b1_ref: (1, 4C)   f32 vectors
    # w1_ref: (C, 4C) bf16,  w2_ref: (4C, C) bf16
    # o_ref : (BB, H, W, C)  f32   output block
    # xp_ref: (BB, H+6, W+11, C) f32  VMEM scratch: zero-padded input
    f32 = jnp.float32

    # ---- build the zero-padded image in VMEM (no HBM pad round-trip) -------
    xin = x_ref[...]                                            # (BB, H, W, C)
    xp_ref[...] = jnp.zeros_like(xp_ref)
    xp_ref[:, _PAD_T:_PAD_T + H, _PAD_L:_PAD_L + W, :] = xin

    # ---- depthwise 7x7 conv, padding=3, groups=C ----------------------------
    # kw (sublane-axis offset) is the outer loop so only 7 unaligned W slices
    # are materialized; the inner kh slice is along an untiled major axis.
    wd = wd_ref[...]                                            # (49, C)
    acc = jnp.zeros((BB, H, W, C), f32)
    for kw in range(7):
        col0 = _PAD_L - 3 + kw
        sw = xp_ref[:, :, col0:col0 + W, :]                     # (BB, H+6, W, C)
        for kh in range(7):
            k = kh * 7 + kw
            w_tap = wd[k:k + 1, :].reshape(1, 1, 1, C)
            acc = acc + sw[:, kh:kh + H, :, :] * w_tap

    M = BB * H * W
    a2 = acc.reshape(M, C) + bd_ref[...]                        # dconv bias

    # ---- LayerNorm over channels (eps = 1e-5, torch default) ----------------
    mu = jnp.mean(a2, axis=-1, keepdims=True)
    xc = a2 - mu
    var = jnp.mean(xc * xc, axis=-1, keepdims=True)
    yn = xc * lax.rsqrt(var + 1e-5)
    yn = yn * lnw_ref[...] + lnb_ref[...]

    # ---- 1x1 conv C -> 4C on the MXU (bf16 operands, f32 accumulation) ------
    h1 = jnp.dot(yn.astype(jnp.bfloat16), w1_ref[...],
                 preferred_element_type=f32) + b1_ref[...]

    # ---- exact (erf-based) GELU, matches torch nn.GELU() default ------------
    h1 = 0.5 * h1 * (1.0 + _erf(h1 * f32(0.7071067811865476)))

    # ---- 1x1 conv 4C -> C ----------------------------------------------------
    h2 = jnp.dot(h1.astype(jnp.bfloat16), w2_ref[...],
                 preferred_element_type=f32) + b2_ref[...]

    # ---- layer scale + residual ----------------------------------------------
    out = xin.reshape(M, C) + g_ref[...] * h2
    o_ref[...] = out.reshape(BB, H, W, C).astype(o_ref.dtype)


def _full_spec(shape):
    n = len(shape)
    return pl.BlockSpec(shape, lambda i: (0,) * n)


def srganext_block_nhwc(x_nhwc, params, *, batch_block=1):
    """Channels-last entry point: x_nhwc (B, H, W, C) -> (B, H, W, C)."""
    B, H, W, C = x_nhwc.shape
    bb = int(batch_block)
    assert B % bb == 0, "batch_block must divide the batch size"

    wd = params["wd"]
    bd, lnw, lnb = params["bd"], params["lnw"], params["lnb"]
    w1 = params["w1"].astype(jnp.bfloat16)
    w2 = params["w2"].astype(jnp.bfloat16)
    b1, b2, g = params["b1"], params["b2"], params["gamma"]

    kernel = functools.partial(_srganext_kernel, bb, H, W, C)

    out = pl.pallas_call(
        kernel,
        out_shape=jax.ShapeDtypeStruct((B, H, W, C), x_nhwc.dtype),
        grid_spec=pltpu.PrefetchScalarGridSpec(
            num_scalar_prefetch=0,
            grid=(B // bb,),
            in_specs=[
                pl.BlockSpec((bb, H, W, C), lambda i: (i, 0, 0, 0)),  # x
                _full_spec((49, C)),        # depthwise weights
                _full_spec((1, C)),         # depthwise bias
                _full_spec((1, C)),         # LN weight
                _full_spec((1, C)),         # LN bias
                _full_spec((C, 4 * C)),     # pconv1 weight (bf16)
                _full_spec((1, 4 * C)),     # pconv1 bias
                _full_spec((4 * C, C)),     # pconv2 weight (bf16)
                _full_spec((1, C)),         # pconv2 bias
                _full_spec((1, C)),         # gamma
            ],
            out_specs=pl.BlockSpec((bb, H, W, C), lambda i: (i, 0, 0, 0)),
            scratch_shapes=[pltpu.VMEM((bb, H + 6, W + 11, C), jnp.float32)],
        ),
        compiler_params=pltpu.CompilerParams(
            dimension_semantics=("parallel",)),
    )(x_nhwc, wd, bd, lnw, lnb, w1, b1, w2, b2, g)
    return out


def srganext_block(x_nchw, params, *, batch_block=1):
    """NCHW wrapper matching the PyTorch module interface."""
    x_nhwc = jnp.transpose(x_nchw, (0, 2, 3, 1))
    y = srganext_block_nhwc(x_nhwc, params, batch_block=batch_block)
    return jnp.transpose(y, (0, 3, 1, 2))


def make_params(key, dim, layer_scale_init_value=1e-6):
    ks = jax.random.split(key, 6)
    return {
        # depthwise conv: torch (dim,1,7,7) stored as (49, dim), row = kh*7+kw
        "wd": jax.random.normal(ks[0], (49, dim), jnp.float32) * 0.05,
        "bd": jax.random.normal(ks[1], (1, dim), jnp.float32) * 0.05,
        "lnw": jnp.ones((1, dim), jnp.float32),
        "lnb": jnp.zeros((1, dim), jnp.float32),
        # pconv1: torch (4d, d, 1, 1) stored as (d, 4d) for x @ W
        "w1": jax.random.normal(ks[2], (dim, 4 * dim), jnp.float32) * 0.05,
        "b1": jax.random.normal(ks[3], (1, 4 * dim), jnp.float32) * 0.05,
        # pconv2: torch (d, 4d, 1, 1) stored as (4d, d)
        "w2": jax.random.normal(ks[4], (4 * dim, dim), jnp.float32) * 0.05,
        "b2": jax.random.normal(ks[5], (1, dim), jnp.float32) * 0.05,
        "gamma": jnp.full((1, dim), layer_scale_init_value, jnp.float32),
    }


def reference(x_nchw, params):
    """Pure-JAX (f32) reference mirroring the PyTorch forward."""
    B, C, H, W = x_nchw.shape
    wd = params["wd"].reshape(7, 7, C).transpose(2, 0, 1)[:, None, :, :]
    y = lax.conv_general_dilated(
        x_nchw, wd, (1, 1), [(3, 3), (3, 3)],
        feature_group_count=C,
        dimension_numbers=("NCHW", "OIHW", "NCHW"),
    ) + params["bd"][0][None, :, None, None]
    yn = jnp.transpose(y, (0, 2, 3, 1))
    mu = jnp.mean(yn, axis=-1, keepdims=True)
    var = jnp.mean((yn - mu) ** 2, axis=-1, keepdims=True)
    yn = (yn - mu) / jnp.sqrt(var + 1e-5)
    yn = yn * params["lnw"][0] + params["lnb"][0]
    h1 = jnp.einsum("bhwc,cd->bhwd", yn, params["w1"]) + params["b1"][0]
    h1 = 0.5 * h1 * (1.0 + lax.erf(h1 / jnp.sqrt(2.0)))
    h2 = jnp.einsum("bhwd,dc->bhwc", h1, params["w2"]) + params["b2"][0]
    h2 = params["gamma"][0] * h2
    return x_nchw + jnp.transpose(h2, (0, 3, 1, 2))


if __name__ == "__main__":
    key = jax.random.PRNGKey(0)
    kx, kp = jax.random.split(key)

    B, dim, H, W = 2, 32, 16, 16
    x = jax.random.normal(kx, (B, dim, H, W), jnp.float32)

    # (1) module-default layer scale (1e-6): branch is tiny, tight tolerance.
    p_small = make_params(kp, dim, layer_scale_init_value=1e-6)
    out = jax.block_until_ready(srganext_block(x, p_small, batch_block=1))
    ref = reference(x, p_small)
    assert out.shape == (B, dim, H, W)
    err0 = float(jnp.max(jnp.abs(out - ref)))
    assert err0 < 1e-4, err0

    # (2) layer scale = 1.0 exercises the full conv/LN/MLP branch; looser
    #     tolerance because the two 1x1 convs run in bf16 on the MXU.
    p_big = make_params(kp, dim, layer_scale_init_value=1.0)
    ref1 = reference(x, p_big)
    out1 = jax.block_until_ready(srganext_block(x, p_big, batch_block=1))
    out2 = jax.block_until_ready(srganext_block(x, p_big, batch_block=B))
    err1 = float(jnp.max(jnp.abs(out1 - ref1)))
    err2 = float(jnp.max(jnp.abs(out2 - ref1)))
    assert err1 < 2e-2, err1
    assert err2 < 2e-2, err2

    print("KERNEL_OK")
</pallas_src>

<mosaic_0001>
module attributes {stable_mosaic.version = 11 : i64} {
  func.func @_srganext_kernel(%arg0: i32, %arg1: memref<1x16x16x32xf32, #tpu.memory_space<vmem>>, %arg2: memref<49x32xf32, #tpu.memory_space<vmem>>, %arg3: memref<1x32xf32, #tpu.memory_space<vmem>>, %arg4: memref<1x32xf32, #tpu.memory_space<vmem>>, %arg5: memref<1x32xf32, #tpu.memory_space<vmem>>, %arg6: memref<32x128xbf16, #tpu.memory_space<vmem>>, %arg7: memref<1x128xf32, #tpu.memory_space<vmem>>, %arg8: memref<128x32xbf16, #tpu.memory_space<vmem>>, %arg9: memref<1x32xf32, #tpu.memory_space<vmem>>, %arg10: memref<1x32xf32, #tpu.memory_space<vmem>>, %arg11: memref<1x16x16x32xf32, #tpu.memory_space<vmem>>, %arg12: memref<1x22x27x32xf32, #tpu.memory_space<vmem>>) attributes {dimension_semantics = [#tpu.dimension_semantics<parallel>], iteration_bounds = array<i64: 2>, scalar_prefetch = 0 : i64, scratch_operands = 1 : i64, tpu.core_type = #tpu.core_type<tc>, window_params = [{transform_indices = @transform_0, window_bounds = array<i64: 1, 16, 16, 32>}, {pipeline_mode = #tpu.pipeline_mode<synchronous>, transform_indices = @transform_1, window_bounds = array<i64: 49, 32>}, {pipeline_mode = #tpu.pipeline_mode<synchronous>, transform_indices = @transform_2, window_bounds = array<i64: 1, 32>}, {pipeline_mode = #tpu.pipeline_mode<synchronous>, transform_indices = @transform_3, window_bounds = array<i64: 1, 32>}, {pipeline_mode = #tpu.pipeline_mode<synchronous>, transform_indices = @transform_4, window_bounds = array<i64: 1, 32>}, {pipeline_mode = #tpu.pipeline_mode<synchronous>, transform_indices = @transform_5, window_bounds = array<i64: 32, 128>}, {pipeline_mode = #tpu.pipeline_mode<synchronous>, transform_indices = @transform_6, window_bounds = array<i64: 1, 128>}, {pipeline_mode = #tpu.pipeline_mode<synchronous>, transform_indices = @transform_7, window_bounds = array<i64: 128, 32>}, {pipeline_mode = #tpu.pipeline_mode<synchronous>, transform_indices = @transform_8, window_bounds = array<i64: 1, 32>}, {pipeline_mode = #tpu.pipeline_mode<synchronous>, transform_indices = @transform_9, window_bounds = array<i64: 1, 32>}, {transform_indices = @transform_10, window_bounds = array<i64: 1, 16, 16, 32>}]} {
    %c0 = arith.constant 0 : index
    %c0_0 = arith.constant 0 : index
    %c0_1 = arith.constant 0 : index
    %c0_2 = arith.constant 0 : index
    %0 = vector.load %arg1[%c0, %c0_0, %c0_1, %c0_2] : memref<1x16x16x32xf32, #tpu.memory_space<vmem>>, vector<1x16x16x32xf32>
    %cst = arith.constant 0.000000e+00 : f32
    %1 = vector.broadcast %cst : f32 to vector<1x22x27x32xf32>
    %c0_3 = arith.constant 0 : index
    %c0_4 = arith.constant 0 : index
    %c0_5 = arith.constant 0 : index
    %c0_6 = arith.constant 0 : index
    %2 = vector.load %arg12[%c0_3, %c0_4, %c0_5, %c0_6] : memref<1x22x27x32xf32, #tpu.memory_space<vmem>>, vector<1x22x27x32xf32>
    tpu.vector_store %arg12[%c0_3, %c0_4, %c0_5, %c0_6], %1 {strides = array<i32>} : memref<1x22x27x32xf32, #tpu.memory_space<vmem>>, vector<1x22x27x32xf32>,
    %c0_7 = arith.constant 0 : index
    %c3 = arith.constant 3 : index
    %c8 = arith.constant 8 : index
    %c0_8 = arith.constant 0 : index
    %3 = vector.load %arg12[%c0_7, %c3, %c8, %c0_8] : memref<1x22x27x32xf32, #tpu.memory_space<vmem>>, vector<1x16x16x32xf32>
    tpu.vector_store %arg12[%c0_7, %c3, %c8, %c0_8], %0 {strides = array<i32>} : memref<1x22x27x32xf32, #tpu.memory_space<vmem>>, vector<1x16x16x32xf32>,
    %c0_9 = arith.constant 0 : index
    %c0_10 = arith.constant 0 : index
    %4 = vector.load %arg2[%c0_9, %c0_10] : memref<49x32xf32, #tpu.memory_space<vmem>>, vector<49x32xf32>
    %cst_11 = arith.constant 0.000000e+00 : f32
    %5 = vector.broadcast %cst_11 : f32 to vector<1x16x16x32xf32>
    %c0_12 = arith.constant 0 : index
    %c0_13 = arith.constant 0 : index
    %c5 = arith.constant 5 : index
    %c0_14 = arith.constant 0 : index
    %6 = vector.load %arg12[%c0_12, %c0_13, %c5, %c0_14] : memref<1x22x27x32xf32, #tpu.memory_space<vmem>>, vector<1x22x16x32xf32>
    %7 = vector.extract_strided_slice %4 {offsets = [0, 0], sizes = [1, 32], strides = [1, 1]} : vector<49x32xf32> to vector<1x32xf32>
    %8 = vector.shape_cast %7 : vector<1x32xf32> to vector<1x1x1x32xf32>
    %9 = vector.extract_strided_slice %6 {offsets = [0, 0, 0, 0], sizes = [1, 16, 16, 32], strides = [1, 1, 1, 1]} : vector<1x22x16x32xf32> to vector<1x16x16x32xf32>
    %10 = vector.broadcast %8 : vector<1x1x1x32xf32> to vector<1x16x16x32xf32>
    %11 = arith.mulf %9, %10 : vector<1x16x16x32xf32>
    %12 = arith.addf %5, %11 : vector<1x16x16x32xf32>
    %13 = vector.extract_strided_slice %4 {offsets = [7, 0], sizes = [1, 32], strides = [1, 1]} : vector<49x32xf32> to vector<1x32xf32>
    %14 = vector.shape_cast %13 : vector<1x32xf32> to vector<1x1x1x32xf32>
    %15 = vector.extract_strided_slice %6 {offsets = [0, 1, 0, 0], sizes = [1, 16, 16, 32], strides = [1, 1, 1, 1]} : vector<1x22x16x32xf32> to vector<1x16x16x32xf32>
    %16 = vector.broadcast %14 : vector<1x1x1x32xf32> to vector<1x16x16x32xf32>
    %17 = arith.mulf %15, %16 : vector<1x16x16x32xf32>
    %18 = arith.addf %12, %17 : vector<1x16x16x32xf32>
    %19 = vector.extract_strided_slice %4 {offsets = [14, 0], sizes = [1, 32], strides = [1, 1]} : vector<49x32xf32> to vector<1x32xf32>
    %20 = vector.shape_cast %19 : vector<1x32xf32> to vector<1x1x1x32xf32>
    %21 = vector.extract_strided_slice %6 {offsets = [0, 2, 0, 0], sizes = [1, 16, 16, 32], strides = [1, 1, 1, 1]} : vector<1x22x16x32xf32> to vector<1x16x16x32xf32>
    %22 = vector.broadcast %20 : vector<1x1x1x32xf32> to vector<1x16x16x32xf32>
    %23 = arith.mulf %21, %22 : vector<1x16x16x32xf32>
    %24 = arith.addf %18, %23 : vector<1x16x16x32xf32>
    %25 = vector.extract_strided_slice %4 {offsets = [21, 0], sizes = [1, 32], strides = [1, 1]} : vector<49x32xf32> to vector<1x32xf32>
    %26 = vector.shape_cast %25 : vector<1x32xf32> to vector<1x1x1x32xf32>
    %27 = vector.extract_strided_slice %6 {offsets = [0, 3, 0, 0], sizes = [1, 16, 16, 32], strides = [1, 1, 1, 1]} : vector<1x22x16x32xf32> to vector<1x16x16x32xf32>
    %28 = vector.broadcast %26 : vector<1x1x1x32xf32> to vector<1x16x16x32xf32>
    %29 = arith.mulf %27, %28 : vector<1x16x16x32xf32>
    %30 = arith.addf %24, %29 : vector<1x16x16x32xf32>
    %31 = vector.extract_strided_slice %4 {offsets = [28, 0], sizes = [1, 32], strides = [1, 1]} : vector<49x32xf32> to vector<1x32xf32>
    %32 = vector.shape_cast %31 : vector<1x32xf32> to vector<1x1x1x32xf32>
    %33 = vector.extract_strided_slice %6 {offsets = [0, 4, 0, 0], sizes = [1, 16, 16, 32], strides = [1, 1, 1, 1]} : vector<1x22x16x32xf32> to vector<1x16x16x32xf32>
    %34 = vector.broadcast %32 : vector<1x1x1x32xf32> to vector<1x16x16x32xf32>
    %35 = arith.mulf %33, %34 : vector<1x16x16x32xf32>
    %36 = arith.addf %30, %35 : vector<1x16x16x32xf32>
    %37 = vector.extract_strided_slice %4 {offsets = [35, 0], sizes = [1, 32], strides = [1, 1]} : vector<49x32xf32> to vector<1x32xf32>
    %38 = vector.shape_cast %37 : vector<1x32xf32> to vector<1x1x1x32xf32>
    %39 = vector.extract_strided_slice %6 {offsets = [0, 5, 0, 0], sizes = [1, 16, 16, 32], strides = [1, 1, 1, 1]} : vector<1x22x16x32xf32> to vector<1x16x16x32xf32>
    %40 = vector.broadcast %38 : vector<1x1x1x32xf32> to vector<1x16x16x32xf32>
    %41 = arith.mulf %39, %40 : vector<1x16x16x32xf32>
    %42 = arith.addf %36, %41 : vector<1x16x16x32xf32>
    %43 = vector.extract_strided_slice %4 {offsets = [42, 0], sizes = [1, 32], strides = [1, 1]} : vector<49x32xf32> to vector<1x32xf32>
    %44 = vector.shape_cast %43 : vector<1x32xf32> to vector<1x1x1x32xf32>
    %45 = vector.extract_strided_slice %6 {offsets = [0, 6, 0, 0], sizes = [1, 16, 16, 32], strides = [1, 1, 1, 1]} : vector<1x22x16x32xf32> to vector<1x16x16x32xf32>
    %46 = vector.broadcast %44 : vector<1x1x1x32xf32> to vector<1x16x16x32xf32>
    %47 = arith.mulf %45, %46 : vector<1x16x16x32xf32>
    %48 = arith.addf %42, %47 : vector<1x16x16x32xf32>
    %c0_15 = arith.constant 0 : index
    %c0_16 = arith.constant 0 : index
    %c6 = arith.constant 6 : index
    %c0_17 = arith.constant 0 : index
    %49 = vector.load %arg12[%c0_15, %c0_16, %c6, %c0_17] : memref<1x22x27x32xf32, #tpu.memory_space<vmem>>, vector<1x22x16x32xf32>
    %50 = vector.extract_strided_slice %4 {offsets = [1, 0], sizes = [1, 32], strides = [1, 1]} : vector<49x32xf32> to vector<1x32xf32>
    %51 = vector.shape_cast %50 : vector<1x32xf32> to vector<1x1x1x32xf32>
    %52 = vector.extract_strided_slice %49 {offsets = [0, 0, 0, 0], sizes = [1, 16, 16, 32], strides = [1, 1, 1, 1]} : vector<1x22x16x32xf32> to vector<1x16x16x32xf32>
    %53 = vector.broadcast %51 : vector<1x1x1x32xf32> to vector<1x16x16x32xf32>
    %54 = arith.mulf %52, %53 : vector<1x16x16x32xf32>
    %55 = arith.addf %48, %54 : vector<1x16x16x32xf32>
    %56 = vector.extract_strided_slice %4 {offsets = [8, 0], sizes = [1, 32], strides = [1, 1]} : vector<49x32xf32> to vector<1x32xf32>
    %57 = vector.shape_cast %56 : vector<1x32xf32> to vector<1x1x1x32xf32>
    %58 = vector.extract_strided_slice %49 {offsets = [0, 1, 0, 0], sizes = [1, 16, 16, 32], strides = [1, 1, 1, 1]} : vector<1x22x16x32xf32> to vector<1x16x16x32xf32>
    %59 = vector.broadcast %57 : vector<1x1x1x32xf32> to vector<1x16x16x32xf32>
    %60 = arith.mulf %58, %59 : vector<1x16x16x32xf32>
    %61 = arith.addf %55, %60 : vector<1x16x16x32xf32>
    %62 = vector.extract_strided_slice %4 {offsets = [15, 0], sizes = [1, 32], strides = [1, 1]} : vector<49x32xf32> to vector<1x32xf32>
    %63 = vector.shape_cast %62 : vector<1x32xf32> to vector<1x1x1x32xf32>
    %64 = vector.extract_strided_slice %49 {offsets = [0, 2, 0, 0], sizes = [1, 16, 16, 32], strides = [1, 1, 1, 1]} : vector<1x22x16x32xf32> to vector<1x16x16x32xf32>
    %65 = vector.broadcast %63 : vector<1x1x1x32xf32> to vector<1x16x16x32xf32>
    %66 = arith.mulf %64, %65 : vector<1x16x16x32xf32>
    %67 = arith.addf %61, %66 : vector<1x16x16x32xf32>
    %68 = vector.extract_strided_slice %4 {offsets = [22, 0], sizes = [1, 32], strides = [1, 1]} : vector<49x32xf32> to vector<1x32xf32>
    %69 = vector.shape_cast %68 : vector<1x32xf32> to vector<1x1x1x32xf32>
    %70 = vector.extract_strided_slice %49 {offsets = [0, 3, 0, 0], sizes = [1, 16, 16, 32], strides = [1, 1, 1, 1]} : vector<1x22x16x32xf32> to vector<1x16x16x32xf32>
    %71 = vector.broadcast %69 : vector<1x1x1x32xf32> to vector<1x16x16x32xf32>
    %72 = arith.mulf %70, %71 : vector<1x16x16x32xf32>
    %73 = arith.addf %67, %72 : vector<1x16x16x32xf32>
    %74 = vector.extract_strided_slice %4 {offsets = [29, 0], sizes = [1, 32], strides = [1, 1]} : vector<49x32xf32> to vector<1x32xf32>
    %75 = vector.shape_cast %74 : vector<1x32xf32> to vector<1x1x1x32xf32>
    %76 = vector.extract_strided_slice %49 {offsets = [0, 4, 0, 0], sizes = [1, 16, 16, 32], strides = [1, 1, 1, 1]} : vector<1x22x16x32xf32> to vector<1x16x16x32xf32>
    %77 = vector.broadcast %75 : vector<1x1x1x32xf32> to vector<1x16x16x32xf32>
    %78 = arith.mulf %76, %77 : vector<1x16x16x32xf32>
    %79 = arith.addf %73, %78 : vector<1x16x16x32xf32>
    %80 = vector.extract_strided_slice %4 {offsets = [36, 0], sizes = [1, 32], strides = [1, 1]} : vector<49x32xf32> to vector<1x32xf32>
    %81 = vector.shape_cast %80 : vector<1x32xf32> to vector<1x1x1x32xf32>
    %82 = vector.extract_strided_slice %49 {offsets = [0, 5, 0, 0], sizes = [1, 16, 16, 32], strides = [1, 1, 1, 1]} : vector<1x22x16x32xf32> to vector<1x16x16x32xf32>
    %83 = vector.broadcast %81 : vector<1x1x1x32xf32> to vector<1x16x16x32xf32>
    %84 = arith.mulf %82, %83 : vector<1x16x16x32xf32>
    %85 = arith.addf %79, %84 : vector<1x16x16x32xf32>
    %86 = vector.extract_strided_slice %4 {offsets = [43, 0], sizes = [1, 32], strides = [1, 1]} : vector<49x32xf32> to vector<1x32xf32>
    %87 = vector.shape_cast %86 : vector<1x32xf32> to vector<1x1x1x32xf32>
    %88 = vector.extract_strided_slice %49 {offsets = [0, 6, 0, 0], sizes = [1, 16, 16, 32], strides = [1, 1, 1, 1]} : vector<1x22x16x32xf32> to vector<1x16x16x32xf32>
    %89 = vector.broadcast %87 : vector<1x1x1x32xf32> to vector<1x16x16x32xf32>
    %90 = arith.mulf %88, %89 : vector<1x16x16x32xf32>
    %91 = arith.addf %85, %90 : vector<1x16x16x32xf32>
    %c0_18 = arith.constant 0 : index
    %c0_19 = arith.constant 0 : index
    %c7 = arith.constant 7 : index
    %c0_20 = arith.constant 0 : index
    %92 = vector.load %arg12[%c0_18, %c0_19, %c7, %c0_20] : memref<1x22x27x32xf32, #tpu.memory_space<vmem>>, vector<1x22x16x32xf32>
    %93 = vector.extract_strided_slice %4 {offsets = [2, 0], sizes = [1, 32], strides = [1, 1]} : vector<49x32xf32> to vector<1x32xf32>
    %94 = vector.shape_cast %93 : vector<1x32xf32> to vector<1x1x1x32xf32>
    %95 = vector.extract_strided_slice %92 {offsets = [0, 0, 0, 0], sizes = [1, 16, 16, 32], strides = [1, 1, 1, 1]} : vector<1x22x16x32xf32> to vector<1x16x16x32xf32>
    %96 = vector.broadcast %94 : vector<1x1x1x32xf32> to vector<1x16x16x32xf32>
    %97 = arith.mulf %95, %96 : vector<1x16x16x32xf32>
    %98 = arith.addf %91, %97 : vector<1x16x16x32xf32>
    %99 = vector.extract_strided_slice %4 {offsets = [9, 0], sizes = [1, 32], strides = [1, 1]} : vector<49x32xf32> to vector<1x32xf32>
    %100 = vector.shape_cast %99 : vector<1x32xf32> to vector<1x1x1x32xf32>
    %101 = vector.extract_strided_slice %92 {offsets = [0, 1, 0, 0], sizes = [1, 16, 16, 32], strides = [1, 1, 1, 1]} : vector<1x22x16x32xf32> to vector<1x16x16x32xf32>
    %102 = vector.broadcast %100 : vector<1x1x1x32xf32> to vector<1x16x16x32xf32>
    %103 = arith.mulf %101, %102 : vector<1x16x16x32xf32>
    %104 = arith.addf %98, %103 : vector<1x16x16x32xf32>
    %105 = vector.extract_strided_slice %4 {offsets = [16, 0], sizes = [1, 32], strides = [1, 1]} : vector<49x32xf32> to vector<1x32xf32>
    %106 = vector.shape_cast %105 : vector<1x32xf32> to vector<1x1x1x32xf32>
    %107 = vector.extract_strided_slice %92 {offsets = [0, 2, 0, 0], sizes = [1, 16, 16, 32], strides = [1, 1, 1, 1]} : vector<1x22x16x32xf32> to vector<1x16x16x32xf32>
    %108 = vector.broadcast %106 : vector<1x1x1x32xf32> to vector<1x16x16x32xf32>
    %109 = arith.mulf %107, %108 : vector<1x16x16x32xf32>
    %110 = arith.addf %104, %109 : vector<1x16x16x32xf32>
    %111 = vector.extract_strided_slice %4 {offsets = [23, 0], sizes = [1, 32], strides = [1, 1]} : vector<49x32xf32> to vector<1x32xf32>
    %112 = vector.shape_cast %111 : vector<1x32xf32> to vector<1x1x1x32xf32>
    %113 = vector.extract_strided_slice %92 {offsets = [0, 3, 0, 0], sizes = [1, 16, 16, 32], strides = [1, 1, 1, 1]} : vector<1x22x16x32xf32> to vector<1x16x16x32xf32>
    %114 = vector.broadcast %112 : vector<1x1x1x32xf32> to vector<1x16x16x32xf32>
    %115 = arith.mulf %113, %114 : vector<1x16x16x32xf32>
    %116 = arith.addf %110, %115 : vector<1x16x16x32xf32>
    %117 = vector.extract_strided_slice %4 {offsets = [30, 0], sizes = [1, 32], strides = [1, 1]} : vector<49x32xf32> to vector<1x32xf32>
    %118 = vector.shape_cast %117 : vector<1x32xf32> to vector<1x1x1x32xf32>
    %119 = vector.extract_strided_slice %92 {offsets = [0, 4, 0, 0], sizes = [1, 16, 16, 32], strides = [1, 1, 1, 1]} : vector<1x22x16x32xf32> to vector<1x16x16x32xf32>
    %120 = vector.broadcast %118 : vector<1x1x1x32xf32> to vector<1x16x16x32xf32>
    %121 = arith.mulf %119, %120 : vector<1x16x16x32xf32>
    %122 = arith.addf %116, %121 : vector<1x16x16x32xf32>
    %123 = vector.extract_strided_slice %4 {offsets = [37, 0], sizes = [1, 32], strides = [1, 1]} : vector<49x32xf32> to vector<1x32xf32>
    %124 = vector.shape_cast %123 : vector<1x32xf32> to vector<1x1x1x32xf32>
    %125 = vector.extract_strided_slice %92 {offsets = [0, 5, 0, 0], sizes = [1, 16, 16, 32], strides = [1, 1, 1, 1]} : vector<1x22x16x32xf32> to vector<1x16x16x32xf32>
    %126 = vector.broadcast %124 : vector<1x1x1x32xf32> to vector<1x16x16x32xf32>
    %127 = arith.mulf %125, %126 : vector<1x16x16x32xf32>
    %128 = arith.addf %122, %127 : vector<1x16x16x32xf32>
    %129 = vector.extract_strided_slice %4 {offsets = [44, 0], sizes = [1, 32], strides = [1, 1]} : vector<49x32xf32> to vector<1x32xf32>
    %130 = vector.shape_cast %129 : vector<1x32xf32> to vector<1x1x1x32xf32>
    %131 = vector.extract_strided_slice %92 {offsets = [0, 6, 0, 0], sizes = [1, 16, 16, 32], strides = [1, 1, 1, 1]} : vector<1x22x16x32xf32> to vector<1x16x16x32xf32>
    %132 = vector.broadcast %130 : vector<1x1x1x32xf32> to vector<1x16x16x32xf32>
    %133 = arith.mulf %131, %132 : vector<1x16x16x32xf32>
    %134 = arith.addf %128, %133 : vector<1x16x16x32xf32>
    %c0_21 = arith.constant 0 : index
    %c0_22 = arith.constant 0 : index
    %c8_23 = arith.constant 8 : index
    %c0_24 = arith.constant 0 : index
    %135 = vector.load %arg12[%c0_21, %c0_22, %c8_23, %c0_24] : memref<1x22x27x32xf32, #tpu.memory_space<vmem>>, vector<1x22x16x32xf32>
    %136 = vector.extract_strided_slice %4 {offsets = [3, 0], sizes = [1, 32], strides = [1, 1]} : vector<49x32xf32> to vector<1x32xf32>
    %137 = vector.shape_cast %136 : vector<1x32xf32> to vector<1x1x1x32xf32>
    %138 = vector.extract_strided_slice %135 {offsets = [0, 0, 0, 0], sizes = [1, 16, 16, 32], strides = [1, 1, 1, 1]} : vector<1x22x16x32xf32> to vector<1x16x16x32xf32>
    %139 = vector.broadcast %137 : vector<1x1x1x32xf32> to vector<1x16x16x32xf32>
    %140 = arith.mulf %138, %139 : vector<1x16x16x32xf32>
    %141 = arith.addf %134, %140 : vector<1x16x16x32xf32>
    %142 = vector.extract_strided_slice %4 {offsets = [10, 0], sizes = [1, 32], strides = [1, 1]} : vector<49x32xf32> to vector<1x32xf32>
    %143 = vector.shape_cast %142 : vector<1x32xf32> to vector<1x1x1x32xf32>
    %144 = vector.extract_strided_slice %135 {offsets = [0, 1, 0, 0], sizes = [1, 16, 16, 32], strides = [1, 1, 1, 1]} : vector<1x22x16x32xf32> to vector<1x16x16x32xf32>
    %145 = vector.broadcast %143 : vector<1x1x1x32xf32> to vector<1x16x16x32xf32>
    %146 = arith.mulf %144, %145 : vector<1x16x16x32xf32>
    %147 = arith.addf %141, %146 : vector<1x16x16x32xf32>
    %148 = vector.extract_strided_slice %4 {offsets = [17, 0], sizes = [1, 32], strides = [1, 1]} : vector<49x32xf32> to vector<1x32xf32>
    %149 = vector.shape_cast %148 : vector<1x32xf32> to vector<1x1x1x32xf32>
    %150 = vector.extract_strided_slice %135 {offsets = [0, 2, 0, 0], sizes = [1, 16, 16, 32], strides = [1, 1, 1, 1]} : vector<1x22x16x32xf32> to vector<1x16x16x32xf32>
    %151 = vector.broadcast %149 : vector<1x1x1x32xf32> to vector<1x16x16x32xf32>
    %152 = arith.mulf %150, %151 : vector<1x16x16x32xf32>
    %153 = arith.addf %147, %152 : vector<1x16x16x32xf32>
    %154 = vector.extract_strided_slice %4 {offsets = [24, 0], sizes = [1, 32], strides = [1, 1]} : vector<49x32xf32> to vector<1x32xf32>
    %155 = vector.shape_cast %154 : vector<1x32xf32> to vector<1x1x1x32xf32>
    %156 = vector.extract_strided_slice %135 {offsets = [0, 3, 0, 0], sizes = [1, 16, 16, 32], strides = [1, 1, 1, 1]} : vector<1x22x16x32xf32> to vector<1x16x16x32xf32>
    %157 = vector.broadcast %155 : vector<1x1x1x32xf32> to vector<1x16x16x32xf32>
    %158 = arith.mulf %156, %157 : vector<1x16x16x32xf32>
    %159 = arith.addf %153, %158 : vector<1x16x16x32xf32>
    %160 = vector.extract_strided_slice %4 {offsets = [31, 0], sizes = [1, 32], strides = [1, 1]} : vector<49x32xf32> to vector<1x32xf32>
    %161 = vector.shape_cast %160 : vector<1x32xf32> to vector<1x1x1x32xf32>
    %162 = vector.extract_strided_slice %135 {offsets = [0, 4, 0, 0], sizes = [1, 16, 16, 32], strides = [1, 1, 1, 1]} : vector<1x22x16x32xf32> to vector<1x16x16x32xf32>
    %163 = vector.broadcast %161 : vector<1x1x1x32xf32> to vector<1x16x16x32xf32>
    %164 = arith.mulf %162, %163 : vector<1x16x16x32xf32>
    %165 = arith.addf %159, %164 : vector<1x16x16x32xf32>
    %166 = vector.extract_strided_slice %4 {offsets = [38, 0], sizes = [1, 32], strides = [1, 1]} : vector<49x32xf32> to vector<1x32xf32>
    %167 = vector.shape_cast %166 : vector<1x32xf32> to vector<1x1x1x32xf32>
    %168 = vector.extract_strided_slice %135 {offsets = [0, 5, 0, 0], sizes = [1, 16, 16, 32], strides = [1, 1, 1, 1]} : vector<1x22x16x32xf32> to vector<1x16x16x32xf32>
    %169 = vector.broadcast %167 : vector<1x1x1x32xf32> to vector<1x16x16x32xf32>
    %170 = arith.mulf %168, %169 : vector<1x16x16x32xf32>
    %171 = arith.addf %165, %170 : vector<1x16x16x32xf32>
    %172 = vector.extract_strided_slice %4 {offsets = [45, 0], sizes = [1, 32], strides = [1, 1]} : vector<49x32xf32> to vector<1x32xf32>
    %173 = vector.shape_cast %172 : vector<1x32xf32> to vector<1x1x1x32xf32>
    %174 = vector.extract_strided_slice %135 {offsets = [0, 6, 0, 0], sizes = [1, 16, 16, 32], strides = [1, 1, 1, 1]} : vector<1x22x16x32xf32> to vector<1x16x16x32xf32>
    %175 = vector.broadcast %173 : vector<1x1x1x32xf32> to vector<1x16x16x32xf32>
    %176 = arith.mulf %174, %175 : vector<1x16x16x32xf32>
    %177 = arith.addf %171, %176 : vector<1x16x16x32xf32>
    %c0_25 = arith.constant 0 : index
    %c0_26 = arith.constant 0 : index
    %c9 = arith.constant 9 : index
    %c0_27 = arith.constant 0 : index
    %178 = vector.load %arg12[%c0_25, %c0_26, %c9, %c0_27] : memref<1x22x27x32xf32, #tpu.memory_space<vmem>>, vector<1x22x16x32xf32>
    %179 = vector.extract_strided_slice %4 {offsets = [4, 0], sizes = [1, 32], strides = [1, 1]} : vector<49x32xf32> to vector<1x32xf32>
    %180 = vector.shape_cast %179 : vector<1x32xf32> to vector<1x1x1x32xf32>
    %181 = vector.extract_strided_slice %178 {offsets = [0, 0, 0, 0], sizes = [1, 16, 16, 32], strides = [1, 1, 1, 1]} : vector<1x22x16x32xf32> to vector<1x16x16x32xf32>
    %182 = vector.broadcast %180 : vector<1x1x1x32xf32> to vector<1x16x16x32xf32>
    %183 = arith.mulf %181, %182 : vector<1x16x16x32xf32>
    %184 = arith.addf %177, %183 : vector<1x16x16x32xf32>
    %185 = vector.extract_strided_slice %4 {offsets = [11, 0], sizes = [1, 32], strides = [1, 1]} : vector<49x32xf32> to vector<1x32xf32>
    %186 = vector.shape_cast %185 : vector<1x32xf32> to vector<1x1x1x32xf32>
    %187 = vector.extract_strided_slice %178 {offsets = [0, 1, 0, 0], sizes = [1, 16, 16, 32], strides = [1, 1, 1, 1]} : vector<1x22x16x32xf32> to vector<1x16x16x32xf32>
    %188 = vector.broadcast %186 : vector<1x1x1x32xf32> to vector<1x16x16x32xf32>
    %189 = arith.mulf %187, %188 : vector<1x16x16x32xf32>
    %190 = arith.addf %184, %189 : vector<1x16x16x32xf32>
    %191 = vector.extract_strided_slice %4 {offsets = [18, 0], sizes = [1, 32], strides = [1, 1]} : vector<49x32xf32> to vector<1x32xf32>
    %192 = vector.shape_cast %191 : vector<1x32xf32> to vector<1x1x1x32xf32>
    %193 = vector.extract_strided_slice %178 {offsets = [0, 2, 0, 0], sizes = [1, 16, 16, 32], strides = [1, 1, 1, 1]} : vector<1x22x16x32xf32> to vector<1x16x16x32xf32>
    %194 = vector.broadcast %192 : vector<1x1x1x32xf32> to vector<1x16x16x32xf32>
    %195 = arith.mulf %193, %194 : vector<1x16x16x32xf32>
    %196 = arith.addf %190, %195 : vector<1x16x16x32xf32>
    %197 = vector.extract_strided_slice %4 {offsets = [25, 0], sizes = [1, 32], strides = [1, 1]} : vector<49x32xf32> to vector<1x32xf32>
    %198 = vector.shape_cast %197 : vector<1x32xf32> to vector<1x1x1x32xf32>
    %199 = vector.extract_strided_slice %178 {offsets = [0, 3, 0, 0], sizes = [1, 16, 16, 32], strides = [1, 1, 1, 1]} : vector<1x22x16x32xf32> to vector<1x16x16x32xf32>
    %200 = vector.broadcast %198 : vector<1x1x1x32xf32> to vector<1x16x16x32xf32>
    %201 = arith.mulf %199, %200 : vector<1x16x16x32xf32>
    %202 = arith.addf %196, %201 : vector<1x16x16x32xf32>
    %203 = vector.extract_strided_slice %4 {offsets = [32, 0], sizes = [1, 32], strides = [1, 1]} : vector<49x32xf32> to vector<1x32xf32>
    %204 = vector.shape_cast %203 : vector<1x32xf32> to vector<1x1x1x32xf32>
    %205 = vector.extract_strided_slice %178 {offsets = [0, 4, 0, 0], sizes = [1, 16, 16, 32], strides = [1, 1, 1, 1]} : vector<1x22x16x32xf32> to vector<1x16x16x32xf32>
    %206 = vector.broadcast %204 : vector<1x1x1x32xf32> to vector<1x16x16x32xf32>
    %207 = arith.mulf %205, %206 : vector<1x16x16x32xf32>
    %208 = arith.addf %202, %207 : vector<1x16x16x32xf32>
    %209 = vector.extract_strided_slice %4 {offsets = [39, 0], sizes = [1, 32], strides = [1, 1]} : vector<49x32xf32> to vector<1x32xf32>
    %210 = vector.shape_cast %209 : vector<1x32xf32> to vector<1x1x1x32xf32>
    %211 = vector.extract_strided_slice %178 {offsets = [0, 5, 0, 0], sizes = [1, 16, 16, 32], strides = [1, 1, 1, 1]} : vector<1x22x16x32xf32> to vector<1x16x16x32xf32>
    %212 = vector.broadcast %210 : vector<1x1x1x32xf32> to vector<1x16x16x32xf32>
    %213 = arith.mulf %211, %212 : vector<1x16x16x32xf32>
    %214 = arith.addf %208, %213 : vector<1x16x16x32xf32>
    %215 = vector.extract_strided_slice %4 {offsets = [46, 0], sizes = [1, 32], strides = [1, 1]} : vector<49x32xf32> to vector<1x32xf32>
    %216 = vector.shape_cast %215 : vector<1x32xf32> to vector<1x1x1x32xf32>
    %217 = vector.extract_strided_slice %178 {offsets = [0, 6, 0, 0], sizes = [1, 16, 16, 32], strides = [1, 1, 1, 1]} : vector<1x22x16x32xf32> to vector<1x16x16x32xf32>
    %218 = vector.broadcast %216 : vector<1x1x1x32xf32> to vector<1x16x16x32xf32>
    %219 = arith.mulf %217, %218 : vector<1x16x16x32xf32>
    %220 = arith.addf %214, %219 : vector<1x16x16x32xf32>
    %c0_28 = arith.constant 0 : index
    %c0_29 = arith.constant 0 : index
    %c10 = arith.constant 10 : index
    %c0_30 = arith.constant 0 : index
    %221 = vector.load %arg12[%c0_28, %c0_29, %c10, %c0_30] : memref<1x22x27x32xf32, #tpu.memory_space<vmem>>, vector<1x22x16x32xf32>
    %222 = vector.extract_strided_slice %4 {offsets = [5, 0], sizes = [1, 32], strides = [1, 1]} : vector<49x32xf32> to vector<1x32xf32>
    %223 = vector.shape_cast %222 : vector<1x32xf32> to vector<1x1x1x32xf32>
    %224 = vector.extract_strided_slice %221 {offsets = [0, 0, 0, 0], sizes = [1, 16, 16, 32], strides = [1, 1, 1, 1]} : vector<1x22x16x32xf32> to vector<1x16x16x32xf32>
    %225 = vector.broadcast %223 : vector<1x1x1x32xf32> to vector<1x16x16x32xf32>
    %226 = arith.mulf %224, %225 : vector<1x16x16x32xf32>
    %227 = arith.addf %220, %226 : vector<1x16x16x32xf32>
    %228 = vector.extract_strided_slice %4 {offsets = [12, 0], sizes = [1, 32], strides = [1, 1]} : vector<49x32xf32> to vector<1x32xf32>
    %229 = vector.shape_cast %228 : vector<1x32xf32> to vector<1x1x1x32xf32>
    %230 = vector.extract_strided_slice %221 {offsets = [0, 1, 0, 0], sizes = [1, 16, 16, 32], strides = [1, 1, 1, 1]} : vector<1x22x16x32xf32> to vector<1x16x16x32xf32>
    %231 = vector.broadcast %229 : vector<1x1x1x32xf32> to vector<1x16x16x32xf32>
    %232 = arith.mulf %230, %231 : vector<1x16x16x32xf32>
    %233 = arith.addf %227, %232 : vector<1x16x16x32xf32>
    %234 = vector.extract_strided_slice %4 {offsets = [19, 0], sizes = [1, 32], strides = [1, 1]} : vector<49x32xf32> to vector<1x32xf32>
    %235 = vector.shape_cast %234 : vector<1x32xf32> to vector<1x1x1x32xf32>
    %236 = vector.extract_strided_slice %221 {offsets = [0, 2, 0, 0], sizes = [1, 16, 16, 32], strides = [1, 1, 1, 1]} : vector<1x22x16x32xf32> to vector<1x16x16x32xf32>
    %237 = vector.broadcast %235 : vector<1x1x1x32xf32> to vector<1x16x16x32xf32>
    %238 = arith.mulf %236, %237 : vector<1x16x16x32xf32>
    %239 = arith.addf %233, %238 : vector<1x16x16x32xf32>
    %240 = vector.extract_strided_slice %4 {offsets = [26, 0], sizes = [1, 32], strides = [1, 1]} : vector<49x32xf32> to vector<1x32xf32>
    %241 = vector.shape_cast %240 : vector<1x32xf32> to vector<1x1x1x32xf32>
    %242 = vector.extract_strided_slice %221 {offsets = [0, 3, 0, 0], sizes = [1, 16, 16, 32], strides = [1, 1, 1, 1]} : vector<1x22x16x32xf32> to vector<1x16x16x32xf32>
    %243 = vector.broadcast %241 : vector<1x1x1x32xf32> to vector<1x16x16x32xf32>
    %244 = arith.mulf %242, %243 : vector<1x16x16x32xf32>
    %245 = arith.addf %239, %244 : vector<1x16x16x32xf32>
    %246 = vector.extract_strided_slice %4 {offsets = [33, 0], sizes = [1, 32], strides = [1, 1]} : vector<49x32xf32> to vector<1x32xf32>
    %247 = vector.shape_cast %246 : vector<1x32xf32> to vector<1x1x1x32xf32>
    %248 = vector.extract_strided_slice %221 {offsets = [0, 4, 0, 0], sizes = [1, 16, 16, 32], strides = [1, 1, 1, 1]} : vector<1x22x16x32xf32> to vector<1x16x16x32xf32>
    %249 = vector.broadcast %247 : vector<1x1x1x32xf32> to vector<1x16x16x32xf32>
    %250 = arith.mulf %248, %249 : vector<1x16x16x32xf32>
    %251 = arith.addf %245, %250 : vector<1x16x16x32xf32>
    %252 = vector.extract_strided_slice %4 {offsets = [40, 0], sizes = [1, 32], strides = [1, 1]} : vector<49x32xf32> to vector<1x32xf32>
    %253 = vector.shape_cast %252 : vector<1x32xf32> to vector<1x1x1x32xf32>
    %254 = vector.extract_strided_slice %221 {offsets = [0, 5, 0, 0], sizes = [1, 16, 16, 32], strides = [1, 1, 1, 1]} : vector<1x22x16x32xf32> to vector<1x16x16x32xf32>
    %255 = vector.broadcast %253 : vector<1x1x1x32xf32> to vector<1x16x16x32xf32>
    %256 = arith.mulf %254, %255 : vector<1x16x16x32xf32>
    %257 = arith.addf %251, %256 : vector<1x16x16x32xf32>
    %258 = vector.extract_strided_slice %4 {offsets = [47, 0], sizes = [1, 32], strides = [1, 1]} : vector<49x32xf32> to vector<1x32xf32>
    %259 = vector.shape_cast %258 : vector<1x32xf32> to vector<1x1x1x32xf32>
    %260 = vector.extract_strided_slice %221 {offsets = [0, 6, 0, 0], sizes = [1, 16, 16, 32], strides = [1, 1, 1, 1]} : vector<1x22x16x32xf32> to vector<1x16x16x32xf32>
    %261 = vector.broadcast %259 : vector<1x1x1x32xf32> to vector<1x16x16x32xf32>
    %262 = arith.mulf %260, %261 : vector<1x16x16x32xf32>
    %263 = arith.addf %257, %262 : vector<1x16x16x32xf32>
    %c0_31 = arith.constant 0 : index
    %c0_32 = arith.constant 0 : index
    %c11 = arith.constant 11 : index
    %c0_33 = arith.constant 0 : index
    %264 = vector.load %arg12[%c0_31, %c0_32, %c11, %c0_33] : memref<1x22x27x32xf32, #tpu.memory_space<vmem>>, vector<1x22x16x32xf32>
    %265 = vector.extract_strided_slice %4 {offsets = [6, 0], sizes = [1, 32], strides = [1, 1]} : vector<49x32xf32> to vector<1x32xf32>
    %266 = vector.shape_cast %265 : vector<1x32xf32> to vector<1x1x1x32xf32>
    %267 = vector.extract_strided_slice %264 {offsets = [0, 0, 0, 0], sizes = [1, 16, 16, 32], strides = [1, 1, 1, 1]} : vector<1x22x16x32xf32> to vector<1x16x16x32xf32>
    %268 = vector.broadcast %266 : vector<1x1x1x32xf32> to vector<1x16x16x32xf32>
    %269 = arith.mulf %267, %268 : vector<1x16x16x32xf32>
    %270 = arith.addf %263, %269 : vector<1x16x16x32xf32>
    %271 = vector.extract_strided_slice %4 {offsets = [13, 0], sizes = [1, 32], strides = [1, 1]} : vector<49x32xf32> to vector<1x32xf32>
    %272 = vector.shape_cast %271 : vector<1x32xf32> to vector<1x1x1x32xf32>
    %273 = vector.extract_strided_slice %264 {offsets = [0, 1, 0, 0], sizes = [1, 16, 16, 32], strides = [1, 1, 1, 1]} : vector<1x22x16x32xf32> to vector<1x16x16x32xf32>
    %274 = vector.broadcast %272 : vector<1x1x1x32xf32> to vector<1x16x16x32xf32>
    %275 = arith.mulf %273, %274 : vector<1x16x16x32xf32>
    %276 = arith.addf %270, %275 : vector<1x16x16x32xf32>
    %277 = vector.extract_strided_slice %4 {offsets = [20, 0], sizes = [1, 32], strides = [1, 1]} : vector<49x32xf32> to vector<1x32xf32>
    %278 = vector.shape_cast %277 : vector<1x32xf32> to vector<1x1x1x32xf32>
    %279 = vector.extract_strided_slice %264 {offsets = [0, 2, 0, 0], sizes = [1, 16, 16, 32], strides = [1, 1, 1, 1]} : vector<1x22x16x32xf32> to vector<1x16x16x32xf32>
    %280 = vector.broadcast %278 : vector<1x1x1x32xf32> to vector<1x16x16x32xf32>
    %281 = arith.mulf %279, %280 : vector<1x16x16x32xf32>
    %282 = arith.addf %276, %281 : vector<1x16x16x32xf32>
    %283 = vector.extract_strided_slice %4 {offsets = [27, 0], sizes = [1, 32], strides = [1, 1]} : vector<49x32xf32> to vector<1x32xf32>
    %284 = vector.shape_cast %283 : vector<1x32xf32> to vector<1x1x1x32xf32>
    %285 = vector.extract_strided_slice %264 {offsets = [0, 3, 0, 0], sizes = [1, 16, 16, 32], strides = [1, 1, 1, 1]} : vector<1x22x16x32xf32> to vector<1x16x16x32xf32>
    %286 = vector.broadcast %284 : vector<1x1x1x32xf32> to vector<1x16x16x32xf32>
    %287 = arith.mulf %285, %286 : vector<1x16x16x32xf32>
    %288 = arith.addf %282, %287 : vector<1x16x16x32xf32>
    %289 = vector.extract_strided_slice %4 {offsets = [34, 0], sizes = [1, 32], strides = [1, 1]} : vector<49x32xf32> to vector<1x32xf32>
    %290 = vector.shape_cast %289 : vector<1x32xf32> to vector<1x1x1x32xf32>
    %291 = vector.extract_strided_slice %264 {offsets = [0, 4, 0, 0], sizes = [1, 16, 16, 32], strides = [1, 1, 1, 1]} : vector<1x22x16x32xf32> to vector<1x16x16x32xf32>
    %292 = vector.broadcast %290 : vector<1x1x1x32xf32> to vector<1x16x16x32xf32>
    %293 = arith.mulf %291, %292 : vector<1x16x16x32xf32>
    %294 = arith.addf %288, %293 : vector<1x16x16x32xf32>
    %295 = vector.extract_strided_slice %4 {offsets = [41, 0], sizes = [1, 32], strides = [1, 1]} : vector<49x32xf32> to vector<1x32xf32>
    %296 = vector.shape_cast %295 : vector<1x32xf32> to vector<1x1x1x32xf32>
    %297 = vector.extract_strided_slice %264 {offsets = [0, 5, 0, 0], sizes = [1, 16, 16, 32], strides = [1, 1, 1, 1]} : vector<1x22x16x32xf32> to vector<1x16x16x32xf32>
    %298 = vector.broadcast %296 : vector<1x1x1x32xf32> to vector<1x16x16x32xf32>
    %299 = arith.mulf %297, %298 : vector<1x16x16x32xf32>
    %300 = arith.addf %294, %299 : vector<1x16x16x32xf32>
    %301 = vector.extract_strided_slice %4 {offsets = [48, 0], sizes = [1, 32], strides = [1, 1]} : vector<49x32xf32> to vector<1x32xf32>
    %302 = vector.shape_cast %301 : vector<1x32xf32> to vector<1x1x1x32xf32>
    %303 = vector.extract_strided_slice %264 {offsets = [0, 6, 0, 0], sizes = [1, 16, 16, 32], strides = [1, 1, 1, 1]} : vector<1x22x16x32xf32> to vector<1x16x16x32xf32>
    %304 = vector.broadcast %302 : vector<1x1x1x32xf32> to vector<1x16x16x32xf32>
    %305 = arith.mulf %303, %304 : vector<1x16x16x32xf32>
    %306 = arith.addf %300, %305 : vector<1x16x16x32xf32>
    %307 = vector.shape_cast %306 : vector<1x16x16x32xf32> to vector<256x32xf32>
    %c0_34 = arith.constant 0 : index
    %c0_35 = arith.constant 0 : index
    %308 = vector.load %arg3[%c0_34, %c0_35] : memref<1x32xf32, #tpu.memory_space<vmem>>, vector<1x32xf32>
    %309 = vector.broadcast %308 : vector<1x32xf32> to vector<256x32xf32>
    %310 = arith.addf %307, %309 : vector<256x32xf32>
    %cst_36 = arith.constant dense<0.000000e+00> : vector<256xf32>
    %311 = vector.multi_reduction <add>, %310, %cst_36 [1] : vector<256x32xf32> to vector<256xf32>
    %312 = vector.shape_cast %311 : vector<256xf32> to vector<256x1xf32>
    %cst_37 = arith.constant 3.200000e+01 : f32
    %313 = vector.broadcast %cst_37 : f32 to vector<256x1xf32>
    %314 = arith.divf %312, %313 : vector<256x1xf32>
    %315 = vector.broadcast %314 : vector<256x1xf32> to vector<256x32xf32>
    %316 = arith.subf %310, %315 : vector<256x32xf32>
    %317 = arith.mulf %316, %316 : vector<256x32xf32>
    %cst_38 = arith.constant dense<0.000000e+00> : vector<256xf32>
    %318 = vector.multi_reduction <add>, %317, %cst_38 [1] : vector<256x32xf32> to vector<256xf32>
    %319 = vector.shape_cast %318 : vector<256xf32> to vector<256x1xf32>
    %cst_39 = arith.constant 3.200000e+01 : f32
    %320 = vector.broadcast %cst_39 : f32 to vector<256x1xf32>
    %321 = arith.divf %319, %320 : vector<256x1xf32>
    %cst_40 = arith.constant 9.99999974E-6 : f32
    %322 = vector.broadcast %cst_40 : f32 to vector<256x1xf32>
    %323 = arith.addf %321, %322 : vector<256x1xf32>
    %324 = math.rsqrt %323 : vector<256x1xf32>
    %325 = vector.broadcast %324 : vector<256x1xf32> to vector<256x32xf32>
    %326 = arith.mulf %316, %325 : vector<256x32xf32>
    %c0_41 = arith.constant 0 : index
    %c0_42 = arith.constant 0 : index
    %327 = vector.load %arg4[%c0_41, %c0_42] : memref<1x32xf32, #tpu.memory_space<vmem>>, vector<1x32xf32>
    %328 = vector.broadcast %327 : vector<1x32xf32> to vector<256x32xf32>
    %329 = arith.mulf %326, %328 : vector<256x32xf32>
    %c0_43 = arith.constant 0 : index
    %c0_44 = arith.constant 0 : index
    %330 = vector.load %arg5[%c0_43, %c0_44] : memref<1x32xf32, #tpu.memory_space<vmem>>, vector<1x32xf32>
    %331 = vector.broadcast %330 : vector<1x32xf32> to vector<256x32xf32>
    %332 = arith.addf %329, %331 : vector<256x32xf32>
    %333 = arith.truncf %332 : vector<256x32xf32> to vector<256x32xbf16>
    %c0_45 = arith.constant 0 : index
    %c0_46 = arith.constant 0 : index
    %334 = vector.load %arg6[%c0_45, %c0_46] : memref<32x128xbf16, #tpu.memory_space<vmem>>, vector<32x128xbf16>
    %cst_47 = arith.constant dense<0.000000e+00> : vector<256x128xf32>
    %335 = tpu.matmul %333, %334, %cst_47 {dimension_numbers = #tpu.dot_dimension_numbers<[1], [0], [0], [1], [0, 0, 1, 1], [], []>} : vector<256x32xbf16>, vector<32x128xbf16>, vector<256x128xf32> -> vector<256x128xf32>
    %c0_48 = arith.constant 0 : index
    %c0_49 = arith.constant 0 : index
    %336 = vector.load %arg7[%c0_48, %c0_49] : memref<1x128xf32, #tpu.memory_space<vmem>>, vector<1x128xf32>
    %337 = vector.broadcast %336 : vector<1x128xf32> to vector<256x128xf32>
    %338 = arith.addf %335, %337 : vector<256x128xf32>
    %cst_50 = arith.constant 5.000000e-01 : f32
    %339 = vector.broadcast %cst_50 : f32 to vector<256x128xf32>
    %340 = arith.mulf %339, %338 : vector<256x128xf32>
    %cst_51 = arith.constant 0.707106769 : f32
    %341 = vector.broadcast %cst_51 : f32 to vector<256x128xf32>
    %342 = arith.mulf %338, %341 : vector<256x128xf32>
    %343 = math.absf %342 : vector<256x128xf32>
    %cst_52 = arith.constant 0.327591091 : f32
    %344 = vector.broadcast %cst_52 : f32 to vector<256x128xf32>
    %345 = arith.mulf %344, %343 : vector<256x128xf32>
    %cst_53 = arith.constant 1.000000e+00 : f32
    %346 = vector.broadcast %cst_53 : f32 to vector<256x128xf32>
    %347 = arith.addf %346, %345 : vector<256x128xf32>
    %cst_54 = arith.constant 1.000000e+00 : f32
    %348 = vector.broadcast %cst_54 : f32 to vector<256x128xf32>
    %349 = arith.divf %348, %347 : vector<256x128xf32>
    %cst_55 = arith.constant 1.06140542 : f32
    %350 = vector.broadcast %cst_55 : f32 to vector<256x128xf32>
    %351 = arith.mulf %349, %350 : vector<256x128xf32>
    %cst_56 = arith.constant -1.45315206 : f32
    %352 = vector.broadcast %cst_56 : f32 to vector<256x128xf32>
    %353 = arith.addf %352, %351 : vector<256x128xf32>
    %354 = arith.mulf %349, %353 : vector<256x128xf32>
    %cst_57 = arith.constant 1.42141378 : f32
    %355 = vector.broadcast %cst_57 : f32 to vector<256x128xf32>
    %356 = arith.addf %355, %354 : vector<256x128xf32>
    %357 = arith.mulf %349, %356 : vector<256x128xf32>
    %cst_58 = arith.constant -0.284496725 : f32
    %358 = vector.broadcast %cst_58 : f32 to vector<256x128xf32>
    %359 = arith.addf %358, %357 : vector<256x128xf32>
    %360 = arith.mulf %349, %359 : vector<256x128xf32>
    %cst_59 = arith.constant 0.254829586 : f32
    %361 = vector.broadcast %cst_59 : f32 to vector<256x128xf32>
    %362 = arith.addf %361, %360 : vector<256x128xf32>
    %363 = arith.mulf %349, %362 : vector<256x128xf32>
    %cst_60 = arith.constant 0.000000e+00 : f32
    %364 = vector.broadcast %cst_60 : f32 to vector<256x128xf32>
    %365 = arith.subf %364, %343 : vector<256x128xf32>
    %366 = arith.mulf %365, %343 : vector<256x128xf32>
    %367 = math.exp %366 : vector<256x128xf32>
    %368 = arith.mulf %363, %367 : vector<256x128xf32>
    %cst_61 = arith.constant 1.000000e+00 : f32
    %369 = vector.broadcast %cst_61 : f32 to vector<256x128xf32>
    %370 = arith.subf %369, %368 : vector<256x128xf32>
    %cst_62 = arith.constant 0.000000e+00 : f32
    %371 = vector.broadcast %cst_62 : f32 to vector<256x128xf32>
    %372 = arith.cmpf olt, %342, %371 : vector<256x128xf32>
    %cst_63 = arith.constant 0.000000e+00 : f32
    %373 = vector.broadcast %cst_63 : f32 to vector<256x128xf32>
    %374 = arith.subf %373, %370 : vector<256x128xf32>
    %375 = arith.select %372, %374, %370 : vector<256x128xi1>, vector<256x128xf32>
    %cst_64 = arith.constant 1.000000e+00 : f32
    %376 = vector.broadcast %cst_64 : f32 to vector<256x128xf32>
    %377 = arith.addf %376, %375 : vector<256x128xf32>
    %378 = arith.mulf %340, %377 : vector<256x128xf32>
    %379 = arith.truncf %378 : vector<256x128xf32> to vector<256x128xbf16>
    %c0_65 = arith.constant 0 : index
    %c0_66 = arith.constant 0 : index
    %380 = vector.load %arg8[%c0_65, %c0_66] : memref<128x32xbf16, #tpu.memory_space<vmem>>, vector<128x32xbf16>
    %cst_67 = arith.constant dense<0.000000e+00> : vector<256x32xf32>
    %381 = tpu.matmul %379, %380, %cst_67 {dimension_numbers = #tpu.dot_dimension_numbers<[1], [0], [0], [1], [0, 0, 1, 1], [], []>} : vector<256x128xbf16>, vector<128x32xbf16>, vector<256x32xf32> -> vector<256x32xf32>
    %c0_68 = arith.constant 0 : index
    %c0_69 = arith.constant 0 : index
    %382 = vector.load %arg9[%c0_68, %c0_69] : memref<1x32xf32, #tpu.memory_space<vmem>>, vector<1x32xf32>
    %383 = vector.broadcast %382 : vector<1x32xf32> to vector<256x32xf32>
    %384 = arith.addf %381, %383 : vector<256x32xf32>
    %385 = vector.shape_cast %0 : vector<1x16x16x32xf32> to vector<256x32xf32>
    %c0_70 = arith.constant 0 : index
    %c0_71 = arith.constant 0 : index
    %386 = vector.load %arg10[%c0_70, %c0_71] : memref<1x32xf32, #tpu.memory_space<vmem>>, vector<1x32xf32>
    %387 = vector.broadcast %386 : vector<1x32xf32> to vector<256x32xf32>
    %388 = arith.mulf %387, %384 : vector<256x32xf32>
    %389 = arith.addf %385, %388 : vector<256x32xf32>
    %390 = vector.shape_cast %389 : vector<256x32xf32> to vector<1x16x16x32xf32>
    %c0_72 = arith.constant 0 : index
    %c0_73 = arith.constant 0 : index
    %c0_74 = arith.constant 0 : index
    %c0_75 = arith.constant 0 : index
    %391 = vector.load %arg11[%c0_72, %c0_73, %c0_74, %c0_75] : memref<1x16x16x32xf32, #tpu.memory_space<vmem>>, vector<1x16x16x32xf32>
    tpu.vector_store %arg11[%c0_72, %c0_73, %c0_74, %c0_75], %390 {strides = array<i32>} : memref<1x16x16x32xf32, #tpu.memory_space<vmem>>, vector<1x16x16x32xf32>,
    return
  }
  func.func @transform_0(%arg0: i32) -> (i32, i32, i32, i32) {
    %c0_i32 = arith.constant 0 : i32
    %c0_i32_0 = arith.constant 0 : i32
    %c0_i32_1 = arith.constant 0 : i32
    %c0_i32_2 = arith.constant 0 : i32
    return %arg0, %c0_i32, %c0_i32_0, %c0_i32_1 : i32, i32, i32, i32
  }
  func.func @transform_1(%arg0: i32) -> (i32, i32) {
    %c0_i32 = arith.constant 0 : i32
    %c0_i32_0 = arith.constant 0 : i32
    %c0_i32_1 = arith.constant 0 : i32
    return %c0_i32, %c0_i32_0 : i32, i32
  }
  func.func @transform_2(%arg0: i32) -> (i32, i32) {
    %c0_i32 = arith.constant 0 : i32
    %c0_i32_0 = arith.constant 0 : i32
    %c0_i32_1 = arith.constant 0 : i32
    return %c0_i32, %c0_i32_0 : i32, i32
  }
  func.func @transform_3(%arg0: i32) -> (i32, i32) {
    %c0_i32 = arith.constant 0 : i32
    %c0_i32_0 = arith.constant 0 : i32
    %c0_i32_1 = arith.constant 0 : i32
    return %c0_i32, %c0_i32_0 : i32, i32
  }
  func.func @transform_4(%arg0: i32) -> (i32, i32) {
    %c0_i32 = arith.constant 0 : i32
    %c0_i32_0 = arith.constant 0 : i32
    %c0_i32_1 = arith.constant 0 : i32
    return %c0_i32, %c0_i32_0 : i32, i32
  }
  func.func @transform_5(%arg0: i32) -> (i32, i32) {
    %c0_i32 = arith.constant 0 : i32
    %c0_i32_0 = arith.constant 0 : i32
    %c0_i32_1 = arith.constant 0 : i32
    return %c0_i32, %c0_i32_0 : i32, i32
  }
  func.func @transform_6(%arg0: i32) -> (i32, i32) {
    %c0_i32 = arith.constant 0 : i32
    %c0_i32_0 = arith.constant 0 : i32
    %c0_i32_1 = arith.constant 0 : i32
    return %c0_i32, %c0_i32_0 : i32, i32
  }
  func.func @transform_7(%arg0: i32) -> (i32, i32) {
    %c0_i32 = arith.constant 0 : i32
    %c0_i32_0 = arith.constant 0 : i32
    %c0_i32_1 = arith.constant 0 : i32
    return %c0_i32, %c0_i32_0 : i32, i32
  }
  func.func @transform_8(%arg0: i32) -> (i32, i32) {
    %c0_i32 = arith.constant 0 : i32
    %c0_i32_0 = arith.constant 0 : i32
    %c0_i32_1 = arith.constant 0 : i32
    return %c0_i32, %c0_i32_0 : i32, i32
  }
  func.func @transform_9(%arg0: i32) -> (i32, i32) {
    %c0_i32 = arith.constant 0 : i32
    %c0_i32_0 = arith.constant 0 : i32
    %c0_i32_1 = arith.constant 0 : i32
    return %c0_i32, %c0_i32_0 : i32, i32
  }
  func.func @transform_10(%arg0: i32) -> (i32, i32, i32, i32) {
    %c0_i32 = arith.constant 0 : i32
    %c0_i32_0 = arith.constant 0 : i32
    %c0_i32_1 = arith.constant 0 : i32
    %c0_i32_2 = arith.constant 0 : i32
    return %arg0, %c0_i32, %c0_i32_0, %c0_i32_1 : i32, i32, i32, i32
  }
}

</mosaic_0001>

<llo_original>
// kernel: tpu_custom_call.1
$region0: #{tpu_custom_call.1}
  #allocation0 [shape = 'u32[]', space=smem, size = 0x4, offset = 0x4, fixed_abs, tag = 'smem constant byte address 0x4 - core index']
  #allocation1 [shape = 'u32[144,128]{1,0:T(1,128)}', space=vmem, size = 0x12000, scoped, tag = 'internal scratch']
  #allocation2 [shape = 'f32[1,22,27,32]{3,2,1,0:T(8,128)}', space=vmem, size = 0x58000, scoped, tag = 'scratch operand']
  %s0 = inlined_call_operand.hbm [shape: f32[2,16,16,32], index: 0, kind: input, shape index: {}]
  %s1 = inlined_call_operand.vmem [shape: f32[49,32], index: 1, kind: input, shape index: {}]
  %s2 = inlined_call_operand.vmem [shape: f32[1,32], index: 2, kind: input, shape index: {}]
  %s3 = inlined_call_operand.vmem [shape: f32[1,32], index: 3, kind: input, shape index: {}]
  %s4 = inlined_call_operand.vmem [shape: f32[1,32], index: 4, kind: input, shape index: {}]
  %s5 = inlined_call_operand.vmem [shape: bf16[32,128], index: 5, kind: input, shape index: {}]
  %s6 = inlined_call_operand.vmem [shape: f32[1,128], index: 6, kind: input, shape index: {}]
  %s7 = inlined_call_operand.vmem [shape: bf16[128,32], index: 7, kind: input, shape index: {}]
  %s8 = inlined_call_operand.vmem [shape: f32[1,32], index: 8, kind: input, shape index: {}]
  %s9 = inlined_call_operand.vmem [shape: f32[1,32], index: 9, kind: input, shape index: {}]
  %s10 = inlined_call_operand.hbm [shape: f32[2,16,16,32], index: 10, kind: output, shape index: {}]
  %s11 = sld [smem:[#allocation0]]
  $region77: #{tpu_custom_call.1} parent=0
    _
  %s13 = ssub.s32 1, %s11
  %s14 = scalar_select 0, %s13, %s11
  $region1: #{tpu_custom_call.1} parent=0
    #allocation3 [shape = 'u8[262144]{0}', space=vmem, size = 0x40000, scoped, tag = 'input window, operand 0']
    #allocation4 [shape = 's32[2]{0}', space=sflag, size = 0x8, scoped, tag = 'scoped memory for tpu_custom_call.1']
    #allocation5 [shape = 's32[2]{0}', space=sflag, size = 0x8, scoped, tag = 'scoped memory for tpu_custom_call.1']
    #allocation6 [shape = 'u8[262144]{0}', space=vmem, size = 0x40000, scoped, tag = 'output window, operand 0']
    %15 = vsyncpa [#allocation4], 0
    %s16 = scalar_lea.sflag [#allocation4], 1
    %17 = vsyncpa %s16, 0
    %18 = vsyncpa [#allocation5], 0
    %s19 = scalar_lea.sflag [#allocation5], 1
    %20 = vsyncpa %s19, 0
    loop: start=0, step=1, limit=4
    $region2: #{tpu_custom_call.1} parent=1 // loop_pre_header
      _
    $region3: #{tpu_custom_call.1} parent=1 // loop_header
      %s22 = sphi 0, %s26
      %p23 = scmp.ge.s32.totalorder %s22, 4
      %s32 = sphi 0, %s34
      %s35 = sphi 0, %s32
      %s36 = sphi 0, %s35
      %s52 = sphi 0, %s36
      %s56 = sphi 0, %s56
      %s58 = sphi 0, %s56
      %s59 = sphi 0, %s58
      %s73 = sphi 0, %s59
      %s77 = sphi 0, %s77
      %s79 = sphi 0, %s77
      %s80 = sphi 0, %s79
      %s94 = sphi 0, %s80
      %s98 = sphi 0, %s98
      %s100 = sphi 0, %s98
      %s101 = sphi 0, %s100
      %s115 = sphi 0, %s101
      %s119 = sphi 0, %s119
      %s121 = sphi 0, %s119
      %s122 = sphi 0, %s121
      %s136 = sphi 0, %s122
      %s140 = sphi 0, %s140
      %s142 = sphi 0, %s140
      %s143 = sphi 0, %s142
      %s157 = sphi 0, %s143
      %s161 = sphi 0, %s161
      %s163 = sphi 0, %s161
      %s164 = sphi 0, %s163
      %s178 = sphi 0, %s164
      %s182 = sphi 0, %s182
      %s184 = sphi 0, %s182
      %s185 = sphi 0, %s184
      %s199 = sphi 0, %s185
      %s203 = sphi 0, %s203
      %s205 = sphi 0, %s203
      %s206 = sphi 0, %s205
      %s220 = sphi 0, %s206
      %s224 = sphi 0, %s224
      %s226 = sphi 0, %s224
      %s227 = sphi 0, %s226
      %s241 = sphi 0, %s227
      %s247 = sphi 0, %s249
      %s250 = sphi 0, %s247
      %s251 = sphi 0, %s250
      %s267 = sphi 0, %s251
    $region4: #{tpu_custom_call.1} parent=1 // loop_header_branch
      %25 = sbr.rel (%p23) target = $region8
    $region5: #{tpu_custom_call.1} parent=1 // loop_body
      %s27 = ssub.s32 %s22, 1
      %s28 = ssub.s32 %s22, 2
      %s29 = sadd.s32 %s22, 1
      %s30 = ssub.s32 %s22, %s29
      %p31 = scmp.eq.s32.totalorder %s30, 0
      %s33 = sadd.s32 %s32, 1
      %s34 = scalar_select %p31, %s32, %s33
      %p37 = pneg %p31
      %p38 = scmp.eq.s32.totalorder %s22, 1
      %p39 = por %p37, %p38
      %p40 = scmp.ne.s32.totalorder %s32, %s35
      %p41 = scmp.eq.s32.totalorder %s22, 0
      %p42 = por %p40, %p41
      %p43 = scmp.ne.s32.totalorder %s32, %s35
      %p44 = scmp.eq.s32.totalorder %s27, 1
      %p45 = por %p43, %p44
      %p46 = scmp.ne.s32.totalorder %s35, %s36
      %p47 = scmp.eq.s32.totalorder %s27, 0
      %p48 = por %p46, %p47
      %p49 = scmp.ne.s32.totalorder %s35, %s36
      %p50 = scmp.eq.s32.totalorder %s28, 1
      %p51 = por %p49, %p50
      %p53 = scmp.ne.s32.totalorder %s36, %s52
      %p54 = scmp.eq.s32.totalorder %s28, 0
      %p55 = por %p53, %p54
      %s57 = sadd.s32 %s56, 1
      %p60 = scmp.eq.s32.totalorder %s22, 1
      %p61 = scmp.ne.s32.totalorder %s56, %s58
      %p62 = scmp.eq.s32.totalorder %s22, 0
      %p63 = por %p61, %p62
      %p64 = scmp.ne.s32.totalorder %s56, %s58
      %p65 = scmp.eq.s32.totalorder %s27, 1
      %p66 = por %p64, %p65
      %p67 = scmp.ne.s32.totalorder %s58, %s59
      %p68 = scmp.eq.s32.totalorder %s27, 0
      %p69 = por %p67, %p68
      %p70 = scmp.ne.s32.totalorder %s58, %s59
      %p71 = scmp.eq.s32.totalorder %s28, 1
      %p72 = por %p70, %p71
      %p74 = scmp.ne.s32.totalorder %s59, %s73
      %p75 = scmp.eq.s32.totalorder %s28, 0
      %p76 = por %p74, %p75
      %s78 = sadd.s32 %s77, 1
      %p81 = scmp.eq.s32.totalorder %s22, 1
      %p82 = scmp.ne.s32.totalorder %s77, %s79
      %p83 = scmp.eq.s32.totalorder %s22, 0
      %p84 = por %p82, %p83
      %p85 = scmp.ne.s32.totalorder %s77, %s79
      %p86 = scmp.eq.s32.totalorder %s27, 1
      %p87 = por %p85, %p86
      %p88 = scmp.ne.s32.totalorder %s79, %s80
      %p89 = scmp.eq.s32.totalorder %s27, 0
      %p90 = por %p88, %p89
      %p91 = scmp.ne.s32.totalorder %s79, %s80
      %p92 = scmp.eq.s32.totalorder %s28, 1
      %p93 = por %p91, %p92
      %p95 = scmp.ne.s32.totalorder %s80, %s94
      %p96 = scmp.eq.s32.totalorder %s28, 0
      %p97 = por %p95, %p96
      %s99 = sadd.s32 %s98, 1
      %p102 = scmp.eq.s32.totalorder %s22, 1
      %p103 = scmp.ne.s32.totalorder %s98, %s100
      %p104 = scmp.eq.s32.totalorder %s22, 0
      %p105 = por %p103, %p104
      %p106 = scmp.ne.s32.totalorder %s98, %s100
      %p107 = scmp.eq.s32.totalorder %s27, 1
      %p108 = por %p106, %p107
      %p109 = scmp.ne.s32.totalorder %s100, %s101
      %p110 = scmp.eq.s32.totalorder %s27, 0
      %p111 = por %p109, %p110
      %p112 = scmp.ne.s32.totalorder %s100, %s101
      %p113 = scmp.eq.s32.totalorder %s28, 1
      %p114 = por %p112, %p113
      %p116 = scmp.ne.s32.totalorder %s101, %s115
      %p117 = scmp.eq.s32.totalorder %s28, 0
      %p118 = por %p116, %p117
      %s120 = sadd.s32 %s119, 1
      %p123 = scmp.eq.s32.totalorder %s22, 1
      %p124 = scmp.ne.s32.totalorder %s119, %s121
      %p125 = scmp.eq.s32.totalorder %s22, 0
      %p126 = por %p124, %p125
      %p127 = scmp.ne.s32.totalorder %s119, %s121
      %p128 = scmp.eq.s32.totalorder %s27, 1
      %p129 = por %p127, %p128
      %p130 = scmp.ne.s32.totalorder %s121, %s122
      %p131 = scmp.eq.s32.totalorder %s27, 0
      %p132 = por %p130, %p131
      %p133 = scmp.ne.s32.totalorder %s121, %s122
      %p134 = scmp.eq.s32.totalorder %s28, 1
      %p135 = por %p133, %p134
      %p137 = scmp.ne.s32.totalorder %s122, %s136
      %p138 = scmp.eq.s32.totalorder %s28, 0
      %p139 = por %p137, %p138
      %s141 = sadd.s32 %s140, 1
      %p144 = scmp.eq.s32.totalorder %s22, 1
      %p145 = scmp.ne.s32.totalorder %s140, %s142
      %p146 = scmp.eq.s32.totalorder %s22, 0
      %p147 = por %p145, %p146
      %p148 = scmp.ne.s32.totalorder %s140, %s142
      %p149 = scmp.eq.s32.totalorder %s27, 1
      %p150 = por %p148, %p149
      %p151 = scmp.ne.s32.totalorder %s142, %s143
      %p152 = scmp.eq.s32.totalorder %s27, 0
      %p153 = por %p151, %p152
      %p154 = scmp.ne.s32.totalorder %s142, %s143
      %p155 = scmp.eq.s32.totalorder %s28, 1
      %p156 = por %p154, %p155
      %p158 = scmp.ne.s32.totalorder %s143, %s157
      %p159 = scmp.eq.s32.totalorder %s28, 0
      %p160 = por %p158, %p159
      %s162 = sadd.s32 %s161, 1
      %p165 = scmp.eq.s32.totalorder %s22, 1
      %p166 = scmp.ne.s32.totalorder %s161, %s163
      %p167 = scmp.eq.s32.totalorder %s22, 0
      %p168 = por %p166, %p167
      %p169 = scmp.ne.s32.totalorder %s161, %s163
      %p170 = scmp.eq.s32.totalorder %s27, 1
      %p171 = por %p169, %p170
      %p172 = scmp.ne.s32.totalorder %s163, %s164
      %p173 = scmp.eq.s32.totalorder %s27, 0
      %p174 = por %p172, %p173
      %p175 = scmp.ne.s32.totalorder %s163, %s164
      %p176 = scmp.eq.s32.totalorder %s28, 1
      %p177 = por %p175, %p176
      %p179 = scmp.ne.s32.totalorder %s164, %s178
      %p180 = scmp.eq.s32.totalorder %s28, 0
      %p181 = por %p179, %p180
      %s183 = sadd.s32 %s182, 1
      %p186 = scmp.eq.s32.totalorder %s22, 1
      %p187 = scmp.ne.s32.totalorder %s182, %s184
      %p188 = scmp.eq.s32.totalorder %s22, 0
      %p189 = por %p187, %p188
      %p190 = scmp.ne.s32.totalorder %s182, %s184
      %p191 = scmp.eq.s32.totalorder %s27, 1
      %p192 = por %p190, %p191
      %p193 = scmp.ne.s32.totalorder %s184, %s185
      %p194 = scmp.eq.s32.totalorder %s27, 0
      %p195 = por %p193, %p194
      %p196 = scmp.ne.s32.totalorder %s184, %s185
      %p197 = scmp.eq.s32.totalorder %s28, 1
      %p198 = por %p196, %p197
      %p200 = scmp.ne.s32.totalorder %s185, %s199
      %p201 = scmp.eq.s32.totalorder %s28, 0
      %p202 = por %p200, %p201
      %s204 = sadd.s32 %s203, 1
      %p207 = scmp.eq.s32.totalorder %s22, 1
      %p208 = scmp.ne.s32.totalorder %s203, %s205
      %p209 = scmp.eq.s32.totalorder %s22, 0
      %p210 = por %p208, %p209
      %p211 = scmp.ne.s32.totalorder %s203, %s205
      %p212 = scmp.eq.s32.totalorder %s27, 1
      %p213 = por %p211, %p212
      %p214 = scmp.ne.s32.totalorder %s205, %s206
      %p215 = scmp.eq.s32.totalorder %s27, 0
      %p216 = por %p214, %p215
      %p217 = scmp.ne.s32.totalorder %s205, %s206
      %p218 = scmp.eq.s32.totalorder %s28, 1
      %p219 = por %p217, %p218
      %p221 = scmp.ne.s32.totalorder %s206, %s220
      %p222 = scmp.eq.s32.totalorder %s28, 0
      %p223 = por %p221, %p222
      %s225 = sadd.s32 %s224, 1
      %p228 = scmp.eq.s32.totalorder %s22, 1
      %p229 = scmp.ne.s32.totalorder %s224, %s226
      %p230 = scmp.eq.s32.totalorder %s22, 0
      %p231 = por %p229, %p230
      %p232 = scmp.ne.s32.totalorder %s224, %s226
      %p233 = scmp.eq.s32.totalorder %s27, 1
      %p234 = por %p232, %p233
      %p235 = scmp.ne.s32.totalorder %s226, %s227
      %p236 = scmp.eq.s32.totalorder %s27, 0
      %p237 = por %p235, %p236
      %p238 = scmp.ne.s32.totalorder %s226, %s227
      %p239 = scmp.eq.s32.totalorder %s28, 1
      %p240 = por %p238, %p239
      %p242 = scmp.ne.s32.totalorder %s227, %s241
      %p243 = scmp.eq.s32.totalorder %s28, 0
      %p244 = por %p242, %p243
      %s245 = ssub.s32 %s22, %s29
      %p246 = scmp.eq.s32.totalorder %s245, 0
      %s248 = sadd.s32 %s247, 1
      %s249 = scalar_select %p246, %s247, %s248
      %p252 = pneg %p246
      %p253 = scmp.eq.s32.totalorder %s22, 1
      %p254 = por %p252, %p253
      %p255 = scmp.ne.s32.totalorder %s247, %s250
      %p256 = scmp.eq.s32.totalorder %s22, 0
      %p257 = por %p255, %p256
      %p258 = scmp.ne.s32.totalorder %s247, %s250
      %p259 = scmp.eq.s32.totalorder %s27, 1
      %p260 = por %p258, %p259
      %p261 = scmp.ne.s32.totalorder %s250, %s251
      %p262 = scmp.eq.s32.totalorder %s27, 0
      %p263 = por %p261, %p262
      %p264 = scmp.ne.s32.totalorder %s250, %s251
      %p265 = scmp.eq.s32.totalorder %s28, 1
      %p266 = por %p264, %p265
      %p268 = scmp.ne.s32.totalorder %s251, %s267
      %p269 = scmp.eq.s32.totalorder %s28, 0
      %p270 = por %p268, %p269
      %p271 = scmp.le.s32.totalorder 1, %s22
      %p272 = scmp.lt.s32.totalorder %s22, 3
      %p273 = pnand %p271, %p272
      %p274 = pneg %p273
      // Predicated region
      $region9: #{tpu_custom_call.1} parent=5 // pred_check
        _
      $region10: #{tpu_custom_call.1} parent=5 // pred_check_branch
        %276 = sbr.rel (%p273) target = $region12
      $region11: #{tpu_custom_call.1} parent=5 // pred_region
        %s277 = ssub.s32 %s22, 1
        // Predicated region
        $region13: #{tpu_custom_call.1} parent=11 // pred_check
          %p278 = pneg %p69
        $region14: #{tpu_custom_call.1} parent=11 // pred_check_branch
          %280 = sbr.rel (%p278) target = $region16
        $region15: #{tpu_custom_call.1} parent=11 // pred_region
          _
        $region16: #{tpu_custom_call.1} parent=11 // pred_fallthru
          _
        // Predicated region
        $region17: #{tpu_custom_call.1} parent=11 // pred_check
          %p281 = pneg %p90
        $region18: #{tpu_custom_call.1} parent=11 // pred_check_branch
          %283 = sbr.rel (%p281) target = $region20
        $region19: #{tpu_custom_call.1} parent=11 // pred_region
          _
        $region20: #{tpu_custom_call.1} parent=11 // pred_fallthru
          _
        // Predicated region
        $region21: #{tpu_custom_call.1} parent=11 // pred_check
          %p284 = pneg %p111
        $region22: #{tpu_custom_call.1} parent=11 // pred_check_branch
          %286 = sbr.rel (%p284) target = $region24
        $region23: #{tpu_custom_call.1} parent=11 // pred_region
          _
        $region24: #{tpu_custom_call.1} parent=11 // pred_fallthru
          _
        // Predicated region
        $region25: #{tpu_custom_call.1} parent=11 // pred_check
          %p287 = pneg %p132
        $region26: #{tpu_custom_call.1} parent=11 // pred_check_branch
          %289 = sbr.rel (%p287) target = $region28
        $region27: #{tpu_custom_call.1} parent=11 // pred_region
          _
        $region28: #{tpu_custom_call.1} parent=11 // pred_fallthru
          _
        // Predicated region
        $region29: #{tpu_custom_call.1} parent=11 // pred_check
          %p290 = pneg %p153
        $region30: #{tpu_custom_call.1} parent=11 // pred_check_branch
          %292 = sbr.rel (%p290) target = $region32
        $region31: #{tpu_custom_call.1} parent=11 // pred_region
          _
        $region32: #{tpu_custom_call.1} parent=11 // pred_fallthru
          _
        // Predicated region
        $region33: #{tpu_custom_call.1} parent=11 // pred_check
          %p293 = pneg %p174
        $region34: #{tpu_custom_call.1} parent=11 // pred_check_branch
          %295 = sbr.rel (%p293) target = $region36
        $region35: #{tpu_custom_call.1} parent=11 // pred_region
          _
        $region36: #{tpu_custom_call.1} parent=11 // pred_fallthru
          _
        // Predicated region
        $region37: #{tpu_custom_call.1} parent=11 // pred_check
          %p296 = pneg %p195
        $region38: #{tpu_custom_call.1} parent=11 // pred_check_branch
          %298 = sbr.rel (%p296) target = $region40
        $region39: #{tpu_custom_call.1} parent=11 // pred_region
          _
        $region40: #{tpu_custom_call.1} parent=11 // pred_fallthru
          _
        // Predicated region
        $region41: #{tpu_custom_call.1} parent=11 // pred_check
          %p299 = pneg %p216
        $region42: #{tpu_custom_call.1} parent=11 // pred_check_branch
          %301 = sbr.rel (%p299) target = $region44
        $region43: #{tpu_custom_call.1} parent=11 // pred_region
          _
        $region44: #{tpu_custom_call.1} parent=11 // pred_fallthru
          _
        // Predicated region
        $region45: #{tpu_custom_call.1} parent=11 // pred_check
          %p302 = pneg %p237
        $region46: #{tpu_custom_call.1} parent=11 // pred_check_branch
          %304 = sbr.rel (%p302) target = $region48
        $region47: #{tpu_custom_call.1} parent=11 // pred_region
          _
        $region48: #{tpu_custom_call.1} parent=11 // pred_fallthru
          _
      $region12: #{tpu_custom_call.1} parent=5 // pred_fallthru
        _
      %p305 = scmp.lt.s32.totalorder %s22, 2
      // Predicated region
      $region49: #{tpu_custom_call.1} parent=5 // pred_check
        %p306 = pneg %p305
      $region50: #{tpu_custom_call.1} parent=5 // pred_check_branch
        %308 = sbr.rel (%p306) target = $region52
      $region51: #{tpu_custom_call.1} parent=5 // pred_region
        // Predicated region
        $region53: #{tpu_custom_call.1} parent=51 // pred_check
          %p309 = pneg %p42
        $region54: #{tpu_custom_call.1} parent=51 // pred_check_branch
          %311 = sbr.rel (%p309) target = $region56
        $region55: #{tpu_custom_call.1} parent=51 // pred_region
          %s312 = sand.u32 %s32, 1
          %s313 = scalar_lea.sflag [#allocation4], %s312
          %s314 = sand.u32 %s32, 1
          %s315 = smul.addr %s314, 256
          %s316 = scalar_lea.vmem [#allocation3], %s315
          %s318 = ssub.s32 4096, 4096
          %319 = vsyncadd %s313, %s318
          %s320 = smul.addr %s22, 32
          %s321 = smul.addr %s320, 128
          %s322 = scalar_lea.hbm %s0, %s321
          %s323 = sshll.u32 %s316, 4
          %s324 = int_to_ptr.vmem [resolvable:$true] %s323
          %329 = dma.hbm_to_vmem [thread:$0]  %s322, 4096, %s324, %s313, 128, 128, 8
        $region56: #{tpu_custom_call.1} parent=51 // pred_fallthru
          _
      $region52: #{tpu_custom_call.1} parent=5 // pred_fallthru
        _
      %p330 = scmp.le.s32.totalorder 1, %s22
      %p331 = scmp.lt.s32.totalorder %s22, 3
      %p332 = pnand %p330, %p331
      %p333 = pneg %p332
      // Predicated region
      $region57: #{tpu_custom_call.1} parent=5 // pred_check
        _
      $region58: #{tpu_custom_call.1} parent=5 // pred_check_branch
        %335 = sbr.rel (%p332) target = $region60
      $region59: #{tpu_custom_call.1} parent=5 // pred_region
        %s336 = ssub.s32 %s22, 1
        %s337 = sand.u32 %s35, 1
        %s338 = scalar_lea.sflag [#allocation4], %s337
        %s339 = sand.u32 %s35, 1
        %s340 = smul.addr %s339, 256
        %s341 = scalar_lea.vmem [#allocation3], %s340
        // Predicated region
        $region61: #{tpu_custom_call.1} parent=59 // pred_check
          %p342 = pneg %p48
        $region62: #{tpu_custom_call.1} parent=59 // pred_check_branch
          %344 = sbr.rel (%p342) target = $region64
        $region63: #{tpu_custom_call.1} parent=59 // pred_region
          %345 = dma.done %s338, 4096
        $region64: #{tpu_custom_call.1} parent=59 // pred_fallthru
          _
        %s346 = sand.u32 %s35, 1
        %s347 = scalar_lea.sflag [#allocation4], %s346
        %s348 = sand.u32 %s35, 1
        %s349 = smul.addr %s348, 256
        %s350 = scalar_lea.vmem [#allocation3], %s349
        %p351 = pneg %p48
        %p352 = pneg %p45
        %p353 = pneg %p69
        %p354 = pneg %p66
        %p355 = pneg %p90
        %p356 = pneg %p87
        %p357 = pneg %p111
        %p358 = pneg %p108
        %p359 = pneg %p132
        %p360 = pneg %p129
        %p361 = pneg %p153
        %p362 = pneg %p150
        %p363 = pneg %p174
        %p364 = pneg %p171
        %p365 = pneg %p195
        %p366 = pneg %p192
        %p367 = pneg %p216
        %p368 = pneg %p213
        %p369 = pneg %p237
        %p370 = pneg %p234
        %p371 = pneg %p263
        %p372 = pneg %p260
        %s373 = sand.u32 %s250, 1
        %s374 = scalar_lea.sflag [#allocation5], %s373
        %s375 = sand.u32 %s250, 1
        %s376 = smul.addr %s375, 256
        %s377 = scalar_lea.vmem [#allocation6], %s376
        %v379 = vld [vmem:[%s341] sm:$0xff]
        %v380 = vld [vmem:[%s341 + $0x8] sm:$0xff]
        %v381 = vld [vmem:[%s341 + $0x10] sm:$0xff]
        %v382 = vld [vmem:[%s341 + $0x18] sm:$0xff]
        %v383 = vld [vmem:[%s341 + $0x20] sm:$0xff]
        %v384 = vld [vmem:[%s341 + $0x28] sm:$0xff]
        %v385 = vld [vmem:[%s341 + $0x30] sm:$0xff]
        %v386 = vld [vmem:[%s341 + $0x38] sm:$0xff]
        %v387 = vld [vmem:[%s341 + $0x40] sm:$0xff]
        %v388 = vld [vmem:[%s341 + $0x48] sm:$0xff]
        %v389 = vld [vmem:[%s341 + $0x50] sm:$0xff]
        %v390 = vld [vmem:[%s341 + $0x58] sm:$0xff]
        %v391 = vld [vmem:[%s341 + $0x60] sm:$0xff]
        %v392 = vld [vmem:[%s341 + $0x68] sm:$0xff]
        %v393 = vld [vmem:[%s341 + $0x70] sm:$0xff]
        %v394 = vld [vmem:[%s341 + $0x78] sm:$0xff]
        %v395 = vld [vmem:[%s341 + $0x80] sm:$0xff]
        %v396 = vld [vmem:[%s341 + $0x88] sm:$0xff]
        %v397 = vld [vmem:[%s341 + $0x90] sm:$0xff]
        %v398 = vld [vmem:[%s341 + $0x98] sm:$0xff]
        %v399 = vld [vmem:[%s341 + $0xa0] sm:$0xff]
        %v400 = vld [vmem:[%s341 + $0xa8] sm:$0xff]
        %v401 = vld [vmem:[%s341 + $0xb0] sm:$0xff]
        %v402 = vld [vmem:[%s341 + $0xb8] sm:$0xff]
        %v403 = vld [vmem:[%s341 + $0xc0] sm:$0xff]
        %v404 = vld [vmem:[%s341 + $0xc8] sm:$0xff]
        %v405 = vld [vmem:[%s341 + $0xd0] sm:$0xff]
        %v406 = vld [vmem:[%s341 + $0xd8] sm:$0xff]
        %v407 = vld [vmem:[%s341 + $0xe0] sm:$0xff]
        %v408 = vld [vmem:[%s341 + $0xe8] sm:$0xff]
        %v409 = vld [vmem:[%s341 + $0xf0] sm:$0xff]
        %v410 = vld [vmem:[%s341 + $0xf8] sm:$0xff]
        %vm411 = vcmask 261120
        %412 = vst.msk [vmem:[#allocation2] sm:$0xff] %vm411, 0.0
        %413 = vst.msk [vmem:[#allocation2 + $0x8] sm:$0xff] %vm411, 0.0
        %414 = vst.msk [vmem:[#allocation2 + $0x10] sm:$0xff] %vm411, 0.0
        %vm415 = vcmask 256000
        %416 = vst.msk [vmem:[#allocation2 + $0x18] sm:$0x7] %vm415, 0.0
        %417 = vst.msk [vmem:[#allocation2 + $0x20] sm:$0xff] %vm411, 0.0
        %418 = vst.msk [vmem:[#allocation2 + $0x28] sm:$0xff] %vm411, 0.0
        %419 = vst.msk [vmem:[#allocation2 + $0x30] sm:$0xff] %vm411, 0.0
        %420 = vst.msk [vmem:[#allocation2 + $0x38] sm:$0x7] %vm415, 0.0
        %421 = vst.msk [vmem:[#allocation2 + $0x40] sm:$0xff] %vm411, 0.0
        %422 = vst.msk [vmem:[#allocation2 + $0x48] sm:$0xff] %vm411, 0.0
        %423 = vst.msk [vmem:[#allocation2 + $0x50] sm:$0xff] %vm411, 0.0
        %424 = vst.msk [vmem:[#allocation2 + $0x58] sm:$0x7] %vm415, 0.0
        %425 = vst.msk [vmem:[#allocation2 + $0x60] sm:$0xff] %vm411, 0.0
        %426 = vst.msk [vmem:[#allocation2 + $0x68] sm:$0xff] %vm411, 0.0
        %427 = vst.msk [vmem:[#allocation2 + $0x70] sm:$0xff] %vm411, 0.0
        %428 = vst.msk [vmem:[#allocation2 + $0x78] sm:$0x7] %vm415, 0.0
        %429 = vst.msk [vmem:[#allocation2 + $0x80] sm:$0xff] %vm411, 0.0
        %430 = vst.msk [vmem:[#allocation2 + $0x88] sm:$0xff] %vm411, 0.0
        %431 = vst.msk [vmem:[#allocation2 + $0x90] sm:$0xff] %vm411, 0.0
        %432 = vst.msk [vmem:[#allocation2 + $0x98] sm:$0x7] %vm415, 0.0
        %433 = vst.msk [vmem:[#allocation2 + $0xa0] sm:$0xff] %vm411, 0.0
        %434 = vst.msk [vmem:[#allocation2 + $0xa8] sm:$0xff] %vm411, 0.0
        %435 = vst.msk [vmem:[#allocation2 + $0xb0] sm:$0xff] %vm411, 0.0
        %436 = vst.msk [vmem:[#allocation2 + $0xb8] sm:$0x7] %vm415, 0.0
        %437 = vst.msk [vmem:[#allocation2 + $0xc0] sm:$0xff] %vm411, 0.0
        %438 = vst.msk [vmem:[#allocation2 + $0xc8] sm:$0xff] %vm411, 0.0
        %439 = vst.msk [vmem:[#allocation2 + $0xd0] sm:$0xff] %vm411, 0.0
        %440 = vst.msk [vmem:[#allocation2 + $0xd8] sm:$0x7] %vm415, 0.0
        %441 = vst.msk [vmem:[#allocation2 + $0xe0] sm:$0xff] %vm411, 0.0
        %442 = vst.msk [vmem:[#allocation2 + $0xe8] sm:$0xff] %vm411, 0.0
        %443 = vst.msk [vmem:[#allocation2 + $0xf0] sm:$0xff] %vm411, 0.0
        %444 = vst.msk [vmem:[#allocation2 + $0xf8] sm:$0x7] %vm415, 0.0
        %445 = vst.msk [vmem:[#allocation2 + $0x100] sm:$0xff] %vm411, 0.0
        %446 = vst.msk [vmem:[#allocation2 + $0x108] sm:$0xff] %vm411, 0.0
        %447 = vst.msk [vmem:[#allocation2 + $0x110] sm:$0xff] %vm411, 0.0
        %448 = vst.msk [vmem:[#allocation2 + $0x118] sm:$0x7] %vm415, 0.0
        %449 = vst.msk [vmem:[#allocation2 + $0x120] sm:$0xff] %vm411, 0.0
        %450 = vst.msk [vmem:[#allocation2 + $0x128] sm:$0xff] %vm411, 0.0
        %451 = vst.msk [vmem:[#allocation2 + $0x130] sm:$0xff] %vm411, 0.0
        %452 = vst.msk [vmem:[#allocation2 + $0x138] sm:$0x7] %vm415, 0.0
        %453 = vst.msk [vmem:[#allocation2 + $0x140] sm:$0xff] %vm411, 0.0
        %454 = vst.msk [vmem:[#allocation2 + $0x148] sm:$0xff] %vm411, 0.0
        %455 = vst.msk [vmem:[#allocation2 + $0x150] sm:$0xff] %vm411, 0.0
        %456 = vst.msk [vmem:[#allocation2 + $0x158] sm:$0x7] %vm415, 0.0
        %457 = vst.msk [vmem:[#allocation2 + $0x160] sm:$0xff] %vm411, 0.0
        %458 = vst.msk [vmem:[#allocation2 + $0x168] sm:$0xff] %vm411, 0.0
        %459 = vst.msk [vmem:[#allocation2 + $0x170] sm:$0xff] %vm411, 0.0
        %460 = vst.msk [vmem:[#allocation2 + $0x178] sm:$0x7] %vm415, 0.0
        %461 = vst.msk [vmem:[#allocation2 + $0x180] sm:$0xff] %vm411, 0.0
        %462 = vst.msk [vmem:[#allocation2 + $0x188] sm:$0xff] %vm411, 0.0
        %463 = vst.msk [vmem:[#allocation2 + $0x190] sm:$0xff] %vm411, 0.0
        %464 = vst.msk [vmem:[#allocation2 + $0x198] sm:$0x7] %vm415, 0.0
        %465 = vst.msk [vmem:[#allocation2 + $0x1a0] sm:$0xff] %vm411, 0.0
        %466 = vst.msk [vmem:[#allocation2 + $0x1a8] sm:$0xff] %vm411, 0.0
        %467 = vst.msk [vmem:[#allocation2 + $0x1b0] sm:$0xff] %vm411, 0.0
        %468 = vst.msk [vmem:[#allocation2 + $0x1b8] sm:$0x7] %vm415, 0.0
        %469 = vst.msk [vmem:[#allocation2 + $0x1c0] sm:$0xff] %vm411, 0.0
        %470 = vst.msk [vmem:[#allocation2 + $0x1c8] sm:$0xff] %vm411, 0.0
        %471 = vst.msk [vmem:[#allocation2 + $0x1d0] sm:$0xff] %vm411, 0.0
        %472 = vst.msk [vmem:[#allocation2 + $0x1d8] sm:$0x7] %vm415, 0.0
        %473 = vst.msk [vmem:[#allocation2 + $0x1e0] sm:$0xff] %vm411, 0.0
        %474 = vst.msk [vmem:[#allocation2 + $0x1e8] sm:$0xff] %vm411, 0.0
        %475 = vst.msk [vmem:[#allocation2 + $0x1f0] sm:$0xff] %vm411, 0.0
        %476 = vst.msk [vmem:[#allocation2 + $0x1f8] sm:$0x7] %vm415, 0.0
        %477 = vst.msk [vmem:[#allocation2 + $0x200] sm:$0xff] %vm411, 0.0
        %478 = vst.msk [vmem:[#allocation2 + $0x208] sm:$0xff] %vm411, 0.0
        %479 = vst.msk [vmem:[#allocation2 + $0x210] sm:$0xff] %vm411, 0.0
        %480 = vst.msk [vmem:[#allocation2 + $0x218] sm:$0x7] %vm415, 0.0
        %481 = vst.msk [vmem:[#allocation2 + $0x220] sm:$0xff] %vm411, 0.0
        %482 = vst.msk [vmem:[#allocation2 + $0x228] sm:$0xff] %vm411, 0.0
        %483 = vst.msk [vmem:[#allocation2 + $0x230] sm:$0xff] %vm411, 0.0
        %484 = vst.msk [vmem:[#allocation2 + $0x238] sm:$0x7] %vm415, 0.0
        %485 = vst.msk [vmem:[#allocation2 + $0x240] sm:$0xff] %vm411, 0.0
        %486 = vst.msk [vmem:[#allocation2 + $0x248] sm:$0xff] %vm411, 0.0
        %487 = vst.msk [vmem:[#allocation2 + $0x250] sm:$0xff] %vm411, 0.0
        %488 = vst.msk [vmem:[#allocation2 + $0x258] sm:$0x7] %vm415, 0.0
        %489 = vst.msk [vmem:[#allocation2 + $0x260] sm:$0xff] %vm411, 0.0
        %490 = vst.msk [vmem:[#allocation2 + $0x268] sm:$0xff] %vm411, 0.0
        %491 = vst.msk [vmem:[#allocation2 + $0x270] sm:$0xff] %vm411, 0.0
        %492 = vst.msk [vmem:[#allocation2 + $0x278] sm:$0x7] %vm415, 0.0
        %493 = vst.msk [vmem:[#allocation2 + $0x280] sm:$0xff] %vm411, 0.0
        %494 = vst.msk [vmem:[#allocation2 + $0x288] sm:$0xff] %vm411, 0.0
        %495 = vst.msk [vmem:[#allocation2 + $0x290] sm:$0xff] %vm411, 0.0
        %496 = vst.msk [vmem:[#allocation2 + $0x298] sm:$0x7] %vm415, 0.0
        %497 = vst.msk [vmem:[#allocation2 + $0x2a0] sm:$0xff] %vm411, 0.0
        %498 = vst.msk [vmem:[#allocation2 + $0x2a8] sm:$0xff] %vm411, 0.0
        %499 = vst.msk [vmem:[#allocation2 + $0x2b0] sm:$0xff] %vm411, 0.0
        %500 = vst.msk [vmem:[#allocation2 + $0x2b8] sm:$0x7] %vm415, 0.0
        %s501 = scalar_lea.vmem [#allocation2], 96
        %502 = vst.msk [vmem:[%s501 + $0x8] sm:$0xff] %vm411, %v379
        %503 = vst.msk [vmem:[%s501 + $0x10] sm:$0xff] %vm411, %v380
        %504 = vst.msk [vmem:[%s501 + $0x28] sm:$0xff] %vm411, %v381
        %505 = vst.msk [vmem:[%s501 + $0x30] sm:$0xff] %vm411, %v382
        %506 = vst.msk [vmem:[%s501 + $0x48] sm:$0xff] %vm411, %v383
        %507 = vst.msk [vmem:[%s501 + $0x50] sm:$0xff] %vm411, %v384
        %508 = vst.msk [vmem:[%s501 + $0x68] sm:$0xff] %vm411, %v385
        %509 = vst.msk [vmem:[%s501 + $0x70] sm:$0xff] %vm411, %v386
        %510 = vst.msk [vmem:[%s501 + $0x88] sm:$0xff] %vm411, %v387
        %511 = vst.msk [vmem:[%s501 + $0x90] sm:$0xff] %vm411, %v388
        %512 = vst.msk [vmem:[%s501 + $0xa8] sm:$0xff] %vm411, %v389
        %513 = vst.msk [vmem:[%s501 + $0xb0] sm:$0xff] %vm411, %v390
        %514 = vst.msk [vmem:[%s501 + $0xc8] sm:$0xff] %vm411, %v391
        %515 = vst.msk [vmem:[%s501 + $0xd0] sm:$0xff] %vm411, %v392
        %516 = vst.msk [vmem:[%s501 + $0xe8] sm:$0xff] %vm411, %v393
        %517 = vst.msk [vmem:[%s501 + $0xf0] sm:$0xff] %vm411, %v394
        %518 = vst.msk [vmem:[%s501 + $0x108] sm:$0xff] %vm411, %v395
        %519 = vst.msk [vmem:[%s501 + $0x110] sm:$0xff] %vm411, %v396
        %520 = vst.msk [vmem:[%s501 + $0x128] sm:$0xff] %vm411, %v397
        %521 = vst.msk [vmem:[%s501 + $0x130] sm:$0xff] %vm411, %v398
        %522 = vst.msk [vmem:[%s501 + $0x148] sm:$0xff] %vm411, %v399
        %523 = vst.msk [vmem:[%s501 + $0x150] sm:$0xff] %vm411, %v400
        %524 = vst.msk [vmem:[%s501 + $0x168] sm:$0xff] %vm411, %v401
        %525 = vst.msk [vmem:[%s501 + $0x170] sm:$0xff] %vm411, %v402
        %526 = vst.msk [vmem:[%s501 + $0x188] sm:$0xff] %vm411, %v403
        %527 = vst.msk [vmem:[%s501 + $0x190] sm:$0xff] %vm411, %v404
        %528 = vst.msk [vmem:[%s501 + $0x1a8] sm:$0xff] %vm411, %v405
        %529 = vst.msk [vmem:[%s501 + $0x1b0] sm:$0xff] %vm411, %v406
        %530 = vst.msk [vmem:[%s501 + $0x1c8] sm:$0xff] %vm411, %v407
        %531 = vst.msk [vmem:[%s501 + $0x1d0] sm:$0xff] %vm411, %v408
        %532 = vst.msk [vmem:[%s501 + $0x1e8] sm:$0xff] %vm411, %v409
        %533 = vst.msk [vmem:[%s501 + $0x1f0] sm:$0xff] %vm411, %v410
        %v534 = vld [vmem:[%s1] sm:$0xff]
        %v535 = vld [vmem:[%s1 + $0x8] sm:$0xff]
        %v536 = vld [vmem:[%s1 + $0x10] sm:$0xff]
        %v537 = vld [vmem:[%s1 + $0x18] sm:$0xff]
        %v538 = vld [vmem:[%s1 + $0x20] sm:$0xff]
        %v539 = vld [vmem:[%s1 + $0x28] sm:$0xff]
        %v540 = vld [vmem:[%s1 + $0x30] sm:$0x1]
        %v541 = vld [vmem:[#allocation2 + $0x5] sm:$0xff]
        %v542 = vld [vmem:[#allocation2 + $0xd] sm:$0xff]
        %v543 = vld [vmem:[#allocation2 + $0x25] sm:$0xff]
        %v544 = vld [vmem:[#allocation2 + $0x2d] sm:$0xff]
        %v545 = vld [vmem:[#allocation2 + $0x45] sm:$0xff]
        %v546 = vld [vmem:[#allocation2 + $0x4d] sm:$0xff]
        %v547 = vld [vmem:[#allocation2 + $0x65] sm:$0xff]
        %v548 = vld [vmem:[#allocation2 + $0x6d] sm:$0xff]
        %v549 = vld [vmem:[#allocation2 + $0x85] sm:$0xff]
        %v550 = vld [vmem:[#allocation2 + $0x8d] sm:$0xff]
        %v551 = vld [vmem:[#allocation2 + $0xa5] sm:$0xff]
        %v552 = vld [vmem:[#allocation2 + $0xad] sm:$0xff]
        %v553 = vld [vmem:[#allocation2 + $0xc5] sm:$0xff]
        %v554 = vld [vmem:[#allocation2 + $0xcd] sm:$0xff]
        %v555 = vld [vmem:[#allocation2 + $0xe5] sm:$0xff]
        %v556 = vld [vmem:[#allocation2 + $0xed] sm:$0xff]
        %v557 = vld [vmem:[#allocation2 + $0x105] sm:$0xff]
        %v558 = vld [vmem:[#allocation2 + $0x10d] sm:$0xff]
        %v559 = vld [vmem:[#allocation2 + $0x125] sm:$0xff]
        %v560 = vld [vmem:[#allocation2 + $0x12d] sm:$0xff]
        %v561 = vld [vmem:[#allocation2 + $0x145] sm:$0xff]
        %v562 = vld [vmem:[#allocation2 + $0x14d] sm:$0xff]
        %v563 = vld [vmem:[#allocation2 + $0x165] sm:$0xff]
        %v564 = vld [vmem:[#allocation2 + $0x16d] sm:$0xff]
        %v565 = vld [vmem:[#allocation2 + $0x185] sm:$0xff]
        %v566 = vld [vmem:[#allocation2 + $0x18d] sm:$0xff]
        %v567 = vld [vmem:[#allocation2 + $0x1a5] sm:$0xff]
        %v568 = vld [vmem:[#allocation2 + $0x1ad] sm:$0xff]
        %v569 = vld [vmem:[#allocation2 + $0x1c5] sm:$0xff]
        %v570 = vld [vmem:[#allocation2 + $0x1cd] sm:$0xff]
        %v571 = vld [vmem:[#allocation2 + $0x1e5] sm:$0xff]
        %v572 = vld [vmem:[#allocation2 + $0x1ed] sm:$0xff]
        %v573 = vld [vmem:[#allocation2 + $0x205] sm:$0xff]
        %v574 = vld [vmem:[#allocation2 + $0x20d] sm:$0xff]
        %v575 = vld [vmem:[#allocation2 + $0x225] sm:$0xff]
        %v576 = vld [vmem:[#allocation2 + $0x22d] sm:$0xff]
        %v577 = vld [vmem:[#allocation2 + $0x245] sm:$0xff]
        %v578 = vld [vmem:[#allocation2 + $0x24d] sm:$0xff]
        %v579 = vld [vmem:[#allocation2 + $0x265] sm:$0xff]
        %v580 = vld [vmem:[#allocation2 + $0x26d] sm:$0xff]
        %v581 = vld [vmem:[#allocation2 + $0x285] sm:$0xff]
        %v582 = vld [vmem:[#allocation2 + $0x28d] sm:$0xff]
        %v583 = vld [vmem:[#allocation2 + $0x2a5] sm:$0xff]
        %v584 = vld [vmem:[#allocation2 + $0x2ad] sm:$0xff]
        %v585 = vlaneseq
        %v586 = vshrl.u32 %v585, 7
        %v587 = vsub.s32 0, %v586
        %v588 = vrot.slane %v534, %v587
        %v589 = vmul.f32 %v541, %v588
        %v590 = vmul.f32 %v542, %v588
        %v591 = vmul.f32 %v543, %v588
        %v592 = vmul.f32 %v544, %v588
        %v593 = vmul.f32 %v545, %v588
        %v594 = vmul.f32 %v546, %v588
        %v595 = vmul.f32 %v547, %v588
        %v596 = vmul.f32 %v548, %v588
        %v597 = vmul.f32 %v549, %v588
        %v598 = vmul.f32 %v550, %v588
        %v599 = vmul.f32 %v551, %v588
        %v600 = vmul.f32 %v552, %v588
        %v601 = vmul.f32 %v553, %v588
        %v602 = vmul.f32 %v554, %v588
        %v603 = vmul.f32 %v555, %v588
        %v604 = vmul.f32 %v556, %v588
        %v605 = vmul.f32 %v557, %v588
        %v606 = vmul.f32 %v558, %v588
        %v607 = vmul.f32 %v559, %v588
        %v608 = vmul.f32 %v560, %v588
        %v609 = vmul.f32 %v561, %v588
        %v610 = vmul.f32 %v562, %v588
        %v611 = vmul.f32 %v563, %v588
        %v612 = vmul.f32 %v564, %v588
        %v613 = vmul.f32 %v565, %v588
        %v614 = vmul.f32 %v566, %v588
        %v615 = vmul.f32 %v567, %v588
        %v616 = vmul.f32 %v568, %v588
        %v617 = vmul.f32 %v569, %v588
        %v618 = vmul.f32 %v570, %v588
        %v619 = vmul.f32 %v571, %v588
        %v620 = vmul.f32 %v572, %v588
        %v621 = vadd.f32 %v589, 0.0
        %v622 = vadd.f32 %v590, 0.0
        %v623 = vadd.f32 %v591, 0.0
        %v624 = vadd.f32 %v592, 0.0
        %v625 = vadd.f32 %v593, 0.0
        %v626 = vadd.f32 %v594, 0.0
        %v627 = vadd.f32 %v595, 0.0
        %v628 = vadd.f32 %v596, 0.0
        %v629 = vadd.f32 %v597, 0.0
        %v630 = vadd.f32 %v598, 0.0
        %v631 = vadd.f32 %v599, 0.0
        %v632 = vadd.f32 %v600, 0.0
        %v633 = vadd.f32 %v601, 0.0
        %v634 = vadd.f32 %v602, 0.0
        %v635 = vadd.f32 %v603, 0.0
        %v636 = vadd.f32 %v604, 0.0
        %v637 = vadd.f32 %v605, 0.0
        %v638 = vadd.f32 %v606, 0.0
        %v639 = vadd.f32 %v607, 0.0
        %v640 = vadd.f32 %v608, 0.0
        %v641 = vadd.f32 %v609, 0.0
        %v642 = vadd.f32 %v610, 0.0
        %v643 = vadd.f32 %v611, 0.0
        %v644 = vadd.f32 %v612, 0.0
        %v645 = vadd.f32 %v613, 0.0
        %v646 = vadd.f32 %v614, 0.0
        %v647 = vadd.f32 %v615, 0.0
        %v648 = vadd.f32 %v616, 0.0
        %v649 = vadd.f32 %v617, 0.0
        %v650 = vadd.f32 %v618, 0.0
        %v651 = vadd.f32 %v619, 0.0
        %v652 = vadd.f32 %v620, 0.0
        %v653 = vlaneseq
        %v654 = vshrl.u32 %v653, 7
        %v655 = vsub.s32 7, %v654
        %v656 = vrot.slane %v534, %v655
        %v657 = vmul.f32 %v543, %v656
        %v658 = vmul.f32 %v544, %v656
        %v659 = vmul.f32 %v545, %v656
        %v660 = vmul.f32 %v546, %v656
        %v661 = vmul.f32 %v547, %v656
        %v662 = vmul.f32 %v548, %v656
        %v663 = vmul.f32 %v549, %v656
        %v664 = vmul.f32 %v550, %v656
        %v665 = vmul.f32 %v551, %v656
        %v666 = vmul.f32 %v552, %v656
        %v667 = vmul.f32 %v553, %v656
        %v668 = vmul.f32 %v554, %v656
        %v669 = vmul.f32 %v555, %v656
        %v670 = vmul.f32 %v556, %v656
        %v671 = vmul.f32 %v557, %v656
        %v672 = vmul.f32 %v558, %v656
        %v673 = vmul.f32 %v559, %v656
        %v674 = vmul.f32 %v560, %v656
        %v675 = vmul.f32 %v561, %v656
        %v676 = vmul.f32 %v562, %v656
        %v677 = vmul.f32 %v563, %v656
        %v678 = vmul.f32 %v564, %v656
        %v679 = vmul.f32 %v565, %v656
        %v680 = vmul.f32 %v566, %v656
        %v681 = vmul.f32 %v567, %v656
        %v682 = vmul.f32 %v568, %v656
        %v683 = vmul.f32 %v569, %v656
        %v684 = vmul.f32 %v570, %v656
        %v685 = vmul.f32 %v571, %v656
        %v686 = vmul.f32 %v572, %v656
        %v687 = vmul.f32 %v573, %v656
        %v688 = vmul.f32 %v574, %v656
        %v689 = vadd.f32 %v621, %v657
        %v690 = vadd.f32 %v622, %v658
        %v691 = vadd.f32 %v623, %v659
        %v692 = vadd.f32 %v624, %v660
        %v693 = vadd.f32 %v625, %v661
        %v694 = vadd.f32 %v626, %v662
        %v695 = vadd.f32 %v627, %v663
        %v696 = vadd.f32 %v628, %v664
        %v697 = vadd.f32 %v629, %v665
        %v698 = vadd.f32 %v630, %v666
        %v699 = vadd.f32 %v631, %v667
        %v700 = vadd.f32 %v632, %v668
        %v701 = vadd.f32 %v633, %v669
        %v702 = vadd.f32 %v634, %v670
        %v703 = vadd.f32 %v635, %v671
        %v704 = vadd.f32 %v636, %v672
        %v705 = vadd.f32 %v637, %v673
        %v706 = vadd.f32 %v638, %v674
        %v707 = vadd.f32 %v639, %v675
        %v708 = vadd.f32 %v640, %v676
        %v709 = vadd.f32 %v641, %v677
        %v710 = vadd.f32 %v642, %v678
        %v711 = vadd.f32 %v643, %v679
        %v712 = vadd.f32 %v644, %v680
        %v713 = vadd.f32 %v645, %v681
        %v714 = vadd.f32 %v646, %v682
        %v715 = vadd.f32 %v647, %v683
        %v716 = vadd.f32 %v648, %v684
        %v717 = vadd.f32 %v649, %v685
        %v718 = vadd.f32 %v650, %v686
        %v719 = vadd.f32 %v651, %v687
        %v720 = vadd.f32 %v652, %v688
        %v721 = vlaneseq
        %v722 = vshrl.u32 %v721, 7
        %v723 = vsub.s32 6, %v722
        %v724 = vrot.slane %v535, %v723
        %v725 = vmul.f32 %v545, %v724
        %v726 = vmul.f32 %v546, %v724
        %v727 = vmul.f32 %v547, %v724
        %v728 = vmul.f32 %v548, %v724
        %v729 = vmul.f32 %v549, %v724
        %v730 = vmul.f32 %v550, %v724
        %v731 = vmul.f32 %v551, %v724
        %v732 = vmul.f32 %v552, %v724
        %v733 = vmul.f32 %v553, %v724
        %v734 = vmul.f32 %v554, %v724
        %v735 = vmul.f32 %v555, %v724
        %v736 = vmul.f32 %v556, %v724
        %v737 = vmul.f32 %v557, %v724
        %v738 = vmul.f32 %v558, %v724
        %v739 = vmul.f32 %v559, %v724
        %v740 = vmul.f32 %v560, %v724
        %v741 = vmul.f32 %v561, %v724
        %v742 = vmul.f32 %v562, %v724
        %v743 = vmul.f32 %v563, %v724
        %v744 = vmul.f32 %v564, %v724
        %v745 = vmul.f32 %v565, %v724
        %v746 = vmul.f32 %v566, %v724
        %v747 = vmul.f32 %v567, %v724
        %v748 = vmul.f32 %v568, %v724
        %v749 = vmul.f32 %v569, %v724
        %v750 = vmul.f32 %v570, %v724
        %v751 = vmul.f32 %v571, %v724
        %v752 = vmul.f32 %v572, %v724
        %v753 = vmul.f32 %v573, %v724
        %v754 = vmul.f32 %v574, %v724
        %v755 = vmul.f32 %v575, %v724
        %v756 = vmul.f32 %v576, %v724
        %v757 = vadd.f32 %v689, %v725
        %v758 = vadd.f32 %v690, %v726
        %v759 = vadd.f32 %v691, %v727
        %v760 = vadd.f32 %v692, %v728
        %v761 = vadd.f32 %v693, %v729
        %v762 = vadd.f32 %v694, %v730
        %v763 = vadd.f32 %v695, %v731
        %v764 = vadd.f32 %v696, %v732
        %v765 = vadd.f32 %v697, %v733
        %v766 = vadd.f32 %v698, %v734
        %v767 = vadd.f32 %v699, %v735
        %v768 = vadd.f32 %v700, %v736
        %v769 = vadd.f32 %v701, %v737
        %v770 = vadd.f32 %v702, %v738
        %v771 = vadd.f32 %v703, %v739
        %v772 = vadd.f32 %v704, %v740
        %v773 = vadd.f32 %v705, %v741
        %v774 = vadd.f32 %v706, %v742
        %v775 = vadd.f32 %v707, %v743
        %v776 = vadd.f32 %v708, %v744
        %v777 = vadd.f32 %v709, %v745
        %v778 = vadd.f32 %v710, %v746
        %v779 = vadd.f32 %v711, %v747
        %v780 = vadd.f32 %v712, %v748
        %v781 = vadd.f32 %v713, %v749
        %v782 = vadd.f32 %v714, %v750
        %v783 = vadd.f32 %v715, %v751
        %v784 = vadd.f32 %v716, %v752
        %v785 = vadd.f32 %v717, %v753
        %v786 = vadd.f32 %v718, %v754
        %v787 = vadd.f32 %v719, %v755
        %v788 = vadd.f32 %v720, %v756
        %v789 = vlaneseq
        %v790 = vshrl.u32 %v789, 7
        %v791 = vsub.s32 5, %v790
        %v792 = vrot.slane %v536, %v791
        %v793 = vmul.f32 %v547, %v792
        %v794 = vmul.f32 %v548, %v792
        %v795 = vmul.f32 %v549, %v792
        %v796 = vmul.f32 %v550, %v792
        %v797 = vmul.f32 %v551, %v792
        %v798 = vmul.f32 %v552, %v792
        %v799 = vmul.f32 %v553, %v792
        %v800 = vmul.f32 %v554, %v792
        %v801 = vmul.f32 %v555, %v792
        %v802 = vmul.f32 %v556, %v792
        %v803 = vmul.f32 %v557, %v792
        %v804 = vmul.f32 %v558, %v792
        %v805 = vmul.f32 %v559, %v792
        %v806 = vmul.f32 %v560, %v792
        %v807 = vmul.f32 %v561, %v792
        %v808 = vmul.f32 %v562, %v792
        %v809 = vmul.f32 %v563, %v792
        %v810 = vmul.f32 %v564, %v792
        %v811 = vmul.f32 %v565, %v792
        %v812 = vmul.f32 %v566, %v792
        %v813 = vmul.f32 %v567, %v792
        %v814 = vmul.f32 %v568, %v792
        %v815 = vmul.f32 %v569, %v792
        %v816 = vmul.f32 %v570, %v792
        %v817 = vmul.f32 %v571, %v792
        %v818 = vmul.f32 %v572, %v792
        %v819 = vmul.f32 %v573, %v792
        %v820 = vmul.f32 %v574, %v792
        %v821 = vmul.f32 %v575, %v792
        %v822 = vmul.f32 %v576, %v792
        %v823 = vmul.f32 %v577, %v792
        %v824 = vmul.f32 %v578, %v792
        %v825 = vadd.f32 %v757, %v793
        %v826 = vadd.f32 %v758, %v794
        %v827 = vadd.f32 %v759, %v795
        %v828 = vadd.f32 %v760, %v796
        %v829 = vadd.f32 %v761, %v797
        %v830 = vadd.f32 %v762, %v798
        %v831 = vadd.f32 %v763, %v799
        %v832 = vadd.f32 %v764, %v800
        %v833 = vadd.f32 %v765, %v801
        %v834 = vadd.f32 %v766, %v802
        %v835 = vadd.f32 %v767, %v803
        %v836 = vadd.f32 %v768, %v804
        %v837 = vadd.f32 %v769, %v805
        %v838 = vadd.f32 %v770, %v806
        %v839 = vadd.f32 %v771, %v807
        %v840 = vadd.f32 %v772, %v808
        %v841 = vadd.f32 %v773, %v809
        %v842 = vadd.f32 %v774, %v810
        %v843 = vadd.f32 %v775, %v811
        %v844 = vadd.f32 %v776, %v812
        %v845 = vadd.f32 %v777, %v813
        %v846 = vadd.f32 %v778, %v814
        %v847 = vadd.f32 %v779, %v815
        %v848 = vadd.f32 %v780, %v816
        %v849 = vadd.f32 %v781, %v817
        %v850 = vadd.f32 %v782, %v818
        %v851 = vadd.f32 %v783, %v819
        %v852 = vadd.f32 %v784, %v820
        %v853 = vadd.f32 %v785, %v821
        %v854 = vadd.f32 %v786, %v822
        %v855 = vadd.f32 %v787, %v823
        %v856 = vadd.f32 %v788, %v824
        %v857 = vlaneseq
        %v858 = vshrl.u32 %v857, 7
        %v859 = vsub.s32 4, %v858
        %v860 = vrot.slane %v537, %v859
        %v861 = vmul.f32 %v549, %v860
        %v862 = vmul.f32 %v550, %v860
        %v863 = vmul.f32 %v551, %v860
        %v864 = vmul.f32 %v552, %v860
        %v865 = vmul.f32 %v553, %v860
        %v866 = vmul.f32 %v554, %v860
        %v867 = vmul.f32 %v555, %v860
        %v868 = vmul.f32 %v556, %v860
        %v869 = vmul.f32 %v557, %v860
        %v870 = vmul.f32 %v558, %v860
        %v871 = vmul.f32 %v559, %v860
        %v872 = vmul.f32 %v560, %v860
        %v873 = vmul.f32 %v561, %v860
        %v874 = vmul.f32 %v562, %v860
        %v875 = vmul.f32 %v563, %v860
        %v876 = vmul.f32 %v564, %v860
        %v877 = vmul.f32 %v565, %v860
        %v878 = vmul.f32 %v566, %v860
        %v879 = vmul.f32 %v567, %v860
        %v880 = vmul.f32 %v568, %v860
        %v881 = vmul.f32 %v569, %v860
        %v882 = vmul.f32 %v570, %v860
        %v883 = vmul.f32 %v571, %v860
        %v884 = vmul.f32 %v572, %v860
        %v885 = vmul.f32 %v573, %v860
        %v886 = vmul.f32 %v574, %v860
        %v887 = vmul.f32 %v575, %v860
        %v888 = vmul.f32 %v576, %v860
        %v889 = vmul.f32 %v577, %v860
        %v890 = vmul.f32 %v578, %v860
        %v891 = vmul.f32 %v579, %v860
        %v892 = vmul.f32 %v580, %v860
        %v893 = vadd.f32 %v825, %v861
        %v894 = vadd.f32 %v826, %v862
        %v895 = vadd.f32 %v827, %v863
        %v896 = vadd.f32 %v828, %v864
        %v897 = vadd.f32 %v829, %v865
        %v898 = vadd.f32 %v830, %v866
        %v899 = vadd.f32 %v831, %v867
        %v900 = vadd.f32 %v832, %v868
        %v901 = vadd.f32 %v833, %v869
        %v902 = vadd.f32 %v834, %v870
        %v903 = vadd.f32 %v835, %v871
        %v904 = vadd.f32 %v836, %v872
        %v905 = vadd.f32 %v837, %v873
        %v906 = vadd.f32 %v838, %v874
        %v907 = vadd.f32 %v839, %v875
        %v908 = vadd.f32 %v840, %v876
        %v909 = vadd.f32 %v841, %v877
        %v910 = vadd.f32 %v842, %v878
        %v911 = vadd.f32 %v843, %v879
        %v912 = vadd.f32 %v844, %v880
        %v913 = vadd.f32 %v845, %v881
        %v914 = vadd.f32 %v846, %v882
        %v915 = vadd.f32 %v847, %v883
        %v916 = vadd.f32 %v848, %v884
        %v917 = vadd.f32 %v849, %v885
        %v918 = vadd.f32 %v850, %v886
        %v919 = vadd.f32 %v851, %v887
        %v920 = vadd.f32 %v852, %v888
        %v921 = vadd.f32 %v853, %v889
        %v922 = vadd.f32 %v854, %v890
        %v923 = vadd.f32 %v855, %v891
        %v924 = vadd.f32 %v856, %v892
        %v925 = vlaneseq
        %v926 = vshrl.u32 %v925, 7
        %v927 = vsub.s32 3, %v926
        %v928 = vrot.slane %v538, %v927
        %v929 = vmul.f32 %v551, %v928
        %v930 = vmul.f32 %v552, %v928
        %v931 = vmul.f32 %v553, %v928
        %v932 = vmul.f32 %v554, %v928
        %v933 = vmul.f32 %v555, %v928
        %v934 = vmul.f32 %v556, %v928
        %v935 = vmul.f32 %v557, %v928
        %v936 = vmul.f32 %v558, %v928
        %v937 = vmul.f32 %v559, %v928
        %v938 = vmul.f32 %v560, %v928
        %v939 = vmul.f32 %v561, %v928
        %v940 = vmul.f32 %v562, %v928
        %v941 = vmul.f32 %v563, %v928
        %v942 = vmul.f32 %v564, %v928
        %v943 = vmul.f32 %v565, %v928
        %v944 = vmul.f32 %v566, %v928
        %v945 = vmul.f32 %v567, %v928
        %v946 = vmul.f32 %v568, %v928
        %v947 = vmul.f32 %v569, %v928
        %v948 = vmul.f32 %v570, %v928
        %v949 = vmul.f32 %v571, %v928
        %v950 = vmul.f32 %v572, %v928
        %v951 = vmul.f32 %v573, %v928
        %v952 = vmul.f32 %v574, %v928
        %v953 = vmul.f32 %v575, %v928
        %v954 = vmul.f32 %v576, %v928
        %v955 = vmul.f32 %v577, %v928
        %v956 = vmul.f32 %v578, %v928
        %v957 = vmul.f32 %v579, %v928
        %v958 = vmul.f32 %v580, %v928
        %v959 = vmul.f32 %v581, %v928
        %v960 = vmul.f32 %v582, %v928
        %v961 = vadd.f32 %v893, %v929
        %v962 = vadd.f32 %v894, %v930
        %v963 = vadd.f32 %v895, %v931
        %v964 = vadd.f32 %v896, %v932
        %v965 = vadd.f32 %v897, %v933
        %v966 = vadd.f32 %v898, %v934
        %v967 = vadd.f32 %v899, %v935
        %v968 = vadd.f32 %v900, %v936
        %v969 = vadd.f32 %v901, %v937
        %v970 = vadd.f32 %v902, %v938
        %v971 = vadd.f32 %v903, %v939
        %v972 = vadd.f32 %v904, %v940
        %v973 = vadd.f32 %v905, %v941
        %v974 = vadd.f32 %v906, %v942
        %v975 = vadd.f32 %v907, %v943
        %v976 = vadd.f32 %v908, %v944
        %v977 = vadd.f32 %v909, %v945
        %v978 = vadd.f32 %v910, %v946
        %v979 = vadd.f32 %v911, %v947
        %v980 = vadd.f32 %v912, %v948
        %v981 = vadd.f32 %v913, %v949
        %v982 = vadd.f32 %v914, %v950
        %v983 = vadd.f32 %v915, %v951
        %v984 = vadd.f32 %v916, %v952
        %v985 = vadd.f32 %v917, %v953
        %v986 = vadd.f32 %v918, %v954
        %v987 = vadd.f32 %v919, %v955
        %v988 = vadd.f32 %v920, %v956
        %v989 = vadd.f32 %v921, %v957
        %v990 = vadd.f32 %v922, %v958
        %v991 = vadd.f32 %v923, %v959
        %v992 = vadd.f32 %v924, %v960
        %v993 = vlaneseq
        %v994 = vshrl.u32 %v993, 7
        %v995 = vsub.s32 2, %v994
        %v996 = vrot.slane %v539, %v995
        %v997 = vmul.f32 %v553, %v996
        %v998 = vmul.f32 %v554, %v996
        %v999 = vmul.f32 %v555, %v996
        %v1000 = vmul.f32 %v556, %v996
        %v1001 = vmul.f32 %v557, %v996
        %v1002 = vmul.f32 %v558, %v996
        %v1003 = vmul.f32 %v559, %v996
        %v1004 = vmul.f32 %v560, %v996
        %v1005 = vmul.f32 %v561, %v996
        %v1006 = vmul.f32 %v562, %v996
        %v1007 = vmul.f32 %v563, %v996
        %v1008 = vmul.f32 %v564, %v996
        %v1009 = vmul.f32 %v565, %v996
        %v1010 = vmul.f32 %v566, %v996
        %v1011 = vmul.f32 %v567, %v996
        %v1012 = vmul.f32 %v568, %v996
        %v1013 = vmul.f32 %v569, %v996
        %v1014 = vmul.f32 %v570, %v996
        %v1015 = vmul.f32 %v571, %v996
        %v1016 = vmul.f32 %v572, %v996
        %v1017 = vmul.f32 %v573, %v996
        %v1018 = vmul.f32 %v574, %v996
        %v1019 = vmul.f32 %v575, %v996
        %v1020 = vmul.f32 %v576, %v996
        %v1021 = vmul.f32 %v577, %v996
        %v1022 = vmul.f32 %v578, %v996
        %v1023 = vmul.f32 %v579, %v996
        %v1024 = vmul.f32 %v580, %v996
        %v1025 = vmul.f32 %v581, %v996
        %v1026 = vmul.f32 %v582, %v996
        %v1027 = vmul.f32 %v583, %v996
        %v1028 = vmul.f32 %v584, %v996
        %v1029 = vadd.f32 %v961, %v997
        %v1030 = vadd.f32 %v962, %v998
        %v1031 = vadd.f32 %v963, %v999
        %v1032 = vadd.f32 %v964, %v1000
        %v1033 = vadd.f32 %v965, %v1001
        %v1034 = vadd.f32 %v966, %v1002
        %v1035 = vadd.f32 %v967, %v1003
        %v1036 = vadd.f32 %v968, %v1004
        %v1037 = vadd.f32 %v969, %v1005
        %v1038 = vadd.f32 %v970, %v1006
        %v1039 = vadd.f32 %v971, %v1007
        %v1040 = vadd.f32 %v972, %v1008
        %v1041 = vadd.f32 %v973, %v1009
        %v1042 = vadd.f32 %v974, %v1010
        %v1043 = vadd.f32 %v975, %v1011
        %v1044 = vadd.f32 %v976, %v1012
        %v1045 = vadd.f32 %v977, %v1013
        %v1046 = vadd.f32 %v978, %v1014
        %v1047 = vadd.f32 %v979, %v1015
        %v1048 = vadd.f32 %v980, %v1016
        %v1049 = vadd.f32 %v981, %v1017
        %v1050 = vadd.f32 %v982, %v1018
        %v1051 = vadd.f32 %v983, %v1019
        %v1052 = vadd.f32 %v984, %v1020
        %v1053 = vadd.f32 %v985, %v1021
        %v1054 = vadd.f32 %v986, %v1022
        %v1055 = vadd.f32 %v987, %v1023
        %v1056 = vadd.f32 %v988, %v1024
        %v1057 = vadd.f32 %v989, %v1025
        %v1058 = vadd.f32 %v990, %v1026
        %v1059 = vadd.f32 %v991, %v1027
        %v1060 = vadd.f32 %v992, %v1028
        %v1061 = vld [vmem:[#allocation2 + $0x6] sm:$0xff]
        %v1062 = vld [vmem:[#allocation2 + $0xe] sm:$0xff]
        %v1063 = vld [vmem:[#allocation2 + $0x26] sm:$0xff]
        %v1064 = vld [vmem:[#allocation2 + $0x2e] sm:$0xff]
        %v1065 = vld [vmem:[#allocation2 + $0x46] sm:$0xff]
        %v1066 = vld [vmem:[#allocation2 + $0x4e] sm:$0xff]
        %v1067 = vld [vmem:[#allocation2 + $0x66] sm:$0xff]
        %v1068 = vld [vmem:[#allocation2 + $0x6e] sm:$0xff]
        %v1069 = vld [vmem:[#allocation2 + $0x86] sm:$0xff]
        %v1070 = vld [vmem:[#allocation2 + $0x8e] sm:$0xff]
        %v1071 = vld [vmem:[#allocation2 + $0xa6] sm:$0xff]
        %v1072 = vld [vmem:[#allocation2 + $0xae] sm:$0xff]
        %v1073 = vld [vmem:[#allocation2 + $0xc6] sm:$0xff]
        %v1074 = vld [vmem:[#allocation2 + $0xce] sm:$0xff]
        %v1075 = vld [vmem:[#allocation2 + $0xe6] sm:$0xff]
        %v1076 = vld [vmem:[#allocation2 + $0xee] sm:$0xff]
        %v1077 = vld [vmem:[#allocation2 + $0x106] sm:$0xff]
        %v1078 = vld [vmem:[#allocation2 + $0x10e] sm:$0xff]
        %v1079 = vld [vmem:[#allocation2 + $0x126] sm:$0xff]
        %v1080 = vld [vmem:[#allocation2 + $0x12e] sm:$0xff]
        %v1081 = vld [vmem:[#allocation2 + $0x146] sm:$0xff]
        %v1082 = vld [vmem:[#allocation2 + $0x14e] sm:$0xff]
        %v1083 = vld [vmem:[#allocation2 + $0x166] sm:$0xff]
        %v1084 = vld [vmem:[#allocation2 + $0x16e] sm:$0xff]
        %v1085 = vld [vmem:[#allocation2 + $0x186] sm:$0xff]
        %v1086 = vld [vmem:[#allocation2 + $0x18e] sm:$0xff]
        %v1087 = vld [vmem:[#allocation2 + $0x1a6] sm:$0xff]
        %v1088 = vld [vmem:[#allocation2 + $0x1ae] sm:$0xff]
        %v1089 = vld [vmem:[#allocation2 + $0x1c6] sm:$0xff]
        %v1090 = vld [vmem:[#allocation2 + $0x1ce] sm:$0xff]
        %v1091 = vld [vmem:[#allocation2 + $0x1e6] sm:$0xff]
        %v1092 = vld [vmem:[#allocation2 + $0x1ee] sm:$0xff]
        %v1093 = vld [vmem:[#allocation2 + $0x206] sm:$0xff]
        %v1094 = vld [vmem:[#allocation2 + $0x20e] sm:$0xff]
        %v1095 = vld [vmem:[#allocation2 + $0x226] sm:$0xff]
        %v1096 = vld [vmem:[#allocation2 + $0x22e] sm:$0xff]
        %v1097 = vld [vmem:[#allocation2 + $0x246] sm:$0xff]
        %v1098 = vld [vmem:[#allocation2 + $0x24e] sm:$0xff]
        %v1099 = vld [vmem:[#allocation2 + $0x266] sm:$0xff]
        %v1100 = vld [vmem:[#allocation2 + $0x26e] sm:$0xff]
        %v1101 = vld [vmem:[#allocation2 + $0x286] sm:$0xff]
        %v1102 = vld [vmem:[#allocation2 + $0x28e] sm:$0xff]
        %v1103 = vld [vmem:[#allocation2 + $0x2a6] sm:$0xff]
        %v1104 = vld [vmem:[#allocation2 + $0x2ae] sm:$0xff]
        %v1105 = vlaneseq
        %v1106 = vshrl.u32 %v1105, 7
        %v1107 = vsub.s32 1, %v1106
        %v1108 = vrot.slane %v534, %v1107
        %v1109 = vmul.f32 %v1061, %v1108
        %v1110 = vmul.f32 %v1062, %v1108
        %v1111 = vmul.f32 %v1063, %v1108
        %v1112 = vmul.f32 %v1064, %v1108
        %v1113 = vmul.f32 %v1065, %v1108
        %v1114 = vmul.f32 %v1066, %v1108
        %v1115 = vmul.f32 %v1067, %v1108
        %v1116 = vmul.f32 %v1068, %v1108
        %v1117 = vmul.f32 %v1069, %v1108
        %v1118 = vmul.f32 %v1070, %v1108
        %v1119 = vmul.f32 %v1071, %v1108
        %v1120 = vmul.f32 %v1072, %v1108
        %v1121 = vmul.f32 %v1073, %v1108
        %v1122 = vmul.f32 %v1074, %v1108
        %v1123 = vmul.f32 %v1075, %v1108
        %v1124 = vmul.f32 %v1076, %v1108
        %v1125 = vmul.f32 %v1077, %v1108
        %v1126 = vmul.f32 %v1078, %v1108
        %v1127 = vmul.f32 %v1079, %v1108
        %v1128 = vmul.f32 %v1080, %v1108
        %v1129 = vmul.f32 %v1081, %v1108
        %v1130 = vmul.f32 %v1082, %v1108
        %v1131 = vmul.f32 %v1083, %v1108
        %v1132 = vmul.f32 %v1084, %v1108
        %v1133 = vmul.f32 %v1085, %v1108
        %v1134 = vmul.f32 %v1086, %v1108
        %v1135 = vmul.f32 %v1087, %v1108
        %v1136 = vmul.f32 %v1088, %v1108
        %v1137 = vmul.f32 %v1089, %v1108
        %v1138 = vmul.f32 %v1090, %v1108
        %v1139 = vmul.f32 %v1091, %v1108
        %v1140 = vmul.f32 %v1092, %v1108
        %v1141 = vadd.f32 %v1029, %v1109
        %v1142 = vadd.f32 %v1030, %v1110
        %v1143 = vadd.f32 %v1031, %v1111
        %v1144 = vadd.f32 %v1032, %v1112
        %v1145 = vadd.f32 %v1033, %v1113
        %v1146 = vadd.f32 %v1034, %v1114
        %v1147 = vadd.f32 %v1035, %v1115
        %v1148 = vadd.f32 %v1036, %v1116
        %v1149 = vadd.f32 %v1037, %v1117
        %v1150 = vadd.f32 %v1038, %v1118
        %v1151 = vadd.f32 %v1039, %v1119
        %v1152 = vadd.f32 %v1040, %v1120
        %v1153 = vadd.f32 %v1041, %v1121
        %v1154 = vadd.f32 %v1042, %v1122
        %v1155 = vadd.f32 %v1043, %v1123
        %v1156 = vadd.f32 %v1044, %v1124
        %v1157 = vadd.f32 %v1045, %v1125
        %v1158 = vadd.f32 %v1046, %v1126
        %v1159 = vadd.f32 %v1047, %v1127
        %v1160 = vadd.f32 %v1048, %v1128
        %v1161 = vadd.f32 %v1049, %v1129
        %v1162 = vadd.f32 %v1050, %v1130
        %v1163 = vadd.f32 %v1051, %v1131
        %v1164 = vadd.f32 %v1052, %v1132
        %v1165 = vadd.f32 %v1053, %v1133
        %v1166 = vadd.f32 %v1054, %v1134
        %v1167 = vadd.f32 %v1055, %v1135
        %v1168 = vadd.f32 %v1056, %v1136
        %v1169 = vadd.f32 %v1057, %v1137
        %v1170 = vadd.f32 %v1058, %v1138
        %v1171 = vadd.f32 %v1059, %v1139
        %v1172 = vadd.f32 %v1060, %v1140
        %v1173 = vlaneseq
        %v1174 = vshrl.u32 %v1173, 7
        %v1175 = vsub.s32 0, %v1174
        %v1176 = vrot.slane %v535, %v1175
        %v1177 = vmul.f32 %v1063, %v1176
        %v1178 = vmul.f32 %v1064, %v1176
        %v1179 = vmul.f32 %v1065, %v1176
        %v1180 = vmul.f32 %v1066, %v1176
        %v1181 = vmul.f32 %v1067, %v1176
        %v1182 = vmul.f32 %v1068, %v1176
        %v1183 = vmul.f32 %v1069, %v1176
        %v1184 = vmul.f32 %v1070, %v1176
        %v1185 = vmul.f32 %v1071, %v1176
        %v1186 = vmul.f32 %v1072, %v1176
        %v1187 = vmul.f32 %v1073, %v1176
        %v1188 = vmul.f32 %v1074, %v1176
        %v1189 = vmul.f32 %v1075, %v1176
        %v1190 = vmul.f32 %v1076, %v1176
        %v1191 = vmul.f32 %v1077, %v1176
        %v1192 = vmul.f32 %v1078, %v1176
        %v1193 = vmul.f32 %v1079, %v1176
        %v1194 = vmul.f32 %v1080, %v1176
        %v1195 = vmul.f32 %v1081, %v1176
        %v1196 = vmul.f32 %v1082, %v1176
        %v1197 = vmul.f32 %v1083, %v1176
        %v1198 = vmul.f32 %v1084, %v1176
        %v1199 = vmul.f32 %v1085, %v1176
        %v1200 = vmul.f32 %v1086, %v1176
        %v1201 = vmul.f32 %v1087, %v1176
        %v1202 = vmul.f32 %v1088, %v1176
        %v1203 = vmul.f32 %v1089, %v1176
        %v1204 = vmul.f32 %v1090, %v1176
        %v1205 = vmul.f32 %v1091, %v1176
        %v1206 = vmul.f32 %v1092, %v1176
        %v1207 = vmul.f32 %v1093, %v1176
        %v1208 = vmul.f32 %v1094, %v1176
        %v1209 = vadd.f32 %v1141, %v1177
        %v1210 = vadd.f32 %v1142, %v1178
        %v1211 = vadd.f32 %v1143, %v1179
        %v1212 = vadd.f32 %v1144, %v1180
        %v1213 = vadd.f32 %v1145, %v1181
        %v1214 = vadd.f32 %v1146, %v1182
        %v1215 = vadd.f32 %v1147, %v1183
        %v1216 = vadd.f32 %v1148, %v1184
        %v1217 = vadd.f32 %v1149, %v1185
        %v1218 = vadd.f32 %v1150, %v1186
        %v1219 = vadd.f32 %v1151, %v1187
        %v1220 = vadd.f32 %v1152, %v1188
        %v1221 = vadd.f32 %v1153, %v1189
        %v1222 = vadd.f32 %v1154, %v1190
        %v1223 = vadd.f32 %v1155, %v1191
        %v1224 = vadd.f32 %v1156, %v1192
        %v1225 = vadd.f32 %v1157, %v1193
        %v1226 = vadd.f32 %v1158, %v1194
        %v1227 = vadd.f32 %v1159, %v1195
        %v1228 = vadd.f32 %v1160, %v1196
        %v1229 = vadd.f32 %v1161, %v1197
        %v1230 = vadd.f32 %v1162, %v1198
        %v1231 = vadd.f32 %v1163, %v1199
        %v1232 = vadd.f32 %v1164, %v1200
        %v1233 = vadd.f32 %v1165, %v1201
        %v1234 = vadd.f32 %v1166, %v1202
        %v1235 = vadd.f32 %v1167, %v1203
        %v1236 = vadd.f32 %v1168, %v1204
        %v1237 = vadd.f32 %v1169, %v1205
        %v1238 = vadd.f32 %v1170, %v1206
        %v1239 = vadd.f32 %v1171, %v1207
        %v1240 = vadd.f32 %v1172, %v1208
        %v1241 = vlaneseq
        %v1242 = vshrl.u32 %v1241, 7
        %v1243 = vsub.s32 7, %v1242
        %v1244 = vrot.slane %v535, %v1243
        %v1245 = vmul.f32 %v1065, %v1244
        %v1246 = vmul.f32 %v1066, %v1244
        %v1247 = vmul.f32 %v1067, %v1244
        %v1248 = vmul.f32 %v1068, %v1244
        %v1249 = vmul.f32 %v1069, %v1244
        %v1250 = vmul.f32 %v1070, %v1244
        %v1251 = vmul.f32 %v1071, %v1244
        %v1252 = vmul.f32 %v1072, %v1244
        %v1253 = vmul.f32 %v1073, %v1244
        %v1254 = vmul.f32 %v1074, %v1244
        %v1255 = vmul.f32 %v1075, %v1244
        %v1256 = vmul.f32 %v1076, %v1244
        %v1257 = vmul.f32 %v1077, %v1244
        %v1258 = vmul.f32 %v1078, %v1244
        %v1259 = vmul.f32 %v1079, %v1244
        %v1260 = vmul.f32 %v1080, %v1244
        %v1261 = vmul.f32 %v1081, %v1244
        %v1262 = vmul.f32 %v1082, %v1244
        %v1263 = vmul.f32 %v1083, %v1244
        %v1264 = vmul.f32 %v1084, %v1244
        %v1265 = vmul.f32 %v1085, %v1244
        %v1266 = vmul.f32 %v1086, %v1244
        %v1267 = vmul.f32 %v1087, %v1244
        %v1268 = vmul.f32 %v1088, %v1244
        %v1269 = vmul.f32 %v1089, %v1244
        %v1270 = vmul.f32 %v1090, %v1244
        %v1271 = vmul.f32 %v1091, %v1244
        %v1272 = vmul.f32 %v1092, %v1244
        %v1273 = vmul.f32 %v1093, %v1244
        %v1274 = vmul.f32 %v1094, %v1244
        %v1275 = vmul.f32 %v1095, %v1244
        %v1276 = vmul.f32 %v1096, %v1244
        %v1277 = vadd.f32 %v1209, %v1245
        %v1278 = vadd.f32 %v1210, %v1246
        %v1279 = vadd.f32 %v1211, %v1247
        %v1280 = vadd.f32 %v1212, %v1248
        %v1281 = vadd.f32 %v1213, %v1249
        %v1282 = vadd.f32 %v1214, %v1250
        %v1283 = vadd.f32 %v1215, %v1251
        %v1284 = vadd.f32 %v1216, %v1252
        %v1285 = vadd.f32 %v1217, %v1253
        %v1286 = vadd.f32 %v1218, %v1254
        %v1287 = vadd.f32 %v1219, %v1255
        %v1288 = vadd.f32 %v1220, %v1256
        %v1289 = vadd.f32 %v1221, %v1257
        %v1290 = vadd.f32 %v1222, %v1258
        %v1291 = vadd.f32 %v1223, %v1259
        %v1292 = vadd.f32 %v1224, %v1260
        %v1293 = vadd.f32 %v1225, %v1261
        %v1294 = vadd.f32 %v1226, %v1262
        %v1295 = vadd.f32 %v1227, %v1263
        %v1296 = vadd.f32 %v1228, %v1264
        %v1297 = vadd.f32 %v1229, %v1265
        %v1298 = vadd.f32 %v1230, %v1266
        %v1299 = vadd.f32 %v1231, %v1267
        %v1300 = vadd.f32 %v1232, %v1268
        %v1301 = vadd.f32 %v1233, %v1269
        %v1302 = vadd.f32 %v1234, %v1270
        %v1303 = vadd.f32 %v1235, %v1271
        %v1304 = vadd.f32 %v1236, %v1272
        %v1305 = vadd.f32 %v1237, %v1273
        %v1306 = vadd.f32 %v1238, %v1274
        %v1307 = vadd.f32 %v1239, %v1275
        %v1308 = vadd.f32 %v1240, %v1276
        %v1309 = vlaneseq
        %v1310 = vshrl.u32 %v1309, 7
        %v1311 = vsub.s32 6, %v1310
        %v1312 = vrot.slane %v536, %v1311
        %v1313 = vmul.f32 %v1067, %v1312
        %v1314 = vmul.f32 %v1068, %v1312
        %v1315 = vmul.f32 %v1069, %v1312
        %v1316 = vmul.f32 %v1070, %v1312
        %v1317 = vmul.f32 %v1071, %v1312
        %v1318 = vmul.f32 %v1072, %v1312
        %v1319 = vmul.f32 %v1073, %v1312
        %v1320 = vmul.f32 %v1074, %v1312
        %v1321 = vmul.f32 %v1075, %v1312
        %v1322 = vmul.f32 %v1076, %v1312
        %v1323 = vmul.f32 %v1077, %v1312
        %v1324 = vmul.f32 %v1078, %v1312
        %v1325 = vmul.f32 %v1079, %v1312
        %v1326 = vmul.f32 %v1080, %v1312
        %v1327 = vmul.f32 %v1081, %v1312
        %v1328 = vmul.f32 %v1082, %v1312
        %v1329 = vmul.f32 %v1083, %v1312
        %v1330 = vmul.f32 %v1084, %v1312
        %v1331 = vmul.f32 %v1085, %v1312
        %v1332 = vmul.f32 %v1086, %v1312
        %v1333 = vmul.f32 %v1087, %v1312
        %v1334 = vmul.f32 %v1088, %v1312
        %v1335 = vmul.f32 %v1089, %v1312
        %v1336 = vmul.f32 %v1090, %v1312
        %v1337 = vmul.f32 %v1091, %v1312
        %v1338 = vmul.f32 %v1092, %v1312
        %v1339 = vmul.f32 %v1093, %v1312
        %v1340 = vmul.f32 %v1094, %v1312
        %v1341 = vmul.f32 %v1095, %v1312
        %v1342 = vmul.f32 %v1096, %v1312
        %v1343 = vmul.f32 %v1097, %v1312
        %v1344 = vmul.f32 %v1098, %v1312
        %v1345 = vadd.f32 %v1277, %v1313
        %v1346 = vadd.f32 %v1278, %v1314
        %v1347 = vadd.f32 %v1279, %v1315
        %v1348 = vadd.f32 %v1280, %v1316
        %v1349 = vadd.f32 %v1281, %v1317
        %v1350 = vadd.f32 %v1282, %v1318
        %v1351 = vadd.f32 %v1283, %v1319
        %v1352 = vadd.f32 %v1284, %v1320
        %v1353 = vadd.f32 %v1285, %v1321
        %v1354 = vadd.f32 %v1286, %v1322
        %v1355 = vadd.f32 %v1287, %v1323
        %v1356 = vadd.f32 %v1288, %v1324
        %v1357 = vadd.f32 %v1289, %v1325
        %v1358 = vadd.f32 %v1290, %v1326
        %v1359 = vadd.f32 %v1291, %v1327
        %v1360 = vadd.f32 %v1292, %v1328
        %v1361 = vadd.f32 %v1293, %v1329
        %v1362 = vadd.f32 %v1294, %v1330
        %v1363 = vadd.f32 %v1295, %v1331
        %v1364 = vadd.f32 %v1296, %v1332
        %v1365 = vadd.f32 %v1297, %v1333
        %v1366 = vadd.f32 %v1298, %v1334
        %v1367 = vadd.f32 %v1299, %v1335
        %v1368 = vadd.f32 %v1300, %v1336
        %v1369 = vadd.f32 %v1301, %v1337
        %v1370 = vadd.f32 %v1302, %v1338
        %v1371 = vadd.f32 %v1303, %v1339
        %v1372 = vadd.f32 %v1304, %v1340
        %v1373 = vadd.f32 %v1305, %v1341
        %v1374 = vadd.f32 %v1306, %v1342
        %v1375 = vadd.f32 %v1307, %v1343
        %v1376 = vadd.f32 %v1308, %v1344
        %v1377 = vlaneseq
        %v1378 = vshrl.u32 %v1377, 7
        %v1379 = vsub.s32 5, %v1378
        %v1380 = vrot.slane %v537, %v1379
        %v1381 = vmul.f32 %v1069, %v1380
        %v1382 = vmul.f32 %v1070, %v1380
        %v1383 = vmul.f32 %v1071, %v1380
        %v1384 = vmul.f32 %v1072, %v1380
        %v1385 = vmul.f32 %v1073, %v1380
        %v1386 = vmul.f32 %v1074, %v1380
        %v1387 = vmul.f32 %v1075, %v1380
        %v1388 = vmul.f32 %v1076, %v1380
        %v1389 = vmul.f32 %v1077, %v1380
        %v1390 = vmul.f32 %v1078, %v1380
        %v1391 = vmul.f32 %v1079, %v1380
        %v1392 = vmul.f32 %v1080, %v1380
        %v1393 = vmul.f32 %v1081, %v1380
        %v1394 = vmul.f32 %v1082, %v1380
        %v1395 = vmul.f32 %v1083, %v1380
        %v1396 = vmul.f32 %v1084, %v1380
        %v1397 = vmul.f32 %v1085, %v1380
        %v1398 = vmul.f32 %v1086, %v1380
        %v1399 = vmul.f32 %v1087, %v1380
        %v1400 = vmul.f32 %v1088, %v1380
        %v1401 = vmul.f32 %v1089, %v1380
        %v1402 = vmul.f32 %v1090, %v1380
        %v1403 = vmul.f32 %v1091, %v1380
        %v1404 = vmul.f32 %v1092, %v1380
        %v1405 = vmul.f32 %v1093, %v1380
        %v1406 = vmul.f32 %v1094, %v1380
        %v1407 = vmul.f32 %v1095, %v1380
        %v1408 = vmul.f32 %v1096, %v1380
        %v1409 = vmul.f32 %v1097, %v1380
        %v1410 = vmul.f32 %v1098, %v1380
        %v1411 = vmul.f32 %v1099, %v1380
        %v1412 = vmul.f32 %v1100, %v1380
        %v1413 = vadd.f32 %v1345, %v1381
        %v1414 = vadd.f32 %v1346, %v1382
        %v1415 = vadd.f32 %v1347, %v1383
        %v1416 = vadd.f32 %v1348, %v1384
        %v1417 = vadd.f32 %v1349, %v1385
        %v1418 = vadd.f32 %v1350, %v1386
        %v1419 = vadd.f32 %v1351, %v1387
        %v1420 = vadd.f32 %v1352, %v1388
        %v1421 = vadd.f32 %v1353, %v1389
        %v1422 = vadd.f32 %v1354, %v1390
        %v1423 = vadd.f32 %v1355, %v1391
        %v1424 = vadd.f32 %v1356, %v1392
        %v1425 = vadd.f32 %v1357, %v1393
        %v1426 = vadd.f32 %v1358, %v1394
        %v1427 = vadd.f32 %v1359, %v1395
        %v1428 = vadd.f32 %v1360, %v1396
        %v1429 = vadd.f32 %v1361, %v1397
        %v1430 = vadd.f32 %v1362, %v1398
        %v1431 = vadd.f32 %v1363, %v1399
        %v1432 = vadd.f32 %v1364, %v1400
        %v1433 = vadd.f32 %v1365, %v1401
        %v1434 = vadd.f32 %v1366, %v1402
        %v1435 = vadd.f32 %v1367, %v1403
        %v1436 = vadd.f32 %v1368, %v1404
        %v1437 = vadd.f32 %v1369, %v1405
        %v1438 = vadd.f32 %v1370, %v1406
        %v1439 = vadd.f32 %v1371, %v1407
        %v1440 = vadd.f32 %v1372, %v1408
        %v1441 = vadd.f32 %v1373, %v1409
        %v1442 = vadd.f32 %v1374, %v1410
        %v1443 = vadd.f32 %v1375, %v1411
        %v1444 = vadd.f32 %v1376, %v1412
        %v1445 = vlaneseq
        %v1446 = vshrl.u32 %v1445, 7
        %v1447 = vsub.s32 4, %v1446
        %v1448 = vrot.slane %v538, %v1447
        %v1449 = vmul.f32 %v1071, %v1448
        %v1450 = vmul.f32 %v1072, %v1448
        %v1451 = vmul.f32 %v1073, %v1448
        %v1452 = vmul.f32 %v1074, %v1448
        %v1453 = vmul.f32 %v1075, %v1448
        %v1454 = vmul.f32 %v1076, %v1448
        %v1455 = vmul.f32 %v1077, %v1448
        %v1456 = vmul.f32 %v1078, %v1448
        %v1457 = vmul.f32 %v1079, %v1448
        %v1458 = vmul.f32 %v1080, %v1448
        %v1459 = vmul.f32 %v1081, %v1448
        %v1460 = vmul.f32 %v1082, %v1448
        %v1461 = vmul.f32 %v1083, %v1448
        %v1462 = vmul.f32 %v1084, %v1448
        %v1463 = vmul.f32 %v1085, %v1448
        %v1464 = vmul.f32 %v1086, %v1448
        %v1465 = vmul.f32 %v1087, %v1448
        %v1466 = vmul.f32 %v1088, %v1448
        %v1467 = vmul.f32 %v1089, %v1448
        %v1468 = vmul.f32 %v1090, %v1448
        %v1469 = vmul.f32 %v1091, %v1448
        %v1470 = vmul.f32 %v1092, %v1448
        %v1471 = vmul.f32 %v1093, %v1448
        %v1472 = vmul.f32 %v1094, %v1448
        %v1473 = vmul.f32 %v1095, %v1448
        %v1474 = vmul.f32 %v1096, %v1448
        %v1475 = vmul.f32 %v1097, %v1448
        %v1476 = vmul.f32 %v1098, %v1448
        %v1477 = vmul.f32 %v1099, %v1448
        %v1478 = vmul.f32 %v1100, %v1448
        %v1479 = vmul.f32 %v1101, %v1448
        %v1480 = vmul.f32 %v1102, %v1448
        %v1481 = vadd.f32 %v1413, %v1449
        %v1482 = vadd.f32 %v1414, %v1450
        %v1483 = vadd.f32 %v1415, %v1451
        %v1484 = vadd.f32 %v1416, %v1452
        %v1485 = vadd.f32 %v1417, %v1453
        %v1486 = vadd.f32 %v1418, %v1454
        %v1487 = vadd.f32 %v1419, %v1455
        %v1488 = vadd.f32 %v1420, %v1456
        %v1489 = vadd.f32 %v1421, %v1457
        %v1490 = vadd.f32 %v1422, %v1458
        %v1491 = vadd.f32 %v1423, %v1459
        %v1492 = vadd.f32 %v1424, %v1460
        %v1493 = vadd.f32 %v1425, %v1461
        %v1494 = vadd.f32 %v1426, %v1462
        %v1495 = vadd.f32 %v1427, %v1463
        %v1496 = vadd.f32 %v1428, %v1464
        %v1497 = vadd.f32 %v1429, %v1465
        %v1498 = vadd.f32 %v1430, %v1466
        %v1499 = vadd.f32 %v1431, %v1467
        %v1500 = vadd.f32 %v1432, %v1468
        %v1501 = vadd.f32 %v1433, %v1469
        %v1502 = vadd.f32 %v1434, %v1470
        %v1503 = vadd.f32 %v1435, %v1471
        %v1504 = vadd.f32 %v1436, %v1472
        %v1505 = vadd.f32 %v1437, %v1473
        %v1506 = vadd.f32 %v1438, %v1474
        %v1507 = vadd.f32 %v1439, %v1475
        %v1508 = vadd.f32 %v1440, %v1476
        %v1509 = vadd.f32 %v1441, %v1477
        %v1510 = vadd.f32 %v1442, %v1478
        %v1511 = vadd.f32 %v1443, %v1479
        %v1512 = vadd.f32 %v1444, %v1480
        %v1513 = vlaneseq
        %v1514 = vshrl.u32 %v1513, 7
        %v1515 = vsub.s32 3, %v1514
        %v1516 = vrot.slane %v539, %v1515
        %v1517 = vmul.f32 %v1073, %v1516
        %v1518 = vmul.f32 %v1074, %v1516
        %v1519 = vmul.f32 %v1075, %v1516
        %v1520 = vmul.f32 %v1076, %v1516
        %v1521 = vmul.f32 %v1077, %v1516
        %v1522 = vmul.f32 %v1078, %v1516
        %v1523 = vmul.f32 %v1079, %v1516
        %v1524 = vmul.f32 %v1080, %v1516
        %v1525 = vmul.f32 %v1081, %v1516
        %v1526 = vmul.f32 %v1082, %v1516
        %v1527 = vmul.f32 %v1083, %v1516
        %v1528 = vmul.f32 %v1084, %v1516
        %v1529 = vmul.f32 %v1085, %v1516
        %v1530 = vmul.f32 %v1086, %v1516
        %v1531 = vmul.f32 %v1087, %v1516
        %v1532 = vmul.f32 %v1088, %v1516
        %v1533 = vmul.f32 %v1089, %v1516
        %v1534 = vmul.f32 %v1090, %v1516
        %v1535 = vmul.f32 %v1091, %v1516
        %v1536 = vmul.f32 %v1092, %v1516
        %v1537 = vmul.f32 %v1093, %v1516
        %v1538 = vmul.f32 %v1094, %v1516
        %v1539 = vmul.f32 %v1095, %v1516
        %v1540 = vmul.f32 %v1096, %v1516
        %v1541 = vmul.f32 %v1097, %v1516
        %v1542 = vmul.f32 %v1098, %v1516
        %v1543 = vmul.f32 %v1099, %v1516
        %v1544 = vmul.f32 %v1100, %v1516
        %v1545 = vmul.f32 %v1101, %v1516
        %v1546 = vmul.f32 %v1102, %v1516
        %v1547 = vmul.f32 %v1103, %v1516
        %v1548 = vmul.f32 %v1104, %v1516
        %v1549 = vadd.f32 %v1481, %v1517
        %v1550 = vadd.f32 %v1482, %v1518
        %v1551 = vadd.f32 %v1483, %v1519
        %v1552 = vadd.f32 %v1484, %v1520
        %v1553 = vadd.f32 %v1485, %v1521
        %v1554 = vadd.f32 %v1486, %v1522
        %v1555 = vadd.f32 %v1487, %v1523
        %v1556 = vadd.f32 %v1488, %v1524
        %v1557 = vadd.f32 %v1489, %v1525
        %v1558 = vadd.f32 %v1490, %v1526
        %v1559 = vadd.f32 %v1491, %v1527
        %v1560 = vadd.f32 %v1492, %v1528
        %v1561 = vadd.f32 %v1493, %v1529
        %v1562 = vadd.f32 %v1494, %v1530
        %v1563 = vadd.f32 %v1495, %v1531
        %v1564 = vadd.f32 %v1496, %v1532
        %v1565 = vadd.f32 %v1497, %v1533
        %v1566 = vadd.f32 %v1498, %v1534
        %v1567 = vadd.f32 %v1499, %v1535
        %v1568 = vadd.f32 %v1500, %v1536
        %v1569 = vadd.f32 %v1501, %v1537
        %v1570 = vadd.f32 %v1502, %v1538
        %v1571 = vadd.f32 %v1503, %v1539
        %v1572 = vadd.f32 %v1504, %v1540
        %v1573 = vadd.f32 %v1505, %v1541
        %v1574 = vadd.f32 %v1506, %v1542
        %v1575 = vadd.f32 %v1507, %v1543
        %v1576 = vadd.f32 %v1508, %v1544
        %v1577 = vadd.f32 %v1509, %v1545
        %v1578 = vadd.f32 %v1510, %v1546
        %v1579 = vadd.f32 %v1511, %v1547
        %v1580 = vadd.f32 %v1512, %v1548
        %v1581 = vld [vmem:[#allocation2 + $0x7] sm:$0xff]
        %v1582 = vld [vmem:[#allocation2 + $0xf] sm:$0xff]
        %v1583 = vld [vmem:[#allocation2 + $0x27] sm:$0xff]
        %v1584 = vld [vmem:[#allocation2 + $0x2f] sm:$0xff]
        %v1585 = vld [vmem:[#allocation2 + $0x47] sm:$0xff]
        %v1586 = vld [vmem:[#allocation2 + $0x4f] sm:$0xff]
        %v1587 = vld [vmem:[#allocation2 + $0x67] sm:$0xff]
        %v1588 = vld [vmem:[#allocation2 + $0x6f] sm:$0xff]
        %v1589 = vld [vmem:[#allocation2 + $0x87] sm:$0xff]
        %v1590 = vld [vmem:[#allocation2 + $0x8f] sm:$0xff]
        %v1591 = vld [vmem:[#allocation2 + $0xa7] sm:$0xff]
        %v1592 = vld [vmem:[#allocation2 + $0xaf] sm:$0xff]
        %v1593 = vld [vmem:[#allocation2 + $0xc7] sm:$0xff]
        %v1594 = vld [vmem:[#allocation2 + $0xcf] sm:$0xff]
        %v1595 = vld [vmem:[#allocation2 + $0xe7] sm:$0xff]
        %v1596 = vld [vmem:[#allocation2 + $0xef] sm:$0xff]
        %v1597 = vld [vmem:[#allocation2 + $0x107] sm:$0xff]
        %v1598 = vld [vmem:[#allocation2 + $0x10f] sm:$0xff]
        %v1599 = vld [vmem:[#allocation2 + $0x127] sm:$0xff]
        %v1600 = vld [vmem:[#allocation2 + $0x12f] sm:$0xff]
        %v1601 = vld [vmem:[#allocation2 + $0x147] sm:$0xff]
        %v1602 = vld [vmem:[#allocation2 + $0x14f] sm:$0xff]
        %v1603 = vld [vmem:[#allocation2 + $0x167] sm:$0xff]
        %v1604 = vld [vmem:[#allocation2 + $0x16f] sm:$0xff]
        %v1605 = vld [vmem:[#allocation2 + $0x187] sm:$0xff]
        %v1606 = vld [vmem:[#allocation2 + $0x18f] sm:$0xff]
        %v1607 = vld [vmem:[#allocation2 + $0x1a7] sm:$0xff]
        %v1608 = vld [vmem:[#allocation2 + $0x1af] sm:$0xff]
        %v1609 = vld [vmem:[#allocation2 + $0x1c7] sm:$0xff]
        %v1610 = vld [vmem:[#allocation2 + $0x1cf] sm:$0xff]
        %v1611 = vld [vmem:[#allocation2 + $0x1e7] sm:$0xff]
        %v1612 = vld [vmem:[#allocation2 + $0x1ef] sm:$0xff]
        %v1613 = vld [vmem:[#allocation2 + $0x207] sm:$0xff]
        %v1614 = vld [vmem:[#allocation2 + $0x20f] sm:$0xff]
        %v1615 = vld [vmem:[#allocation2 + $0x227] sm:$0xff]
        %v1616 = vld [vmem:[#allocation2 + $0x22f] sm:$0xff]
        %v1617 = vld [vmem:[#allocation2 + $0x247] sm:$0xff]
        %v1618 = vld [vmem:[#allocation2 + $0x24f] sm:$0xff]
        %v1619 = vld [vmem:[#allocation2 + $0x267] sm:$0xff]
        %v1620 = vld [vmem:[#allocation2 + $0x26f] sm:$0xff]
        %v1621 = vld [vmem:[#allocation2 + $0x287] sm:$0xff]
        %v1622 = vld [vmem:[#allocation2 + $0x28f] sm:$0xff]
        %v1623 = vld [vmem:[#allocation2 + $0x2a7] sm:$0xff]
        %v1624 = vld [vmem:[#allocation2 + $0x2af] sm:$0xff]
        %v1625 = vlaneseq
        %v1626 = vshrl.u32 %v1625, 7
        %v1627 = vsub.s32 2, %v1626
        %v1628 = vrot.slane %v534, %v1627
        %v1629 = vmul.f32 %v1581, %v1628
        %v1630 = vmul.f32 %v1582, %v1628
        %v1631 = vmul.f32 %v1583, %v1628
        %v1632 = vmul.f32 %v1584, %v1628
        %v1633 = vmul.f32 %v1585, %v1628
        %v1634 = vmul.f32 %v1586, %v1628
        %v1635 = vmul.f32 %v1587, %v1628
        %v1636 = vmul.f32 %v1588, %v1628
        %v1637 = vmul.f32 %v1589, %v1628
        %v1638 = vmul.f32 %v1590, %v1628
        %v1639 = vmul.f32 %v1591, %v1628
        %v1640 = vmul.f32 %v1592, %v1628
        %v1641 = vmul.f32 %v1593, %v1628
        %v1642 = vmul.f32 %v1594, %v1628
        %v1643 = vmul.f32 %v1595, %v1628
        %v1644 = vmul.f32 %v1596, %v1628
        %v1645 = vmul.f32 %v1597, %v1628
        %v1646 = vmul.f32 %v1598, %v1628
        %v1647 = vmul.f32 %v1599, %v1628
        %v1648 = vmul.f32 %v1600, %v1628
        %v1649 = vmul.f32 %v1601, %v1628
        %v1650 = vmul.f32 %v1602, %v1628
        %v1651 = vmul.f32 %v1603, %v1628
        %v1652 = vmul.f32 %v1604, %v1628
        %v1653 = vmul.f32 %v1605, %v1628
        %v1654 = vmul.f32 %v1606, %v1628
        %v1655 = vmul.f32 %v1607, %v1628
        %v1656 = vmul.f32 %v1608, %v1628
        %v1657 = vmul.f32 %v1609, %v1628
        %v1658 = vmul.f32 %v1610, %v1628
        %v1659 = vmul.f32 %v1611, %v1628
        %v1660 = vmul.f32 %v1612, %v1628
        %v1661 = vadd.f32 %v1549, %v1629
        %v1662 = vadd.f32 %v1550, %v1630
        %v1663 = vadd.f32 %v1551, %v1631
        %v1664 = vadd.f32 %v1552, %v1632
        %v1665 = vadd.f32 %v1553, %v1633
        %v1666 = vadd.f32 %v1554, %v1634
        %v1667 = vadd.f32 %v1555, %v1635
        %v1668 = vadd.f32 %v1556, %v1636
        %v1669 = vadd.f32 %v1557, %v1637
        %v1670 = vadd.f32 %v1558, %v1638
        %v1671 = vadd.f32 %v1559, %v1639
        %v1672 = vadd.f32 %v1560, %v1640
        %v1673 = vadd.f32 %v1561, %v1641
        %v1674 = vadd.f32 %v1562, %v1642
        %v1675 = vadd.f32 %v1563, %v1643
        %v1676 = vadd.f32 %v1564, %v1644
        %v1677 = vadd.f32 %v1565, %v1645
        %v1678 = vadd.f32 %v1566, %v1646
        %v1679 = vadd.f32 %v1567, %v1647
        %v1680 = vadd.f32 %v1568, %v1648
        %v1681 = vadd.f32 %v1569, %v1649
        %v1682 = vadd.f32 %v1570, %v1650
        %v1683 = vadd.f32 %v1571, %v1651
        %v1684 = vadd.f32 %v1572, %v1652
        %v1685 = vadd.f32 %v1573, %v1653
        %v1686 = vadd.f32 %v1574, %v1654
        %v1687 = vadd.f32 %v1575, %v1655
        %v1688 = vadd.f32 %v1576, %v1656
        %v1689 = vadd.f32 %v1577, %v1657
        %v1690 = vadd.f32 %v1578, %v1658
        %v1691 = vadd.f32 %v1579, %v1659
        %v1692 = vadd.f32 %v1580, %v1660
        %v1693 = vlaneseq
        %v1694 = vshrl.u32 %v1693, 7
        %v1695 = vsub.s32 1, %v1694
        %v1696 = vrot.slane %v535, %v1695
        %v1697 = vmul.f32 %v1583, %v1696
        %v1698 = vmul.f32 %v1584, %v1696
        %v1699 = vmul.f32 %v1585, %v1696
        %v1700 = vmul.f32 %v1586, %v1696
        %v1701 = vmul.f32 %v1587, %v1696
        %v1702 = vmul.f32 %v1588, %v1696
        %v1703 = vmul.f32 %v1589, %v1696
        %v1704 = vmul.f32 %v1590, %v1696
        %v1705 = vmul.f32 %v1591, %v1696
        %v1706 = vmul.f32 %v1592, %v1696
        %v1707 = vmul.f32 %v1593, %v1696
        %v1708 = vmul.f32 %v1594, %v1696
        %v1709 = vmul.f32 %v1595, %v1696
        %v1710 = vmul.f32 %v1596, %v1696
        %v1711 = vmul.f32 %v1597, %v1696
        %v1712 = vmul.f32 %v1598, %v1696
        %v1713 = vmul.f32 %v1599, %v1696
        %v1714 = vmul.f32 %v1600, %v1696
        %v1715 = vmul.f32 %v1601, %v1696
        %v1716 = vmul.f32 %v1602, %v1696
        %v1717 = vmul.f32 %v1603, %v1696
        %v1718 = vmul.f32 %v1604, %v1696
        %v1719 = vmul.f32 %v1605, %v1696
        %v1720 = vmul.f32 %v1606, %v1696
        %v1721 = vmul.f32 %v1607, %v1696
        %v1722 = vmul.f32 %v1608, %v1696
        %v1723 = vmul.f32 %v1609, %v1696
        %v1724 = vmul.f32 %v1610, %v1696
        %v1725 = vmul.f32 %v1611, %v1696
        %v1726 = vmul.f32 %v1612, %v1696
        %v1727 = vmul.f32 %v1613, %v1696
        %v1728 = vmul.f32 %v1614, %v1696
        %v1729 = vadd.f32 %v1661, %v1697
        %v1730 = vadd.f32 %v1662, %v1698
        %v1731 = vadd.f32 %v1663, %v1699
        %v1732 = vadd.f32 %v1664, %v1700
        %v1733 = vadd.f32 %v1665, %v1701
        %v1734 = vadd.f32 %v1666, %v1702
        %v1735 = vadd.f32 %v1667, %v1703
        %v1736 = vadd.f32 %v1668, %v1704
        %v1737 = vadd.f32 %v1669, %v1705
        %v1738 = vadd.f32 %v1670, %v1706
        %v1739 = vadd.f32 %v1671, %v1707
        %v1740 = vadd.f32 %v1672, %v1708
        %v1741 = vadd.f32 %v1673, %v1709
        %v1742 = vadd.f32 %v1674, %v1710
        %v1743 = vadd.f32 %v1675, %v1711
        %v1744 = vadd.f32 %v1676, %v1712
        %v1745 = vadd.f32 %v1677, %v1713
        %v1746 = vadd.f32 %v1678, %v1714
        %v1747 = vadd.f32 %v1679, %v1715
        %v1748 = vadd.f32 %v1680, %v1716
        %v1749 = vadd.f32 %v1681, %v1717
        %v1750 = vadd.f32 %v1682, %v1718
        %v1751 = vadd.f32 %v1683, %v1719
        %v1752 = vadd.f32 %v1684, %v1720
        %v1753 = vadd.f32 %v1685, %v1721
        %v1754 = vadd.f32 %v1686, %v1722
        %v1755 = vadd.f32 %v1687, %v1723
        %v1756 = vadd.f32 %v1688, %v1724
        %v1757 = vadd.f32 %v1689, %v1725
        %v1758 = vadd.f32 %v1690, %v1726
        %v1759 = vadd.f32 %v1691, %v1727
        %v1760 = vadd.f32 %v1692, %v1728
        %v1761 = vlaneseq
        %v1762 = vshrl.u32 %v1761, 7
        %v1763 = vsub.s32 0, %v1762
        %v1764 = vrot.slane %v536, %v1763
        %v1765 = vmul.f32 %v1585, %v1764
        %v1766 = vmul.f32 %v1586, %v1764
        %v1767 = vmul.f32 %v1587, %v1764
        %v1768 = vmul.f32 %v1588, %v1764
        %v1769 = vmul.f32 %v1589, %v1764
        %v1770 = vmul.f32 %v1590, %v1764
        %v1771 = vmul.f32 %v1591, %v1764
        %v1772 = vmul.f32 %v1592, %v1764
        %v1773 = vmul.f32 %v1593, %v1764
        %v1774 = vmul.f32 %v1594, %v1764
        %v1775 = vmul.f32 %v1595, %v1764
        %v1776 = vmul.f32 %v1596, %v1764
        %v1777 = vmul.f32 %v1597, %v1764
        %v1778 = vmul.f32 %v1598, %v1764
        %v1779 = vmul.f32 %v1599, %v1764
        %v1780 = vmul.f32 %v1600, %v1764
        %v1781 = vmul.f32 %v1601, %v1764
        %v1782 = vmul.f32 %v1602, %v1764
        %v1783 = vmul.f32 %v1603, %v1764
        %v1784 = vmul.f32 %v1604, %v1764
        %v1785 = vmul.f32 %v1605, %v1764
        %v1786 = vmul.f32 %v1606, %v1764
        %v1787 = vmul.f32 %v1607, %v1764
        %v1788 = vmul.f32 %v1608, %v1764
        %v1789 = vmul.f32 %v1609, %v1764
        %v1790 = vmul.f32 %v1610, %v1764
        %v1791 = vmul.f32 %v1611, %v1764
        %v1792 = vmul.f32 %v1612, %v1764
        %v1793 = vmul.f32 %v1613, %v1764
        %v1794 = vmul.f32 %v1614, %v1764
        %v1795 = vmul.f32 %v1615, %v1764
        %v1796 = vmul.f32 %v1616, %v1764
        %v1797 = vadd.f32 %v1729, %v1765
        %v1798 = vadd.f32 %v1730, %v1766
        %v1799 = vadd.f32 %v1731, %v1767
        %v1800 = vadd.f32 %v1732, %v1768
        %v1801 = vadd.f32 %v1733, %v1769
        %v1802 = vadd.f32 %v1734, %v1770
        %v1803 = vadd.f32 %v1735, %v1771
        %v1804 = vadd.f32 %v1736, %v1772
        %v1805 = vadd.f32 %v1737, %v1773
        %v1806 = vadd.f32 %v1738, %v1774
        %v1807 = vadd.f32 %v1739, %v1775
        %v1808 = vadd.f32 %v1740, %v1776
        %v1809 = vadd.f32 %v1741, %v1777
        %v1810 = vadd.f32 %v1742, %v1778
        %v1811 = vadd.f32 %v1743, %v1779
        %v1812 = vadd.f32 %v1744, %v1780
        %v1813 = vadd.f32 %v1745, %v1781
        %v1814 = vadd.f32 %v1746, %v1782
        %v1815 = vadd.f32 %v1747, %v1783
        %v1816 = vadd.f32 %v1748, %v1784
        %v1817 = vadd.f32 %v1749, %v1785
        %v1818 = vadd.f32 %v1750, %v1786
        %v1819 = vadd.f32 %v1751, %v1787
        %v1820 = vadd.f32 %v1752, %v1788
        %v1821 = vadd.f32 %v1753, %v1789
        %v1822 = vadd.f32 %v1754, %v1790
        %v1823 = vadd.f32 %v1755, %v1791
        %v1824 = vadd.f32 %v1756, %v1792
        %v1825 = vadd.f32 %v1757, %v1793
        %v1826 = vadd.f32 %v1758, %v1794
        %v1827 = vadd.f32 %v1759, %v1795
        %v1828 = vadd.f32 %v1760, %v1796
        %v1829 = vlaneseq
        %v1830 = vshrl.u32 %v1829, 7
        %v1831 = vsub.s32 7, %v1830
        %v1832 = vrot.slane %v536, %v1831
        %v1833 = vmul.f32 %v1587, %v1832
        %v1834 = vmul.f32 %v1588, %v1832
        %v1835 = vmul.f32 %v1589, %v1832
        %v1836 = vmul.f32 %v1590, %v1832
        %v1837 = vmul.f32 %v1591, %v1832
        %v1838 = vmul.f32 %v1592, %v1832
        %v1839 = vmul.f32 %v1593, %v1832
        %v1840 = vmul.f32 %v1594, %v1832
        %v1841 = vmul.f32 %v1595, %v1832
        %v1842 = vmul.f32 %v1596, %v1832
        %v1843 = vmul.f32 %v1597, %v1832
        %v1844 = vmul.f32 %v1598, %v1832
        %v1845 = vmul.f32 %v1599, %v1832
        %v1846 = vmul.f32 %v1600, %v1832
        %v1847 = vmul.f32 %v1601, %v1832
        %v1848 = vmul.f32 %v1602, %v1832
        %v1849 = vmul.f32 %v1603, %v1832
        %v1850 = vmul.f32 %v1604, %v1832
        %v1851 = vmul.f32 %v1605, %v1832
        %v1852 = vmul.f32 %v1606, %v1832
        %v1853 = vmul.f32 %v1607, %v1832
        %v1854 = vmul.f32 %v1608, %v1832
        %v1855 = vmul.f32 %v1609, %v1832
        %v1856 = vmul.f32 %v1610, %v1832
        %v1857 = vmul.f32 %v1611, %v1832
        %v1858 = vmul.f32 %v1612, %v1832
        %v1859 = vmul.f32 %v1613, %v1832
        %v1860 = vmul.f32 %v1614, %v1832
        %v1861 = vmul.f32 %v1615, %v1832
        %v1862 = vmul.f32 %v1616, %v1832
        %v1863 = vmul.f32 %v1617, %v1832
        %v1864 = vmul.f32 %v1618, %v1832
        %v1865 = vadd.f32 %v1797, %v1833
        %v1866 = vadd.f32 %v1798, %v1834
        %v1867 = vadd.f32 %v1799, %v1835
        %v1868 = vadd.f32 %v1800, %v1836
        %v1869 = vadd.f32 %v1801, %v1837
        %v1870 = vadd.f32 %v1802, %v1838
        %v1871 = vadd.f32 %v1803, %v1839
        %v1872 = vadd.f32 %v1804, %v1840
        %v1873 = vadd.f32 %v1805, %v1841
        %v1874 = vadd.f32 %v1806, %v1842
        %v1875 = vadd.f32 %v1807, %v1843
        %v1876 = vadd.f32 %v1808, %v1844
        %v1877 = vadd.f32 %v1809, %v1845
        %v1878 = vadd.f32 %v1810, %v1846
        %v1879 = vadd.f32 %v1811, %v1847
        %v1880 = vadd.f32 %v1812, %v1848
        %v1881 = vadd.f32 %v1813, %v1849
        %v1882 = vadd.f32 %v1814, %v1850
        %v1883 = vadd.f32 %v1815, %v1851
        %v1884 = vadd.f32 %v1816, %v1852
        %v1885 = vadd.f32 %v1817, %v1853
        %v1886 = vadd.f32 %v1818, %v1854
        %v1887 = vadd.f32 %v1819, %v1855
        %v1888 = vadd.f32 %v1820, %v1856
        %v1889 = vadd.f32 %v1821, %v1857
        %v1890 = vadd.f32 %v1822, %v1858
        %v1891 = vadd.f32 %v1823, %v1859
        %v1892 = vadd.f32 %v1824, %v1860
        %v1893 = vadd.f32 %v1825, %v1861
        %v1894 = vadd.f32 %v1826, %v1862
        %v1895 = vadd.f32 %v1827, %v1863
        %v1896 = vadd.f32 %v1828, %v1864
        %v1897 = vlaneseq
        %v1898 = vshrl.u32 %v1897, 7
        %v1899 = vsub.s32 6, %v1898
        %v1900 = vrot.slane %v537, %v1899
        %v1901 = vmul.f32 %v1589, %v1900
        %v1902 = vmul.f32 %v1590, %v1900
        %v1903 = vmul.f32 %v1591, %v1900
        %v1904 = vmul.f32 %v1592, %v1900
        %v1905 = vmul.f32 %v1593, %v1900
        %v1906 = vmul.f32 %v1594, %v1900
        %v1907 = vmul.f32 %v1595, %v1900
        %v1908 = vmul.f32 %v1596, %v1900
        %v1909 = vmul.f32 %v1597, %v1900
        %v1910 = vmul.f32 %v1598, %v1900
        %v1911 = vmul.f32 %v1599, %v1900
        %v1912 = vmul.f32 %v1600, %v1900
        %v1913 = vmul.f32 %v1601, %v1900
        %v1914 = vmul.f32 %v1602, %v1900
        %v1915 = vmul.f32 %v1603, %v1900
        %v1916 = vmul.f32 %v1604, %v1900
        %v1917 = vmul.f32 %v1605, %v1900
        %v1918 = vmul.f32 %v1606, %v1900
        %v1919 = vmul.f32 %v1607, %v1900
        %v1920 = vmul.f32 %v1608, %v1900
        %v1921 = vmul.f32 %v1609, %v1900
        %v1922 = vmul.f32 %v1610, %v1900
        %v1923 = vmul.f32 %v1611, %v1900
        %v1924 = vmul.f32 %v1612, %v1900
        %v1925 = vmul.f32 %v1613, %v1900
        %v1926 = vmul.f32 %v1614, %v1900
        %v1927 = vmul.f32 %v1615, %v1900
        %v1928 = vmul.f32 %v1616, %v1900
        %v1929 = vmul.f32 %v1617, %v1900
        %v1930 = vmul.f32 %v1618, %v1900
        %v1931 = vmul.f32 %v1619, %v1900
        %v1932 = vmul.f32 %v1620, %v1900
        %v1933 = vadd.f32 %v1865, %v1901
        %v1934 = vadd.f32 %v1866, %v1902
        %v1935 = vadd.f32 %v1867, %v1903
        %v1936 = vadd.f32 %v1868, %v1904
        %v1937 = vadd.f32 %v1869, %v1905
        %v1938 = vadd.f32 %v1870, %v1906
        %v1939 = vadd.f32 %v1871, %v1907
        %v1940 = vadd.f32 %v1872, %v1908
        %v1941 = vadd.f32 %v1873, %v1909
        %v1942 = vadd.f32 %v1874, %v1910
        %v1943 = vadd.f32 %v1875, %v1911
        %v1944 = vadd.f32 %v1876, %v1912
        %v1945 = vadd.f32 %v1877, %v1913
        %v1946 = vadd.f32 %v1878, %v1914
        %v1947 = vadd.f32 %v1879, %v1915
        %v1948 = vadd.f32 %v1880, %v1916
        %v1949 = vadd.f32 %v1881, %v1917
        %v1950 = vadd.f32 %v1882, %v1918
        %v1951 = vadd.f32 %v1883, %v1919
        %v1952 = vadd.f32 %v1884, %v1920
        %v1953 = vadd.f32 %v1885, %v1921
        %v1954 = vadd.f32 %v1886, %v1922
        %v1955 = vadd.f32 %v1887, %v1923
        %v1956 = vadd.f32 %v1888, %v1924
        %v1957 = vadd.f32 %v1889, %v1925
        %v1958 = vadd.f32 %v1890, %v1926
        %v1959 = vadd.f32 %v1891, %v1927
        %v1960 = vadd.f32 %v1892, %v1928
        %v1961 = vadd.f32 %v1893, %v1929
        %v1962 = vadd.f32 %v1894, %v1930
        %v1963 = vadd.f32 %v1895, %v1931
        %v1964 = vadd.f32 %v1896, %v1932
        %v1965 = vlaneseq
        %v1966 = vshrl.u32 %v1965, 7
        %v1967 = vsub.s32 5, %v1966
        %v1968 = vrot.slane %v538, %v1967
        %v1969 = vmul.f32 %v1591, %v1968
        %v1970 = vmul.f32 %v1592, %v1968
        %v1971 = vmul.f32 %v1593, %v1968
        %v1972 = vmul.f32 %v1594, %v1968
        %v1973 = vmul.f32 %v1595, %v1968
        %v1974 = vmul.f32 %v1596, %v1968
        %v1975 = vmul.f32 %v1597, %v1968
        %v1976 = vmul.f32 %v1598, %v1968
        %v1977 = vmul.f32 %v1599, %v1968
        %v1978 = vmul.f32 %v1600, %v1968
        %v1979 = vmul.f32 %v1601, %v1968
        %v1980 = vmul.f32 %v1602, %v1968
        %v1981 = vmul.f32 %v1603, %v1968
        %v1982 = vmul.f32 %v1604, %v1968
        %v1983 = vmul.f32 %v1605, %v1968
        %v1984 = vmul.f32 %v1606, %v1968
        %v1985 = vmul.f32 %v1607, %v1968
        %v1986 = vmul.f32 %v1608, %v1968
        %v1987 = vmul.f32 %v1609, %v1968
        %v1988 = vmul.f32 %v1610, %v1968
        %v1989 = vmul.f32 %v1611, %v1968
        %v1990 = vmul.f32 %v1612, %v1968
        %v1991 = vmul.f32 %v1613, %v1968
        %v1992 = vmul.f32 %v1614, %v1968
        %v1993 = vmul.f32 %v1615, %v1968
        %v1994 = vmul.f32 %v1616, %v1968
        %v1995 = vmul.f32 %v1617, %v1968
        %v1996 = vmul.f32 %v1618, %v1968
        %v1997 = vmul.f32 %v1619, %v1968
        %v1998 = vmul.f32 %v1620, %v1968
        %v1999 = vmul.f32 %v1621, %v1968
        %v2000 = vmul.f32 %v1622, %v1968
        %v2001 = vadd.f32 %v1933, %v1969
        %v2002 = vadd.f32 %v1934, %v1970
        %v2003 = vadd.f32 %v1935, %v1971
        %v2004 = vadd.f32 %v1936, %v1972
        %v2005 = vadd.f32 %v1937, %v1973
        %v2006 = vadd.f32 %v1938, %v1974
        %v2007 = vadd.f32 %v1939, %v1975
        %v2008 = vadd.f32 %v1940, %v1976
        %v2009 = vadd.f32 %v1941, %v1977
        %v2010 = vadd.f32 %v1942, %v1978
        %v2011 = vadd.f32 %v1943, %v1979
        %v2012 = vadd.f32 %v1944, %v1980
        %v2013 = vadd.f32 %v1945, %v1981
        %v2014 = vadd.f32 %v1946, %v1982
        %v2015 = vadd.f32 %v1947, %v1983
        %v2016 = vadd.f32 %v1948, %v1984
        %v2017 = vadd.f32 %v1949, %v1985
        %v2018 = vadd.f32 %v1950, %v1986
        %v2019 = vadd.f32 %v1951, %v1987
        %v2020 = vadd.f32 %v1952, %v1988
        %v2021 = vadd.f32 %v1953, %v1989
        %v2022 = vadd.f32 %v1954, %v1990
        %v2023 = vadd.f32 %v1955, %v1991
        %v2024 = vadd.f32 %v1956, %v1992
        %v2025 = vadd.f32 %v1957, %v1993
        %v2026 = vadd.f32 %v1958, %v1994
        %v2027 = vadd.f32 %v1959, %v1995
        %v2028 = vadd.f32 %v1960, %v1996
        %v2029 = vadd.f32 %v1961, %v1997
        %v2030 = vadd.f32 %v1962, %v1998
        %v2031 = vadd.f32 %v1963, %v1999
        %v2032 = vadd.f32 %v1964, %v2000
        %v2033 = vlaneseq
        %v2034 = vshrl.u32 %v2033, 7
        %v2035 = vsub.s32 4, %v2034
        %v2036 = vrot.slane %v539, %v2035
        %v2037 = vmul.f32 %v1593, %v2036
        %v2038 = vmul.f32 %v1594, %v2036
        %v2039 = vmul.f32 %v1595, %v2036
        %v2040 = vmul.f32 %v1596, %v2036
        %v2041 = vmul.f32 %v1597, %v2036
        %v2042 = vmul.f32 %v1598, %v2036
        %v2043 = vmul.f32 %v1599, %v2036
        %v2044 = vmul.f32 %v1600, %v2036
        %v2045 = vmul.f32 %v1601, %v2036
        %v2046 = vmul.f32 %v1602, %v2036
        %v2047 = vmul.f32 %v1603, %v2036
        %v2048 = vmul.f32 %v1604, %v2036
        %v2049 = vmul.f32 %v1605, %v2036
        %v2050 = vmul.f32 %v1606, %v2036
        %v2051 = vmul.f32 %v1607, %v2036
        %v2052 = vmul.f32 %v1608, %v2036
        %v2053 = vmul.f32 %v1609, %v2036
        %v2054 = vmul.f32 %v1610, %v2036
        %v2055 = vmul.f32 %v1611, %v2036
        %v2056 = vmul.f32 %v1612, %v2036
        %v2057 = vmul.f32 %v1613, %v2036
        %v2058 = vmul.f32 %v1614, %v2036
        %v2059 = vmul.f32 %v1615, %v2036
        %v2060 = vmul.f32 %v1616, %v2036
        %v2061 = vmul.f32 %v1617, %v2036
        %v2062 = vmul.f32 %v1618, %v2036
        %v2063 = vmul.f32 %v1619, %v2036
        %v2064 = vmul.f32 %v1620, %v2036
        %v2065 = vmul.f32 %v1621, %v2036
        %v2066 = vmul.f32 %v1622, %v2036
        %v2067 = vmul.f32 %v1623, %v2036
        %v2068 = vmul.f32 %v1624, %v2036
        %v2069 = vadd.f32 %v2001, %v2037
        %v2070 = vadd.f32 %v2002, %v2038
        %v2071 = vadd.f32 %v2003, %v2039
        %v2072 = vadd.f32 %v2004, %v2040
        %v2073 = vadd.f32 %v2005, %v2041
        %v2074 = vadd.f32 %v2006, %v2042
        %v2075 = vadd.f32 %v2007, %v2043
        %v2076 = vadd.f32 %v2008, %v2044
        %v2077 = vadd.f32 %v2009, %v2045
        %v2078 = vadd.f32 %v2010, %v2046
        %v2079 = vadd.f32 %v2011, %v2047
        %v2080 = vadd.f32 %v2012, %v2048
        %v2081 = vadd.f32 %v2013, %v2049
        %v2082 = vadd.f32 %v2014, %v2050
        %v2083 = vadd.f32 %v2015, %v2051
        %v2084 = vadd.f32 %v2016, %v2052
        %v2085 = vadd.f32 %v2017, %v2053
        %v2086 = vadd.f32 %v2018, %v2054
        %v2087 = vadd.f32 %v2019, %v2055
        %v2088 = vadd.f32 %v2020, %v2056
        %v2089 = vadd.f32 %v2021, %v2057
        %v2090 = vadd.f32 %v2022, %v2058
        %v2091 = vadd.f32 %v2023, %v2059
        %v2092 = vadd.f32 %v2024, %v2060
        %v2093 = vadd.f32 %v2025, %v2061
        %v2094 = vadd.f32 %v2026, %v2062
        %v2095 = vadd.f32 %v2027, %v2063
        %v2096 = vadd.f32 %v2028, %v2064
        %v2097 = vadd.f32 %v2029, %v2065
        %v2098 = vadd.f32 %v2030, %v2066
        %v2099 = vadd.f32 %v2031, %v2067
        %v2100 = vadd.f32 %v2032, %v2068
        %v2101 = vld [vmem:[#allocation2 + $0x8] sm:$0xff]
        %v2102 = vld [vmem:[#allocation2 + $0x10] sm:$0xff]
        %v2103 = vld [vmem:[#allocation2 + $0x28] sm:$0xff]
        %v2104 = vld [vmem:[#allocation2 + $0x30] sm:$0xff]
        %v2105 = vld [vmem:[#allocation2 + $0x48] sm:$0xff]
        %v2106 = vld [vmem:[#allocation2 + $0x50] sm:$0xff]
        %v2107 = vld [vmem:[#allocation2 + $0x68] sm:$0xff]
        %v2108 = vld [vmem:[#allocation2 + $0x70] sm:$0xff]
        %v2109 = vld [vmem:[#allocation2 + $0x88] sm:$0xff]
        %v2110 = vld [vmem:[#allocation2 + $0x90] sm:$0xff]
        %v2111 = vld [vmem:[#allocation2 + $0xa8] sm:$0xff]
        %v2112 = vld [vmem:[#allocation2 + $0xb0] sm:$0xff]
        %v2113 = vld [vmem:[#allocation2 + $0xc8] sm:$0xff]
        %v2114 = vld [vmem:[#allocation2 + $0xd0] sm:$0xff]
        %v2115 = vld [vmem:[#allocation2 + $0xe8] sm:$0xff]
        %v2116 = vld [vmem:[#allocation2 + $0xf0] sm:$0xff]
        %v2117 = vld [vmem:[#allocation2 + $0x108] sm:$0xff]
        %v2118 = vld [vmem:[#allocation2 + $0x110] sm:$0xff]
        %v2119 = vld [vmem:[#allocation2 + $0x128] sm:$0xff]
        %v2120 = vld [vmem:[#allocation2 + $0x130] sm:$0xff]
        %v2121 = vld [vmem:[#allocation2 + $0x148] sm:$0xff]
        %v2122 = vld [vmem:[#allocation2 + $0x150] sm:$0xff]
        %v2123 = vld [vmem:[#allocation2 + $0x168] sm:$0xff]
        %v2124 = vld [vmem:[#allocation2 + $0x170] sm:$0xff]
        %v2125 = vld [vmem:[#allocation2 + $0x188] sm:$0xff]
        %v2126 = vld [vmem:[#allocation2 + $0x190] sm:$0xff]
        %v2127 = vld [vmem:[#allocation2 + $0x1a8] sm:$0xff]
        %v2128 = vld [vmem:[#allocation2 + $0x1b0] sm:$0xff]
        %v2129 = vld [vmem:[#allocation2 + $0x1c8] sm:$0xff]
        %v2130 = vld [vmem:[#allocation2 + $0x1d0] sm:$0xff]
        %v2131 = vld [vmem:[#allocation2 + $0x1e8] sm:$0xff]
        %v2132 = vld [vmem:[#allocation2 + $0x1f0] sm:$0xff]
        %v2133 = vld [vmem:[#allocation2 + $0x208] sm:$0xff]
        %v2134 = vld [vmem:[#allocation2 + $0x210] sm:$0xff]
        %v2135 = vld [vmem:[#allocation2 + $0x228] sm:$0xff]
        %v2136 = vld [vmem:[#allocation2 + $0x230] sm:$0xff]
        %v2137 = vld [vmem:[#allocation2 + $0x248] sm:$0xff]
        %v2138 = vld [vmem:[#allocation2 + $0x250] sm:$0xff]
        %v2139 = vld [vmem:[#allocation2 + $0x268] sm:$0xff]
        %v2140 = vld [vmem:[#allocation2 + $0x270] sm:$0xff]
        %v2141 = vld [vmem:[#allocation2 + $0x288] sm:$0xff]
        %v2142 = vld [vmem:[#allocation2 + $0x290] sm:$0xff]
        %v2143 = vld [vmem:[#allocation2 + $0x2a8] sm:$0xff]
        %v2144 = vld [vmem:[#allocation2 + $0x2b0] sm:$0xff]
        %v2145 = vlaneseq
        %v2146 = vshrl.u32 %v2145, 7
        %v2147 = vsub.s32 3, %v2146
        %v2148 = vrot.slane %v534, %v2147
        %v2149 = vmul.f32 %v2101, %v2148
        %v2150 = vmul.f32 %v2102, %v2148
        %v2151 = vmul.f32 %v2103, %v2148
        %v2152 = vmul.f32 %v2104, %v2148
        %v2153 = vmul.f32 %v2105, %v2148
        %v2154 = vmul.f32 %v2106, %v2148
        %v2155 = vmul.f32 %v2107, %v2148
        %v2156 = vmul.f32 %v2108, %v2148
        %v2157 = vmul.f32 %v2109, %v2148
        %v2158 = vmul.f32 %v2110, %v2148
        %v2159 = vmul.f32 %v2111, %v2148
        %v2160 = vmul.f32 %v2112, %v2148
        %v2161 = vmul.f32 %v2113, %v2148
        %v2162 = vmul.f32 %v2114, %v2148
        %v2163 = vmul.f32 %v2115, %v2148
        %v2164 = vmul.f32 %v2116, %v2148
        %v2165 = vmul.f32 %v2117, %v2148
        %v2166 = vmul.f32 %v2118, %v2148
        %v2167 = vmul.f32 %v2119, %v2148
        %v2168 = vmul.f32 %v2120, %v2148
        %v2169 = vmul.f32 %v2121, %v2148
        %v2170 = vmul.f32 %v2122, %v2148
        %v2171 = vmul.f32 %v2123, %v2148
        %v2172 = vmul.f32 %v2124, %v2148
        %v2173 = vmul.f32 %v2125, %v2148
        %v2174 = vmul.f32 %v2126, %v2148
        %v2175 = vmul.f32 %v2127, %v2148
        %v2176 = vmul.f32 %v2128, %v2148
        %v2177 = vmul.f32 %v2129, %v2148
        %v2178 = vmul.f32 %v2130, %v2148
        %v2179 = vmul.f32 %v2131, %v2148
        %v2180 = vmul.f32 %v2132, %v2148
        %v2181 = vadd.f32 %v2069, %v2149
        %v2182 = vadd.f32 %v2070, %v2150
        %v2183 = vadd.f32 %v2071, %v2151
        %v2184 = vadd.f32 %v2072, %v2152
        %v2185 = vadd.f32 %v2073, %v2153
        %v2186 = vadd.f32 %v2074, %v2154
        %v2187 = vadd.f32 %v2075, %v2155
        %v2188 = vadd.f32 %v2076, %v2156
        %v2189 = vadd.f32 %v2077, %v2157
        %v2190 = vadd.f32 %v2078, %v2158
        %v2191 = vadd.f32 %v2079, %v2159
        %v2192 = vadd.f32 %v2080, %v2160
        %v2193 = vadd.f32 %v2081, %v2161
        %v2194 = vadd.f32 %v2082, %v2162
        %v2195 = vadd.f32 %v2083, %v2163
        %v2196 = vadd.f32 %v2084, %v2164
        %v2197 = vadd.f32 %v2085, %v2165
        %v2198 = vadd.f32 %v2086, %v2166
        %v2199 = vadd.f32 %v2087, %v2167
        %v2200 = vadd.f32 %v2088, %v2168
        %v2201 = vadd.f32 %v2089, %v2169
        %v2202 = vadd.f32 %v2090, %v2170
        %v2203 = vadd.f32 %v2091, %v2171
        %v2204 = vadd.f32 %v2092, %v2172
        %v2205 = vadd.f32 %v2093, %v2173
        %v2206 = vadd.f32 %v2094, %v2174
        %v2207 = vadd.f32 %v2095, %v2175
        %v2208 = vadd.f32 %v2096, %v2176
        %v2209 = vadd.f32 %v2097, %v2177
        %v2210 = vadd.f32 %v2098, %v2178
        %v2211 = vadd.f32 %v2099, %v2179
        %v2212 = vadd.f32 %v2100, %v2180
        %v2213 = vlaneseq
        %v2214 = vshrl.u32 %v2213, 7
        %v2215 = vsub.s32 2, %v2214
        %v2216 = vrot.slane %v535, %v2215
        %v2217 = vmul.f32 %v2103, %v2216
        %v2218 = vmul.f32 %v2104, %v2216
        %v2219 = vmul.f32 %v2105, %v2216
        %v2220 = vmul.f32 %v2106, %v2216
        %v2221 = vmul.f32 %v2107, %v2216
        %v2222 = vmul.f32 %v2108, %v2216
        %v2223 = vmul.f32 %v2109, %v2216
        %v2224 = vmul.f32 %v2110, %v2216
        %v2225 = vmul.f32 %v2111, %v2216
        %v2226 = vmul.f32 %v2112, %v2216
        %v2227 = vmul.f32 %v2113, %v2216
        %v2228 = vmul.f32 %v2114, %v2216
        %v2229 = vmul.f32 %v2115, %v2216
        %v2230 = vmul.f32 %v2116, %v2216
        %v2231 = vmul.f32 %v2117, %v2216
        %v2232 = vmul.f32 %v2118, %v2216
        %v2233 = vmul.f32 %v2119, %v2216
        %v2234 = vmul.f32 %v2120, %v2216
        %v2235 = vmul.f32 %v2121, %v2216
        %v2236 = vmul.f32 %v2122, %v2216
        %v2237 = vmul.f32 %v2123, %v2216
        %v2238 = vmul.f32 %v2124, %v2216
        %v2239 = vmul.f32 %v2125, %v2216
        %v2240 = vmul.f32 %v2126, %v2216
        %v2241 = vmul.f32 %v2127, %v2216
        %v2242 = vmul.f32 %v2128, %v2216
        %v2243 = vmul.f32 %v2129, %v2216
        %v2244 = vmul.f32 %v2130, %v2216
        %v2245 = vmul.f32 %v2131, %v2216
        %v2246 = vmul.f32 %v2132, %v2216
        %v2247 = vmul.f32 %v2133, %v2216
        %v2248 = vmul.f32 %v2134, %v2216
        %v2249 = vadd.f32 %v2181, %v2217
        %v2250 = vadd.f32 %v2182, %v2218
        %v2251 = vadd.f32 %v2183, %v2219
        %v2252 = vadd.f32 %v2184, %v2220
        %v2253 = vadd.f32 %v2185, %v2221
        %v2254 = vadd.f32 %v2186, %v2222
        %v2255 = vadd.f32 %v2187, %v2223
        %v2256 = vadd.f32 %v2188, %v2224
        %v2257 = vadd.f32 %v2189, %v2225
        %v2258 = vadd.f32 %v2190, %v2226
        %v2259 = vadd.f32 %v2191, %v2227
        %v2260 = vadd.f32 %v2192, %v2228
        %v2261 = vadd.f32 %v2193, %v2229
        %v2262 = vadd.f32 %v2194, %v2230
        %v2263 = vadd.f32 %v2195, %v2231
        %v2264 = vadd.f32 %v2196, %v2232
        %v2265 = vadd.f32 %v2197, %v2233
        %v2266 = vadd.f32 %v2198, %v2234
        %v2267 = vadd.f32 %v2199, %v2235
        %v2268 = vadd.f32 %v2200, %v2236
        %v2269 = vadd.f32 %v2201, %v2237
        %v2270 = vadd.f32 %v2202, %v2238
        %v2271 = vadd.f32 %v2203, %v2239
        %v2272 = vadd.f32 %v2204, %v2240
        %v2273 = vadd.f32 %v2205, %v2241
        %v2274 = vadd.f32 %v2206, %v2242
        %v2275 = vadd.f32 %v2207, %v2243
        %v2276 = vadd.f32 %v2208, %v2244
        %v2277 = vadd.f32 %v2209, %v2245
        %v2278 = vadd.f32 %v2210, %v2246
        %v2279 = vadd.f32 %v2211, %v2247
        %v2280 = vadd.f32 %v2212, %v2248
        %v2281 = vlaneseq
        %v2282 = vshrl.u32 %v2281, 7
        %v2283 = vsub.s32 1, %v2282
        %v2284 = vrot.slane %v536, %v2283
        %v2285 = vmul.f32 %v2105, %v2284
        %v2286 = vmul.f32 %v2106, %v2284
        %v2287 = vmul.f32 %v2107, %v2284
        %v2288 = vmul.f32 %v2108, %v2284
        %v2289 = vmul.f32 %v2109, %v2284
        %v2290 = vmul.f32 %v2110, %v2284
        %v2291 = vmul.f32 %v2111, %v2284
        %v2292 = vmul.f32 %v2112, %v2284
        %v2293 = vmul.f32 %v2113, %v2284
        %v2294 = vmul.f32 %v2114, %v2284
        %v2295 = vmul.f32 %v2115, %v2284
        %v2296 = vmul.f32 %v2116, %v2284
        %v2297 = vmul.f32 %v2117, %v2284
        %v2298 = vmul.f32 %v2118, %v2284
        %v2299 = vmul.f32 %v2119, %v2284
        %v2300 = vmul.f32 %v2120, %v2284
        %v2301 = vmul.f32 %v2121, %v2284
        %v2302 = vmul.f32 %v2122, %v2284
        %v2303 = vmul.f32 %v2123, %v2284
        %v2304 = vmul.f32 %v2124, %v2284
        %v2305 = vmul.f32 %v2125, %v2284
        %v2306 = vmul.f32 %v2126, %v2284
        %v2307 = vmul.f32 %v2127, %v2284
        %v2308 = vmul.f32 %v2128, %v2284
        %v2309 = vmul.f32 %v2129, %v2284
        %v2310 = vmul.f32 %v2130, %v2284
        %v2311 = vmul.f32 %v2131, %v2284
        %v2312 = vmul.f32 %v2132, %v2284
        %v2313 = vmul.f32 %v2133, %v2284
        %v2314 = vmul.f32 %v2134, %v2284
        %v2315 = vmul.f32 %v2135, %v2284
        %v2316 = vmul.f32 %v2136, %v2284
        %v2317 = vadd.f32 %v2249, %v2285
        %v2318 = vadd.f32 %v2250, %v2286
        %v2319 = vadd.f32 %v2251, %v2287
        %v2320 = vadd.f32 %v2252, %v2288
        %v2321 = vadd.f32 %v2253, %v2289
        %v2322 = vadd.f32 %v2254, %v2290
        %v2323 = vadd.f32 %v2255, %v2291
        %v2324 = vadd.f32 %v2256, %v2292
        %v2325 = vadd.f32 %v2257, %v2293
        %v2326 = vadd.f32 %v2258, %v2294
        %v2327 = vadd.f32 %v2259, %v2295
        %v2328 = vadd.f32 %v2260, %v2296
        %v2329 = vadd.f32 %v2261, %v2297
        %v2330 = vadd.f32 %v2262, %v2298
        %v2331 = vadd.f32 %v2263, %v2299
        %v2332 = vadd.f32 %v2264, %v2300
        %v2333 = vadd.f32 %v2265, %v2301
        %v2334 = vadd.f32 %v2266, %v2302
        %v2335 = vadd.f32 %v2267, %v2303
        %v2336 = vadd.f32 %v2268, %v2304
        %v2337 = vadd.f32 %v2269, %v2305
        %v2338 = vadd.f32 %v2270, %v2306
        %v2339 = vadd.f32 %v2271, %v2307
        %v2340 = vadd.f32 %v2272, %v2308
        %v2341 = vadd.f32 %v2273, %v2309
        %v2342 = vadd.f32 %v2274, %v2310
        %v2343 = vadd.f32 %v2275, %v2311
        %v2344 = vadd.f32 %v2276, %v2312
        %v2345 = vadd.f32 %v2277, %v2313
        %v2346 = vadd.f32 %v2278, %v2314
        %v2347 = vadd.f32 %v2279, %v2315
        %v2348 = vadd.f32 %v2280, %v2316
        %v2349 = vlaneseq
        %v2350 = vshrl.u32 %v2349, 7
        %v2351 = vsub.s32 0, %v2350
        %v2352 = vrot.slane %v537, %v2351
        %v2353 = vmul.f32 %v2107, %v2352
        %v2354 = vmul.f32 %v2108, %v2352
        %v2355 = vmul.f32 %v2109, %v2352
        %v2356 = vmul.f32 %v2110, %v2352
        %v2357 = vmul.f32 %v2111, %v2352
        %v2358 = vmul.f32 %v2112, %v2352
        %v2359 = vmul.f32 %v2113, %v2352
        %v2360 = vmul.f32 %v2114, %v2352
        %v2361 = vmul.f32 %v2115, %v2352
        %v2362 = vmul.f32 %v2116, %v2352
        %v2363 = vmul.f32 %v2117, %v2352
        %v2364 = vmul.f32 %v2118, %v2352
        %v2365 = vmul.f32 %v2119, %v2352
        %v2366 = vmul.f32 %v2120, %v2352
        %v2367 = vmul.f32 %v2121, %v2352
        %v2368 = vmul.f32 %v2122, %v2352
        %v2369 = vmul.f32 %v2123, %v2352
        %v2370 = vmul.f32 %v2124, %v2352
        %v2371 = vmul.f32 %v2125, %v2352
        %v2372 = vmul.f32 %v2126, %v2352
        %v2373 = vmul.f32 %v2127, %v2352
        %v2374 = vmul.f32 %v2128, %v2352
        %v2375 = vmul.f32 %v2129, %v2352
        %v2376 = vmul.f32 %v2130, %v2352
        %v2377 = vmul.f32 %v2131, %v2352
        %v2378 = vmul.f32 %v2132, %v2352
        %v2379 = vmul.f32 %v2133, %v2352
        %v2380 = vmul.f32 %v2134, %v2352
        %v2381 = vmul.f32 %v2135, %v2352
        %v2382 = vmul.f32 %v2136, %v2352
        %v2383 = vmul.f32 %v2137, %v2352
        %v2384 = vmul.f32 %v2138, %v2352
        %v2385 = vadd.f32 %v2317, %v2353
        %v2386 = vadd.f32 %v2318, %v2354
        %v2387 = vadd.f32 %v2319, %v2355
        %v2388 = vadd.f32 %v2320, %v2356
        %v2389 = vadd.f32 %v2321, %v2357
        %v2390 = vadd.f32 %v2322, %v2358
        %v2391 = vadd.f32 %v2323, %v2359
        %v2392 = vadd.f32 %v2324, %v2360
        %v2393 = vadd.f32 %v2325, %v2361
        %v2394 = vadd.f32 %v2326, %v2362
        %v2395 = vadd.f32 %v2327, %v2363
        %v2396 = vadd.f32 %v2328, %v2364
        %v2397 = vadd.f32 %v2329, %v2365
        %v2398 = vadd.f32 %v2330, %v2366
        %v2399 = vadd.f32 %v2331, %v2367
        %v2400 = vadd.f32 %v2332, %v2368
        %v2401 = vadd.f32 %v2333, %v2369
        %v2402 = vadd.f32 %v2334, %v2370
        %v2403 = vadd.f32 %v2335, %v2371
        %v2404 = vadd.f32 %v2336, %v2372
        %v2405 = vadd.f32 %v2337, %v2373
        %v2406 = vadd.f32 %v2338, %v2374
        %v2407 = vadd.f32 %v2339, %v2375
        %v2408 = vadd.f32 %v2340, %v2376
        %v2409 = vadd.f32 %v2341, %v2377
        %v2410 = vadd.f32 %v2342, %v2378
        %v2411 = vadd.f32 %v2343, %v2379
        %v2412 = vadd.f32 %v2344, %v2380
        %v2413 = vadd.f32 %v2345, %v2381
        %v2414 = vadd.f32 %v2346, %v2382
        %v2415 = vadd.f32 %v2347, %v2383
        %v2416 = vadd.f32 %v2348, %v2384
        %v2417 = vlaneseq
        %v2418 = vshrl.u32 %v2417, 7
        %v2419 = vsub.s32 7, %v2418
        %v2420 = vrot.slane %v537, %v2419
        %v2421 = vmul.f32 %v2109, %v2420
        %v2422 = vmul.f32 %v2110, %v2420
        %v2423 = vmul.f32 %v2111, %v2420
        %v2424 = vmul.f32 %v2112, %v2420
        %v2425 = vmul.f32 %v2113, %v2420
        %v2426 = vmul.f32 %v2114, %v2420
        %v2427 = vmul.f32 %v2115, %v2420
        %v2428 = vmul.f32 %v2116, %v2420
        %v2429 = vmul.f32 %v2117, %v2420
        %v2430 = vmul.f32 %v2118, %v2420
        %v2431 = vmul.f32 %v2119, %v2420
        %v2432 = vmul.f32 %v2120, %v2420
        %v2433 = vmul.f32 %v2121, %v2420
        %v2434 = vmul.f32 %v2122, %v2420
        %v2435 = vmul.f32 %v2123, %v2420
        %v2436 = vmul.f32 %v2124, %v2420
        %v2437 = vmul.f32 %v2125, %v2420
        %v2438 = vmul.f32 %v2126, %v2420
        %v2439 = vmul.f32 %v2127, %v2420
        %v2440 = vmul.f32 %v2128, %v2420
        %v2441 = vmul.f32 %v2129, %v2420
        %v2442 = vmul.f32 %v2130, %v2420
        %v2443 = vmul.f32 %v2131, %v2420
        %v2444 = vmul.f32 %v2132, %v2420
        %v2445 = vmul.f32 %v2133, %v2420
        %v2446 = vmul.f32 %v2134, %v2420
        %v2447 = vmul.f32 %v2135, %v2420
        %v2448 = vmul.f32 %v2136, %v2420
        %v2449 = vmul.f32 %v2137, %v2420
        %v2450 = vmul.f32 %v2138, %v2420
        %v2451 = vmul.f32 %v2139, %v2420
        %v2452 = vmul.f32 %v2140, %v2420
        %v2453 = vadd.f32 %v2385, %v2421
        %v2454 = vadd.f32 %v2386, %v2422
        %v2455 = vadd.f32 %v2387, %v2423
        %v2456 = vadd.f32 %v2388, %v2424
        %v2457 = vadd.f32 %v2389, %v2425
        %v2458 = vadd.f32 %v2390, %v2426
        %v2459 = vadd.f32 %v2391, %v2427
        %v2460 = vadd.f32 %v2392, %v2428
        %v2461 = vadd.f32 %v2393, %v2429
        %v2462 = vadd.f32 %v2394, %v2430
        %v2463 = vadd.f32 %v2395, %v2431
        %v2464 = vadd.f32 %v2396, %v2432
        %v2465 = vadd.f32 %v2397, %v2433
        %v2466 = vadd.f32 %v2398, %v2434
        %v2467 = vadd.f32 %v2399, %v2435
        %v2468 = vadd.f32 %v2400, %v2436
        %v2469 = vadd.f32 %v2401, %v2437
        %v2470 = vadd.f32 %v2402, %v2438
        %v2471 = vadd.f32 %v2403, %v2439
        %v2472 = vadd.f32 %v2404, %v2440
        %v2473 = vadd.f32 %v2405, %v2441
        %v2474 = vadd.f32 %v2406, %v2442
        %v2475 = vadd.f32 %v2407, %v2443
        %v2476 = vadd.f32 %v2408, %v2444
        %v2477 = vadd.f32 %v2409, %v2445
        %v2478 = vadd.f32 %v2410, %v2446
        %v2479 = vadd.f32 %v2411, %v2447
        %v2480 = vadd.f32 %v2412, %v2448
        %v2481 = vadd.f32 %v2413, %v2449
        %v2482 = vadd.f32 %v2414, %v2450
        %v2483 = vadd.f32 %v2415, %v2451
        %v2484 = vadd.f32 %v2416, %v2452
        %v2485 = vlaneseq
        %v2486 = vshrl.u32 %v2485, 7
        %v2487 = vsub.s32 6, %v2486
        %v2488 = vrot.slane %v538, %v2487
        %v2489 = vmul.f32 %v2111, %v2488
        %v2490 = vmul.f32 %v2112, %v2488
        %v2491 = vmul.f32 %v2113, %v2488
        %v2492 = vmul.f32 %v2114, %v2488
        %v2493 = vmul.f32 %v2115, %v2488
        %v2494 = vmul.f32 %v2116, %v2488
        %v2495 = vmul.f32 %v2117, %v2488
        %v2496 = vmul.f32 %v2118, %v2488
        %v2497 = vmul.f32 %v2119, %v2488
        %v2498 = vmul.f32 %v2120, %v2488
        %v2499 = vmul.f32 %v2121, %v2488
        %v2500 = vmul.f32 %v2122, %v2488
        %v2501 = vmul.f32 %v2123, %v2488
        %v2502 = vmul.f32 %v2124, %v2488
        %v2503 = vmul.f32 %v2125, %v2488
        %v2504 = vmul.f32 %v2126, %v2488
        %v2505 = vmul.f32 %v2127, %v2488
        %v2506 = vmul.f32 %v2128, %v2488
        %v2507 = vmul.f32 %v2129, %v2488
        %v2508 = vmul.f32 %v2130, %v2488
        %v2509 = vmul.f32 %v2131, %v2488
        %v2510 = vmul.f32 %v2132, %v2488
        %v2511 = vmul.f32 %v2133, %v2488
        %v2512 = vmul.f32 %v2134, %v2488
        %v2513 = vmul.f32 %v2135, %v2488
        %v2514 = vmul.f32 %v2136, %v2488
        %v2515 = vmul.f32 %v2137, %v2488
        %v2516 = vmul.f32 %v2138, %v2488
        %v2517 = vmul.f32 %v2139, %v2488
        %v2518 = vmul.f32 %v2140, %v2488
        %v2519 = vmul.f32 %v2141, %v2488
        %v2520 = vmul.f32 %v2142, %v2488
        %v2521 = vadd.f32 %v2453, %v2489
        %v2522 = vadd.f32 %v2454, %v2490
        %v2523 = vadd.f32 %v2455, %v2491
        %v2524 = vadd.f32 %v2456, %v2492
        %v2525 = vadd.f32 %v2457, %v2493
        %v2526 = vadd.f32 %v2458, %v2494
        %v2527 = vadd.f32 %v2459, %v2495
        %v2528 = vadd.f32 %v2460, %v2496
        %v2529 = vadd.f32 %v2461, %v2497
        %v2530 = vadd.f32 %v2462, %v2498
        %v2531 = vadd.f32 %v2463, %v2499
        %v2532 = vadd.f32 %v2464, %v2500
        %v2533 = vadd.f32 %v2465, %v2501
        %v2534 = vadd.f32 %v2466, %v2502
        %v2535 = vadd.f32 %v2467, %v2503
        %v2536 = vadd.f32 %v2468, %v2504
        %v2537 = vadd.f32 %v2469, %v2505
        %v2538 = vadd.f32 %v2470, %v2506
        %v2539 = vadd.f32 %v2471, %v2507
        %v2540 = vadd.f32 %v2472, %v2508
        %v2541 = vadd.f32 %v2473, %v2509
        %v2542 = vadd.f32 %v2474, %v2510
        %v2543 = vadd.f32 %v2475, %v2511
        %v2544 = vadd.f32 %v2476, %v2512
        %v2545 = vadd.f32 %v2477, %v2513
        %v2546 = vadd.f32 %v2478, %v2514
        %v2547 = vadd.f32 %v2479, %v2515
        %v2548 = vadd.f32 %v2480, %v2516
        %v2549 = vadd.f32 %v2481, %v2517
        %v2550 = vadd.f32 %v2482, %v2518
        %v2551 = vadd.f32 %v2483, %v2519
        %v2552 = vadd.f32 %v2484, %v2520
        %v2553 = vlaneseq
        %v2554 = vshrl.u32 %v2553, 7
        %v2555 = vsub.s32 5, %v2554
        %v2556 = vrot.slane %v539, %v2555
        %v2557 = vmul.f32 %v2113, %v2556
        %v2558 = vmul.f32 %v2114, %v2556
        %v2559 = vmul.f32 %v2115, %v2556
        %v2560 = vmul.f32 %v2116, %v2556
        %v2561 = vmul.f32 %v2117, %v2556
        %v2562 = vmul.f32 %v2118, %v2556
        %v2563 = vmul.f32 %v2119, %v2556
        %v2564 = vmul.f32 %v2120, %v2556
        %v2565 = vmul.f32 %v2121, %v2556
        %v2566 = vmul.f32 %v2122, %v2556
        %v2567 = vmul.f32 %v2123, %v2556
        %v2568 = vmul.f32 %v2124, %v2556
        %v2569 = vmul.f32 %v2125, %v2556
        %v2570 = vmul.f32 %v2126, %v2556
        %v2571 = vmul.f32 %v2127, %v2556
        %v2572 = vmul.f32 %v2128, %v2556
        %v2573 = vmul.f32 %v2129, %v2556
        %v2574 = vmul.f32 %v2130, %v2556
        %v2575 = vmul.f32 %v2131, %v2556
        %v2576 = vmul.f32 %v2132, %v2556
        %v2577 = vmul.f32 %v2133, %v2556
        %v2578 = vmul.f32 %v2134, %v2556
        %v2579 = vmul.f32 %v2135, %v2556
        %v2580 = vmul.f32 %v2136, %v2556
        %v2581 = vmul.f32 %v2137, %v2556
        %v2582 = vmul.f32 %v2138, %v2556
        %v2583 = vmul.f32 %v2139, %v2556
        %v2584 = vmul.f32 %v2140, %v2556
        %v2585 = vmul.f32 %v2141, %v2556
        %v2586 = vmul.f32 %v2142, %v2556
        %v2587 = vmul.f32 %v2143, %v2556
        %v2588 = vmul.f32 %v2144, %v2556
        %v2589 = vadd.f32 %v2521, %v2557
        %v2590 = vadd.f32 %v2522, %v2558
        %v2591 = vadd.f32 %v2523, %v2559
        %v2592 = vadd.f32 %v2524, %v2560
        %v2593 = vadd.f32 %v2525, %v2561
        %v2594 = vadd.f32 %v2526, %v2562
        %v2595 = vadd.f32 %v2527, %v2563
        %v2596 = vadd.f32 %v2528, %v2564
        %v2597 = vadd.f32 %v2529, %v2565
        %v2598 = vadd.f32 %v2530, %v2566
        %v2599 = vadd.f32 %v2531, %v2567
        %v2600 = vadd.f32 %v2532, %v2568
        %v2601 = vadd.f32 %v2533, %v2569
        %v2602 = vadd.f32 %v2534, %v2570
        %v2603 = vadd.f32 %v2535, %v2571
        %v2604 = vadd.f32 %v2536, %v2572
        %v2605 = vadd.f32 %v2537, %v2573
        %v2606 = vadd.f32 %v2538, %v2574
        %v2607 = vadd.f32 %v2539, %v2575
        %v2608 = vadd.f32 %v2540, %v2576
        %v2609 = vadd.f32 %v2541, %v2577
        %v2610 = vadd.f32 %v2542, %v2578
        %v2611 = vadd.f32 %v2543, %v2579
        %v2612 = vadd.f32 %v2544, %v2580
        %v2613 = vadd.f32 %v2545, %v2581
        %v2614 = vadd.f32 %v2546, %v2582
        %v2615 = vadd.f32 %v2547, %v2583
        %v2616 = vadd.f32 %v2548, %v2584
        %v2617 = vadd.f32 %v2549, %v2585
        %v2618 = vadd.f32 %v2550, %v2586
        %v2619 = vadd.f32 %v2551, %v2587
        %v2620 = vadd.f32 %v2552, %v2588
        %v2621 = vld [vmem:[#allocation2 + $0x9] sm:$0xff]
        %v2622 = vld [vmem:[#allocation2 + $0x11] sm:$0xff]
        %v2623 = vld [vmem:[#allocation2 + $0x29] sm:$0xff]
        %v2624 = vld [vmem:[#allocation2 + $0x31] sm:$0xff]
        %v2625 = vld [vmem:[#allocation2 + $0x49] sm:$0xff]
        %v2626 = vld [vmem:[#allocation2 + $0x51] sm:$0xff]
        %v2627 = vld [vmem:[#allocation2 + $0x69] sm:$0xff]
        %v2628 = vld [vmem:[#allocation2 + $0x71] sm:$0xff]
        %v2629 = vld [vmem:[#allocation2 + $0x89] sm:$0xff]
        %v2630 = vld [vmem:[#allocation2 + $0x91] sm:$0xff]
        %v2631 = vld [vmem:[#allocation2 + $0xa9] sm:$0xff]
        %v2632 = vld [vmem:[#allocation2 + $0xb1] sm:$0xff]
        %v2633 = vld [vmem:[#allocation2 + $0xc9] sm:$0xff]
        %v2634 = vld [vmem:[#allocation2 + $0xd1] sm:$0xff]
        %v2635 = vld [vmem:[#allocation2 + $0xe9] sm:$0xff]
        %v2636 = vld [vmem:[#allocation2 + $0xf1] sm:$0xff]
        %v2637 = vld [vmem:[#allocation2 + $0x109] sm:$0xff]
        %v2638 = vld [vmem:[#allocation2 + $0x111] sm:$0xff]
        %v2639 = vld [vmem:[#allocation2 + $0x129] sm:$0xff]
        %v2640 = vld [vmem:[#allocation2 + $0x131] sm:$0xff]
        %v2641 = vld [vmem:[#allocation2 + $0x149] sm:$0xff]
        %v2642 = vld [vmem:[#allocation2 + $0x151] sm:$0xff]
        %v2643 = vld [vmem:[#allocation2 + $0x169] sm:$0xff]
        %v2644 = vld [vmem:[#allocation2 + $0x171] sm:$0xff]
        %v2645 = vld [vmem:[#allocation2 + $0x189] sm:$0xff]
        %v2646 = vld [vmem:[#allocation2 + $0x191] sm:$0xff]
        %v2647 = vld [vmem:[#allocation2 + $0x1a9] sm:$0xff]
        %v2648 = vld [vmem:[#allocation2 + $0x1b1] sm:$0xff]
        %v2649 = vld [vmem:[#allocation2 + $0x1c9] sm:$0xff]
        %v2650 = vld [vmem:[#allocation2 + $0x1d1] sm:$0xff]
        %v2651 = vld [vmem:[#allocation2 + $0x1e9] sm:$0xff]
        %v2652 = vld [vmem:[#allocation2 + $0x1f1] sm:$0xff]
        %v2653 = vld [vmem:[#allocation2 + $0x209] sm:$0xff]
        %v2654 = vld [vmem:[#allocation2 + $0x211] sm:$0xff]
        %v2655 = vld [vmem:[#allocation2 + $0x229] sm:$0xff]
        %v2656 = vld [vmem:[#allocation2 + $0x231] sm:$0xff]
        %v2657 = vld [vmem:[#allocation2 + $0x249] sm:$0xff]
        %v2658 = vld [vmem:[#allocation2 + $0x251] sm:$0xff]
        %v2659 = vld [vmem:[#allocation2 + $0x269] sm:$0xff]
        %v2660 = vld [vmem:[#allocation2 + $0x271] sm:$0xff]
        %v2661 = vld [vmem:[#allocation2 + $0x289] sm:$0xff]
        %v2662 = vld [vmem:[#allocation2 + $0x291] sm:$0xff]
        %v2663 = vld [vmem:[#allocation2 + $0x2a9] sm:$0xff]
        %v2664 = vld [vmem:[#allocation2 + $0x2b1] sm:$0xff]
        %v2665 = vlaneseq
        %v2666 = vshrl.u32 %v2665, 7
        %v2667 = vsub.s32 4, %v2666
        %v2668 = vrot.slane %v534, %v2667
        %v2669 = vmul.f32 %v2621, %v2668
        %v2670 = vmul.f32 %v2622, %v2668
        %v2671 = vmul.f32 %v2623, %v2668
        %v2672 = vmul.f32 %v2624, %v2668
        %v2673 = vmul.f32 %v2625, %v2668
        %v2674 = vmul.f32 %v2626, %v2668
        %v2675 = vmul.f32 %v2627, %v2668
        %v2676 = vmul.f32 %v2628, %v2668
        %v2677 = vmul.f32 %v2629, %v2668
        %v2678 = vmul.f32 %v2630, %v2668
        %v2679 = vmul.f32 %v2631, %v2668
        %v2680 = vmul.f32 %v2632, %v2668
        %v2681 = vmul.f32 %v2633, %v2668
        %v2682 = vmul.f32 %v2634, %v2668
        %v2683 = vmul.f32 %v2635, %v2668
        %v2684 = vmul.f32 %v2636, %v2668
        %v2685 = vmul.f32 %v2637, %v2668
        %v2686 = vmul.f32 %v2638, %v2668
        %v2687 = vmul.f32 %v2639, %v2668
        %v2688 = vmul.f32 %v2640, %v2668
        %v2689 = vmul.f32 %v2641, %v2668
        %v2690 = vmul.f32 %v2642, %v2668
        %v2691 = vmul.f32 %v2643, %v2668
        %v2692 = vmul.f32 %v2644, %v2668
        %v2693 = vmul.f32 %v2645, %v2668
        %v2694 = vmul.f32 %v2646, %v2668
        %v2695 = vmul.f32 %v2647, %v2668
        %v2696 = vmul.f32 %v2648, %v2668
        %v2697 = vmul.f32 %v2649, %v2668
        %v2698 = vmul.f32 %v2650, %v2668
        %v2699 = vmul.f32 %v2651, %v2668
        %v2700 = vmul.f32 %v2652, %v2668
        %v2701 = vadd.f32 %v2589, %v2669
        %v2702 = vadd.f32 %v2590, %v2670
        %v2703 = vadd.f32 %v2591, %v2671
        %v2704 = vadd.f32 %v2592, %v2672
        %v2705 = vadd.f32 %v2593, %v2673
        %v2706 = vadd.f32 %v2594, %v2674
        %v2707 = vadd.f32 %v2595, %v2675
        %v2708 = vadd.f32 %v2596, %v2676
        %v2709 = vadd.f32 %v2597, %v2677
        %v2710 = vadd.f32 %v2598, %v2678
        %v2711 = vadd.f32 %v2599, %v2679
        %v2712 = vadd.f32 %v2600, %v2680
        %v2713 = vadd.f32 %v2601, %v2681
        %v2714 = vadd.f32 %v2602, %v2682
        %v2715 = vadd.f32 %v2603, %v2683
        %v2716 = vadd.f32 %v2604, %v2684
        %v2717 = vadd.f32 %v2605, %v2685
        %v2718 = vadd.f32 %v2606, %v2686
        %v2719 = vadd.f32 %v2607, %v2687
        %v2720 = vadd.f32 %v2608, %v2688
        %v2721 = vadd.f32 %v2609, %v2689
        %v2722 = vadd.f32 %v2610, %v2690
        %v2723 = vadd.f32 %v2611, %v2691
        %v2724 = vadd.f32 %v2612, %v2692
        %v2725 = vadd.f32 %v2613, %v2693
        %v2726 = vadd.f32 %v2614, %v2694
        %v2727 = vadd.f32 %v2615, %v2695
        %v2728 = vadd.f32 %v2616, %v2696
        %v2729 = vadd.f32 %v2617, %v2697
        %v2730 = vadd.f32 %v2618, %v2698
        %v2731 = vadd.f32 %v2619, %v2699
        %v2732 = vadd.f32 %v2620, %v2700
        %v2733 = vlaneseq
        %v2734 = vshrl.u32 %v2733, 7
        %v2735 = vsub.s32 3, %v2734
        %v2736 = vrot.slane %v535, %v2735
        %v2737 = vmul.f32 %v2623, %v2736
        %v2738 = vmul.f32 %v2624, %v2736
        %v2739 = vmul.f32 %v2625, %v2736
        %v2740 = vmul.f32 %v2626, %v2736
        %v2741 = vmul.f32 %v2627, %v2736
        %v2742 = vmul.f32 %v2628, %v2736
        %v2743 = vmul.f32 %v2629, %v2736
        %v2744 = vmul.f32 %v2630, %v2736
        %v2745 = vmul.f32 %v2631, %v2736
        %v2746 = vmul.f32 %v2632, %v2736
        %v2747 = vmul.f32 %v2633, %v2736
        %v2748 = vmul.f32 %v2634, %v2736
        %v2749 = vmul.f32 %v2635, %v2736
        %v2750 = vmul.f32 %v2636, %v2736
        %v2751 = vmul.f32 %v2637, %v2736
        %v2752 = vmul.f32 %v2638, %v2736
        %v2753 = vmul.f32 %v2639, %v2736
        %v2754 = vmul.f32 %v2640, %v2736
        %v2755 = vmul.f32 %v2641, %v2736
        %v2756 = vmul.f32 %v2642, %v2736
        %v2757 = vmul.f32 %v2643, %v2736
        %v2758 = vmul.f32 %v2644, %v2736
        %v2759 = vmul.f32 %v2645, %v2736
        %v2760 = vmul.f32 %v2646, %v2736
        %v2761 = vmul.f32 %v2647, %v2736
        %v2762 = vmul.f32 %v2648, %v2736
        %v2763 = vmul.f32 %v2649, %v2736
        %v2764 = vmul.f32 %v2650, %v2736
        %v2765 = vmul.f32 %v2651, %v2736
        %v2766 = vmul.f32 %v2652, %v2736
        %v2767 = vmul.f32 %v2653, %v2736
        %v2768 = vmul.f32 %v2654, %v2736
        %v2769 = vadd.f32 %v2701, %v2737
        %v2770 = vadd.f32 %v2702, %v2738
        %v2771 = vadd.f32 %v2703, %v2739
        %v2772 = vadd.f32 %v2704, %v2740
        %v2773 = vadd.f32 %v2705, %v2741
        %v2774 = vadd.f32 %v2706, %v2742
        %v2775 = vadd.f32 %v2707, %v2743
        %v2776 = vadd.f32 %v2708, %v2744
        %v2777 = vadd.f32 %v2709, %v2745
        %v2778 = vadd.f32 %v2710, %v2746
        %v2779 = vadd.f32 %v2711, %v2747
        %v2780 = vadd.f32 %v2712, %v2748
        %v2781 = vadd.f32 %v2713, %v2749
        %v2782 = vadd.f32 %v2714, %v2750
        %v2783 = vadd.f32 %v2715, %v2751
        %v2784 = vadd.f32 %v2716, %v2752
        %v2785 = vadd.f32 %v2717, %v2753
        %v2786 = vadd.f32 %v2718, %v2754
        %v2787 = vadd.f32 %v2719, %v2755
        %v2788 = vadd.f32 %v2720, %v2756
        %v2789 = vadd.f32 %v2721, %v2757
        %v2790 = vadd.f32 %v2722, %v2758
        %v2791 = vadd.f32 %v2723, %v2759
        %v2792 = vadd.f32 %v2724, %v2760
        %v2793 = vadd.f32 %v2725, %v2761
        %v2794 = vadd.f32 %v2726, %v2762
        %v2795 = vadd.f32 %v2727, %v2763
        %v2796 = vadd.f32 %v2728, %v2764
        %v2797 = vadd.f32 %v2729, %v2765
        %v2798 = vadd.f32 %v2730, %v2766
        %v2799 = vadd.f32 %v2731, %v2767
        %v2800 = vadd.f32 %v2732, %v2768
        %v2801 = vlaneseq
        %v2802 = vshrl.u32 %v2801, 7
        %v2803 = vsub.s32 2, %v2802
        %v2804 = vrot.slane %v536, %v2803
        %v2805 = vmul.f32 %v2625, %v2804
        %v2806 = vmul.f32 %v2626, %v2804
        %v2807 = vmul.f32 %v2627, %v2804
        %v2808 = vmul.f32 %v2628, %v2804
        %v2809 = vmul.f32 %v2629, %v2804
        %v2810 = vmul.f32 %v2630, %v2804
        %v2811 = vmul.f32 %v2631, %v2804
        %v2812 = vmul.f32 %v2632, %v2804
        %v2813 = vmul.f32 %v2633, %v2804
        %v2814 = vmul.f32 %v2634, %v2804
        %v2815 = vmul.f32 %v2635, %v2804
        %v2816 = vmul.f32 %v2636, %v2804
        %v2817 = vmul.f32 %v2637, %v2804
        %v2818 = vmul.f32 %v2638, %v2804
        %v2819 = vmul.f32 %v2639, %v2804
        %v2820 = vmul.f32 %v2640, %v2804
        %v2821 = vmul.f32 %v2641, %v2804
        %v2822 = vmul.f32 %v2642, %v2804
        %v2823 = vmul.f32 %v2643, %v2804
        %v2824 = vmul.f32 %v2644, %v2804
        %v2825 = vmul.f32 %v2645, %v2804
        %v2826 = vmul.f32 %v2646, %v2804
        %v2827 = vmul.f32 %v2647, %v2804
        %v2828 = vmul.f32 %v2648, %v2804
        %v2829 = vmul.f32 %v2649, %v2804
        %v2830 = vmul.f32 %v2650, %v2804
        %v2831 = vmul.f32 %v2651, %v2804
        %v2832 = vmul.f32 %v2652, %v2804
        %v2833 = vmul.f32 %v2653, %v2804
        %v2834 = vmul.f32 %v2654, %v2804
        %v2835 = vmul.f32 %v2655, %v2804
        %v2836 = vmul.f32 %v2656, %v2804
        %v2837 = vadd.f32 %v2769, %v2805
        %v2838 = vadd.f32 %v2770, %v2806
        %v2839 = vadd.f32 %v2771, %v2807
        %v2840 = vadd.f32 %v2772, %v2808
        %v2841 = vadd.f32 %v2773, %v2809
        %v2842 = vadd.f32 %v2774, %v2810
        %v2843 = vadd.f32 %v2775, %v2811
        %v2844 = vadd.f32 %v2776, %v2812
        %v2845 = vadd.f32 %v2777, %v2813
        %v2846 = vadd.f32 %v2778, %v2814
        %v2847 = vadd.f32 %v2779, %v2815
        %v2848 = vadd.f32 %v2780, %v2816
        %v2849 = vadd.f32 %v2781, %v2817
        %v2850 = vadd.f32 %v2782, %v2818
        %v2851 = vadd.f32 %v2783, %v2819
        %v2852 = vadd.f32 %v2784, %v2820
        %v2853 = vadd.f32 %v2785, %v2821
        %v2854 = vadd.f32 %v2786, %v2822
        %v2855 = vadd.f32 %v2787, %v2823
        %v2856 = vadd.f32 %v2788, %v2824
        %v2857 = vadd.f32 %v2789, %v2825
        %v2858 = vadd.f32 %v2790, %v2826
        %v2859 = vadd.f32 %v2791, %v2827
        %v2860 = vadd.f32 %v2792, %v2828
        %v2861 = vadd.f32 %v2793, %v2829
        %v2862 = vadd.f32 %v2794, %v2830
        %v2863 = vadd.f32 %v2795, %v2831
        %v2864 = vadd.f32 %v2796, %v2832
        %v2865 = vadd.f32 %v2797, %v2833
        %v2866 = vadd.f32 %v2798, %v2834
        %v2867 = vadd.f32 %v2799, %v2835
        %v2868 = vadd.f32 %v2800, %v2836
        %v2869 = vlaneseq
        %v2870 = vshrl.u32 %v2869, 7
        %v2871 = vsub.s32 1, %v2870
        %v2872 = vrot.slane %v537, %v2871
        %v2873 = vmul.f32 %v2627, %v2872
        %v2874 = vmul.f32 %v2628, %v2872
        %v2875 = vmul.f32 %v2629, %v2872
        %v2876 = vmul.f32 %v2630, %v2872
        %v2877 = vmul.f32 %v2631, %v2872
        %v2878 = vmul.f32 %v2632, %v2872
        %v2879 = vmul.f32 %v2633, %v2872
        %v2880 = vmul.f32 %v2634, %v2872
        %v2881 = vmul.f32 %v2635, %v2872
        %v2882 = vmul.f32 %v2636, %v2872
        %v2883 = vmul.f32 %v2637, %v2872
        %v2884 = vmul.f32 %v2638, %v2872
        %v2885 = vmul.f32 %v2639, %v2872
        %v2886 = vmul.f32 %v2640, %v2872
        %v2887 = vmul.f32 %v2641, %v2872
        %v2888 = vmul.f32 %v2642, %v2872
        %v2889 = vmul.f32 %v2643, %v2872
        %v2890 = vmul.f32 %v2644, %v2872
        %v2891 = vmul.f32 %v2645, %v2872
        %v2892 = vmul.f32 %v2646, %v2872
        %v2893 = vmul.f32 %v2647, %v2872
        %v2894 = vmul.f32 %v2648, %v2872
        %v2895 = vmul.f32 %v2649, %v2872
        %v2896 = vmul.f32 %v2650, %v2872
        %v2897 = vmul.f32 %v2651, %v2872
        %v2898 = vmul.f32 %v2652, %v2872
        %v2899 = vmul.f32 %v2653, %v2872
        %v2900 = vmul.f32 %v2654, %v2872
        %v2901 = vmul.f32 %v2655, %v2872
        %v2902 = vmul.f32 %v2656, %v2872
        %v2903 = vmul.f32 %v2657, %v2872
        %v2904 = vmul.f32 %v2658, %v2872
        %v2905 = vadd.f32 %v2837, %v2873
        %v2906 = vadd.f32 %v2838, %v2874
        %v2907 = vadd.f32 %v2839, %v2875
        %v2908 = vadd.f32 %v2840, %v2876
        %v2909 = vadd.f32 %v2841, %v2877
        %v2910 = vadd.f32 %v2842, %v2878
        %v2911 = vadd.f32 %v2843, %v2879
        %v2912 = vadd.f32 %v2844, %v2880
        %v2913 = vadd.f32 %v2845, %v2881
        %v2914 = vadd.f32 %v2846, %v2882
        %v2915 = vadd.f32 %v2847, %v2883
        %v2916 = vadd.f32 %v2848, %v2884
        %v2917 = vadd.f32 %v2849, %v2885
        %v2918 = vadd.f32 %v2850, %v2886
        %v2919 = vadd.f32 %v2851, %v2887
        %v2920 = vadd.f32 %v2852, %v2888
        %v2921 = vadd.f32 %v2853, %v2889
        %v2922 = vadd.f32 %v2854, %v2890
        %v2923 = vadd.f32 %v2855, %v2891
        %v2924 = vadd.f32 %v2856, %v2892
        %v2925 = vadd.f32 %v2857, %v2893
        %v2926 = vadd.f32 %v2858, %v2894
        %v2927 = vadd.f32 %v2859, %v2895
        %v2928 = vadd.f32 %v2860, %v2896
        %v2929 = vadd.f32 %v2861, %v2897
        %v2930 = vadd.f32 %v2862, %v2898
        %v2931 = vadd.f32 %v2863, %v2899
        %v2932 = vadd.f32 %v2864, %v2900
        %v2933 = vadd.f32 %v2865, %v2901
        %v2934 = vadd.f32 %v2866, %v2902
        %v2935 = vadd.f32 %v2867, %v2903
        %v2936 = vadd.f32 %v2868, %v2904
        %v2937 = vlaneseq
        %v2938 = vshrl.u32 %v2937, 7
        %v2939 = vsub.s32 0, %v2938
        %v2940 = vrot.slane %v538, %v2939
        %v2941 = vmul.f32 %v2629, %v2940
        %v2942 = vmul.f32 %v2630, %v2940
        %v2943 = vmul.f32 %v2631, %v2940
        %v2944 = vmul.f32 %v2632, %v2940
        %v2945 = vmul.f32 %v2633, %v2940
        %v2946 = vmul.f32 %v2634, %v2940
        %v2947 = vmul.f32 %v2635, %v2940
        %v2948 = vmul.f32 %v2636, %v2940
        %v2949 = vmul.f32 %v2637, %v2940
        %v2950 = vmul.f32 %v2638, %v2940
        %v2951 = vmul.f32 %v2639, %v2940
        %v2952 = vmul.f32 %v2640, %v2940
        %v2953 = vmul.f32 %v2641, %v2940
        %v2954 = vmul.f32 %v2642, %v2940
        %v2955 = vmul.f32 %v2643, %v2940
        %v2956 = vmul.f32 %v2644, %v2940
        %v2957 = vmul.f32 %v2645, %v2940
        %v2958 = vmul.f32 %v2646, %v2940
        %v2959 = vmul.f32 %v2647, %v2940
        %v2960 = vmul.f32 %v2648, %v2940
        %v2961 = vmul.f32 %v2649, %v2940
        %v2962 = vmul.f32 %v2650, %v2940
        %v2963 = vmul.f32 %v2651, %v2940
        %v2964 = vmul.f32 %v2652, %v2940
        %v2965 = vmul.f32 %v2653, %v2940
        %v2966 = vmul.f32 %v2654, %v2940
        %v2967 = vmul.f32 %v2655, %v2940
        %v2968 = vmul.f32 %v2656, %v2940
        %v2969 = vmul.f32 %v2657, %v2940
        %v2970 = vmul.f32 %v2658, %v2940
        %v2971 = vmul.f32 %v2659, %v2940
        %v2972 = vmul.f32 %v2660, %v2940
        %v2973 = vadd.f32 %v2905, %v2941
        %v2974 = vadd.f32 %v2906, %v2942
        %v2975 = vadd.f32 %v2907, %v2943
        %v2976 = vadd.f32 %v2908, %v2944
        %v2977 = vadd.f32 %v2909, %v2945
        %v2978 = vadd.f32 %v2910, %v2946
        %v2979 = vadd.f32 %v2911, %v2947
        %v2980 = vadd.f32 %v2912, %v2948
        %v2981 = vadd.f32 %v2913, %v2949
        %v2982 = vadd.f32 %v2914, %v2950
        %v2983 = vadd.f32 %v2915, %v2951
        %v2984 = vadd.f32 %v2916, %v2952
        %v2985 = vadd.f32 %v2917, %v2953
        %v2986 = vadd.f32 %v2918, %v2954
        %v2987 = vadd.f32 %v2919, %v2955
        %v2988 = vadd.f32 %v2920, %v2956
        %v2989 = vadd.f32 %v2921, %v2957
        %v2990 = vadd.f32 %v2922, %v2958
        %v2991 = vadd.f32 %v2923, %v2959
        %v2992 = vadd.f32 %v2924, %v2960
        %v2993 = vadd.f32 %v2925, %v2961
        %v2994 = vadd.f32 %v2926, %v2962
        %v2995 = vadd.f32 %v2927, %v2963
        %v2996 = vadd.f32 %v2928, %v2964
        %v2997 = vadd.f32 %v2929, %v2965
        %v2998 = vadd.f32 %v2930, %v2966
        %v2999 = vadd.f32 %v2931, %v2967
        %v3000 = vadd.f32 %v2932, %v2968
        %v3001 = vadd.f32 %v2933, %v2969
        %v3002 = vadd.f32 %v2934, %v2970
        %v3003 = vadd.f32 %v2935, %v2971
        %v3004 = vadd.f32 %v2936, %v2972
        %v3005 = vlaneseq
        %v3006 = vshrl.u32 %v3005, 7
        %v3007 = vsub.s32 7, %v3006
        %v3008 = vrot.slane %v538, %v3007
        %v3009 = vmul.f32 %v2631, %v3008
        %v3010 = vmul.f32 %v2632, %v3008
        %v3011 = vmul.f32 %v2633, %v3008
        %v3012 = vmul.f32 %v2634, %v3008
        %v3013 = vmul.f32 %v2635, %v3008
        %v3014 = vmul.f32 %v2636, %v3008
        %v3015 = vmul.f32 %v2637, %v3008
        %v3016 = vmul.f32 %v2638, %v3008
        %v3017 = vmul.f32 %v2639, %v3008
        %v3018 = vmul.f32 %v2640, %v3008
        %v3019 = vmul.f32 %v2641, %v3008
        %v3020 = vmul.f32 %v2642, %v3008
        %v3021 = vmul.f32 %v2643, %v3008
        %v3022 = vmul.f32 %v2644, %v3008
        %v3023 = vmul.f32 %v2645, %v3008
        %v3024 = vmul.f32 %v2646, %v3008
        %v3025 = vmul.f32 %v2647, %v3008
        %v3026 = vmul.f32 %v2648, %v3008
        %v3027 = vmul.f32 %v2649, %v3008
        %v3028 = vmul.f32 %v2650, %v3008
        %v3029 = vmul.f32 %v2651, %v3008
        %v3030 = vmul.f32 %v2652, %v3008
        %v3031 = vmul.f32 %v2653, %v3008
        %v3032 = vmul.f32 %v2654, %v3008
        %v3033 = vmul.f32 %v2655, %v3008
        %v3034 = vmul.f32 %v2656, %v3008
        %v3035 = vmul.f32 %v2657, %v3008
        %v3036 = vmul.f32 %v2658, %v3008
        %v3037 = vmul.f32 %v2659, %v3008
        %v3038 = vmul.f32 %v2660, %v3008
        %v3039 = vmul.f32 %v2661, %v3008
        %v3040 = vmul.f32 %v2662, %v3008
        %v3041 = vadd.f32 %v2973, %v3009
        %v3042 = vadd.f32 %v2974, %v3010
        %v3043 = vadd.f32 %v2975, %v3011
        %v3044 = vadd.f32 %v2976, %v3012
        %v3045 = vadd.f32 %v2977, %v3013
        %v3046 = vadd.f32 %v2978, %v3014
        %v3047 = vadd.f32 %v2979, %v3015
        %v3048 = vadd.f32 %v2980, %v3016
        %v3049 = vadd.f32 %v2981, %v3017
        %v3050 = vadd.f32 %v2982, %v3018
        %v3051 = vadd.f32 %v2983, %v3019
        %v3052 = vadd.f32 %v2984, %v3020
        %v3053 = vadd.f32 %v2985, %v3021
        %v3054 = vadd.f32 %v2986, %v3022
        %v3055 = vadd.f32 %v2987, %v3023
        %v3056 = vadd.f32 %v2988, %v3024
        %v3057 = vadd.f32 %v2989, %v3025
        %v3058 = vadd.f32 %v2990, %v3026
        %v3059 = vadd.f32 %v2991, %v3027
        %v3060 = vadd.f32 %v2992, %v3028
        %v3061 = vadd.f32 %v2993, %v3029
        %v3062 = vadd.f32 %v2994, %v3030
        %v3063 = vadd.f32 %v2995, %v3031
        %v3064 = vadd.f32 %v2996, %v3032
        %v3065 = vadd.f32 %v2997, %v3033
        %v3066 = vadd.f32 %v2998, %v3034
        %v3067 = vadd.f32 %v2999, %v3035
        %v3068 = vadd.f32 %v3000, %v3036
        %v3069 = vadd.f32 %v3001, %v3037
        %v3070 = vadd.f32 %v3002, %v3038
        %v3071 = vadd.f32 %v3003, %v3039
        %v3072 = vadd.f32 %v3004, %v3040
        %v3073 = vlaneseq
        %v3074 = vshrl.u32 %v3073, 7
        %v3075 = vsub.s32 6, %v3074
        %v3076 = vrot.slane %v539, %v3075
        %v3077 = vmul.f32 %v2633, %v3076
        %v3078 = vmul.f32 %v2634, %v3076
        %v3079 = vmul.f32 %v2635, %v3076
        %v3080 = vmul.f32 %v2636, %v3076
        %v3081 = vmul.f32 %v2637, %v3076
        %v3082 = vmul.f32 %v2638, %v3076
        %v3083 = vmul.f32 %v2639, %v3076
        %v3084 = vmul.f32 %v2640, %v3076
        %v3085 = vmul.f32 %v2641, %v3076
        %v3086 = vmul.f32 %v2642, %v3076
        %v3087 = vmul.f32 %v2643, %v3076
        %v3088 = vmul.f32 %v2644, %v3076
        %v3089 = vmul.f32 %v2645, %v3076
        %v3090 = vmul.f32 %v2646, %v3076
        %v3091 = vmul.f32 %v2647, %v3076
        %v3092 = vmul.f32 %v2648, %v3076
        %v3093 = vmul.f32 %v2649, %v3076
        %v3094 = vmul.f32 %v2650, %v3076
        %v3095 = vmul.f32 %v2651, %v3076
        %v3096 = vmul.f32 %v2652, %v3076
        %v3097 = vmul.f32 %v2653, %v3076
        %v3098 = vmul.f32 %v2654, %v3076
        %v3099 = vmul.f32 %v2655, %v3076
        %v3100 = vmul.f32 %v2656, %v3076
        %v3101 = vmul.f32 %v2657, %v3076
        %v3102 = vmul.f32 %v2658, %v3076
        %v3103 = vmul.f32 %v2659, %v3076
        %v3104 = vmul.f32 %v2660, %v3076
        %v3105 = vmul.f32 %v2661, %v3076
        %v3106 = vmul.f32 %v2662, %v3076
        %v3107 = vmul.f32 %v2663, %v3076
        %v3108 = vmul.f32 %v2664, %v3076
        %v3109 = vadd.f32 %v3041, %v3077
        %v3110 = vadd.f32 %v3042, %v3078
        %v3111 = vadd.f32 %v3043, %v3079
        %v3112 = vadd.f32 %v3044, %v3080
        %v3113 = vadd.f32 %v3045, %v3081
        %v3114 = vadd.f32 %v3046, %v3082
        %v3115 = vadd.f32 %v3047, %v3083
        %v3116 = vadd.f32 %v3048, %v3084
        %v3117 = vadd.f32 %v3049, %v3085
        %v3118 = vadd.f32 %v3050, %v3086
        %v3119 = vadd.f32 %v3051, %v3087
        %v3120 = vadd.f32 %v3052, %v3088
        %v3121 = vadd.f32 %v3053, %v3089
        %v3122 = vadd.f32 %v3054, %v3090
        %v3123 = vadd.f32 %v3055, %v3091
        %v3124 = vadd.f32 %v3056, %v3092
        %v3125 = vadd.f32 %v3057, %v3093
        %v3126 = vadd.f32 %v3058, %v3094
        %v3127 = vadd.f32 %v3059, %v3095
        %v3128 = vadd.f32 %v3060, %v3096
        %v3129 = vadd.f32 %v3061, %v3097
        %v3130 = vadd.f32 %v3062, %v3098
        %v3131 = vadd.f32 %v3063, %v3099
        %v3132 = vadd.f32 %v3064, %v3100
        %v3133 = vadd.f32 %v3065, %v3101
        %v3134 = vadd.f32 %v3066, %v3102
        %v3135 = vadd.f32 %v3067, %v3103
        %v3136 = vadd.f32 %v3068, %v3104
        %v3137 = vadd.f32 %v3069, %v3105
        %v3138 = vadd.f32 %v3070, %v3106
        %v3139 = vadd.f32 %v3071, %v3107
        %v3140 = vadd.f32 %v3072, %v3108
        %v3141 = vld [vmem:[#allocation2 + $0xa] sm:$0xff]
        %v3142 = vld [vmem:[#allocation2 + $0x12] sm:$0xff]
        %v3143 = vld [vmem:[#allocation2 + $0x2a] sm:$0xff]
        %v3144 = vld [vmem:[#allocation2 + $0x32] sm:$0xff]
        %v3145 = vld [vmem:[#allocation2 + $0x4a] sm:$0xff]
        %v3146 = vld [vmem:[#allocation2 + $0x52] sm:$0xff]
        %v3147 = vld [vmem:[#allocation2 + $0x6a] sm:$0xff]
        %v3148 = vld [vmem:[#allocation2 + $0x72] sm:$0xff]
        %v3149 = vld [vmem:[#allocation2 + $0x8a] sm:$0xff]
        %v3150 = vld [vmem:[#allocation2 + $0x92] sm:$0xff]
        %v3151 = vld [vmem:[#allocation2 + $0xaa] sm:$0xff]
        %v3152 = vld [vmem:[#allocation2 + $0xb2] sm:$0xff]
        %v3153 = vld [vmem:[#allocation2 + $0xca] sm:$0xff]
        %v3154 = vld [vmem:[#allocation2 + $0xd2] sm:$0xff]
        %v3155 = vld [vmem:[#allocation2 + $0xea] sm:$0xff]
        %v3156 = vld [vmem:[#allocation2 + $0xf2] sm:$0xff]
        %v3157 = vld [vmem:[#allocation2 + $0x10a] sm:$0xff]
        %v3158 = vld [vmem:[#allocation2 + $0x112] sm:$0xff]
        %v3159 = vld [vmem:[#allocation2 + $0x12a] sm:$0xff]
        %v3160 = vld [vmem:[#allocation2 + $0x132] sm:$0xff]
        %v3161 = vld [vmem:[#allocation2 + $0x14a] sm:$0xff]
        %v3162 = vld [vmem:[#allocation2 + $0x152] sm:$0xff]
        %v3163 = vld [vmem:[#allocation2 + $0x16a] sm:$0xff]
        %v3164 = vld [vmem:[#allocation2 + $0x172] sm:$0xff]
        %v3165 = vld [vmem:[#allocation2 + $0x18a] sm:$0xff]
        %v3166 = vld [vmem:[#allocation2 + $0x192] sm:$0xff]
        %v3167 = vld [vmem:[#allocation2 + $0x1aa] sm:$0xff]
        %v3168 = vld [vmem:[#allocation2 + $0x1b2] sm:$0xff]
        %v3169 = vld [vmem:[#allocation2 + $0x1ca] sm:$0xff]
        %v3170 = vld [vmem:[#allocation2 + $0x1d2] sm:$0xff]
        %v3171 = vld [vmem:[#allocation2 + $0x1ea] sm:$0xff]
        %v3172 = vld [vmem:[#allocation2 + $0x1f2] sm:$0xff]
        %v3173 = vld [vmem:[#allocation2 + $0x20a] sm:$0xff]
        %v3174 = vld [vmem:[#allocation2 + $0x212] sm:$0xff]
        %v3175 = vld [vmem:[#allocation2 + $0x22a] sm:$0xff]
        %v3176 = vld [vmem:[#allocation2 + $0x232] sm:$0xff]
        %v3177 = vld [vmem:[#allocation2 + $0x24a] sm:$0xff]
        %v3178 = vld [vmem:[#allocation2 + $0x252] sm:$0xff]
        %v3179 = vld [vmem:[#allocation2 + $0x26a] sm:$0xff]
        %v3180 = vld [vmem:[#allocation2 + $0x272] sm:$0xff]
        %v3181 = vld [vmem:[#allocation2 + $0x28a] sm:$0xff]
        %v3182 = vld [vmem:[#allocation2 + $0x292] sm:$0xff]
        %v3183 = vld [vmem:[#allocation2 + $0x2aa] sm:$0xff]
        %v3184 = vld [vmem:[#allocation2 + $0x2b2] sm:$0xff]
        %v3185 = vlaneseq
        %v3186 = vshrl.u32 %v3185, 7
        %v3187 = vsub.s32 5, %v3186
        %v3188 = vrot.slane %v534, %v3187
        %v3189 = vmul.f32 %v3141, %v3188
        %v3190 = vmul.f32 %v3142, %v3188
        %v3191 = vmul.f32 %v3143, %v3188
        %v3192 = vmul.f32 %v3144, %v3188
        %v3193 = vmul.f32 %v3145, %v3188
        %v3194 = vmul.f32 %v3146, %v3188
        %v3195 = vmul.f32 %v3147, %v3188
        %v3196 = vmul.f32 %v3148, %v3188
        %v3197 = vmul.f32 %v3149, %v3188
        %v3198 = vmul.f32 %v3150, %v3188
        %v3199 = vmul.f32 %v3151, %v3188
        %v3200 = vmul.f32 %v3152, %v3188
        %v3201 = vmul.f32 %v3153, %v3188
        %v3202 = vmul.f32 %v3154, %v3188
        %v3203 = vmul.f32 %v3155, %v3188
        %v3204 = vmul.f32 %v3156, %v3188
        %v3205 = vmul.f32 %v3157, %v3188
        %v3206 = vmul.f32 %v3158, %v3188
        %v3207 = vmul.f32 %v3159, %v3188
        %v3208 = vmul.f32 %v3160, %v3188
        %v3209 = vmul.f32 %v3161, %v3188
        %v3210 = vmul.f32 %v3162, %v3188
        %v3211 = vmul.f32 %v3163, %v3188
        %v3212 = vmul.f32 %v3164, %v3188
        %v3213 = vmul.f32 %v3165, %v3188
        %v3214 = vmul.f32 %v3166, %v3188
        %v3215 = vmul.f32 %v3167, %v3188
        %v3216 = vmul.f32 %v3168, %v3188
        %v3217 = vmul.f32 %v3169, %v3188
        %v3218 = vmul.f32 %v3170, %v3188
        %v3219 = vmul.f32 %v3171, %v3188
        %v3220 = vmul.f32 %v3172, %v3188
        %v3221 = vadd.f32 %v3109, %v3189
        %v3222 = vadd.f32 %v3110, %v3190
        %v3223 = vadd.f32 %v3111, %v3191
        %v3224 = vadd.f32 %v3112, %v3192
        %v3225 = vadd.f32 %v3113, %v3193
        %v3226 = vadd.f32 %v3114, %v3194
        %v3227 = vadd.f32 %v3115, %v3195
        %v3228 = vadd.f32 %v3116, %v3196
        %v3229 = vadd.f32 %v3117, %v3197
        %v3230 = vadd.f32 %v3118, %v3198
        %v3231 = vadd.f32 %v3119, %v3199
        %v3232 = vadd.f32 %v3120, %v3200
        %v3233 = vadd.f32 %v3121, %v3201
        %v3234 = vadd.f32 %v3122, %v3202
        %v3235 = vadd.f32 %v3123, %v3203
        %v3236 = vadd.f32 %v3124, %v3204
        %v3237 = vadd.f32 %v3125, %v3205
        %v3238 = vadd.f32 %v3126, %v3206
        %v3239 = vadd.f32 %v3127, %v3207
        %v3240 = vadd.f32 %v3128, %v3208
        %v3241 = vadd.f32 %v3129, %v3209
        %v3242 = vadd.f32 %v3130, %v3210
        %v3243 = vadd.f32 %v3131, %v3211
        %v3244 = vadd.f32 %v3132, %v3212
        %v3245 = vadd.f32 %v3133, %v3213
        %v3246 = vadd.f32 %v3134, %v3214
        %v3247 = vadd.f32 %v3135, %v3215
        %v3248 = vadd.f32 %v3136, %v3216
        %v3249 = vadd.f32 %v3137, %v3217
        %v3250 = vadd.f32 %v3138, %v3218
        %v3251 = vadd.f32 %v3139, %v3219
        %v3252 = vadd.f32 %v3140, %v3220
        %v3253 = vlaneseq
        %v3254 = vshrl.u32 %v3253, 7
        %v3255 = vsub.s32 4, %v3254
        %v3256 = vrot.slane %v535, %v3255
        %v3257 = vmul.f32 %v3143, %v3256
        %v3258 = vmul.f32 %v3144, %v3256
        %v3259 = vmul.f32 %v3145, %v3256
        %v3260 = vmul.f32 %v3146, %v3256
        %v3261 = vmul.f32 %v3147, %v3256
        %v3262 = vmul.f32 %v3148, %v3256
        %v3263 = vmul.f32 %v3149, %v3256
        %v3264 = vmul.f32 %v3150, %v3256
        %v3265 = vmul.f32 %v3151, %v3256
        %v3266 = vmul.f32 %v3152, %v3256
        %v3267 = vmul.f32 %v3153, %v3256
        %v3268 = vmul.f32 %v3154, %v3256
        %v3269 = vmul.f32 %v3155, %v3256
        %v3270 = vmul.f32 %v3156, %v3256
        %v3271 = vmul.f32 %v3157, %v3256
        %v3272 = vmul.f32 %v3158, %v3256
        %v3273 = vmul.f32 %v3159, %v3256
        %v3274 = vmul.f32 %v3160, %v3256
        %v3275 = vmul.f32 %v3161, %v3256
        %v3276 = vmul.f32 %v3162, %v3256
        %v3277 = vmul.f32 %v3163, %v3256
        %v3278 = vmul.f32 %v3164, %v3256
        %v3279 = vmul.f32 %v3165, %v3256
        %v3280 = vmul.f32 %v3166, %v3256
        %v3281 = vmul.f32 %v3167, %v3256
        %v3282 = vmul.f32 %v3168, %v3256
        %v3283 = vmul.f32 %v3169, %v3256
        %v3284 = vmul.f32 %v3170, %v3256
        %v3285 = vmul.f32 %v3171, %v3256
        %v3286 = vmul.f32 %v3172, %v3256
        %v3287 = vmul.f32 %v3173, %v3256
        %v3288 = vmul.f32 %v3174, %v3256
        %v3289 = vadd.f32 %v3221, %v3257
        %v3290 = vadd.f32 %v3222, %v3258
        %v3291 = vadd.f32 %v3223, %v3259
        %v3292 = vadd.f32 %v3224, %v3260
        %v3293 = vadd.f32 %v3225, %v3261
        %v3294 = vadd.f32 %v3226, %v3262
        %v3295 = vadd.f32 %v3227, %v3263
        %v3296 = vadd.f32 %v3228, %v3264
        %v3297 = vadd.f32 %v3229, %v3265
        %v3298 = vadd.f32 %v3230, %v3266
        %v3299 = vadd.f32 %v3231, %v3267
        %v3300 = vadd.f32 %v3232, %v3268
        %v3301 = vadd.f32 %v3233, %v3269
        %v3302 = vadd.f32 %v3234, %v3270
        %v3303 = vadd.f32 %v3235, %v3271
        %v3304 = vadd.f32 %v3236, %v3272
        %v3305 = vadd.f32 %v3237, %v3273
        %v3306 = vadd.f32 %v3238, %v3274
        %v3307 = vadd.f32 %v3239, %v3275
        %v3308 = vadd.f32 %v3240, %v3276
        %v3309 = vadd.f32 %v3241, %v3277
        %v3310 = vadd.f32 %v3242, %v3278
        %v3311 = vadd.f32 %v3243, %v3279
        %v3312 = vadd.f32 %v3244, %v3280
        %v3313 = vadd.f32 %v3245, %v3281
        %v3314 = vadd.f32 %v3246, %v3282
        %v3315 = vadd.f32 %v3247, %v3283
        %v3316 = vadd.f32 %v3248, %v3284
        %v3317 = vadd.f32 %v3249, %v3285
        %v3318 = vadd.f32 %v3250, %v3286
        %v3319 = vadd.f32 %v3251, %v3287
        %v3320 = vadd.f32 %v3252, %v3288
        %v3321 = vlaneseq
        %v3322 = vshrl.u32 %v3321, 7
        %v3323 = vsub.s32 3, %v3322
        %v3324 = vrot.slane %v536, %v3323
        %v3325 = vmul.f32 %v3145, %v3324
        %v3326 = vmul.f32 %v3146, %v3324
        %v3327 = vmul.f32 %v3147, %v3324
        %v3328 = vmul.f32 %v3148, %v3324
        %v3329 = vmul.f32 %v3149, %v3324
        %v3330 = vmul.f32 %v3150, %v3324
        %v3331 = vmul.f32 %v3151, %v3324
        %v3332 = vmul.f32 %v3152, %v3324
        %v3333 = vmul.f32 %v3153, %v3324
        %v3334 = vmul.f32 %v3154, %v3324
        %v3335 = vmul.f32 %v3155, %v3324
        %v3336 = vmul.f32 %v3156, %v3324
        %v3337 = vmul.f32 %v3157, %v3324
        %v3338 = vmul.f32 %v3158, %v3324
        %v3339 = vmul.f32 %v3159, %v3324
        %v3340 = vmul.f32 %v3160, %v3324
        %v3341 = vmul.f32 %v3161, %v3324
        %v3342 = vmul.f32 %v3162, %v3324
        %v3343 = vmul.f32 %v3163, %v3324
        %v3344 = vmul.f32 %v3164, %v3324
        %v3345 = vmul.f32 %v3165, %v3324
        %v3346 = vmul.f32 %v3166, %v3324
        %v3347 = vmul.f32 %v3167, %v3324
        %v3348 = vmul.f32 %v3168, %v3324
        %v3349 = vmul.f32 %v3169, %v3324
        %v3350 = vmul.f32 %v3170, %v3324
        %v3351 = vmul.f32 %v3171, %v3324
        %v3352 = vmul.f32 %v3172, %v3324
        %v3353 = vmul.f32 %v3173, %v3324
        %v3354 = vmul.f32 %v3174, %v3324
        %v3355 = vmul.f32 %v3175, %v3324
        %v3356 = vmul.f32 %v3176, %v3324
        %v3357 = vadd.f32 %v3289, %v3325
        %v3358 = vadd.f32 %v3290, %v3326
        %v3359 = vadd.f32 %v3291, %v3327
        %v3360 = vadd.f32 %v3292, %v3328
        %v3361 = vadd.f32 %v3293, %v3329
        %v3362 = vadd.f32 %v3294, %v3330
        %v3363 = vadd.f32 %v3295, %v3331
        %v3364 = vadd.f32 %v3296, %v3332
        %v3365 = vadd.f32 %v3297, %v3333
        %v3366 = vadd.f32 %v3298, %v3334
        %v3367 = vadd.f32 %v3299, %v3335
        %v3368 = vadd.f32 %v3300, %v3336
        %v3369 = vadd.f32 %v3301, %v3337
        %v3370 = vadd.f32 %v3302, %v3338
        %v3371 = vadd.f32 %v3303, %v3339
        %v3372 = vadd.f32 %v3304, %v3340
        %v3373 = vadd.f32 %v3305, %v3341
        %v3374 = vadd.f32 %v3306, %v3342
        %v3375 = vadd.f32 %v3307, %v3343
        %v3376 = vadd.f32 %v3308, %v3344
        %v3377 = vadd.f32 %v3309, %v3345
        %v3378 = vadd.f32 %v3310, %v3346
        %v3379 = vadd.f32 %v3311, %v3347
        %v3380 = vadd.f32 %v3312, %v3348
        %v3381 = vadd.f32 %v3313, %v3349
        %v3382 = vadd.f32 %v3314, %v3350
        %v3383 = vadd.f32 %v3315, %v3351
        %v3384 = vadd.f32 %v3316, %v3352
        %v3385 = vadd.f32 %v3317, %v3353
        %v3386 = vadd.f32 %v3318, %v3354
        %v3387 = vadd.f32 %v3319, %v3355
        %v3388 = vadd.f32 %v3320, %v3356
        %v3389 = vlaneseq
        %v3390 = vshrl.u32 %v3389, 7
        %v3391 = vsub.s32 2, %v3390
        %v3392 = vrot.slane %v537, %v3391
        %v3393 = vmul.f32 %v3147, %v3392
        %v3394 = vmul.f32 %v3148, %v3392
        %v3395 = vmul.f32 %v3149, %v3392
        %v3396 = vmul.f32 %v3150, %v3392
        %v3397 = vmul.f32 %v3151, %v3392
        %v3398 = vmul.f32 %v3152, %v3392
        %v3399 = vmul.f32 %v3153, %v3392
        %v3400 = vmul.f32 %v3154, %v3392
        %v3401 = vmul.f32 %v3155, %v3392
        %v3402 = vmul.f32 %v3156, %v3392
        %v3403 = vmul.f32 %v3157, %v3392
        %v3404 = vmul.f32 %v3158, %v3392
        %v3405 = vmul.f32 %v3159, %v3392
        %v3406 = vmul.f32 %v3160, %v3392
        %v3407 = vmul.f32 %v3161, %v3392
        %v3408 = vmul.f32 %v3162, %v3392
        %v3409 = vmul.f32 %v3163, %v3392
        %v3410 = vmul.f32 %v3164, %v3392
        %v3411 = vmul.f32 %v3165, %v3392
        %v3412 = vmul.f32 %v3166, %v3392
        %v3413 = vmul.f32 %v3167, %v3392
        %v3414 = vmul.f32 %v3168, %v3392
        %v3415 = vmul.f32 %v3169, %v3392
        %v3416 = vmul.f32 %v3170, %v3392
        %v3417 = vmul.f32 %v3171, %v3392
        %v3418 = vmul.f32 %v3172, %v3392
        %v3419 = vmul.f32 %v3173, %v3392
        %v3420 = vmul.f32 %v3174, %v3392
        %v3421 = vmul.f32 %v3175, %v3392
        %v3422 = vmul.f32 %v3176, %v3392
        %v3423 = vmul.f32 %v3177, %v3392
        %v3424 = vmul.f32 %v3178, %v3392
        %v3425 = vadd.f32 %v3357, %v3393
        %v3426 = vadd.f32 %v3358, %v3394
        %v3427 = vadd.f32 %v3359, %v3395
        %v3428 = vadd.f32 %v3360, %v3396
        %v3429 = vadd.f32 %v3361, %v3397
        %v3430 = vadd.f32 %v3362, %v3398
        %v3431 = vadd.f32 %v3363, %v3399
        %v3432 = vadd.f32 %v3364, %v3400
        %v3433 = vadd.f32 %v3365, %v3401
        %v3434 = vadd.f32 %v3366, %v3402
        %v3435 = vadd.f32 %v3367, %v3403
        %v3436 = vadd.f32 %v3368, %v3404
        %v3437 = vadd.f32 %v3369, %v3405
        %v3438 = vadd.f32 %v3370, %v3406
        %v3439 = vadd.f32 %v3371, %v3407
        %v3440 = vadd.f32 %v3372, %v3408
        %v3441 = vadd.f32 %v3373, %v3409
        %v3442 = vadd.f32 %v3374, %v3410
        %v3443 = vadd.f32 %v3375, %v3411
        %v3444 = vadd.f32 %v3376, %v3412
        %v3445 = vadd.f32 %v3377, %v3413
        %v3446 = vadd.f32 %v3378, %v3414
        %v3447 = vadd.f32 %v3379, %v3415
        %v3448 = vadd.f32 %v3380, %v3416
        %v3449 = vadd.f32 %v3381, %v3417
        %v3450 = vadd.f32 %v3382, %v3418
        %v3451 = vadd.f32 %v3383, %v3419
        %v3452 = vadd.f32 %v3384, %v3420
        %v3453 = vadd.f32 %v3385, %v3421
        %v3454 = vadd.f32 %v3386, %v3422
        %v3455 = vadd.f32 %v3387, %v3423
        %v3456 = vadd.f32 %v3388, %v3424
        %v3457 = vlaneseq
        %v3458 = vshrl.u32 %v3457, 7
        %v3459 = vsub.s32 1, %v3458
        %v3460 = vrot.slane %v538, %v3459
        %v3461 = vmul.f32 %v3149, %v3460
        %v3462 = vmul.f32 %v3150, %v3460
        %v3463 = vmul.f32 %v3151, %v3460
        %v3464 = vmul.f32 %v3152, %v3460
        %v3465 = vmul.f32 %v3153, %v3460
        %v3466 = vmul.f32 %v3154, %v3460
        %v3467 = vmul.f32 %v3155, %v3460
        %v3468 = vmul.f32 %v3156, %v3460
        %v3469 = vmul.f32 %v3157, %v3460
        %v3470 = vmul.f32 %v3158, %v3460
        %v3471 = vmul.f32 %v3159, %v3460
        %v3472 = vmul.f32 %v3160, %v3460
        %v3473 = vmul.f32 %v3161, %v3460
        %v3474 = vmul.f32 %v3162, %v3460
        %v3475 = vmul.f32 %v3163, %v3460
        %v3476 = vmul.f32 %v3164, %v3460
        %v3477 = vmul.f32 %v3165, %v3460
        %v3478 = vmul.f32 %v3166, %v3460
        %v3479 = vmul.f32 %v3167, %v3460
        %v3480 = vmul.f32 %v3168, %v3460
        %v3481 = vmul.f32 %v3169, %v3460
        %v3482 = vmul.f32 %v3170, %v3460
        %v3483 = vmul.f32 %v3171, %v3460
        %v3484 = vmul.f32 %v3172, %v3460
        %v3485 = vmul.f32 %v3173, %v3460
        %v3486 = vmul.f32 %v3174, %v3460
        %v3487 = vmul.f32 %v3175, %v3460
        %v3488 = vmul.f32 %v3176, %v3460
        %v3489 = vmul.f32 %v3177, %v3460
        %v3490 = vmul.f32 %v3178, %v3460
        %v3491 = vmul.f32 %v3179, %v3460
        %v3492 = vmul.f32 %v3180, %v3460
        %v3493 = vadd.f32 %v3425, %v3461
        %v3494 = vadd.f32 %v3426, %v3462
        %v3495 = vadd.f32 %v3427, %v3463
        %v3496 = vadd.f32 %v3428, %v3464
        %v3497 = vadd.f32 %v3429, %v3465
        %v3498 = vadd.f32 %v3430, %v3466
        %v3499 = vadd.f32 %v3431, %v3467
        %v3500 = vadd.f32 %v3432, %v3468
        %v3501 = vadd.f32 %v3433, %v3469
        %v3502 = vadd.f32 %v3434, %v3470
        %v3503 = vadd.f32 %v3435, %v3471
        %v3504 = vadd.f32 %v3436, %v3472
        %v3505 = vadd.f32 %v3437, %v3473
        %v3506 = vadd.f32 %v3438, %v3474
        %v3507 = vadd.f32 %v3439, %v3475
        %v3508 = vadd.f32 %v3440, %v3476
        %v3509 = vadd.f32 %v3441, %v3477
        %v3510 = vadd.f32 %v3442, %v3478
        %v3511 = vadd.f32 %v3443, %v3479
        %v3512 = vadd.f32 %v3444, %v3480
        %v3513 = vadd.f32 %v3445, %v3481
        %v3514 = vadd.f32 %v3446, %v3482
        %v3515 = vadd.f32 %v3447, %v3483
        %v3516 = vadd.f32 %v3448, %v3484
        %v3517 = vadd.f32 %v3449, %v3485
        %v3518 = vadd.f32 %v3450, %v3486
        %v3519 = vadd.f32 %v3451, %v3487
        %v3520 = vadd.f32 %v3452, %v3488
        %v3521 = vadd.f32 %v3453, %v3489
        %v3522 = vadd.f32 %v3454, %v3490
        %v3523 = vadd.f32 %v3455, %v3491
        %v3524 = vadd.f32 %v3456, %v3492
        %v3525 = vlaneseq
        %v3526 = vshrl.u32 %v3525, 7
        %v3527 = vsub.s32 0, %v3526
        %v3528 = vrot.slane %v539, %v3527
        %v3529 = vmul.f32 %v3151, %v3528
        %v3530 = vmul.f32 %v3152, %v3528
        %v3531 = vmul.f32 %v3153, %v3528
        %v3532 = vmul.f32 %v3154, %v3528
        %v3533 = vmul.f32 %v3155, %v3528
        %v3534 = vmul.f32 %v3156, %v3528
        %v3535 = vmul.f32 %v3157, %v3528
        %v3536 = vmul.f32 %v3158, %v3528
        %v3537 = vmul.f32 %v3159, %v3528
        %v3538 = vmul.f32 %v3160, %v3528
        %v3539 = vmul.f32 %v3161, %v3528
        %v3540 = vmul.f32 %v3162, %v3528
        %v3541 = vmul.f32 %v3163, %v3528
        %v3542 = vmul.f32 %v3164, %v3528
        %v3543 = vmul.f32 %v3165, %v3528
        %v3544 = vmul.f32 %v3166, %v3528
        %v3545 = vmul.f32 %v3167, %v3528
        %v3546 = vmul.f32 %v3168, %v3528
        %v3547 = vmul.f32 %v3169, %v3528
        %v3548 = vmul.f32 %v3170, %v3528
        %v3549 = vmul.f32 %v3171, %v3528
        %v3550 = vmul.f32 %v3172, %v3528
        %v3551 = vmul.f32 %v3173, %v3528
        %v3552 = vmul.f32 %v3174, %v3528
        %v3553 = vmul.f32 %v3175, %v3528
        %v3554 = vmul.f32 %v3176, %v3528
        %v3555 = vmul.f32 %v3177, %v3528
        %v3556 = vmul.f32 %v3178, %v3528
        %v3557 = vmul.f32 %v3179, %v3528
        %v3558 = vmul.f32 %v3180, %v3528
        %v3559 = vmul.f32 %v3181, %v3528
        %v3560 = vmul.f32 %v3182, %v3528
        %v3561 = vadd.f32 %v3493, %v3529
        %v3562 = vadd.f32 %v3494, %v3530
        %v3563 = vadd.f32 %v3495, %v3531
        %v3564 = vadd.f32 %v3496, %v3532
        %v3565 = vadd.f32 %v3497, %v3533
        %v3566 = vadd.f32 %v3498, %v3534
        %v3567 = vadd.f32 %v3499, %v3535
        %v3568 = vadd.f32 %v3500, %v3536
        %v3569 = vadd.f32 %v3501, %v3537
        %v3570 = vadd.f32 %v3502, %v3538
        %v3571 = vadd.f32 %v3503, %v3539
        %v3572 = vadd.f32 %v3504, %v3540
        %v3573 = vadd.f32 %v3505, %v3541
        %v3574 = vadd.f32 %v3506, %v3542
        %v3575 = vadd.f32 %v3507, %v3543
        %v3576 = vadd.f32 %v3508, %v3544
        %v3577 = vadd.f32 %v3509, %v3545
        %v3578 = vadd.f32 %v3510, %v3546
        %v3579 = vadd.f32 %v3511, %v3547
        %v3580 = vadd.f32 %v3512, %v3548
        %v3581 = vadd.f32 %v3513, %v3549
        %v3582 = vadd.f32 %v3514, %v3550
        %v3583 = vadd.f32 %v3515, %v3551
        %v3584 = vadd.f32 %v3516, %v3552
        %v3585 = vadd.f32 %v3517, %v3553
        %v3586 = vadd.f32 %v3518, %v3554
        %v3587 = vadd.f32 %v3519, %v3555
        %v3588 = vadd.f32 %v3520, %v3556
        %v3589 = vadd.f32 %v3521, %v3557
        %v3590 = vadd.f32 %v3522, %v3558
        %v3591 = vadd.f32 %v3523, %v3559
        %v3592 = vadd.f32 %v3524, %v3560
        %v3593 = vlaneseq
        %v3594 = vshrl.u32 %v3593, 7
        %v3595 = vsub.s32 7, %v3594
        %v3596 = vrot.slane %v539, %v3595
        %v3597 = vmul.f32 %v3153, %v3596
        %v3598 = vmul.f32 %v3154, %v3596
        %v3599 = vmul.f32 %v3155, %v3596
        %v3600 = vmul.f32 %v3156, %v3596
        %v3601 = vmul.f32 %v3157, %v3596
        %v3602 = vmul.f32 %v3158, %v3596
        %v3603 = vmul.f32 %v3159, %v3596
        %v3604 = vmul.f32 %v3160, %v3596
        %v3605 = vmul.f32 %v3161, %v3596
        %v3606 = vmul.f32 %v3162, %v3596
        %v3607 = vmul.f32 %v3163, %v3596
        %v3608 = vmul.f32 %v3164, %v3596
        %v3609 = vmul.f32 %v3165, %v3596
        %v3610 = vmul.f32 %v3166, %v3596
        %v3611 = vmul.f32 %v3167, %v3596
        %v3612 = vmul.f32 %v3168, %v3596
        %v3613 = vmul.f32 %v3169, %v3596
        %v3614 = vmul.f32 %v3170, %v3596
        %v3615 = vmul.f32 %v3171, %v3596
        %v3616 = vmul.f32 %v3172, %v3596
        %v3617 = vmul.f32 %v3173, %v3596
        %v3618 = vmul.f32 %v3174, %v3596
        %v3619 = vmul.f32 %v3175, %v3596
        %v3620 = vmul.f32 %v3176, %v3596
        %v3621 = vmul.f32 %v3177, %v3596
        %v3622 = vmul.f32 %v3178, %v3596
        %v3623 = vmul.f32 %v3179, %v3596
        %v3624 = vmul.f32 %v3180, %v3596
        %v3625 = vmul.f32 %v3181, %v3596
        %v3626 = vmul.f32 %v3182, %v3596
        %v3627 = vmul.f32 %v3183, %v3596
        %v3628 = vmul.f32 %v3184, %v3596
        %v3629 = vadd.f32 %v3561, %v3597
        %v3630 = vadd.f32 %v3562, %v3598
        %v3631 = vadd.f32 %v3563, %v3599
        %v3632 = vadd.f32 %v3564, %v3600
        %v3633 = vadd.f32 %v3565, %v3601
        %v3634 = vadd.f32 %v3566, %v3602
        %v3635 = vadd.f32 %v3567, %v3603
        %v3636 = vadd.f32 %v3568, %v3604
        %v3637 = vadd.f32 %v3569, %v3605
        %v3638 = vadd.f32 %v3570, %v3606
        %v3639 = vadd.f32 %v3571, %v3607
        %v3640 = vadd.f32 %v3572, %v3608
        %v3641 = vadd.f32 %v3573, %v3609
        %v3642 = vadd.f32 %v3574, %v3610
        %v3643 = vadd.f32 %v3575, %v3611
        %v3644 = vadd.f32 %v3576, %v3612
        %v3645 = vadd.f32 %v3577, %v3613
        %v3646 = vadd.f32 %v3578, %v3614
        %v3647 = vadd.f32 %v3579, %v3615
        %v3648 = vadd.f32 %v3580, %v3616
        %v3649 = vadd.f32 %v3581, %v3617
        %v3650 = vadd.f32 %v3582, %v3618
        %v3651 = vadd.f32 %v3583, %v3619
        %v3652 = vadd.f32 %v3584, %v3620
        %v3653 = vadd.f32 %v3585, %v3621
        %v3654 = vadd.f32 %v3586, %v3622
        %v3655 = vadd.f32 %v3587, %v3623
        %v3656 = vadd.f32 %v3588, %v3624
        %v3657 = vadd.f32 %v3589, %v3625
        %v3658 = vadd.f32 %v3590, %v3626
        %v3659 = vadd.f32 %v3591, %v3627
        %v3660 = vadd.f32 %v3592, %v3628
        %v3661 = vld [vmem:[#allocation2 + $0xb] sm:$0xff]
        %v3662 = vld [vmem:[#allocation2 + $0x13] sm:$0xff]
        %v3663 = vld [vmem:[#allocation2 + $0x2b] sm:$0xff]
        %v3664 = vld [vmem:[#allocation2 + $0x33] sm:$0xff]
        %v3665 = vld [vmem:[#allocation2 + $0x4b] sm:$0xff]
        %v3666 = vld [vmem:[#allocation2 + $0x53] sm:$0xff]
        %v3667 = vld [vmem:[#allocation2 + $0x6b] sm:$0xff]
        %v3668 = vld [vmem:[#allocation2 + $0x73] sm:$0xff]
        %v3669 = vld [vmem:[#allocation2 + $0x8b] sm:$0xff]
        %v3670 = vld [vmem:[#allocation2 + $0x93] sm:$0xff]
        %v3671 = vld [vmem:[#allocation2 + $0xab] sm:$0xff]
        %v3672 = vld [vmem:[#allocation2 + $0xb3] sm:$0xff]
        %v3673 = vld [vmem:[#allocation2 + $0xcb] sm:$0xff]
        %v3674 = vld [vmem:[#allocation2 + $0xd3] sm:$0xff]
        %v3675 = vld [vmem:[#allocation2 + $0xeb] sm:$0xff]
        %v3676 = vld [vmem:[#allocation2 + $0xf3] sm:$0xff]
        %v3677 = vld [vmem:[#allocation2 + $0x10b] sm:$0xff]
        %v3678 = vld [vmem:[#allocation2 + $0x113] sm:$0xff]
        %v3679 = vld [vmem:[#allocation2 + $0x12b] sm:$0xff]
        %v3680 = vld [vmem:[#allocation2 + $0x133] sm:$0xff]
        %v3681 = vld [vmem:[#allocation2 + $0x14b] sm:$0xff]
        %v3682 = vld [vmem:[#allocation2 + $0x153] sm:$0xff]
        %v3683 = vld [vmem:[#allocation2 + $0x16b] sm:$0xff]
        %v3684 = vld [vmem:[#allocation2 + $0x173] sm:$0xff]
        %v3685 = vld [vmem:[#allocation2 + $0x18b] sm:$0xff]
        %v3686 = vld [vmem:[#allocation2 + $0x193] sm:$0xff]
        %v3687 = vld [vmem:[#allocation2 + $0x1ab] sm:$0xff]
        %v3688 = vld [vmem:[#allocation2 + $0x1b3] sm:$0xff]
        %v3689 = vld [vmem:[#allocation2 + $0x1cb] sm:$0xff]
        %v3690 = vld [vmem:[#allocation2 + $0x1d3] sm:$0xff]
        %v3691 = vld [vmem:[#allocation2 + $0x1eb] sm:$0xff]
        %v3692 = vld [vmem:[#allocation2 + $0x1f3] sm:$0xff]
        %v3693 = vld [vmem:[#allocation2 + $0x20b] sm:$0xff]
        %v3694 = vld [vmem:[#allocation2 + $0x213] sm:$0xff]
        %v3695 = vld [vmem:[#allocation2 + $0x22b] sm:$0xff]
        %v3696 = vld [vmem:[#allocation2 + $0x233] sm:$0xff]
        %v3697 = vld [vmem:[#allocation2 + $0x24b] sm:$0xff]
        %v3698 = vld [vmem:[#allocation2 + $0x253] sm:$0xff]
        %v3699 = vld [vmem:[#allocation2 + $0x26b] sm:$0xff]
        %v3700 = vld [vmem:[#allocation2 + $0x273] sm:$0xff]
        %v3701 = vld [vmem:[#allocation2 + $0x28b] sm:$0xff]
        %v3702 = vld [vmem:[#allocation2 + $0x293] sm:$0xff]
        %v3703 = vld [vmem:[#allocation2 + $0x2ab] sm:$0xff]
        %v3704 = vld [vmem:[#allocation2 + $0x2b3] sm:$0xff]
        %v3705 = vlaneseq
        %v3706 = vshrl.u32 %v3705, 7
        %v3707 = vsub.s32 6, %v3706
        %v3708 = vrot.slane %v534, %v3707
        %v3709 = vmul.f32 %v3661, %v3708
        %v3710 = vmul.f32 %v3662, %v3708
        %v3711 = vmul.f32 %v3663, %v3708
        %v3712 = vmul.f32 %v3664, %v3708
        %v3713 = vmul.f32 %v3665, %v3708
        %v3714 = vmul.f32 %v3666, %v3708
        %v3715 = vmul.f32 %v3667, %v3708
        %v3716 = vmul.f32 %v3668, %v3708
        %v3717 = vmul.f32 %v3669, %v3708
        %v3718 = vmul.f32 %v3670, %v3708
        %v3719 = vmul.f32 %v3671, %v3708
        %v3720 = vmul.f32 %v3672, %v3708
        %v3721 = vmul.f32 %v3673, %v3708
        %v3722 = vmul.f32 %v3674, %v3708
        %v3723 = vmul.f32 %v3675, %v3708
        %v3724 = vmul.f32 %v3676, %v3708
        %v3725 = vmul.f32 %v3677, %v3708
        %v3726 = vmul.f32 %v3678, %v3708
        %v3727 = vmul.f32 %v3679, %v3708
        %v3728 = vmul.f32 %v3680, %v3708
        %v3729 = vmul.f32 %v3681, %v3708
        %v3730 = vmul.f32 %v3682, %v3708
        %v3731 = vmul.f32 %v3683, %v3708
        %v3732 = vmul.f32 %v3684, %v3708
        %v3733 = vmul.f32 %v3685, %v3708
        %v3734 = vmul.f32 %v3686, %v3708
        %v3735 = vmul.f32 %v3687, %v3708
        %v3736 = vmul.f32 %v3688, %v3708
        %v3737 = vmul.f32 %v3689, %v3708
        %v3738 = vmul.f32 %v3690, %v3708
        %v3739 = vmul.f32 %v3691, %v3708
        %v3740 = vmul.f32 %v3692, %v3708
        %v3741 = vadd.f32 %v3629, %v3709
        %v3742 = vadd.f32 %v3630, %v3710
        %v3743 = vadd.f32 %v3631, %v3711
        %v3744 = vadd.f32 %v3632, %v3712
        %v3745 = vadd.f32 %v3633, %v3713
        %v3746 = vadd.f32 %v3634, %v3714
        %v3747 = vadd.f32 %v3635, %v3715
        %v3748 = vadd.f32 %v3636, %v3716
        %v3749 = vadd.f32 %v3637, %v3717
        %v3750 = vadd.f32 %v3638, %v3718
        %v3751 = vadd.f32 %v3639, %v3719
        %v3752 = vadd.f32 %v3640, %v3720
        %v3753 = vadd.f32 %v3641, %v3721
        %v3754 = vadd.f32 %v3642, %v3722
        %v3755 = vadd.f32 %v3643, %v3723
        %v3756 = vadd.f32 %v3644, %v3724
        %v3757 = vadd.f32 %v3645, %v3725
        %v3758 = vadd.f32 %v3646, %v3726
        %v3759 = vadd.f32 %v3647, %v3727
        %v3760 = vadd.f32 %v3648, %v3728
        %v3761 = vadd.f32 %v3649, %v3729
        %v3762 = vadd.f32 %v3650, %v3730
        %v3763 = vadd.f32 %v3651, %v3731
        %v3764 = vadd.f32 %v3652, %v3732
        %v3765 = vadd.f32 %v3653, %v3733
        %v3766 = vadd.f32 %v3654, %v3734
        %v3767 = vadd.f32 %v3655, %v3735
        %v3768 = vadd.f32 %v3656, %v3736
        %v3769 = vadd.f32 %v3657, %v3737
        %v3770 = vadd.f32 %v3658, %v3738
        %v3771 = vadd.f32 %v3659, %v3739
        %v3772 = vadd.f32 %v3660, %v3740
        %v3773 = vlaneseq
        %v3774 = vshrl.u32 %v3773, 7
        %v3775 = vsub.s32 5, %v3774
        %v3776 = vrot.slane %v535, %v3775
        %v3777 = vmul.f32 %v3663, %v3776
        %v3778 = vmul.f32 %v3664, %v3776
        %v3779 = vmul.f32 %v3665, %v3776
        %v3780 = vmul.f32 %v3666, %v3776
        %v3781 = vmul.f32 %v3667, %v3776
        %v3782 = vmul.f32 %v3668, %v3776
        %v3783 = vmul.f32 %v3669, %v3776
        %v3784 = vmul.f32 %v3670, %v3776
        %v3785 = vmul.f32 %v3671, %v3776
        %v3786 = vmul.f32 %v3672, %v3776
        %v3787 = vmul.f32 %v3673, %v3776
        %v3788 = vmul.f32 %v3674, %v3776
        %v3789 = vmul.f32 %v3675, %v3776
        %v3790 = vmul.f32 %v3676, %v3776
        %v3791 = vmul.f32 %v3677, %v3776
        %v3792 = vmul.f32 %v3678, %v3776
        %v3793 = vmul.f32 %v3679, %v3776
        %v3794 = vmul.f32 %v3680, %v3776
        %v3795 = vmul.f32 %v3681, %v3776
        %v3796 = vmul.f32 %v3682, %v3776
        %v3797 = vmul.f32 %v3683, %v3776
        %v3798 = vmul.f32 %v3684, %v3776
        %v3799 = vmul.f32 %v3685, %v3776
        %v3800 = vmul.f32 %v3686, %v3776
        %v3801 = vmul.f32 %v3687, %v3776
        %v3802 = vmul.f32 %v3688, %v3776
        %v3803 = vmul.f32 %v3689, %v3776
        %v3804 = vmul.f32 %v3690, %v3776
        %v3805 = vmul.f32 %v3691, %v3776
        %v3806 = vmul.f32 %v3692, %v3776
        %v3807 = vmul.f32 %v3693, %v3776
        %v3808 = vmul.f32 %v3694, %v3776
        %v3809 = vadd.f32 %v3741, %v3777
        %v3810 = vadd.f32 %v3742, %v3778
        %v3811 = vadd.f32 %v3743, %v3779
        %v3812 = vadd.f32 %v3744, %v3780
        %v3813 = vadd.f32 %v3745, %v3781
        %v3814 = vadd.f32 %v3746, %v3782
        %v3815 = vadd.f32 %v3747, %v3783
        %v3816 = vadd.f32 %v3748, %v3784
        %v3817 = vadd.f32 %v3749, %v3785
        %v3818 = vadd.f32 %v3750, %v3786
        %v3819 = vadd.f32 %v3751, %v3787
        %v3820 = vadd.f32 %v3752, %v3788
        %v3821 = vadd.f32 %v3753, %v3789
        %v3822 = vadd.f32 %v3754, %v3790
        %v3823 = vadd.f32 %v3755, %v3791
        %v3824 = vadd.f32 %v3756, %v3792
        %v3825 = vadd.f32 %v3757, %v3793
        %v3826 = vadd.f32 %v3758, %v3794
        %v3827 = vadd.f32 %v3759, %v3795
        %v3828 = vadd.f32 %v3760, %v3796
        %v3829 = vadd.f32 %v3761, %v3797
        %v3830 = vadd.f32 %v3762, %v3798
        %v3831 = vadd.f32 %v3763, %v3799
        %v3832 = vadd.f32 %v3764, %v3800
        %v3833 = vadd.f32 %v3765, %v3801
        %v3834 = vadd.f32 %v3766, %v3802
        %v3835 = vadd.f32 %v3767, %v3803
        %v3836 = vadd.f32 %v3768, %v3804
        %v3837 = vadd.f32 %v3769, %v3805
        %v3838 = vadd.f32 %v3770, %v3806
        %v3839 = vadd.f32 %v3771, %v3807
        %v3840 = vadd.f32 %v3772, %v3808
        %v3841 = vlaneseq
        %v3842 = vshrl.u32 %v3841, 7
        %v3843 = vsub.s32 4, %v3842
        %v3844 = vrot.slane %v536, %v3843
        %v3845 = vmul.f32 %v3665, %v3844
        %v3846 = vmul.f32 %v3666, %v3844
        %v3847 = vmul.f32 %v3667, %v3844
        %v3848 = vmul.f32 %v3668, %v3844
        %v3849 = vmul.f32 %v3669, %v3844
        %v3850 = vmul.f32 %v3670, %v3844
        %v3851 = vmul.f32 %v3671, %v3844
        %v3852 = vmul.f32 %v3672, %v3844
        %v3853 = vmul.f32 %v3673, %v3844
        %v3854 = vmul.f32 %v3674, %v3844
        %v3855 = vmul.f32 %v3675, %v3844
        %v3856 = vmul.f32 %v3676, %v3844
        %v3857 = vmul.f32 %v3677, %v3844
        %v3858 = vmul.f32 %v3678, %v3844
        %v3859 = vmul.f32 %v3679, %v3844
        %v3860 = vmul.f32 %v3680, %v3844
        %v3861 = vmul.f32 %v3681, %v3844
        %v3862 = vmul.f32 %v3682, %v3844
        %v3863 = vmul.f32 %v3683, %v3844
        %v3864 = vmul.f32 %v3684, %v3844
        %v3865 = vmul.f32 %v3685, %v3844
        %v3866 = vmul.f32 %v3686, %v3844
        %v3867 = vmul.f32 %v3687, %v3844
        %v3868 = vmul.f32 %v3688, %v3844
        %v3869 = vmul.f32 %v3689, %v3844
        %v3870 = vmul.f32 %v3690, %v3844
        %v3871 = vmul.f32 %v3691, %v3844
        %v3872 = vmul.f32 %v3692, %v3844
        %v3873 = vmul.f32 %v3693, %v3844
        %v3874 = vmul.f32 %v3694, %v3844
        %v3875 = vmul.f32 %v3695, %v3844
        %v3876 = vmul.f32 %v3696, %v3844
        %v3877 = vadd.f32 %v3809, %v3845
        %v3878 = vadd.f32 %v3810, %v3846
        %v3879 = vadd.f32 %v3811, %v3847
        %v3880 = vadd.f32 %v3812, %v3848
        %v3881 = vadd.f32 %v3813, %v3849
        %v3882 = vadd.f32 %v3814, %v3850
        %v3883 = vadd.f32 %v3815, %v3851
        %v3884 = vadd.f32 %v3816, %v3852
        %v3885 = vadd.f32 %v3817, %v3853
        %v3886 = vadd.f32 %v3818, %v3854
        %v3887 = vadd.f32 %v3819, %v3855
        %v3888 = vadd.f32 %v3820, %v3856
        %v3889 = vadd.f32 %v3821, %v3857
        %v3890 = vadd.f32 %v3822, %v3858
        %v3891 = vadd.f32 %v3823, %v3859
        %v3892 = vadd.f32 %v3824, %v3860
        %v3893 = vadd.f32 %v3825, %v3861
        %v3894 = vadd.f32 %v3826, %v3862
        %v3895 = vadd.f32 %v3827, %v3863
        %v3896 = vadd.f32 %v3828, %v3864
        %v3897 = vadd.f32 %v3829, %v3865
        %v3898 = vadd.f32 %v3830, %v3866
        %v3899 = vadd.f32 %v3831, %v3867
        %v3900 = vadd.f32 %v3832, %v3868
        %v3901 = vadd.f32 %v3833, %v3869
        %v3902 = vadd.f32 %v3834, %v3870
        %v3903 = vadd.f32 %v3835, %v3871
        %v3904 = vadd.f32 %v3836, %v3872
        %v3905 = vadd.f32 %v3837, %v3873
        %v3906 = vadd.f32 %v3838, %v3874
        %v3907 = vadd.f32 %v3839, %v3875
        %v3908 = vadd.f32 %v3840, %v3876
        %v3909 = vlaneseq
        %v3910 = vshrl.u32 %v3909, 7
        %v3911 = vsub.s32 3, %v3910
        %v3912 = vrot.slane %v537, %v3911
        %v3913 = vmul.f32 %v3667, %v3912
        %v3914 = vmul.f32 %v3668, %v3912
        %v3915 = vmul.f32 %v3669, %v3912
        %v3916 = vmul.f32 %v3670, %v3912
        %v3917 = vmul.f32 %v3671, %v3912
        %v3918 = vmul.f32 %v3672, %v3912
        %v3919 = vmul.f32 %v3673, %v3912
        %v3920 = vmul.f32 %v3674, %v3912
        %v3921 = vmul.f32 %v3675, %v3912
        %v3922 = vmul.f32 %v3676, %v3912
        %v3923 = vmul.f32 %v3677, %v3912
        %v3924 = vmul.f32 %v3678, %v3912
        %v3925 = vmul.f32 %v3679, %v3912
        %v3926 = vmul.f32 %v3680, %v3912
        %v3927 = vmul.f32 %v3681, %v3912
        %v3928 = vmul.f32 %v3682, %v3912
        %v3929 = vmul.f32 %v3683, %v3912
        %v3930 = vmul.f32 %v3684, %v3912
        %v3931 = vmul.f32 %v3685, %v3912
        %v3932 = vmul.f32 %v3686, %v3912
        %v3933 = vmul.f32 %v3687, %v3912
        %v3934 = vmul.f32 %v3688, %v3912
        %v3935 = vmul.f32 %v3689, %v3912
        %v3936 = vmul.f32 %v3690, %v3912
        %v3937 = vmul.f32 %v3691, %v3912
        %v3938 = vmul.f32 %v3692, %v3912
        %v3939 = vmul.f32 %v3693, %v3912
        %v3940 = vmul.f32 %v3694, %v3912
        %v3941 = vmul.f32 %v3695, %v3912
        %v3942 = vmul.f32 %v3696, %v3912
        %v3943 = vmul.f32 %v3697, %v3912
        %v3944 = vmul.f32 %v3698, %v3912
        %v3945 = vadd.f32 %v3877, %v3913
        %v3946 = vadd.f32 %v3878, %v3914
        %v3947 = vadd.f32 %v3879, %v3915
        %v3948 = vadd.f32 %v3880, %v3916
        %v3949 = vadd.f32 %v3881, %v3917
        %v3950 = vadd.f32 %v3882, %v3918
        %v3951 = vadd.f32 %v3883, %v3919
        %v3952 = vadd.f32 %v3884, %v3920
        %v3953 = vadd.f32 %v3885, %v3921
        %v3954 = vadd.f32 %v3886, %v3922
        %v3955 = vadd.f32 %v3887, %v3923
        %v3956 = vadd.f32 %v3888, %v3924
        %v3957 = vadd.f32 %v3889, %v3925
        %v3958 = vadd.f32 %v3890, %v3926
        %v3959 = vadd.f32 %v3891, %v3927
        %v3960 = vadd.f32 %v3892, %v3928
        %v3961 = vadd.f32 %v3893, %v3929
        %v3962 = vadd.f32 %v3894, %v3930
        %v3963 = vadd.f32 %v3895, %v3931
        %v3964 = vadd.f32 %v3896, %v3932
        %v3965 = vadd.f32 %v3897, %v3933
        %v3966 = vadd.f32 %v3898, %v3934
        %v3967 = vadd.f32 %v3899, %v3935
        %v3968 = vadd.f32 %v3900, %v3936
        %v3969 = vadd.f32 %v3901, %v3937
        %v3970 = vadd.f32 %v3902, %v3938
        %v3971 = vadd.f32 %v3903, %v3939
        %v3972 = vadd.f32 %v3904, %v3940
        %v3973 = vadd.f32 %v3905, %v3941
        %v3974 = vadd.f32 %v3906, %v3942
        %v3975 = vadd.f32 %v3907, %v3943
        %v3976 = vadd.f32 %v3908, %v3944
        %v3977 = vlaneseq
        %v3978 = vshrl.u32 %v3977, 7
        %v3979 = vsub.s32 2, %v3978
        %v3980 = vrot.slane %v538, %v3979
        %v3981 = vmul.f32 %v3669, %v3980
        %v3982 = vmul.f32 %v3670, %v3980
        %v3983 = vmul.f32 %v3671, %v3980
        %v3984 = vmul.f32 %v3672, %v3980
        %v3985 = vmul.f32 %v3673, %v3980
        %v3986 = vmul.f32 %v3674, %v3980
        %v3987 = vmul.f32 %v3675, %v3980
        %v3988 = vmul.f32 %v3676, %v3980
        %v3989 = vmul.f32 %v3677, %v3980
        %v3990 = vmul.f32 %v3678, %v3980
        %v3991 = vmul.f32 %v3679, %v3980
        %v3992 = vmul.f32 %v3680, %v3980
        %v3993 = vmul.f32 %v3681, %v3980
        %v3994 = vmul.f32 %v3682, %v3980
        %v3995 = vmul.f32 %v3683, %v3980
        %v3996 = vmul.f32 %v3684, %v3980
        %v3997 = vmul.f32 %v3685, %v3980
        %v3998 = vmul.f32 %v3686, %v3980
        %v3999 = vmul.f32 %v3687, %v3980
        %v4000 = vmul.f32 %v3688, %v3980
        %v4001 = vmul.f32 %v3689, %v3980
        %v4002 = vmul.f32 %v3690, %v3980
        %v4003 = vmul.f32 %v3691, %v3980
        %v4004 = vmul.f32 %v3692, %v3980
        %v4005 = vmul.f32 %v3693, %v3980
        %v4006 = vmul.f32 %v3694, %v3980
        %v4007 = vmul.f32 %v3695, %v3980
        %v4008 = vmul.f32 %v3696, %v3980
        %v4009 = vmul.f32 %v3697, %v3980
        %v4010 = vmul.f32 %v3698, %v3980
        %v4011 = vmul.f32 %v3699, %v3980
        %v4012 = vmul.f32 %v3700, %v3980
        %v4013 = vadd.f32 %v3945, %v3981
        %v4014 = vadd.f32 %v3946, %v3982
        %v4015 = vadd.f32 %v3947, %v3983
        %v4016 = vadd.f32 %v3948, %v3984
        %v4017 = vadd.f32 %v3949, %v3985
        %v4018 = vadd.f32 %v3950, %v3986
        %v4019 = vadd.f32 %v3951, %v3987
        %v4020 = vadd.f32 %v3952, %v3988
        %v4021 = vadd.f32 %v3953, %v3989
        %v4022 = vadd.f32 %v3954, %v3990
        %v4023 = vadd.f32 %v3955, %v3991
        %v4024 = vadd.f32 %v3956, %v3992
        %v4025 = vadd.f32 %v3957, %v3993
        %v4026 = vadd.f32 %v3958, %v3994
        %v4027 = vadd.f32 %v3959, %v3995
        %v4028 = vadd.f32 %v3960, %v3996
        %v4029 = vadd.f32 %v3961, %v3997
        %v4030 = vadd.f32 %v3962, %v3998
        %v4031 = vadd.f32 %v3963, %v3999
        %v4032 = vadd.f32 %v3964, %v4000
        %v4033 = vadd.f32 %v3965, %v4001
        %v4034 = vadd.f32 %v3966, %v4002
        %v4035 = vadd.f32 %v3967, %v4003
        %v4036 = vadd.f32 %v3968, %v4004
        %v4037 = vadd.f32 %v3969, %v4005
        %v4038 = vadd.f32 %v3970, %v4006
        %v4039 = vadd.f32 %v3971, %v4007
        %v4040 = vadd.f32 %v3972, %v4008
        %v4041 = vadd.f32 %v3973, %v4009
        %v4042 = vadd.f32 %v3974, %v4010
        %v4043 = vadd.f32 %v3975, %v4011
        %v4044 = vadd.f32 %v3976, %v4012
        %v4045 = vlaneseq
        %v4046 = vshrl.u32 %v4045, 7
        %v4047 = vsub.s32 1, %v4046
        %v4048 = vrot.slane %v539, %v4047
        %v4049 = vmul.f32 %v3671, %v4048
        %v4050 = vmul.f32 %v3672, %v4048
        %v4051 = vmul.f32 %v3673, %v4048
        %v4052 = vmul.f32 %v3674, %v4048
        %v4053 = vmul.f32 %v3675, %v4048
        %v4054 = vmul.f32 %v3676, %v4048
        %v4055 = vmul.f32 %v3677, %v4048
        %v4056 = vmul.f32 %v3678, %v4048
        %v4057 = vmul.f32 %v3679, %v4048
        %v4058 = vmul.f32 %v3680, %v4048
        %v4059 = vmul.f32 %v3681, %v4048
        %v4060 = vmul.f32 %v3682, %v4048
        %v4061 = vmul.f32 %v3683, %v4048
        %v4062 = vmul.f32 %v3684, %v4048
        %v4063 = vmul.f32 %v3685, %v4048
        %v4064 = vmul.f32 %v3686, %v4048
        %v4065 = vmul.f32 %v3687, %v4048
        %v4066 = vmul.f32 %v3688, %v4048
        %v4067 = vmul.f32 %v3689, %v4048
        %v4068 = vmul.f32 %v3690, %v4048
        %v4069 = vmul.f32 %v3691, %v4048
        %v4070 = vmul.f32 %v3692, %v4048
        %v4071 = vmul.f32 %v3693, %v4048
        %v4072 = vmul.f32 %v3694, %v4048
        %v4073 = vmul.f32 %v3695, %v4048
        %v4074 = vmul.f32 %v3696, %v4048
        %v4075 = vmul.f32 %v3697, %v4048
        %v4076 = vmul.f32 %v3698, %v4048
        %v4077 = vmul.f32 %v3699, %v4048
        %v4078 = vmul.f32 %v3700, %v4048
        %v4079 = vmul.f32 %v3701, %v4048
        %v4080 = vmul.f32 %v3702, %v4048
        %v4081 = vadd.f32 %v4013, %v4049
        %v4082 = vadd.f32 %v4014, %v4050
        %v4083 = vadd.f32 %v4015, %v4051
        %v4084 = vadd.f32 %v4016, %v4052
        %v4085 = vadd.f32 %v4017, %v4053
        %v4086 = vadd.f32 %v4018, %v4054
        %v4087 = vadd.f32 %v4019, %v4055
        %v4088 = vadd.f32 %v4020, %v4056
        %v4089 = vadd.f32 %v4021, %v4057
        %v4090 = vadd.f32 %v4022, %v4058
        %v4091 = vadd.f32 %v4023, %v4059
        %v4092 = vadd.f32 %v4024, %v4060
        %v4093 = vadd.f32 %v4025, %v4061
        %v4094 = vadd.f32 %v4026, %v4062
        %v4095 = vadd.f32 %v4027, %v4063
        %v4096 = vadd.f32 %v4028, %v4064
        %v4097 = vadd.f32 %v4029, %v4065
        %v4098 = vadd.f32 %v4030, %v4066
        %v4099 = vadd.f32 %v4031, %v4067
        %v4100 = vadd.f32 %v4032, %v4068
        %v4101 = vadd.f32 %v4033, %v4069
        %v4102 = vadd.f32 %v4034, %v4070
        %v4103 = vadd.f32 %v4035, %v4071
        %v4104 = vadd.f32 %v4036, %v4072
        %v4105 = vadd.f32 %v4037, %v4073
        %v4106 = vadd.f32 %v4038, %v4074
        %v4107 = vadd.f32 %v4039, %v4075
        %v4108 = vadd.f32 %v4040, %v4076
        %v4109 = vadd.f32 %v4041, %v4077
        %v4110 = vadd.f32 %v4042, %v4078
        %v4111 = vadd.f32 %v4043, %v4079
        %v4112 = vadd.f32 %v4044, %v4080
        %v4113 = vlaneseq
        %v4114 = vshrl.u32 %v4113, 7
        %v4115 = vsub.s32 0, %v4114
        %v4116 = vrot.slane %v540, %v4115
        %v4117 = vmul.f32 %v3673, %v4116
        %v4118 = vmul.f32 %v3674, %v4116
        %v4119 = vmul.f32 %v3675, %v4116
        %v4120 = vmul.f32 %v3676, %v4116
        %v4121 = vmul.f32 %v3677, %v4116
        %v4122 = vmul.f32 %v3678, %v4116
        %v4123 = vmul.f32 %v3679, %v4116
        %v4124 = vmul.f32 %v3680, %v4116
        %v4125 = vmul.f32 %v3681, %v4116
        %v4126 = vmul.f32 %v3682, %v4116
        %v4127 = vmul.f32 %v3683, %v4116
        %v4128 = vmul.f32 %v3684, %v4116
        %v4129 = vmul.f32 %v3685, %v4116
        %v4130 = vmul.f32 %v3686, %v4116
        %v4131 = vmul.f32 %v3687, %v4116
        %v4132 = vmul.f32 %v3688, %v4116
        %v4133 = vmul.f32 %v3689, %v4116
        %v4134 = vmul.f32 %v3690, %v4116
        %v4135 = vmul.f32 %v3691, %v4116
        %v4136 = vmul.f32 %v3692, %v4116
        %v4137 = vmul.f32 %v3693, %v4116
        %v4138 = vmul.f32 %v3694, %v4116
        %v4139 = vmul.f32 %v3695, %v4116
        %v4140 = vmul.f32 %v3696, %v4116
        %v4141 = vmul.f32 %v3697, %v4116
        %v4142 = vmul.f32 %v3698, %v4116
        %v4143 = vmul.f32 %v3699, %v4116
        %v4144 = vmul.f32 %v3700, %v4116
        %v4145 = vmul.f32 %v3701, %v4116
        %v4146 = vmul.f32 %v3702, %v4116
        %v4147 = vmul.f32 %v3703, %v4116
        %v4148 = vmul.f32 %v3704, %v4116
        %v4149 = vadd.f32 %v4081, %v4117
        %v4150 = vadd.f32 %v4082, %v4118
        %v4151 = vadd.f32 %v4083, %v4119
        %v4152 = vadd.f32 %v4084, %v4120
        %v4153 = vadd.f32 %v4085, %v4121
        %v4154 = vadd.f32 %v4086, %v4122
        %v4155 = vadd.f32 %v4087, %v4123
        %v4156 = vadd.f32 %v4088, %v4124
        %v4157 = vadd.f32 %v4089, %v4125
        %v4158 = vadd.f32 %v4090, %v4126
        %v4159 = vadd.f32 %v4091, %v4127
        %v4160 = vadd.f32 %v4092, %v4128
        %v4161 = vadd.f32 %v4093, %v4129
        %v4162 = vadd.f32 %v4094, %v4130
        %v4163 = vadd.f32 %v4095, %v4131
        %v4164 = vadd.f32 %v4096, %v4132
        %v4165 = vadd.f32 %v4097, %v4133
        %v4166 = vadd.f32 %v4098, %v4134
        %v4167 = vadd.f32 %v4099, %v4135
        %v4168 = vadd.f32 %v4100, %v4136
        %v4169 = vadd.f32 %v4101, %v4137
        %v4170 = vadd.f32 %v4102, %v4138
        %v4171 = vadd.f32 %v4103, %v4139
        %v4172 = vadd.f32 %v4104, %v4140
        %v4173 = vadd.f32 %v4105, %v4141
        %v4174 = vadd.f32 %v4106, %v4142
        %v4175 = vadd.f32 %v4107, %v4143
        %v4176 = vadd.f32 %v4108, %v4144
        %v4177 = vadd.f32 %v4109, %v4145
        %v4178 = vadd.f32 %v4110, %v4146
        %v4179 = vadd.f32 %v4111, %v4147
        %v4180 = vadd.f32 %v4112, %v4148
        %v4181 = vld [vmem:[%s2] sm:$0x1]
        %v4183 = vlaneseq
        %v4184 = vshrl.u32 %v4183, 7
        %v4185 = vsub.s32 0, %v4184
        %v4186 = vrot.slane %v4181, %v4185
        %v4188 = vadd.f32 %v4149, %v4186
        %v4189 = vadd.f32 %v4150, %v4186
        %v4190 = vadd.f32 %v4151, %v4186
        %v4191 = vadd.f32 %v4152, %v4186
        %v4192 = vadd.f32 %v4153, %v4186
        %v4193 = vadd.f32 %v4154, %v4186
        %v4194 = vadd.f32 %v4155, %v4186
        %v4195 = vadd.f32 %v4156, %v4186
        %v4196 = vadd.f32 %v4157, %v4186
        %v4197 = vadd.f32 %v4158, %v4186
        %v4198 = vadd.f32 %v4159, %v4186
        %v4199 = vadd.f32 %v4160, %v4186
        %v4200 = vadd.f32 %v4161, %v4186
        %v4201 = vadd.f32 %v4162, %v4186
        %v4202 = vadd.f32 %v4163, %v4186
        %v4203 = vadd.f32 %v4164, %v4186
        %v4204 = vadd.f32 %v4165, %v4186
        %v4205 = vadd.f32 %v4166, %v4186
        %v4206 = vadd.f32 %v4167, %v4186
        %v4207 = vadd.f32 %v4168, %v4186
        %v4208 = vadd.f32 %v4169, %v4186
        %v4209 = vadd.f32 %v4170, %v4186
        %v4210 = vadd.f32 %v4171, %v4186
        %v4211 = vadd.f32 %v4172, %v4186
        %v4212 = vadd.f32 %v4173, %v4186
        %v4213 = vadd.f32 %v4174, %v4186
        %v4214 = vadd.f32 %v4175, %v4186
        %v4215 = vadd.f32 %v4176, %v4186
        %v4216 = vadd.f32 %v4177, %v4186
        %v4217 = vadd.f32 %v4178, %v4186
        %v4218 = vadd.f32 %v4179, %v4186
        %v4219 = vadd.f32 %v4180, %v4186
        %v4220 = vsel %vm411, %v4188, 0.0
        %4221 = vadd.xlane.f32.xlu0 %v4220
        %v4222 = vpop.xlane.xlu0 %4221
        %v4223 = vsel %vm411, %v4189, 0.0
        %4224 = vadd.xlane.f32.xlu0 %v4223
        %v4225 = vpop.xlane.xlu0 %4224
        %v4226 = vsel %vm411, %v4190, 0.0
        %4227 = vadd.xlane.f32.xlu0 %v4226
        %v4228 = vpop.xlane.xlu0 %4227
        %v4229 = vsel %vm411, %v4191, 0.0
        %4230 = vadd.xlane.f32.xlu0 %v4229
        %v4231 = vpop.xlane.xlu0 %4230
        %v4232 = vsel %vm411, %v4192, 0.0
        %4233 = vadd.xlane.f32.xlu0 %v4232
        %v4234 = vpop.xlane.xlu0 %4233
        %v4235 = vsel %vm411, %v4193, 0.0
        %4236 = vadd.xlane.f32.xlu0 %v4235
        %v4237 = vpop.xlane.xlu0 %4236
        %v4238 = vsel %vm411, %v4194, 0.0
        %4239 = vadd.xlane.f32.xlu0 %v4238
        %v4240 = vpop.xlane.xlu0 %4239
        %v4241 = vsel %vm411, %v4195, 0.0
        %4242 = vadd.xlane.f32.xlu0 %v4241
        %v4243 = vpop.xlane.xlu0 %4242
        %v4244 = vsel %vm411, %v4196, 0.0
        %4245 = vadd.xlane.f32.xlu0 %v4244
        %v4246 = vpop.xlane.xlu0 %4245
        %v4247 = vsel %vm411, %v4197, 0.0
        %4248 = vadd.xlane.f32.xlu0 %v4247
        %v4249 = vpop.xlane.xlu0 %4248
        %v4250 = vsel %vm411, %v4198, 0.0
        %4251 = vadd.xlane.f32.xlu0 %v4250
        %v4252 = vpop.xlane.xlu0 %4251
        %v4253 = vsel %vm411, %v4199, 0.0
        %4254 = vadd.xlane.f32.xlu0 %v4253
        %v4255 = vpop.xlane.xlu0 %4254
        %v4256 = vsel %vm411, %v4200, 0.0
        %4257 = vadd.xlane.f32.xlu0 %v4256
        %v4258 = vpop.xlane.xlu0 %4257
        %v4259 = vsel %vm411, %v4201, 0.0
        %4260 = vadd.xlane.f32.xlu0 %v4259
        %v4261 = vpop.xlane.xlu0 %4260
        %v4262 = vsel %vm411, %v4202, 0.0
        %4263 = vadd.xlane.f32.xlu0 %v4262
        %v4264 = vpop.xlane.xlu0 %4263
        %v4265 = vsel %vm411, %v4203, 0.0
        %4266 = vadd.xlane.f32.xlu0 %v4265
        %v4267 = vpop.xlane.xlu0 %4266
        %v4268 = vsel %vm411, %v4204, 0.0
        %4269 = vadd.xlane.f32.xlu0 %v4268
        %v4270 = vpop.xlane.xlu0 %4269
        %v4271 = vsel %vm411, %v4205, 0.0
        %4272 = vadd.xlane.f32.xlu0 %v4271
        %v4273 = vpop.xlane.xlu0 %4272
        %v4274 = vsel %vm411, %v4206, 0.0
        %4275 = vadd.xlane.f32.xlu0 %v4274
        %v4276 = vpop.xlane.xlu0 %4275
        %v4277 = vsel %vm411, %v4207, 0.0
        %4278 = vadd.xlane.f32.xlu0 %v4277
        %v4279 = vpop.xlane.xlu0 %4278
        %v4280 = vsel %vm411, %v4208, 0.0
        %4281 = vadd.xlane.f32.xlu0 %v4280
        %v4282 = vpop.xlane.xlu0 %4281
        %v4283 = vsel %vm411, %v4209, 0.0
        %4284 = vadd.xlane.f32.xlu0 %v4283
        %v4285 = vpop.xlane.xlu0 %4284
        %v4286 = vsel %vm411, %v4210, 0.0
        %4287 = vadd.xlane.f32.xlu0 %v4286
        %v4288 = vpop.xlane.xlu0 %4287
        %v4289 = vsel %vm411, %v4211, 0.0
        %4290 = vadd.xlane.f32.xlu0 %v4289
        %v4291 = vpop.xlane.xlu0 %4290
        %v4292 = vsel %vm411, %v4212, 0.0
        %4293 = vadd.xlane.f32.xlu0 %v4292
        %v4294 = vpop.xlane.xlu0 %4293
        %v4295 = vsel %vm411, %v4213, 0.0
        %4296 = vadd.xlane.f32.xlu0 %v4295
        %v4297 = vpop.xlane.xlu0 %4296
        %v4298 = vsel %vm411, %v4214, 0.0
        %4299 = vadd.xlane.f32.xlu0 %v4298
        %v4300 = vpop.xlane.xlu0 %4299
        %v4301 = vsel %vm411, %v4215, 0.0
        %4302 = vadd.xlane.f32.xlu0 %v4301
        %v4303 = vpop.xlane.xlu0 %4302
        %v4304 = vsel %vm411, %v4216, 0.0
        %4305 = vadd.xlane.f32.xlu0 %v4304
        %v4306 = vpop.xlane.xlu0 %4305
        %v4307 = vsel %vm411, %v4217, 0.0
        %4308 = vadd.xlane.f32.xlu0 %v4307
        %v4309 = vpop.xlane.xlu0 %4308
        %v4310 = vsel %vm411, %v4218, 0.0
        %4311 = vadd.xlane.f32.xlu0 %v4310
        %v4312 = vpop.xlane.xlu0 %4311
        %v4313 = vsel %vm411, %v4219, 0.0
        %4314 = vadd.xlane.f32.xlu0 %v4313
        %v4315 = vpop.xlane.xlu0 %4314
        %v4316 = vrcp.pop 32.0
        %v4317 = vmul.f32 %v4222, %v4316
        %v4318 = vmul.f32 %v4225, %v4316
        %v4319 = vmul.f32 %v4228, %v4316
        %v4320 = vmul.f32 %v4231, %v4316
        %v4321 = vmul.f32 %v4234, %v4316
        %v4322 = vmul.f32 %v4237, %v4316
        %v4323 = vmul.f32 %v4240, %v4316
        %v4324 = vmul.f32 %v4243, %v4316
        %v4325 = vmul.f32 %v4246, %v4316
        %v4326 = vmul.f32 %v4249, %v4316
        %v4327 = vmul.f32 %v4252, %v4316
        %v4328 = vmul.f32 %v4255, %v4316
        %v4329 = vmul.f32 %v4258, %v4316
        %v4330 = vmul.f32 %v4261, %v4316
        %v4331 = vmul.f32 %v4264, %v4316
        %v4332 = vmul.f32 %v4267, %v4316
        %v4333 = vmul.f32 %v4270, %v4316
        %v4334 = vmul.f32 %v4273, %v4316
        %v4335 = vmul.f32 %v4276, %v4316
        %v4336 = vmul.f32 %v4279, %v4316
        %v4337 = vmul.f32 %v4282, %v4316
        %v4338 = vmul.f32 %v4285, %v4316
        %v4339 = vmul.f32 %v4288, %v4316
        %v4340 = vmul.f32 %v4291, %v4316
        %v4341 = vmul.f32 %v4294, %v4316
        %v4342 = vmul.f32 %v4297, %v4316
        %v4343 = vmul.f32 %v4300, %v4316
        %v4344 = vmul.f32 %v4303, %v4316
        %v4345 = vmul.f32 %v4306, %v4316
        %v4346 = vmul.f32 %v4309, %v4316
        %v4347 = vmul.f32 %v4312, %v4316
        %v4348 = vmul.f32 %v4315, %v4316
        %v4349 = vsub.f32 %v4188, %v4317
        %v4350 = vsub.f32 %v4189, %v4318
        %v4351 = vsub.f32 %v4190, %v4319
        %v4352 = vsub.f32 %v4191, %v4320
        %v4353 = vsub.f32 %v4192, %v4321
        %v4354 = vsub.f32 %v4193, %v4322
        %v4355 = vsub.f32 %v4194, %v4323
        %v4356 = vsub.f32 %v4195, %v4324
        %v4357 = vsub.f32 %v4196, %v4325
        %v4358 = vsub.f32 %v4197, %v4326
        %v4359 = vsub.f32 %v4198, %v4327
        %v4360 = vsub.f32 %v4199, %v4328
        %v4361 = vsub.f32 %v4200, %v4329
        %v4362 = vsub.f32 %v4201, %v4330
        %v4363 = vsub.f32 %v4202, %v4331
        %v4364 = vsub.f32 %v4203, %v4332
        %v4365 = vsub.f32 %v4204, %v4333
        %v4366 = vsub.f32 %v4205, %v4334
        %v4367 = vsub.f32 %v4206, %v4335
        %v4368 = vsub.f32 %v4207, %v4336
        %v4369 = vsub.f32 %v4208, %v4337
        %v4370 = vsub.f32 %v4209, %v4338
        %v4371 = vsub.f32 %v4210, %v4339
        %v4372 = vsub.f32 %v4211, %v4340
        %v4373 = vsub.f32 %v4212, %v4341
        %v4374 = vsub.f32 %v4213, %v4342
        %v4375 = vsub.f32 %v4214, %v4343
        %v4376 = vsub.f32 %v4215, %v4344
        %v4377 = vsub.f32 %v4216, %v4345
        %v4378 = vsub.f32 %v4217, %v4346
        %v4379 = vsub.f32 %v4218, %v4347
        %v4380 = vsub.f32 %v4219, %v4348
        %v4381 = vmul.f32 %v4349, %v4349
        %v4382 = vmul.f32 %v4350, %v4350
        %v4383 = vmul.f32 %v4351, %v4351
        %v4384 = vmul.f32 %v4352, %v4352
        %v4385 = vmul.f32 %v4353, %v4353
        %v4386 = vmul.f32 %v4354, %v4354
        %v4387 = vmul.f32 %v4355, %v4355
        %v4388 = vmul.f32 %v4356, %v4356
        %v4389 = vmul.f32 %v4357, %v4357
        %v4390 = vmul.f32 %v4358, %v4358
        %v4391 = vmul.f32 %v4359, %v4359
        %v4392 = vmul.f32 %v4360, %v4360
        %v4393 = vmul.f32 %v4361, %v4361
        %v4394 = vmul.f32 %v4362, %v4362
        %v4395 = vmul.f32 %v4363, %v4363
        %v4396 = vmul.f32 %v4364, %v4364
        %v4397 = vmul.f32 %v4365, %v4365
        %v4398 = vmul.f32 %v4366, %v4366
        %v4399 = vmul.f32 %v4367, %v4367
        %v4400 = vmul.f32 %v4368, %v4368
        %v4401 = vmul.f32 %v4369, %v4369
        %v4402 = vmul.f32 %v4370, %v4370
        %v4403 = vmul.f32 %v4371, %v4371
        %v4404 = vmul.f32 %v4372, %v4372
        %v4405 = vmul.f32 %v4373, %v4373
        %v4406 = vmul.f32 %v4374, %v4374
        %v4407 = vmul.f32 %v4375, %v4375
        %v4408 = vmul.f32 %v4376, %v4376
        %v4409 = vmul.f32 %v4377, %v4377
        %v4410 = vmul.f32 %v4378, %v4378
        %v4411 = vmul.f32 %v4379, %v4379
        %v4412 = vmul.f32 %v4380, %v4380
        %v4413 = vsel %vm411, %v4381, 0.0
        %4414 = vadd.xlane.f32.xlu0 %v4413
        %v4415 = vpop.xlane.xlu0 %4414
        %v4416 = vsel %vm411, %v4382, 0.0
        %4417 = vadd.xlane.f32.xlu0 %v4416
        %v4418 = vpop.xlane.xlu0 %4417
        %v4419 = vsel %vm411, %v4383, 0.0
        %4420 = vadd.xlane.f32.xlu0 %v4419
        %v4421 = vpop.xlane.xlu0 %4420
        %v4422 = vsel %vm411, %v4384, 0.0
        %4423 = vadd.xlane.f32.xlu0 %v4422
        %v4424 = vpop.xlane.xlu0 %4423
        %v4425 = vsel %vm411, %v4385, 0.0
        %4426 = vadd.xlane.f32.xlu0 %v4425
        %v4427 = vpop.xlane.xlu0 %4426
        %v4428 = vsel %vm411, %v4386, 0.0
        %4429 = vadd.xlane.f32.xlu0 %v4428
        %v4430 = vpop.xlane.xlu0 %4429
        %v4431 = vsel %vm411, %v4387, 0.0
        %4432 = vadd.xlane.f32.xlu0 %v4431
        %v4433 = vpop.xlane.xlu0 %4432
        %v4434 = vsel %vm411, %v4388, 0.0
        %4435 = vadd.xlane.f32.xlu0 %v4434
        %v4436 = vpop.xlane.xlu0 %4435
        %v4437 = vsel %vm411, %v4389, 0.0
        %4438 = vadd.xlane.f32.xlu0 %v4437
        %v4439 = vpop.xlane.xlu0 %4438
        %v4440 = vsel %vm411, %v4390, 0.0
        %4441 = vadd.xlane.f32.xlu0 %v4440
        %v4442 = vpop.xlane.xlu0 %4441
        %v4443 = vsel %vm411, %v4391, 0.0
        %4444 = vadd.xlane.f32.xlu0 %v4443
        %v4445 = vpop.xlane.xlu0 %4444
        %v4446 = vsel %vm411, %v4392, 0.0
        %4447 = vadd.xlane.f32.xlu0 %v4446
        %v4448 = vpop.xlane.xlu0 %4447
        %v4449 = vsel %vm411, %v4393, 0.0
        %4450 = vadd.xlane.f32.xlu0 %v4449
        %v4451 = vpop.xlane.xlu0 %4450
        %v4452 = vsel %vm411, %v4394, 0.0
        %4453 = vadd.xlane.f32.xlu0 %v4452
        %v4454 = vpop.xlane.xlu0 %4453
        %v4455 = vsel %vm411, %v4395, 0.0
        %4456 = vadd.xlane.f32.xlu0 %v4455
        %v4457 = vpop.xlane.xlu0 %4456
        %v4458 = vsel %vm411, %v4396, 0.0
        %4459 = vadd.xlane.f32.xlu0 %v4458
        %v4460 = vpop.xlane.xlu0 %4459
        %v4461 = vsel %vm411, %v4397, 0.0
        %4462 = vadd.xlane.f32.xlu0 %v4461
        %v4463 = vpop.xlane.xlu0 %4462
        %v4464 = vsel %vm411, %v4398, 0.0
        %4465 = vadd.xlane.f32.xlu0 %v4464
        %v4466 = vpop.xlane.xlu0 %4465
        %v4467 = vsel %vm411, %v4399, 0.0
        %4468 = vadd.xlane.f32.xlu0 %v4467
        %v4469 = vpop.xlane.xlu0 %4468
        %v4470 = vsel %vm411, %v4400, 0.0
        %4471 = vadd.xlane.f32.xlu0 %v4470
        %v4472 = vpop.xlane.xlu0 %4471
        %v4473 = vsel %vm411, %v4401, 0.0
        %4474 = vadd.xlane.f32.xlu0 %v4473
        %v4475 = vpop.xlane.xlu0 %4474
        %v4476 = vsel %vm411, %v4402, 0.0
        %4477 = vadd.xlane.f32.xlu0 %v4476
        %v4478 = vpop.xlane.xlu0 %4477
        %v4479 = vsel %vm411, %v4403, 0.0
        %4480 = vadd.xlane.f32.xlu0 %v4479
        %v4481 = vpop.xlane.xlu0 %4480
        %v4482 = vsel %vm411, %v4404, 0.0
        %4483 = vadd.xlane.f32.xlu0 %v4482
        %v4484 = vpop.xlane.xlu0 %4483
        %v4485 = vsel %vm411, %v4405, 0.0
        %4486 = vadd.xlane.f32.xlu0 %v4485
        %v4487 = vpop.xlane.xlu0 %4486
        %v4488 = vsel %vm411, %v4406, 0.0
        %4489 = vadd.xlane.f32.xlu0 %v4488
        %v4490 = vpop.xlane.xlu0 %4489
        %v4491 = vsel %vm411, %v4407, 0.0
        %4492 = vadd.xlane.f32.xlu0 %v4491
        %v4493 = vpop.xlane.xlu0 %4492
        %v4494 = vsel %vm411, %v4408, 0.0
        %4495 = vadd.xlane.f32.xlu0 %v4494
        %v4496 = vpop.xlane.xlu0 %4495
        %v4497 = vsel %vm411, %v4409, 0.0
        %4498 = vadd.xlane.f32.xlu0 %v4497
        %v4499 = vpop.xlane.xlu0 %4498
        %v4500 = vsel %vm411, %v4410, 0.0
        %4501 = vadd.xlane.f32.xlu0 %v4500
        %v4502 = vpop.xlane.xlu0 %4501
        %v4503 = vsel %vm411, %v4411, 0.0
        %4504 = vadd.xlane.f32.xlu0 %v4503
        %v4505 = vpop.xlane.xlu0 %4504
        %v4506 = vsel %vm411, %v4412, 0.0
        %4507 = vadd.xlane.f32.xlu0 %v4506
        %v4508 = vpop.xlane.xlu0 %4507
        %v4509 = vmul.f32 %v4415, %v4316
        %v4510 = vmul.f32 %v4418, %v4316
        %v4511 = vmul.f32 %v4421, %v4316
        %v4512 = vmul.f32 %v4424, %v4316
        %v4513 = vmul.f32 %v4427, %v4316
        %v4514 = vmul.f32 %v4430, %v4316
        %v4515 = vmul.f32 %v4433, %v4316
        %v4516 = vmul.f32 %v4436, %v4316
        %v4517 = vmul.f32 %v4439, %v4316
        %v4518 = vmul.f32 %v4442, %v4316
        %v4519 = vmul.f32 %v4445, %v4316
        %v4520 = vmul.f32 %v4448, %v4316
        %v4521 = vmul.f32 %v4451, %v4316
        %v4522 = vmul.f32 %v4454, %v4316
        %v4523 = vmul.f32 %v4457, %v4316
        %v4524 = vmul.f32 %v4460, %v4316
        %v4525 = vmul.f32 %v4463, %v4316
        %v4526 = vmul.f32 %v4466, %v4316
        %v4527 = vmul.f32 %v4469, %v4316
        %v4528 = vmul.f32 %v4472, %v4316
        %v4529 = vmul.f32 %v4475, %v4316
        %v4530 = vmul.f32 %v4478, %v4316
        %v4531 = vmul.f32 %v4481, %v4316
        %v4532 = vmul.f32 %v4484, %v4316
        %v4533 = vmul.f32 %v4487, %v4316
        %v4534 = vmul.f32 %v4490, %v4316
        %v4535 = vmul.f32 %v4493, %v4316
        %v4536 = vmul.f32 %v4496, %v4316
        %v4537 = vmul.f32 %v4499, %v4316
        %v4538 = vmul.f32 %v4502, %v4316
        %v4539 = vmul.f32 %v4505, %v4316
        %v4540 = vmul.f32 %v4508, %v4316
        %v4541 = vadd.f32 %v4509, 1e-05
        %v4542 = vadd.f32 %v4510, 1e-05
        %v4543 = vadd.f32 %v4511, 1e-05
        %v4544 = vadd.f32 %v4512, 1e-05
        %v4545 = vadd.f32 %v4513, 1e-05
        %v4546 = vadd.f32 %v4514, 1e-05
        %v4547 = vadd.f32 %v4515, 1e-05
        %v4548 = vadd.f32 %v4516, 1e-05
        %v4549 = vadd.f32 %v4517, 1e-05
        %v4550 = vadd.f32 %v4518, 1e-05
        %v4551 = vadd.f32 %v4519, 1e-05
        %v4552 = vadd.f32 %v4520, 1e-05
        %v4553 = vadd.f32 %v4521, 1e-05
        %v4554 = vadd.f32 %v4522, 1e-05
        %v4555 = vadd.f32 %v4523, 1e-05
        %v4556 = vadd.f32 %v4524, 1e-05
        %v4557 = vadd.f32 %v4525, 1e-05
        %v4558 = vadd.f32 %v4526, 1e-05
        %v4559 = vadd.f32 %v4527, 1e-05
        %v4560 = vadd.f32 %v4528, 1e-05
        %v4561 = vadd.f32 %v4529, 1e-05
        %v4562 = vadd.f32 %v4530, 1e-05
        %v4563 = vadd.f32 %v4531, 1e-05
        %v4564 = vadd.f32 %v4532, 1e-05
        %v4565 = vadd.f32 %v4533, 1e-05
        %v4566 = vadd.f32 %v4534, 1e-05
        %v4567 = vadd.f32 %v4535, 1e-05
        %v4568 = vadd.f32 %v4536, 1e-05
        %v4569 = vadd.f32 %v4537, 1e-05
        %v4570 = vadd.f32 %v4538, 1e-05
        %v4571 = vadd.f32 %v4539, 1e-05
        %v4572 = vadd.f32 %v4540, 1e-05
        %v4573 = vrsqrt.pop %v4541
        %v4574 = vrsqrt.pop %v4542
        %v4575 = vrsqrt.pop %v4543
        %v4576 = vrsqrt.pop %v4544
        %v4577 = vrsqrt.pop %v4545
        %v4578 = vrsqrt.pop %v4546
        %v4579 = vrsqrt.pop %v4547
        %v4580 = vrsqrt.pop %v4548
        %v4581 = vrsqrt.pop %v4549
        %v4582 = vrsqrt.pop %v4550
        %v4583 = vrsqrt.pop %v4551
        %v4584 = vrsqrt.pop %v4552
        %v4585 = vrsqrt.pop %v4553
        %v4586 = vrsqrt.pop %v4554
        %v4587 = vrsqrt.pop %v4555
        %v4588 = vrsqrt.pop %v4556
        %v4589 = vrsqrt.pop %v4557
        %v4590 = vrsqrt.pop %v4558
        %v4591 = vrsqrt.pop %v4559
        %v4592 = vrsqrt.pop %v4560
        %v4593 = vrsqrt.pop %v4561
        %v4594 = vrsqrt.pop %v4562
        %v4595 = vrsqrt.pop %v4563
        %v4596 = vrsqrt.pop %v4564
        %v4597 = vrsqrt.pop %v4565
        %v4598 = vrsqrt.pop %v4566
        %v4599 = vrsqrt.pop %v4567
        %v4600 = vrsqrt.pop %v4568
        %v4601 = vrsqrt.pop %v4569
        %v4602 = vrsqrt.pop %v4570
        %v4603 = vrsqrt.pop %v4571
        %v4604 = vrsqrt.pop %v4572
        %v4605 = vmul.f32 %v4349, %v4573
        %v4606 = vmul.f32 %v4350, %v4574
        %v4607 = vmul.f32 %v4351, %v4575
        %v4608 = vmul.f32 %v4352, %v4576
        %v4609 = vmul.f32 %v4353, %v4577
        %v4610 = vmul.f32 %v4354, %v4578
        %v4611 = vmul.f32 %v4355, %v4579
        %v4612 = vmul.f32 %v4356, %v4580
        %v4613 = vmul.f32 %v4357, %v4581
        %v4614 = vmul.f32 %v4358, %v4582
        %v4615 = vmul.f32 %v4359, %v4583
        %v4616 = vmul.f32 %v4360, %v4584
        %v4617 = vmul.f32 %v4361, %v4585
        %v4618 = vmul.f32 %v4362, %v4586
        %v4619 = vmul.f32 %v4363, %v4587
        %v4620 = vmul.f32 %v4364, %v4588
        %v4621 = vmul.f32 %v4365, %v4589
        %v4622 = vmul.f32 %v4366, %v4590
        %v4623 = vmul.f32 %v4367, %v4591
        %v4624 = vmul.f32 %v4368, %v4592
        %v4625 = vmul.f32 %v4369, %v4593
        %v4626 = vmul.f32 %v4370, %v4594
        %v4627 = vmul.f32 %v4371, %v4595
        %v4628 = vmul.f32 %v4372, %v4596
        %v4629 = vmul.f32 %v4373, %v4597
        %v4630 = vmul.f32 %v4374, %v4598
        %v4631 = vmul.f32 %v4375, %v4599
        %v4632 = vmul.f32 %v4376, %v4600
        %v4633 = vmul.f32 %v4377, %v4601
        %v4634 = vmul.f32 %v4378, %v4602
        %v4635 = vmul.f32 %v4379, %v4603
        %v4636 = vmul.f32 %v4380, %v4604
        %v4637 = vld [vmem:[%s3] sm:$0x1]
        %v4639 = vlaneseq
        %v4640 = vshrl.u32 %v4639, 7
        %v4641 = vsub.s32 0, %v4640
        %v4642 = vrot.slane %v4637, %v4641
        %v4644 = vmul.f32 %v4605, %v4642
        %v4645 = vmul.f32 %v4606, %v4642
        %v4646 = vmul.f32 %v4607, %v4642
        %v4647 = vmul.f32 %v4608, %v4642
        %v4648 = vmul.f32 %v4609, %v4642
        %v4649 = vmul.f32 %v4610, %v4642
        %v4650 = vmul.f32 %v4611, %v4642
        %v4651 = vmul.f32 %v4612, %v4642
        %v4652 = vmul.f32 %v4613, %v4642
        %v4653 = vmul.f32 %v4614, %v4642
        %v4654 = vmul.f32 %v4615, %v4642
        %v4655 = vmul.f32 %v4616, %v4642
        %v4656 = vmul.f32 %v4617, %v4642
        %v4657 = vmul.f32 %v4618, %v4642
        %v4658 = vmul.f32 %v4619, %v4642
        %v4659 = vmul.f32 %v4620, %v4642
        %v4660 = vmul.f32 %v4621, %v4642
        %v4661 = vmul.f32 %v4622, %v4642
        %v4662 = vmul.f32 %v4623, %v4642
        %v4663 = vmul.f32 %v4624, %v4642
        %v4664 = vmul.f32 %v4625, %v4642
        %v4665 = vmul.f32 %v4626, %v4642
        %v4666 = vmul.f32 %v4627, %v4642
        %v4667 = vmul.f32 %v4628, %v4642
        %v4668 = vmul.f32 %v4629, %v4642
        %v4669 = vmul.f32 %v4630, %v4642
        %v4670 = vmul.f32 %v4631, %v4642
        %v4671 = vmul.f32 %v4632, %v4642
        %v4672 = vmul.f32 %v4633, %v4642
        %v4673 = vmul.f32 %v4634, %v4642
        %v4674 = vmul.f32 %v4635, %v4642
        %v4675 = vmul.f32 %v4636, %v4642
        %v4676 = vld [vmem:[%s4] sm:$0x1]
        %v4678 = vlaneseq
        %v4679 = vshrl.u32 %v4678, 7
        %v4680 = vsub.s32 0, %v4679
        %v4681 = vrot.slane %v4676, %v4680
        %v4683 = vadd.f32 %v4644, %v4681
        %v4684 = vadd.f32 %v4645, %v4681
        %v4685 = vadd.f32 %v4646, %v4681
        %v4686 = vadd.f32 %v4647, %v4681
        %v4687 = vadd.f32 %v4648, %v4681
        %v4688 = vadd.f32 %v4649, %v4681
        %v4689 = vadd.f32 %v4650, %v4681
        %v4690 = vadd.f32 %v4651, %v4681
        %v4691 = vadd.f32 %v4652, %v4681
        %v4692 = vadd.f32 %v4653, %v4681
        %v4693 = vadd.f32 %v4654, %v4681
        %v4694 = vadd.f32 %v4655, %v4681
        %v4695 = vadd.f32 %v4656, %v4681
        %v4696 = vadd.f32 %v4657, %v4681
        %v4697 = vadd.f32 %v4658, %v4681
        %v4698 = vadd.f32 %v4659, %v4681
        %v4699 = vadd.f32 %v4660, %v4681
        %v4700 = vadd.f32 %v4661, %v4681
        %v4701 = vadd.f32 %v4662, %v4681
        %v4702 = vadd.f32 %v4663, %v4681
        %v4703 = vadd.f32 %v4664, %v4681
        %v4704 = vadd.f32 %v4665, %v4681
        %v4705 = vadd.f32 %v4666, %v4681
        %v4706 = vadd.f32 %v4667, %v4681
        %v4707 = vadd.f32 %v4668, %v4681
        %v4708 = vadd.f32 %v4669, %v4681
        %v4709 = vadd.f32 %v4670, %v4681
        %v4710 = vadd.f32 %v4671, %v4681
        %v4711 = vadd.f32 %v4672, %v4681
        %v4712 = vadd.f32 %v4673, %v4681
        %v4713 = vadd.f32 %v4674, %v4681
        %v4714 = vadd.f32 %v4675, %v4681
        %v4715 = vpack.c.bf16 %v4684, %v4683
        %v4716 = vpack.c.bf16 %v4686, %v4685
        %v4717 = vpack.c.bf16 %v4688, %v4687
        %v4718 = vpack.c.bf16 %v4690, %v4689
        %v4719 = vpack.c.bf16 %v4692, %v4691
        %v4720 = vpack.c.bf16 %v4694, %v4693
        %v4721 = vpack.c.bf16 %v4696, %v4695
        %v4722 = vpack.c.bf16 %v4698, %v4697
        %v4723 = vpack.c.bf16 %v4700, %v4699
        %v4724 = vpack.c.bf16 %v4702, %v4701
        %v4725 = vpack.c.bf16 %v4704, %v4703
        %v4726 = vpack.c.bf16 %v4706, %v4705
        %v4727 = vpack.c.bf16 %v4708, %v4707
        %v4728 = vpack.c.bf16 %v4710, %v4709
        %v4729 = vpack.c.bf16 %v4712, %v4711
        %v4730 = vpack.c.bf16 %v4714, %v4713
        %v4731 = vld [vmem:[%s5] sm:$0xf]
        %v4732 = vld [vmem:[%s5 + $0x4] sm:$0xf]
        %v4733 = vld [vmem:[%s5 + $0x8] sm:$0xf]
        %v4734 = vld [vmem:[%s5 + $0xc] sm:$0xf]
        %v4735 = vld [vmem:[%s6] sm:$0x1]
        %v4737 = vlaneseq
        %v4738 = vshrl.u32 %v4737, 7
        %v4739 = vsub.s32 0, %v4738
        %v4740 = vrot.slane %v4735, %v4739
        %v4746 = vunpack.c.l.b16 %v4731
        %v4747 = vunpack.c.l.b16 %v4732
        %v4748 = vunpack.c.l.b16 %v4733
        %v4749 = vunpack.c.l.b16 %v4734
        %v4750 = vpack.c.b16 %v4747, %v4746
        %v4751 = vpack.c.b16 %v4749, %v4748
        %v4755 = vsel %vm411, %v4715, 0
        %v4758 = vsel %vm411, %v4716, 0
        %v4761 = vsel %vm411, %v4717, 0
        %v4764 = vsel %vm411, %v4718, 0
        %v4767 = vsel %vm411, %v4719, 0
        %v4770 = vsel %vm411, %v4720, 0
        %v4773 = vsel %vm411, %v4721, 0
        %v4776 = vsel %vm411, %v4722, 0
        %v4779 = vsel %vm411, %v4723, 0
        %v4782 = vsel %vm411, %v4724, 0
        %v4785 = vsel %vm411, %v4725, 0
        %v4788 = vsel %vm411, %v4726, 0
        %v4791 = vsel %vm411, %v4727, 0
        %v4794 = vsel %vm411, %v4728, 0
        %v4797 = vsel %vm411, %v4729, 0
        %v4800 = vsel %vm411, %v4730, 0
        %4802 = vmatprep.subr.bf16.mxu0 0
        %4803 = vmatpush1.bf16.msra.mxu0 %v4750
        %4804 = vmatprep.subr.bf16.mxu0 0
        %4805 = vmatpush1.bf16.msra.mxu0 %v4751
        %4806 = vmatprep.subr.bf16.mxu0 0
        %4807 = vmatpush1.bf16.msra.mxu0 0
        %4808 = vmatprep.subr.bf16.mxu0 0
        %4809 = vmatpush1.bf16.msra.mxu0 0
        %4810 = vmatprep.subr.bf16.mxu0 0
        %4811 = vmatpush1.bf16.msra.mxu0 0
        %4812 = vmatprep.subr.bf16.mxu0 0
        %4813 = vmatpush1.bf16.msra.mxu0 0
        %4814 = vmatprep.subr.bf16.mxu0 0
        %4815 = vmatpush1.bf16.msra.mxu0 0
        %4816 = vmatprep.subr.bf16.mxu0 0
        %4817 = vmatpush1.bf16.msra.mxu0 0
        %4818 = vmatprep.subr.bf16.mxu0 0
        %4819 = vmatpush1.bf16.msra.mxu0 0
        %4820 = vmatprep.subr.bf16.mxu0 0
        %4821 = vmatpush1.bf16.msra.mxu0 0
        %4822 = vmatprep.subr.bf16.mxu0 0
        %4823 = vmatpush1.bf16.msra.mxu0 0
        %4824 = vmatprep.subr.bf16.mxu0 0
        %4825 = vmatpush1.bf16.msra.mxu0 0
        %4826 = vmatprep.subr.bf16.mxu0 0
        %4827 = vmatpush1.bf16.msra.mxu0 0
        %4828 = vmatprep.subr.bf16.mxu0 0
        %4829 = vmatpush1.bf16.msra.mxu0 0
        %4830 = vmatprep.subr.bf16.mxu0 0
        %4831 = vmatpush1.bf16.msra.mxu0 0
        %4832 = vmatprep.subr.bf16.mxu0 0
        %4833 = vmatpush1.bf16.msra.mxu0 0
        %4834 = vmatprep.mubr.bf16.mxu0 0
        %4835 = vmatmul.mubr.bf16.gmra.mrb[0].mxu0 %v4755
        %v4836 = vpop.f32.mrb[0].mxu0
        %v4837 = vadd.f32 %v4740, %v4836
        %v4838 = vpop.f32.mrb[0].mxu0
        %v4839 = vpop.f32.mrb[0].mxu0
        %v4840 = vadd.f32 %v4740, %v4839
        %v4841 = vpop.f32.mrb[0].mxu0
        %4842 = vmatprep.mubr.bf16.mxu0 0
        %4843 = vmatmul.mubr.bf16.gmra.mrb[0].mxu0 %v4758
        %v4844 = vpop.f32.mrb[0].mxu0
        %v4845 = vadd.f32 %v4740, %v4844
        %v4846 = vpop.f32.mrb[0].mxu0
        %v4847 = vpop.f32.mrb[0].mxu0
        %v4848 = vadd.f32 %v4740, %v4847
        %v4849 = vpop.f32.mrb[0].mxu0
        %4850 = vmatprep.mubr.bf16.mxu0 0
        %4851 = vmatmul.mubr.bf16.gmra.mrb[0].mxu0 %v4761
        %v4852 = vpop.f32.mrb[0].mxu0
        %v4853 = vadd.f32 %v4740, %v4852
        %v4854 = vpop.f32.mrb[0].mxu0
        %v4855 = vpop.f32.mrb[0].mxu0
        %v4856 = vadd.f32 %v4740, %v4855
        %v4857 = vpop.f32.mrb[0].mxu0
        %4858 = vmatprep.mubr.bf16.mxu0 0
        %4859 = vmatmul.mubr.bf16.gmra.mrb[0].mxu0 %v4764
        %v4860 = vpop.f32.mrb[0].mxu0
        %v4861 = vadd.f32 %v4740, %v4860
        %v4862 = vpop.f32.mrb[0].mxu0
        %v4863 = vpop.f32.mrb[0].mxu0
        %v4864 = vadd.f32 %v4740, %v4863
        %v4865 = vpop.f32.mrb[0].mxu0
        %4866 = vmatprep.mubr.bf16.mxu0 0
        %4867 = vmatmul.mubr.bf16.gmra.mrb[0].mxu0 %v4767
        %v4868 = vpop.f32.mrb[0].mxu0
        %v4869 = vadd.f32 %v4740, %v4868
        %v4870 = vpop.f32.mrb[0].mxu0
        %v4871 = vpop.f32.mrb[0].mxu0
        %v4872 = vadd.f32 %v4740, %v4871
        %v4873 = vpop.f32.mrb[0].mxu0
        %4874 = vmatprep.mubr.bf16.mxu0 0
        %4875 = vmatmul.mubr.bf16.gmra.mrb[0].mxu0 %v4770
        %v4876 = vpop.f32.mrb[0].mxu0
        %v4877 = vadd.f32 %v4740, %v4876
        %v4878 = vpop.f32.mrb[0].mxu0
        %v4879 = vpop.f32.mrb[0].mxu0
        %v4880 = vadd.f32 %v4740, %v4879
        %v4881 = vpop.f32.mrb[0].mxu0
        %4882 = vmatprep.mubr.bf16.mxu0 0
        %4883 = vmatmul.mubr.bf16.gmra.mrb[0].mxu0 %v4773
        %v4884 = vpop.f32.mrb[0].mxu0
        %v4885 = vadd.f32 %v4740, %v4884
        %v4886 = vpop.f32.mrb[0].mxu0
        %v4887 = vpop.f32.mrb[0].mxu0
        %v4888 = vadd.f32 %v4740, %v4887
        %v4889 = vpop.f32.mrb[0].mxu0
        %4890 = vmatprep.mubr.bf16.mxu0 0
        %4891 = vmatmul.mubr.bf16.gmra.mrb[0].mxu0 %v4776
        %v4892 = vpop.f32.mrb[0].mxu0
        %v4893 = vadd.f32 %v4740, %v4892
        %v4894 = vpop.f32.mrb[0].mxu0
        %v4895 = vpop.f32.mrb[0].mxu0
        %v4896 = vadd.f32 %v4740, %v4895
        %v4897 = vpop.f32.mrb[0].mxu0
        %4898 = vmatprep.mubr.bf16.mxu0 0
        %4899 = vmatmul.mubr.bf16.gmra.mrb[0].mxu0 %v4779
        %v4900 = vpop.f32.mrb[0].mxu0
        %v4901 = vadd.f32 %v4740, %v4900
        %v4902 = vpop.f32.mrb[0].mxu0
        %v4903 = vpop.f32.mrb[0].mxu0
        %v4904 = vadd.f32 %v4740, %v4903
        %v4905 = vpop.f32.mrb[0].mxu0
        %4906 = vmatprep.mubr.bf16.mxu0 0
        %4907 = vmatmul.mubr.bf16.gmra.mrb[0].mxu0 %v4782
        %v4908 = vpop.f32.mrb[0].mxu0
        %v4909 = vadd.f32 %v4740, %v4908
        %v4910 = vpop.f32.mrb[0].mxu0
        %v4911 = vpop.f32.mrb[0].mxu0
        %v4912 = vadd.f32 %v4740, %v4911
        %v4913 = vpop.f32.mrb[0].mxu0
        %4914 = vmatprep.mubr.bf16.mxu0 0
        %4915 = vmatmul.mubr.bf16.gmra.mrb[0].mxu0 %v4785
        %v4916 = vpop.f32.mrb[0].mxu0
        %v4917 = vadd.f32 %v4740, %v4916
        %v4918 = vpop.f32.mrb[0].mxu0
        %v4919 = vpop.f32.mrb[0].mxu0
        %v4920 = vadd.f32 %v4740, %v4919
        %v4921 = vpop.f32.mrb[0].mxu0
        %4922 = vmatprep.mubr.bf16.mxu0 0
        %4923 = vmatmul.mubr.bf16.gmra.mrb[0].mxu0 %v4788
        %v4924 = vpop.f32.mrb[0].mxu0
        %v4925 = vadd.f32 %v4740, %v4924
        %v4926 = vpop.f32.mrb[0].mxu0
        %v4927 = vpop.f32.mrb[0].mxu0
        %v4928 = vadd.f32 %v4740, %v4927
        %v4929 = vpop.f32.mrb[0].mxu0
        %4930 = vmatprep.mubr.bf16.mxu0 0
        %4931 = vmatmul.mubr.bf16.gmra.mrb[0].mxu0 %v4791
        %v4932 = vpop.f32.mrb[0].mxu0
        %v4933 = vadd.f32 %v4740, %v4932
        %v4934 = vpop.f32.mrb[0].mxu0
        %v4935 = vpop.f32.mrb[0].mxu0
        %v4936 = vadd.f32 %v4740, %v4935
        %v4937 = vpop.f32.mrb[0].mxu0
        %4938 = vmatprep.mubr.bf16.mxu0 0
        %4939 = vmatmul.mubr.bf16.gmra.mrb[0].mxu0 %v4794
        %v4940 = vpop.f32.mrb[0].mxu0
        %v4941 = vadd.f32 %v4740, %v4940
        %v4942 = vpop.f32.mrb[0].mxu0
        %v4943 = vpop.f32.mrb[0].mxu0
        %v4944 = vadd.f32 %v4740, %v4943
        %v4945 = vpop.f32.mrb[0].mxu0
        %4946 = vmatprep.mubr.bf16.mxu0 0
        %4947 = vmatmul.mubr.bf16.gmra.mrb[0].mxu0 %v4797
        %v4948 = vpop.f32.mrb[0].mxu0
        %v4949 = vadd.f32 %v4740, %v4948
        %v4950 = vpop.f32.mrb[0].mxu0
        %v4951 = vpop.f32.mrb[0].mxu0
        %v4952 = vadd.f32 %v4740, %v4951
        %v4953 = vpop.f32.mrb[0].mxu0
        %4954 = vmatprep.mubr.bf16.mxu0 0
        %4955 = vmatmul.mubr.bf16.gmra.mrb[0].mxu0 %v4800
        %v4956 = vpop.f32.mrb[0].mxu0
        %v4957 = vadd.f32 %v4740, %v4956
        %v4958 = vpop.f32.mrb[0].mxu0
        %v4959 = vpop.f32.mrb[0].mxu0
        %v4960 = vadd.f32 %v4740, %v4959
        %v4961 = vpop.f32.mrb[0].mxu0
        %4962 = vdwg.mxu0
        %v4963 = vmul.f32 %v4837, 0.5
        %v4964 = vmul.f32 %v4840, 0.5
        %v4965 = vmul.f32 %v4845, 0.5
        %v4966 = vmul.f32 %v4848, 0.5
        %v4967 = vmul.f32 %v4853, 0.5
        %v4968 = vmul.f32 %v4856, 0.5
        %v4969 = vmul.f32 %v4861, 0.5
        %v4970 = vmul.f32 %v4864, 0.5
        %v4971 = vmul.f32 %v4869, 0.5
        %v4972 = vmul.f32 %v4872, 0.5
        %v4973 = vmul.f32 %v4877, 0.5
        %v4974 = vmul.f32 %v4880, 0.5
        %v4975 = vmul.f32 %v4885, 0.5
        %v4976 = vmul.f32 %v4888, 0.5
        %v4977 = vmul.f32 %v4893, 0.5
        %v4978 = vmul.f32 %v4896, 0.5
        %v4979 = vmul.f32 %v4901, 0.5
        %v4980 = vmul.f32 %v4904, 0.5
        %v4981 = vmul.f32 %v4909, 0.5
        %v4982 = vmul.f32 %v4912, 0.5
        %v4983 = vmul.f32 %v4917, 0.5
        %v4984 = vmul.f32 %v4920, 0.5
        %v4985 = vmul.f32 %v4925, 0.5
        %v4986 = vmul.f32 %v4928, 0.5
        %v4987 = vmul.f32 %v4933, 0.5
        %v4988 = vmul.f32 %v4936, 0.5
        %v4989 = vmul.f32 %v4941, 0.5
        %v4990 = vmul.f32 %v4944, 0.5
        %v4991 = vmul.f32 %v4949, 0.5
        %v4992 = vmul.f32 %v4952, 0.5
        %v4993 = vmul.f32 %v4957, 0.5
        %v4994 = vmul.f32 %v4960, 0.5
        %v4995 = vmul.f32 %v4837, 0.70710677
        %v4996 = vmul.f32 %v4840, 0.70710677
        %v4997 = vmul.f32 %v4845, 0.70710677
        %v4998 = vmul.f32 %v4848, 0.70710677
        %v4999 = vmul.f32 %v4853, 0.70710677
        %v5000 = vmul.f32 %v4856, 0.70710677
        %v5001 = vmul.f32 %v4861, 0.70710677
        %v5002 = vmul.f32 %v4864, 0.70710677
        %v5003 = vmul.f32 %v4869, 0.70710677
        %v5004 = vmul.f32 %v4872, 0.70710677
        %v5005 = vmul.f32 %v4877, 0.70710677
        %v5006 = vmul.f32 %v4880, 0.70710677
        %v5007 = vmul.f32 %v4885, 0.70710677
        %v5008 = vmul.f32 %v4888, 0.70710677
        %v5009 = vmul.f32 %v4893, 0.70710677
        %v5010 = vmul.f32 %v4896, 0.70710677
        %v5011 = vmul.f32 %v4901, 0.70710677
        %v5012 = vmul.f32 %v4904, 0.70710677
        %v5013 = vmul.f32 %v4909, 0.70710677
        %v5014 = vmul.f32 %v4912, 0.70710677
        %v5015 = vmul.f32 %v4917, 0.70710677
        %v5016 = vmul.f32 %v4920, 0.70710677
        %v5017 = vmul.f32 %v4925, 0.70710677
        %v5018 = vmul.f32 %v4928, 0.70710677
        %v5019 = vmul.f32 %v4933, 0.70710677
        %v5020 = vmul.f32 %v4936, 0.70710677
        %v5021 = vmul.f32 %v4941, 0.70710677
        %v5022 = vmul.f32 %v4944, 0.70710677
        %v5023 = vmul.f32 %v4949, 0.70710677
        %v5024 = vmul.f32 %v4952, 0.70710677
        %v5025 = vmul.f32 %v4957, 0.70710677
        %v5026 = vmul.f32 %v4960, 0.70710677
        %v5027 = vand.u32 2147483647, %v4995
        %v5028 = vand.u32 2147483647, %v4996
        %v5029 = vand.u32 2147483647, %v4997
        %v5030 = vand.u32 2147483647, %v4998
        %v5031 = vand.u32 2147483647, %v4999
        %v5032 = vand.u32 2147483647, %v5000
        %v5033 = vand.u32 2147483647, %v5001
        %v5034 = vand.u32 2147483647, %v5002
        %v5035 = vand.u32 2147483647, %v5003
        %v5036 = vand.u32 2147483647, %v5004
        %v5037 = vand.u32 2147483647, %v5005
        %v5038 = vand.u32 2147483647, %v5006
        %v5039 = vand.u32 2147483647, %v5007
        %v5040 = vand.u32 2147483647, %v5008
        %v5041 = vand.u32 2147483647, %v5009
        %v5042 = vand.u32 2147483647, %v5010
        %v5043 = vand.u32 2147483647, %v5011
        %v5044 = vand.u32 2147483647, %v5012
        %v5045 = vand.u32 2147483647, %v5013
        %v5046 = vand.u32 2147483647, %v5014
        %v5047 = vand.u32 2147483647, %v5015
        %v5048 = vand.u32 2147483647, %v5016
        %v5049 = vand.u32 2147483647, %v5017
        %v5050 = vand.u32 2147483647, %v5018
        %v5051 = vand.u32 2147483647, %v5019
        %v5052 = vand.u32 2147483647, %v5020
        %v5053 = vand.u32 2147483647, %v5021
        %v5054 = vand.u32 2147483647, %v5022
        %v5055 = vand.u32 2147483647, %v5023
        %v5056 = vand.u32 2147483647, %v5024
        %v5057 = vand.u32 2147483647, %v5025
        %v5058 = vand.u32 2147483647, %v5026
        %v5059 = vmul.f32 %v5027, 0.3275911
        %v5060 = vmul.f32 %v5028, 0.3275911
        %v5061 = vmul.f32 %v5029, 0.3275911
        %v5062 = vmul.f32 %v5030, 0.3275911
        %v5063 = vmul.f32 %v5031, 0.3275911
        %v5064 = vmul.f32 %v5032, 0.3275911
        %v5065 = vmul.f32 %v5033, 0.3275911
        %v5066 = vmul.f32 %v5034, 0.3275911
        %v5067 = vmul.f32 %v5035, 0.3275911
        %v5068 = vmul.f32 %v5036, 0.3275911
        %v5069 = vmul.f32 %v5037, 0.3275911
        %v5070 = vmul.f32 %v5038, 0.3275911
        %v5071 = vmul.f32 %v5039, 0.3275911
        %v5072 = vmul.f32 %v5040, 0.3275911
        %v5073 = vmul.f32 %v5041, 0.3275911
        %v5074 = vmul.f32 %v5042, 0.3275911
        %v5075 = vmul.f32 %v5043, 0.3275911
        %v5076 = vmul.f32 %v5044, 0.3275911
        %v5077 = vmul.f32 %v5045, 0.3275911
        %v5078 = vmul.f32 %v5046, 0.3275911
        %v5079 = vmul.f32 %v5047, 0.3275911
        %v5080 = vmul.f32 %v5048, 0.3275911
        %v5081 = vmul.f32 %v5049, 0.3275911
        %v5082 = vmul.f32 %v5050, 0.3275911
        %v5083 = vmul.f32 %v5051, 0.3275911
        %v5084 = vmul.f32 %v5052, 0.3275911
        %v5085 = vmul.f32 %v5053, 0.3275911
        %v5086 = vmul.f32 %v5054, 0.3275911
        %v5087 = vmul.f32 %v5055, 0.3275911
        %v5088 = vmul.f32 %v5056, 0.3275911
        %v5089 = vmul.f32 %v5057, 0.3275911
        %v5090 = vmul.f32 %v5058, 0.3275911
        %v5091 = vadd.f32 %v5059, 1.0
        %v5092 = vadd.f32 %v5060, 1.0
        %v5093 = vadd.f32 %v5061, 1.0
        %v5094 = vadd.f32 %v5062, 1.0
        %v5095 = vadd.f32 %v5063, 1.0
        %v5096 = vadd.f32 %v5064, 1.0
        %v5097 = vadd.f32 %v5065, 1.0
        %v5098 = vadd.f32 %v5066, 1.0
        %v5099 = vadd.f32 %v5067, 1.0
        %v5100 = vadd.f32 %v5068, 1.0
        %v5101 = vadd.f32 %v5069, 1.0
        %v5102 = vadd.f32 %v5070, 1.0
        %v5103 = vadd.f32 %v5071, 1.0
        %v5104 = vadd.f32 %v5072, 1.0
        %v5105 = vadd.f32 %v5073, 1.0
        %v5106 = vadd.f32 %v5074, 1.0
        %v5107 = vadd.f32 %v5075, 1.0
        %v5108 = vadd.f32 %v5076, 1.0
        %v5109 = vadd.f32 %v5077, 1.0
        %v5110 = vadd.f32 %v5078, 1.0
        %v5111 = vadd.f32 %v5079, 1.0
        %v5112 = vadd.f32 %v5080, 1.0
        %v5113 = vadd.f32 %v5081, 1.0
        %v5114 = vadd.f32 %v5082, 1.0
        %v5115 = vadd.f32 %v5083, 1.0
        %v5116 = vadd.f32 %v5084, 1.0
        %v5117 = vadd.f32 %v5085, 1.0
        %v5118 = vadd.f32 %v5086, 1.0
        %v5119 = vadd.f32 %v5087, 1.0
        %v5120 = vadd.f32 %v5088, 1.0
        %v5121 = vadd.f32 %v5089, 1.0
        %v5122 = vadd.f32 %v5090, 1.0
        %v5123 = vrcp.pop %v5091
        %v5124 = vmul.f32 1.0, %v5123
        %v5125 = vrcp.pop %v5092
        %v5126 = vmul.f32 1.0, %v5125
        %v5127 = vrcp.pop %v5093
        %v5128 = vmul.f32 1.0, %v5127
        %v5129 = vrcp.pop %v5094
        %v5130 = vmul.f32 1.0, %v5129
        %v5131 = vrcp.pop %v5095
        %v5132 = vmul.f32 1.0, %v5131
        %v5133 = vrcp.pop %v5096
        %v5134 = vmul.f32 1.0, %v5133
        %v5135 = vrcp.pop %v5097
        %v5136 = vmul.f32 1.0, %v5135
        %v5137 = vrcp.pop %v5098
        %v5138 = vmul.f32 1.0, %v5137
        %v5139 = vrcp.pop %v5099
        %v5140 = vmul.f32 1.0, %v5139
        %v5141 = vrcp.pop %v5100
        %v5142 = vmul.f32 1.0, %v5141
        %v5143 = vrcp.pop %v5101
        %v5144 = vmul.f32 1.0, %v5143
        %v5145 = vrcp.pop %v5102
        %v5146 = vmul.f32 1.0, %v5145
        %v5147 = vrcp.pop %v5103
        %v5148 = vmul.f32 1.0, %v5147
        %v5149 = vrcp.pop %v5104
        %v5150 = vmul.f32 1.0, %v5149
        %v5151 = vrcp.pop %v5105
        %v5152 = vmul.f32 1.0, %v5151
        %v5153 = vrcp.pop %v5106
        %v5154 = vmul.f32 1.0, %v5153
        %v5155 = vrcp.pop %v5107
        %v5156 = vmul.f32 1.0, %v5155
        %v5157 = vrcp.pop %v5108
        %v5158 = vmul.f32 1.0, %v5157
        %v5159 = vrcp.pop %v5109
        %v5160 = vmul.f32 1.0, %v5159
        %v5161 = vrcp.pop %v5110
        %v5162 = vmul.f32 1.0, %v5161
        %v5163 = vrcp.pop %v5111
        %v5164 = vmul.f32 1.0, %v5163
        %v5165 = vrcp.pop %v5112
        %v5166 = vmul.f32 1.0, %v5165
        %v5167 = vrcp.pop %v5113
        %v5168 = vmul.f32 1.0, %v5167
        %v5169 = vrcp.pop %v5114
        %v5170 = vmul.f32 1.0, %v5169
        %v5171 = vrcp.pop %v5115
        %v5172 = vmul.f32 1.0, %v5171
        %v5173 = vrcp.pop %v5116
        %v5174 = vmul.f32 1.0, %v5173
        %v5175 = vrcp.pop %v5117
        %v5176 = vmul.f32 1.0, %v5175
        %v5177 = vrcp.pop %v5118
        %v5178 = vmul.f32 1.0, %v5177
        %v5179 = vrcp.pop %v5119
        %v5180 = vmul.f32 1.0, %v5179
        %v5181 = vrcp.pop %v5120
        %v5182 = vmul.f32 1.0, %v5181
        %v5183 = vrcp.pop %v5121
        %v5184 = vmul.f32 1.0, %v5183
        %v5185 = vrcp.pop %v5122
        %v5186 = vmul.f32 1.0, %v5185
        %v5187 = vmul.f32 %v5124, 1.0614054
        %v5188 = vmul.f32 %v5126, 1.0614054
        %v5189 = vmul.f32 %v5128, 1.0614054
        %v5190 = vmul.f32 %v5130, 1.0614054
        %v5191 = vmul.f32 %v5132, 1.0614054
        %v5192 = vmul.f32 %v5134, 1.0614054
        %v5193 = vmul.f32 %v5136, 1.0614054
        %v5194 = vmul.f32 %v5138, 1.0614054
        %v5195 = vmul.f32 %v5140, 1.0614054
        %v5196 = vmul.f32 %v5142, 1.0614054
        %v5197 = vmul.f32 %v5144, 1.0614054
        %v5198 = vmul.f32 %v5146, 1.0614054
        %v5199 = vmul.f32 %v5148, 1.0614054
        %v5200 = vmul.f32 %v5150, 1.0614054
        %v5201 = vmul.f32 %v5152, 1.0614054
        %v5202 = vmul.f32 %v5154, 1.0614054
        %v5203 = vmul.f32 %v5156, 1.0614054
        %v5204 = vmul.f32 %v5158, 1.0614054
        %v5205 = vmul.f32 %v5160, 1.0614054
        %v5206 = vmul.f32 %v5162, 1.0614054
        %v5207 = vmul.f32 %v5164, 1.0614054
        %v5208 = vmul.f32 %v5166, 1.0614054
        %v5209 = vmul.f32 %v5168, 1.0614054
        %v5210 = vmul.f32 %v5170, 1.0614054
        %v5211 = vmul.f32 %v5172, 1.0614054
        %v5212 = vmul.f32 %v5174, 1.0614054
        %v5213 = vmul.f32 %v5176, 1.0614054
        %v5214 = vmul.f32 %v5178, 1.0614054
        %v5215 = vmul.f32 %v5180, 1.0614054
        %v5216 = vmul.f32 %v5182, 1.0614054
        %v5217 = vmul.f32 %v5184, 1.0614054
        %v5218 = vmul.f32 %v5186, 1.0614054
        %v5219 = vadd.f32 %v5187, -1.4531521
        %v5220 = vadd.f32 %v5188, -1.4531521
        %v5221 = vadd.f32 %v5189, -1.4531521
        %v5222 = vadd.f32 %v5190, -1.4531521
        %v5223 = vadd.f32 %v5191, -1.4531521
        %v5224 = vadd.f32 %v5192, -1.4531521
        %v5225 = vadd.f32 %v5193, -1.4531521
        %v5226 = vadd.f32 %v5194, -1.4531521
        %v5227 = vadd.f32 %v5195, -1.4531521
        %v5228 = vadd.f32 %v5196, -1.4531521
        %v5229 = vadd.f32 %v5197, -1.4531521
        %v5230 = vadd.f32 %v5198, -1.4531521
        %v5231 = vadd.f32 %v5199, -1.4531521
        %v5232 = vadd.f32 %v5200, -1.4531521
        %v5233 = vadd.f32 %v5201, -1.4531521
        %v5234 = vadd.f32 %v5202, -1.4531521
        %v5235 = vadd.f32 %v5203, -1.4531521
        %v5236 = vadd.f32 %v5204, -1.4531521
        %v5237 = vadd.f32 %v5205, -1.4531521
        %v5238 = vadd.f32 %v5206, -1.4531521
        %v5239 = vadd.f32 %v5207, -1.4531521
        %v5240 = vadd.f32 %v5208, -1.4531521
        %v5241 = vadd.f32 %v5209, -1.4531521
        %v5242 = vadd.f32 %v5210, -1.4531521
        %v5243 = vadd.f32 %v5211, -1.4531521
        %v5244 = vadd.f32 %v5212, -1.4531521
        %v5245 = vadd.f32 %v5213, -1.4531521
        %v5246 = vadd.f32 %v5214, -1.4531521
        %v5247 = vadd.f32 %v5215, -1.4531521
        %v5248 = vadd.f32 %v5216, -1.4531521
        %v5249 = vadd.f32 %v5217, -1.4531521
        %v5250 = vadd.f32 %v5218, -1.4531521
        %v5251 = vmul.f32 %v5124, %v5219
        %v5252 = vmul.f32 %v5126, %v5220
        %v5253 = vmul.f32 %v5128, %v5221
        %v5254 = vmul.f32 %v5130, %v5222
        %v5255 = vmul.f32 %v5132, %v5223
        %v5256 = vmul.f32 %v5134, %v5224
        %v5257 = vmul.f32 %v5136, %v5225
        %v5258 = vmul.f32 %v5138, %v5226
        %v5259 = vmul.f32 %v5140, %v5227
        %v5260 = vmul.f32 %v5142, %v5228
        %v5261 = vmul.f32 %v5144, %v5229
        %v5262 = vmul.f32 %v5146, %v5230
        %v5263 = vmul.f32 %v5148, %v5231
        %v5264 = vmul.f32 %v5150, %v5232
        %v5265 = vmul.f32 %v5152, %v5233
        %v5266 = vmul.f32 %v5154, %v5234
        %v5267 = vmul.f32 %v5156, %v5235
        %v5268 = vmul.f32 %v5158, %v5236
        %v5269 = vmul.f32 %v5160, %v5237
        %v5270 = vmul.f32 %v5162, %v5238
        %v5271 = vmul.f32 %v5164, %v5239
        %v5272 = vmul.f32 %v5166, %v5240
        %v5273 = vmul.f32 %v5168, %v5241
        %v5274 = vmul.f32 %v5170, %v5242
        %v5275 = vmul.f32 %v5172, %v5243
        %v5276 = vmul.f32 %v5174, %v5244
        %v5277 = vmul.f32 %v5176, %v5245
        %v5278 = vmul.f32 %v5178, %v5246
        %v5279 = vmul.f32 %v5180, %v5247
        %v5280 = vmul.f32 %v5182, %v5248
        %v5281 = vmul.f32 %v5184, %v5249
        %v5282 = vmul.f32 %v5186, %v5250
        %v5283 = vadd.f32 %v5251, 1.4214138
        %v5284 = vadd.f32 %v5252, 1.4214138
        %v5285 = vadd.f32 %v5253, 1.4214138
        %v5286 = vadd.f32 %v5254, 1.4214138
        %v5287 = vadd.f32 %v5255, 1.4214138
        %v5288 = vadd.f32 %v5256, 1.4214138
        %v5289 = vadd.f32 %v5257, 1.4214138
        %v5290 = vadd.f32 %v5258, 1.4214138
        %v5291 = vadd.f32 %v5259, 1.4214138
        %v5292 = vadd.f32 %v5260, 1.4214138
        %v5293 = vadd.f32 %v5261, 1.4214138
        %v5294 = vadd.f32 %v5262, 1.4214138
        %v5295 = vadd.f32 %v5263, 1.4214138
        %v5296 = vadd.f32 %v5264, 1.4214138
        %v5297 = vadd.f32 %v5265, 1.4214138
        %v5298 = vadd.f32 %v5266, 1.4214138
        %v5299 = vadd.f32 %v5267, 1.4214138
        %v5300 = vadd.f32 %v5268, 1.4214138
        %v5301 = vadd.f32 %v5269, 1.4214138
        %v5302 = vadd.f32 %v5270, 1.4214138
        %v5303 = vadd.f32 %v5271, 1.4214138
        %v5304 = vadd.f32 %v5272, 1.4214138
        %v5305 = vadd.f32 %v5273, 1.4214138
        %v5306 = vadd.f32 %v5274, 1.4214138
        %v5307 = vadd.f32 %v5275, 1.4214138
        %v5308 = vadd.f32 %v5276, 1.4214138
        %v5309 = vadd.f32 %v5277, 1.4214138
        %v5310 = vadd.f32 %v5278, 1.4214138
        %v5311 = vadd.f32 %v5279, 1.4214138
        %v5312 = vadd.f32 %v5280, 1.4214138
        %v5313 = vadd.f32 %v5281, 1.4214138
        %v5314 = vadd.f32 %v5282, 1.4214138
        %v5315 = vmul.f32 %v5124, %v5283
        %v5316 = vmul.f32 %v5126, %v5284
        %v5317 = vmul.f32 %v5128, %v5285
        %v5318 = vmul.f32 %v5130, %v5286
        %v5319 = vmul.f32 %v5132, %v5287
        %v5320 = vmul.f32 %v5134, %v5288
        %v5321 = vmul.f32 %v5136, %v5289
        %v5322 = vmul.f32 %v5138, %v5290
        %v5323 = vmul.f32 %v5140, %v5291
        %v5324 = vmul.f32 %v5142, %v5292
        %v5325 = vmul.f32 %v5144, %v5293
        %v5326 = vmul.f32 %v5146, %v5294
        %v5327 = vmul.f32 %v5148, %v5295
        %v5328 = vmul.f32 %v5150, %v5296
        %v5329 = vmul.f32 %v5152, %v5297
        %v5330 = vmul.f32 %v5154, %v5298
        %v5331 = vmul.f32 %v5156, %v5299
        %v5332 = vmul.f32 %v5158, %v5300
        %v5333 = vmul.f32 %v5160, %v5301
        %v5334 = vmul.f32 %v5162, %v5302
        %v5335 = vmul.f32 %v5164, %v5303
        %v5336 = vmul.f32 %v5166, %v5304
        %v5337 = vmul.f32 %v5168, %v5305
        %v5338 = vmul.f32 %v5170, %v5306
        %v5339 = vmul.f32 %v5172, %v5307
        %v5340 = vmul.f32 %v5174, %v5308
        %v5341 = vmul.f32 %v5176, %v5309
        %v5342 = vmul.f32 %v5178, %v5310
        %v5343 = vmul.f32 %v5180, %v5311
        %v5344 = vmul.f32 %v5182, %v5312
        %v5345 = vmul.f32 %v5184, %v5313
        %v5346 = vmul.f32 %v5186, %v5314
        %v5347 = vadd.f32 %v5315, -0.28449672
        %v5348 = vadd.f32 %v5316, -0.28449672
        %v5349 = vadd.f32 %v5317, -0.28449672
        %v5350 = vadd.f32 %v5318, -0.28449672
        %v5351 = vadd.f32 %v5319, -0.28449672
        %v5352 = vadd.f32 %v5320, -0.28449672
        %v5353 = vadd.f32 %v5321, -0.28449672
        %v5354 = vadd.f32 %v5322, -0.28449672
        %v5355 = vadd.f32 %v5323, -0.28449672
        %v5356 = vadd.f32 %v5324, -0.28449672
        %v5357 = vadd.f32 %v5325, -0.28449672
        %v5358 = vadd.f32 %v5326, -0.28449672
        %v5359 = vadd.f32 %v5327, -0.28449672
        %v5360 = vadd.f32 %v5328, -0.28449672
        %v5361 = vadd.f32 %v5329, -0.28449672
        %v5362 = vadd.f32 %v5330, -0.28449672
        %v5363 = vadd.f32 %v5331, -0.28449672
        %v5364 = vadd.f32 %v5332, -0.28449672
        %v5365 = vadd.f32 %v5333, -0.28449672
        %v5366 = vadd.f32 %v5334, -0.28449672
        %v5367 = vadd.f32 %v5335, -0.28449672
        %v5368 = vadd.f32 %v5336, -0.28449672
        %v5369 = vadd.f32 %v5337, -0.28449672
        %v5370 = vadd.f32 %v5338, -0.28449672
        %v5371 = vadd.f32 %v5339, -0.28449672
        %v5372 = vadd.f32 %v5340, -0.28449672
        %v5373 = vadd.f32 %v5341, -0.28449672
        %v5374 = vadd.f32 %v5342, -0.28449672
        %v5375 = vadd.f32 %v5343, -0.28449672
        %v5376 = vadd.f32 %v5344, -0.28449672
        %v5377 = vadd.f32 %v5345, -0.28449672
        %v5378 = vadd.f32 %v5346, -0.28449672
        %v5379 = vmul.f32 %v5124, %v5347
        %v5380 = vmul.f32 %v5126, %v5348
        %v5381 = vmul.f32 %v5128, %v5349
        %v5382 = vmul.f32 %v5130, %v5350
        %v5383 = vmul.f32 %v5132, %v5351
        %v5384 = vmul.f32 %v5134, %v5352
        %v5385 = vmul.f32 %v5136, %v5353
        %v5386 = vmul.f32 %v5138, %v5354
        %v5387 = vmul.f32 %v5140, %v5355
        %v5388 = vmul.f32 %v5142, %v5356
        %v5389 = vmul.f32 %v5144, %v5357
        %v5390 = vmul.f32 %v5146, %v5358
        %v5391 = vmul.f32 %v5148, %v5359
        %v5392 = vmul.f32 %v5150, %v5360
        %v5393 = vmul.f32 %v5152, %v5361
        %v5394 = vmul.f32 %v5154, %v5362
        %v5395 = vmul.f32 %v5156, %v5363
        %v5396 = vmul.f32 %v5158, %v5364
        %v5397 = vmul.f32 %v5160, %v5365
        %v5398 = vmul.f32 %v5162, %v5366
        %v5399 = vmul.f32 %v5164, %v5367
        %v5400 = vmul.f32 %v5166, %v5368
        %v5401 = vmul.f32 %v5168, %v5369
        %v5402 = vmul.f32 %v5170, %v5370
        %v5403 = vmul.f32 %v5172, %v5371
        %v5404 = vmul.f32 %v5174, %v5372
        %v5405 = vmul.f32 %v5176, %v5373
        %v5406 = vmul.f32 %v5178, %v5374
        %v5407 = vmul.f32 %v5180, %v5375
        %v5408 = vmul.f32 %v5182, %v5376
        %v5409 = vmul.f32 %v5184, %v5377
        %v5410 = vmul.f32 %v5186, %v5378
        %v5411 = vadd.f32 %v5379, 0.2548296
        %v5412 = vadd.f32 %v5380, 0.2548296
        %v5413 = vadd.f32 %v5381, 0.2548296
        %v5414 = vadd.f32 %v5382, 0.2548296
        %v5415 = vadd.f32 %v5383, 0.2548296
        %v5416 = vadd.f32 %v5384, 0.2548296
        %v5417 = vadd.f32 %v5385, 0.2548296
        %v5418 = vadd.f32 %v5386, 0.2548296
        %v5419 = vadd.f32 %v5387, 0.2548296
        %v5420 = vadd.f32 %v5388, 0.2548296
        %v5421 = vadd.f32 %v5389, 0.2548296
        %v5422 = vadd.f32 %v5390, 0.2548296
        %v5423 = vadd.f32 %v5391, 0.2548296
        %v5424 = vadd.f32 %v5392, 0.2548296
        %v5425 = vadd.f32 %v5393, 0.2548296
        %v5426 = vadd.f32 %v5394, 0.2548296
        %v5427 = vadd.f32 %v5395, 0.2548296
        %v5428 = vadd.f32 %v5396, 0.2548296
        %v5429 = vadd.f32 %v5397, 0.2548296
        %v5430 = vadd.f32 %v5398, 0.2548296
        %v5431 = vadd.f32 %v5399, 0.2548296
        %v5432 = vadd.f32 %v5400, 0.2548296
        %v5433 = vadd.f32 %v5401, 0.2548296
        %v5434 = vadd.f32 %v5402, 0.2548296
        %v5435 = vadd.f32 %v5403, 0.2548296
        %v5436 = vadd.f32 %v5404, 0.2548296
        %v5437 = vadd.f32 %v5405, 0.2548296
        %v5438 = vadd.f32 %v5406, 0.2548296
        %v5439 = vadd.f32 %v5407, 0.2548296
        %v5440 = vadd.f32 %v5408, 0.2548296
        %v5441 = vadd.f32 %v5409, 0.2548296
        %v5442 = vadd.f32 %v5410, 0.2548296
        %v5443 = vmul.f32 %v5124, %v5411
        %v5444 = vmul.f32 %v5126, %v5412
        %v5445 = vmul.f32 %v5128, %v5413
        %v5446 = vmul.f32 %v5130, %v5414
        %v5447 = vmul.f32 %v5132, %v5415
        %v5448 = vmul.f32 %v5134, %v5416
        %v5449 = vmul.f32 %v5136, %v5417
        %v5450 = vmul.f32 %v5138, %v5418
        %v5451 = vmul.f32 %v5140, %v5419
        %v5452 = vmul.f32 %v5142, %v5420
        %v5453 = vmul.f32 %v5144, %v5421
        %v5454 = vmul.f32 %v5146, %v5422
        %v5455 = vmul.f32 %v5148, %v5423
        %v5456 = vmul.f32 %v5150, %v5424
        %v5457 = vmul.f32 %v5152, %v5425
        %v5458 = vmul.f32 %v5154, %v5426
        %v5459 = vmul.f32 %v5156, %v5427
        %v5460 = vmul.f32 %v5158, %v5428
        %v5461 = vmul.f32 %v5160, %v5429
        %v5462 = vmul.f32 %v5162, %v5430
        %v5463 = vmul.f32 %v5164, %v5431
        %v5464 = vmul.f32 %v5166, %v5432
        %v5465 = vmul.f32 %v5168, %v5433
        %v5466 = vmul.f32 %v5170, %v5434
        %v5467 = vmul.f32 %v5172, %v5435
        %v5468 = vmul.f32 %v5174, %v5436
        %v5469 = vmul.f32 %v5176, %v5437
        %v5470 = vmul.f32 %v5178, %v5438
        %v5471 = vmul.f32 %v5180, %v5439
        %v5472 = vmul.f32 %v5182, %v5440
        %v5473 = vmul.f32 %v5184, %v5441
        %v5474 = vmul.f32 %v5186, %v5442
        %v5475 = vsub.f32 0.0, %v5027
        %v5476 = vsub.f32 0.0, %v5028
        %v5477 = vsub.f32 0.0, %v5029
        %v5478 = vsub.f32 0.0, %v5030
        %v5479 = vsub.f32 0.0, %v5031
        %v5480 = vsub.f32 0.0, %v5032
        %v5481 = vsub.f32 0.0, %v5033
        %v5482 = vsub.f32 0.0, %v5034
        %v5483 = vsub.f32 0.0, %v5035
        %v5484 = vsub.f32 0.0, %v5036
        %v5485 = vsub.f32 0.0, %v5037
        %v5486 = vsub.f32 0.0, %v5038
        %v5487 = vsub.f32 0.0, %v5039
        %v5488 = vsub.f32 0.0, %v5040
        %v5489 = vsub.f32 0.0, %v5041
        %v5490 = vsub.f32 0.0, %v5042
        %v5491 = vsub.f32 0.0, %v5043
        %v5492 = vsub.f32 0.0, %v5044
        %v5493 = vsub.f32 0.0, %v5045
        %v5494 = vsub.f32 0.0, %v5046
        %v5495 = vsub.f32 0.0, %v5047
        %v5496 = vsub.f32 0.0, %v5048
        %v5497 = vsub.f32 0.0, %v5049
        %v5498 = vsub.f32 0.0, %v5050
        %v5499 = vsub.f32 0.0, %v5051
        %v5500 = vsub.f32 0.0, %v5052
        %v5501 = vsub.f32 0.0, %v5053
        %v5502 = vsub.f32 0.0, %v5054
        %v5503 = vsub.f32 0.0, %v5055
        %v5504 = vsub.f32 0.0, %v5056
        %v5505 = vsub.f32 0.0, %v5057
        %v5506 = vsub.f32 0.0, %v5058
        %v5507 = vmul.f32 %v5475, %v5027
        %v5508 = vmul.f32 %v5476, %v5028
        %v5509 = vmul.f32 %v5477, %v5029
        %v5510 = vmul.f32 %v5478, %v5030
        %v5511 = vmul.f32 %v5479, %v5031
        %v5512 = vmul.f32 %v5480, %v5032
        %v5513 = vmul.f32 %v5481, %v5033
        %v5514 = vmul.f32 %v5482, %v5034
        %v5515 = vmul.f32 %v5483, %v5035
        %v5516 = vmul.f32 %v5484, %v5036
        %v5517 = vmul.f32 %v5485, %v5037
        %v5518 = vmul.f32 %v5486, %v5038
        %v5519 = vmul.f32 %v5487, %v5039
        %v5520 = vmul.f32 %v5488, %v5040
        %v5521 = vmul.f32 %v5489, %v5041
        %v5522 = vmul.f32 %v5490, %v5042
        %v5523 = vmul.f32 %v5491, %v5043
        %v5524 = vmul.f32 %v5492, %v5044
        %v5525 = vmul.f32 %v5493, %v5045
        %v5526 = vmul.f32 %v5494, %v5046
        %v5527 = vmul.f32 %v5495, %v5047
        %v5528 = vmul.f32 %v5496, %v5048
        %v5529 = vmul.f32 %v5497, %v5049
        %v5530 = vmul.f32 %v5498, %v5050
        %v5531 = vmul.f32 %v5499, %v5051
        %v5532 = vmul.f32 %v5500, %v5052
        %v5533 = vmul.f32 %v5501, %v5053
        %v5534 = vmul.f32 %v5502, %v5054
        %v5535 = vmul.f32 %v5503, %v5055
        %v5536 = vmul.f32 %v5504, %v5056
        %v5537 = vmul.f32 %v5505, %v5057
        %v5538 = vmul.f32 %v5506, %v5058
        %v5539 = vmul.f32 %v5507, 1.442695
        %v5540 = vpow.pop %v5539
        %v5541 = vmul.f32 %v5508, 1.442695
        %v5542 = vpow.pop %v5541
        %v5543 = vmul.f32 %v5509, 1.442695
        %v5544 = vpow.pop %v5543
        %v5545 = vmul.f32 %v5510, 1.442695
        %v5546 = vpow.pop %v5545
        %v5547 = vmul.f32 %v5511, 1.442695
        %v5548 = vpow.pop %v5547
        %v5549 = vmul.f32 %v5512, 1.442695
        %v5550 = vpow.pop %v5549
        %v5551 = vmul.f32 %v5513, 1.442695
        %v5552 = vpow.pop %v5551
        %v5553 = vmul.f32 %v5514, 1.442695
        %v5554 = vpow.pop %v5553
        %v5555 = vmul.f32 %v5515, 1.442695
        %v5556 = vpow.pop %v5555
        %v5557 = vmul.f32 %v5516, 1.442695
        %v5558 = vpow.pop %v5557
        %v5559 = vmul.f32 %v5517, 1.442695
        %v5560 = vpow.pop %v5559
        %v5561 = vmul.f32 %v5518, 1.442695
        %v5562 = vpow.pop %v5561
        %v5563 = vmul.f32 %v5519, 1.442695
        %v5564 = vpow.pop %v5563
        %v5565 = vmul.f32 %v5520, 1.442695
        %v5566 = vpow.pop %v5565
        %v5567 = vmul.f32 %v5521, 1.442695
        %v5568 = vpow.pop %v5567
        %v5569 = vmul.f32 %v5522, 1.442695
        %v5570 = vpow.pop %v5569
        %v5571 = vmul.f32 %v5523, 1.442695
        %v5572 = vpow.pop %v5571
        %v5573 = vmul.f32 %v5524, 1.442695
        %v5574 = vpow.pop %v5573
        %v5575 = vmul.f32 %v5525, 1.442695
        %v5576 = vpow.pop %v5575
        %v5577 = vmul.f32 %v5526, 1.442695
        %v5578 = vpow.pop %v5577
        %v5579 = vmul.f32 %v5527, 1.442695
        %v5580 = vpow.pop %v5579
        %v5581 = vmul.f32 %v5528, 1.442695
        %v5582 = vpow.pop %v5581
        %v5583 = vmul.f32 %v5529, 1.442695
        %v5584 = vpow.pop %v5583
        %v5585 = vmul.f32 %v5530, 1.442695
        %v5586 = vpow.pop %v5585
        %v5587 = vmul.f32 %v5531, 1.442695
        %v5588 = vpow.pop %v5587
        %v5589 = vmul.f32 %v5532, 1.442695
        %v5590 = vpow.pop %v5589
        %v5591 = vmul.f32 %v5533, 1.442695
        %v5592 = vpow.pop %v5591
        %v5593 = vmul.f32 %v5534, 1.442695
        %v5594 = vpow.pop %v5593
        %v5595 = vmul.f32 %v5535, 1.442695
        %v5596 = vpow.pop %v5595
        %v5597 = vmul.f32 %v5536, 1.442695
        %v5598 = vpow.pop %v5597
        %v5599 = vmul.f32 %v5537, 1.442695
        %v5600 = vpow.pop %v5599
        %v5601 = vmul.f32 %v5538, 1.442695
        %v5602 = vpow.pop %v5601
        %v5603 = vmul.f32 %v5443, %v5540
        %v5604 = vmul.f32 %v5444, %v5542
        %v5605 = vmul.f32 %v5445, %v5544
        %v5606 = vmul.f32 %v5446, %v5546
        %v5607 = vmul.f32 %v5447, %v5548
        %v5608 = vmul.f32 %v5448, %v5550
        %v5609 = vmul.f32 %v5449, %v5552
        %v5610 = vmul.f32 %v5450, %v5554
        %v5611 = vmul.f32 %v5451, %v5556
        %v5612 = vmul.f32 %v5452, %v5558
        %v5613 = vmul.f32 %v5453, %v5560
        %v5614 = vmul.f32 %v5454, %v5562
        %v5615 = vmul.f32 %v5455, %v5564
        %v5616 = vmul.f32 %v5456, %v5566
        %v5617 = vmul.f32 %v5457, %v5568
        %v5618 = vmul.f32 %v5458, %v5570
        %v5619 = vmul.f32 %v5459, %v5572
        %v5620 = vmul.f32 %v5460, %v5574
        %v5621 = vmul.f32 %v5461, %v5576
        %v5622 = vmul.f32 %v5462, %v5578
        %v5623 = vmul.f32 %v5463, %v5580
        %v5624 = vmul.f32 %v5464, %v5582
        %v5625 = vmul.f32 %v5465, %v5584
        %v5626 = vmul.f32 %v5466, %v5586
        %v5627 = vmul.f32 %v5467, %v5588
        %v5628 = vmul.f32 %v5468, %v5590
        %v5629 = vmul.f32 %v5469, %v5592
        %v5630 = vmul.f32 %v5470, %v5594
        %v5631 = vmul.f32 %v5471, %v5596
        %v5632 = vmul.f32 %v5472, %v5598
        %v5633 = vmul.f32 %v5473, %v5600
        %v5634 = vmul.f32 %v5474, %v5602
        %v5635 = vsub.f32 1.0, %v5603
        %v5636 = vsub.f32 1.0, %v5604
        %v5637 = vsub.f32 1.0, %v5605
        %v5638 = vsub.f32 1.0, %v5606
        %v5639 = vsub.f32 1.0, %v5607
        %v5640 = vsub.f32 1.0, %v5608
        %v5641 = vsub.f32 1.0, %v5609
        %v5642 = vsub.f32 1.0, %v5610
        %v5643 = vsub.f32 1.0, %v5611
        %v5644 = vsub.f32 1.0, %v5612
        %v5645 = vsub.f32 1.0, %v5613
        %v5646 = vsub.f32 1.0, %v5614
        %v5647 = vsub.f32 1.0, %v5615
        %v5648 = vsub.f32 1.0, %v5616
        %v5649 = vsub.f32 1.0, %v5617
        %v5650 = vsub.f32 1.0, %v5618
        %v5651 = vsub.f32 1.0, %v5619
        %v5652 = vsub.f32 1.0, %v5620
        %v5653 = vsub.f32 1.0, %v5621
        %v5654 = vsub.f32 1.0, %v5622
        %v5655 = vsub.f32 1.0, %v5623
        %v5656 = vsub.f32 1.0, %v5624
        %v5657 = vsub.f32 1.0, %v5625
        %v5658 = vsub.f32 1.0, %v5626
        %v5659 = vsub.f32 1.0, %v5627
        %v5660 = vsub.f32 1.0, %v5628
        %v5661 = vsub.f32 1.0, %v5629
        %v5662 = vsub.f32 1.0, %v5630
        %v5663 = vsub.f32 1.0, %v5631
        %v5664 = vsub.f32 1.0, %v5632
        %v5665 = vsub.f32 1.0, %v5633
        %v5666 = vsub.f32 1.0, %v5634
        %vm5667 = vcmp.lt.f32.partialorder %v4995, 0.0
        %vm5668 = vcmp.lt.f32.partialorder %v4996, 0.0
        %vm5669 = vcmp.lt.f32.partialorder %v4997, 0.0
        %vm5670 = vcmp.lt.f32.partialorder %v4998, 0.0
        %vm5671 = vcmp.lt.f32.partialorder %v4999, 0.0
        %vm5672 = vcmp.lt.f32.partialorder %v5000, 0.0
        %vm5673 = vcmp.lt.f32.partialorder %v5001, 0.0
        %vm5674 = vcmp.lt.f32.partialorder %v5002, 0.0
        %vm5675 = vcmp.lt.f32.partialorder %v5003, 0.0
        %vm5676 = vcmp.lt.f32.partialorder %v5004, 0.0
        %vm5677 = vcmp.lt.f32.partialorder %v5005, 0.0
        %vm5678 = vcmp.lt.f32.partialorder %v5006, 0.0
        %vm5679 = vcmp.lt.f32.partialorder %v5007, 0.0
        %vm5680 = vcmp.lt.f32.partialorder %v5008, 0.0
        %vm5681 = vcmp.lt.f32.partialorder %v5009, 0.0
        %vm5682 = vcmp.lt.f32.partialorder %v5010, 0.0
        %vm5683 = vcmp.lt.f32.partialorder %v5011, 0.0
        %vm5684 = vcmp.lt.f32.partialorder %v5012, 0.0
        %vm5685 = vcmp.lt.f32.partialorder %v5013, 0.0
        %vm5686 = vcmp.lt.f32.partialorder %v5014, 0.0
        %vm5687 = vcmp.lt.f32.partialorder %v5015, 0.0
        %vm5688 = vcmp.lt.f32.partialorder %v5016, 0.0
        %vm5689 = vcmp.lt.f32.partialorder %v5017, 0.0
        %vm5690 = vcmp.lt.f32.partialorder %v5018, 0.0
        %vm5691 = vcmp.lt.f32.partialorder %v5019, 0.0
        %vm5692 = vcmp.lt.f32.partialorder %v5020, 0.0
        %vm5693 = vcmp.lt.f32.partialorder %v5021, 0.0
        %vm5694 = vcmp.lt.f32.partialorder %v5022, 0.0
        %vm5695 = vcmp.lt.f32.partialorder %v5023, 0.0
        %vm5696 = vcmp.lt.f32.partialorder %v5024, 0.0
        %vm5697 = vcmp.lt.f32.partialorder %v5025, 0.0
        %vm5698 = vcmp.lt.f32.partialorder %v5026, 0.0
        %v5699 = vsub.f32 0.0, %v5635
        %v5700 = vsub.f32 0.0, %v5636
        %v5701 = vsub.f32 0.0, %v5637
        %v5702 = vsub.f32 0.0, %v5638
        %v5703 = vsub.f32 0.0, %v5639
        %v5704 = vsub.f32 0.0, %v5640
        %v5705 = vsub.f32 0.0, %v5641
        %v5706 = vsub.f32 0.0, %v5642
        %v5707 = vsub.f32 0.0, %v5643
        %v5708 = vsub.f32 0.0, %v5644
        %v5709 = vsub.f32 0.0, %v5645
        %v5710 = vsub.f32 0.0, %v5646
        %v5711 = vsub.f32 0.0, %v5647
        %v5712 = vsub.f32 0.0, %v5648
        %v5713 = vsub.f32 0.0, %v5649
        %v5714 = vsub.f32 0.0, %v5650
        %v5715 = vsub.f32 0.0, %v5651
        %v5716 = vsub.f32 0.0, %v5652
        %v5717 = vsub.f32 0.0, %v5653
        %v5718 = vsub.f32 0.0, %v5654
        %v5719 = vsub.f32 0.0, %v5655
        %v5720 = vsub.f32 0.0, %v5656
        %v5721 = vsub.f32 0.0, %v5657
        %v5722 = vsub.f32 0.0, %v5658
        %v5723 = vsub.f32 0.0, %v5659
        %v5724 = vsub.f32 0.0, %v5660
        %v5725 = vsub.f32 0.0, %v5661
        %v5726 = vsub.f32 0.0, %v5662
        %v5727 = vsub.f32 0.0, %v5663
        %v5728 = vsub.f32 0.0, %v5664
        %v5729 = vsub.f32 0.0, %v5665
        %v5730 = vsub.f32 0.0, %v5666
        %v5731 = vsel %vm5667, %v5699, %v5635
        %v5732 = vsel %vm5668, %v5700, %v5636
        %v5733 = vsel %vm5669, %v5701, %v5637
        %v5734 = vsel %vm5670, %v5702, %v5638
        %v5735 = vsel %vm5671, %v5703, %v5639
        %v5736 = vsel %vm5672, %v5704, %v5640
        %v5737 = vsel %vm5673, %v5705, %v5641
        %v5738 = vsel %vm5674, %v5706, %v5642
        %v5739 = vsel %vm5675, %v5707, %v5643
        %v5740 = vsel %vm5676, %v5708, %v5644
        %v5741 = vsel %vm5677, %v5709, %v5645
        %v5742 = vsel %vm5678, %v5710, %v5646
        %v5743 = vsel %vm5679, %v5711, %v5647
        %v5744 = vsel %vm5680, %v5712, %v5648
        %v5745 = vsel %vm5681, %v5713, %v5649
        %v5746 = vsel %vm5682, %v5714, %v5650
        %v5747 = vsel %vm5683, %v5715, %v5651
        %v5748 = vsel %vm5684, %v5716, %v5652
        %v5749 = vsel %vm5685, %v5717, %v5653
        %v5750 = vsel %vm5686, %v5718, %v5654
        %v5751 = vsel %vm5687, %v5719, %v5655
        %v5752 = vsel %vm5688, %v5720, %v5656
        %v5753 = vsel %vm5689, %v5721, %v5657
        %v5754 = vsel %vm5690, %v5722, %v5658
        %v5755 = vsel %vm5691, %v5723, %v5659
        %v5756 = vsel %vm5692, %v5724, %v5660
        %v5757 = vsel %vm5693, %v5725, %v5661
        %v5758 = vsel %vm5694, %v5726, %v5662
        %v5759 = vsel %vm5695, %v5727, %v5663
        %v5760 = vsel %vm5696, %v5728, %v5664
        %v5761 = vsel %vm5697, %v5729, %v5665
        %v5762 = vsel %vm5698, %v5730, %v5666
        %v5763 = vadd.f32 %v5731, 1.0
        %v5764 = vadd.f32 %v5732, 1.0
        %v5765 = vadd.f32 %v5733, 1.0
        %v5766 = vadd.f32 %v5734, 1.0
        %v5767 = vadd.f32 %v5735, 1.0
        %v5768 = vadd.f32 %v5736, 1.0
        %v5769 = vadd.f32 %v5737, 1.0
        %v5770 = vadd.f32 %v5738, 1.0
        %v5771 = vadd.f32 %v5739, 1.0
        %v5772 = vadd.f32 %v5740, 1.0
        %v5773 = vadd.f32 %v5741, 1.0
        %v5774 = vadd.f32 %v5742, 1.0
        %v5775 = vadd.f32 %v5743, 1.0
        %v5776 = vadd.f32 %v5744, 1.0
        %v5777 = vadd.f32 %v5745, 1.0
        %v5778 = vadd.f32 %v5746, 1.0
        %v5779 = vadd.f32 %v5747, 1.0
        %v5780 = vadd.f32 %v5748, 1.0
        %v5781 = vadd.f32 %v5749, 1.0
        %v5782 = vadd.f32 %v5750, 1.0
        %v5783 = vadd.f32 %v5751, 1.0
        %v5784 = vadd.f32 %v5752, 1.0
        %v5785 = vadd.f32 %v5753, 1.0
        %v5786 = vadd.f32 %v5754, 1.0
        %v5787 = vadd.f32 %v5755, 1.0
        %v5788 = vadd.f32 %v5756, 1.0
        %v5789 = vadd.f32 %v5757, 1.0
        %v5790 = vadd.f32 %v5758, 1.0
        %v5791 = vadd.f32 %v5759, 1.0
        %v5792 = vadd.f32 %v5760, 1.0
        %v5793 = vadd.f32 %v5761, 1.0
        %v5794 = vadd.f32 %v5762, 1.0
        %v5795 = vmul.f32 %v4963, %v5763
        %v5796 = vmul.f32 %v4964, %v5764
        %v5797 = vmul.f32 %v4965, %v5765
        %v5798 = vmul.f32 %v4966, %v5766
        %v5799 = vmul.f32 %v4967, %v5767
        %v5800 = vmul.f32 %v4968, %v5768
        %v5801 = vmul.f32 %v4969, %v5769
        %v5802 = vmul.f32 %v4970, %v5770
        %v5803 = vmul.f32 %v4971, %v5771
        %v5804 = vmul.f32 %v4972, %v5772
        %v5805 = vmul.f32 %v4973, %v5773
        %v5806 = vmul.f32 %v4974, %v5774
        %v5807 = vmul.f32 %v4975, %v5775
        %v5808 = vmul.f32 %v4976, %v5776
        %v5809 = vmul.f32 %v4977, %v5777
        %v5810 = vmul.f32 %v4978, %v5778
        %v5811 = vmul.f32 %v4979, %v5779
        %v5812 = vmul.f32 %v4980, %v5780
        %v5813 = vmul.f32 %v4981, %v5781
        %v5814 = vmul.f32 %v4982, %v5782
        %v5815 = vmul.f32 %v4983, %v5783
        %v5816 = vmul.f32 %v4984, %v5784
        %v5817 = vmul.f32 %v4985, %v5785
        %v5818 = vmul.f32 %v4986, %v5786
        %v5819 = vmul.f32 %v4987, %v5787
        %v5820 = vmul.f32 %v4988, %v5788
        %v5821 = vmul.f32 %v4989, %v5789
        %v5822 = vmul.f32 %v4990, %v5790
        %v5823 = vmul.f32 %v4991, %v5791
        %v5824 = vmul.f32 %v4992, %v5792
        %v5825 = vmul.f32 %v4993, %v5793
        %v5826 = vmul.f32 %v4994, %v5794
        %v5827 = vpack.c.bf16 %v5796, %v5795
        %v5828 = vpack.c.bf16 %v5798, %v5797
        %v5829 = vpack.c.bf16 %v5800, %v5799
        %v5830 = vpack.c.bf16 %v5802, %v5801
        %v5831 = vpack.c.bf16 %v5804, %v5803
        %v5832 = vpack.c.bf16 %v5806, %v5805
        %v5833 = vpack.c.bf16 %v5808, %v5807
        %v5834 = vpack.c.bf16 %v5810, %v5809
        %v5835 = vpack.c.bf16 %v5812, %v5811
        %v5836 = vpack.c.bf16 %v5814, %v5813
        %v5837 = vpack.c.bf16 %v5816, %v5815
        %v5838 = vpack.c.bf16 %v5818, %v5817
        %v5839 = vpack.c.bf16 %v5820, %v5819
        %v5840 = vpack.c.bf16 %v5822, %v5821
        %v5841 = vpack.c.bf16 %v5824, %v5823
        %v5842 = vpack.c.bf16 %v5826, %v5825
        %v5843 = vld [vmem:[%s7] sm:$0xf]
        %v5844 = vld [vmem:[%s7 + $0x4] sm:$0xf]
        %v5845 = vld [vmem:[%s7 + $0x8] sm:$0xf]
        %v5846 = vld [vmem:[%s7 + $0xc] sm:$0xf]
        %v5847 = vld [vmem:[%s7 + $0x10] sm:$0xf]
        %v5848 = vld [vmem:[%s7 + $0x14] sm:$0xf]
        %v5849 = vld [vmem:[%s7 + $0x18] sm:$0xf]
        %v5850 = vld [vmem:[%s7 + $0x1c] sm:$0xf]
        %v5851 = vld [vmem:[%s7 + $0x20] sm:$0xf]
        %v5852 = vld [vmem:[%s7 + $0x24] sm:$0xf]
        %v5853 = vld [vmem:[%s7 + $0x28] sm:$0xf]
        %v5854 = vld [vmem:[%s7 + $0x2c] sm:$0xf]
        %v5855 = vld [vmem:[%s7 + $0x30] sm:$0xf]
        %v5856 = vld [vmem:[%s7 + $0x34] sm:$0xf]
        %v5857 = vld [vmem:[%s7 + $0x38] sm:$0xf]
        %v5858 = vld [vmem:[%s7 + $0x3c] sm:$0xf]
        %v5859 = vld [vmem:[%s8] sm:$0x1]
        %v5861 = vlaneseq
        %v5862 = vshrl.u32 %v5861, 7
        %v5863 = vsub.s32 0, %v5862
        %v5864 = vrot.slane %v5859, %v5863
        %v5882 = vunpack.c.l.b16 %v5843
        %v5883 = vunpack.c.l.b16 %v5844
        %v5884 = vunpack.c.l.b16 %v5845
        %v5885 = vunpack.c.l.b16 %v5846
        %v5886 = vunpack.c.l.b16 %v5847
        %v5887 = vunpack.c.l.b16 %v5848
        %v5888 = vunpack.c.l.b16 %v5849
        %v5889 = vunpack.c.l.b16 %v5850
        %v5890 = vunpack.c.l.b16 %v5851
        %v5891 = vunpack.c.l.b16 %v5852
        %v5892 = vunpack.c.l.b16 %v5853
        %v5893 = vunpack.c.l.b16 %v5854
        %v5894 = vunpack.c.l.b16 %v5855
        %v5895 = vunpack.c.l.b16 %v5856
        %v5896 = vunpack.c.l.b16 %v5857
        %v5897 = vunpack.c.l.b16 %v5858
        %v5898 = vpack.c.b16 %v5883, %v5882
        %v5899 = vpack.c.b16 %v5885, %v5884
        %v5900 = vpack.c.b16 %v5887, %v5886
        %v5901 = vpack.c.b16 %v5889, %v5888
        %v5902 = vpack.c.b16 %v5891, %v5890
        %v5903 = vpack.c.b16 %v5893, %v5892
        %v5904 = vpack.c.b16 %v5895, %v5894
        %v5905 = vpack.c.b16 %v5897, %v5896
        %5914 = vmatprep.subr.bf16.mxu0 0
        %5915 = vmatpush1.bf16.msra.mxu0 %v5898
        %5916 = vmatprep.subr.bf16.mxu0 0
        %5917 = vmatpush1.bf16.msra.mxu0 %v5899
        %5918 = vmatprep.subr.bf16.mxu0 0
        %5919 = vmatpush1.bf16.msra.mxu0 %v5900
        %5920 = vmatprep.subr.bf16.mxu0 0
        %5921 = vmatpush1.bf16.msra.mxu0 %v5901
        %5922 = vmatprep.subr.bf16.mxu0 0
        %5923 = vmatpush1.bf16.msra.mxu0 %v5902
        %5924 = vmatprep.subr.bf16.mxu0 0
        %5925 = vmatpush1.bf16.msra.mxu0 %v5903
        %5926 = vmatprep.subr.bf16.mxu0 0
        %5927 = vmatpush1.bf16.msra.mxu0 %v5904
        %5928 = vmatprep.subr.bf16.mxu0 0
        %5929 = vmatpush1.bf16.msra.mxu0 %v5905
        %5930 = vmatprep.subr.bf16.mxu0 0
        %5931 = vmatpush1.bf16.msra.mxu0 0
        %5932 = vmatprep.subr.bf16.mxu0 0
        %5933 = vmatpush1.bf16.msra.mxu0 0
        %5934 = vmatprep.subr.bf16.mxu0 0
        %5935 = vmatpush1.bf16.msra.mxu0 0
        %5936 = vmatprep.subr.bf16.mxu0 0
        %5937 = vmatpush1.bf16.msra.mxu0 0
        %5938 = vmatprep.subr.bf16.mxu0 0
        %5939 = vmatpush1.bf16.msra.mxu0 0
        %5940 = vmatprep.subr.bf16.mxu0 0
        %5941 = vmatpush1.bf16.msra.mxu0 0
        %5942 = vmatprep.subr.bf16.mxu0 0
        %5943 = vmatpush1.bf16.msra.mxu0 0
        %5944 = vmatprep.subr.bf16.mxu0 0
        %5945 = vmatpush1.bf16.msra.mxu0 0
        %5946 = vmatprep.mubr.bf16.mxu0 0
        %5947 = vmatmul.mubr.bf16.gmra.mrb[0].mxu0 %v5827
        %v5948 = vpop.f32.mrb[0].mxu0
        %v5949 = vadd.f32 %v5864, %v5948
        %v5950 = vpop.f32.mrb[0].mxu0
        %v5951 = vpop.f32.mrb[0].mxu0
        %v5952 = vadd.f32 %v5864, %v5951
        %v5953 = vpop.f32.mrb[0].mxu0
        %5954 = vmatprep.mubr.bf16.mxu0 0
        %5955 = vmatmul.mubr.bf16.gmra.mrb[0].mxu0 %v5828
        %v5956 = vpop.f32.mrb[0].mxu0
        %v5957 = vadd.f32 %v5864, %v5956
        %v5958 = vpop.f32.mrb[0].mxu0
        %v5959 = vpop.f32.mrb[0].mxu0
        %v5960 = vadd.f32 %v5864, %v5959
        %v5961 = vpop.f32.mrb[0].mxu0
        %5962 = vmatprep.mubr.bf16.mxu0 0
        %5963 = vmatmul.mubr.bf16.gmra.mrb[0].mxu0 %v5829
        %v5964 = vpop.f32.mrb[0].mxu0
        %v5965 = vadd.f32 %v5864, %v5964
        %v5966 = vpop.f32.mrb[0].mxu0
        %v5967 = vpop.f32.mrb[0].mxu0
        %v5968 = vadd.f32 %v5864, %v5967
        %v5969 = vpop.f32.mrb[0].mxu0
        %5970 = vmatprep.mubr.bf16.mxu0 0
        %5971 = vmatmul.mubr.bf16.gmra.mrb[0].mxu0 %v5830
        %v5972 = vpop.f32.mrb[0].mxu0
        %v5973 = vadd.f32 %v5864, %v5972
        %v5974 = vpop.f32.mrb[0].mxu0
        %v5975 = vpop.f32.mrb[0].mxu0
        %v5976 = vadd.f32 %v5864, %v5975
        %v5977 = vpop.f32.mrb[0].mxu0
        %5978 = vmatprep.mubr.bf16.mxu0 0
        %5979 = vmatmul.mubr.bf16.gmra.mrb[0].mxu0 %v5831
        %v5980 = vpop.f32.mrb[0].mxu0
        %v5981 = vadd.f32 %v5864, %v5980
        %v5982 = vpop.f32.mrb[0].mxu0
        %v5983 = vpop.f32.mrb[0].mxu0
        %v5984 = vadd.f32 %v5864, %v5983
        %v5985 = vpop.f32.mrb[0].mxu0
        %5986 = vmatprep.mubr.bf16.mxu0 0
        %5987 = vmatmul.mubr.bf16.gmra.mrb[0].mxu0 %v5832
        %v5988 = vpop.f32.mrb[0].mxu0
        %v5989 = vadd.f32 %v5864, %v5988
        %v5990 = vpop.f32.mrb[0].mxu0
        %v5991 = vpop.f32.mrb[0].mxu0
        %v5992 = vadd.f32 %v5864, %v5991
        %v5993 = vpop.f32.mrb[0].mxu0
        %5994 = vmatprep.mubr.bf16.mxu0 0
        %5995 = vmatmul.mubr.bf16.gmra.mrb[0].mxu0 %v5833
        %v5996 = vpop.f32.mrb[0].mxu0
        %v5997 = vadd.f32 %v5864, %v5996
        %v5998 = vpop.f32.mrb[0].mxu0
        %v5999 = vpop.f32.mrb[0].mxu0
        %v6000 = vadd.f32 %v5864, %v5999
        %v6001 = vpop.f32.mrb[0].mxu0
        %6002 = vmatprep.mubr.bf16.mxu0 0
        %6003 = vmatmul.mubr.bf16.gmra.mrb[0].mxu0 %v5834
        %v6004 = vpop.f32.mrb[0].mxu0
        %v6005 = vadd.f32 %v5864, %v6004
        %v6006 = vpop.f32.mrb[0].mxu0
        %v6007 = vpop.f32.mrb[0].mxu0
        %v6008 = vadd.f32 %v5864, %v6007
        %v6009 = vpop.f32.mrb[0].mxu0
        %6010 = vmatprep.mubr.bf16.mxu0 0
        %6011 = vmatmul.mubr.bf16.gmra.mrb[0].mxu0 %v5835
        %v6012 = vpop.f32.mrb[0].mxu0
        %v6013 = vadd.f32 %v5864, %v6012
        %v6014 = vpop.f32.mrb[0].mxu0
        %v6015 = vpop.f32.mrb[0].mxu0
        %v6016 = vadd.f32 %v5864, %v6015
        %v6017 = vpop.f32.mrb[0].mxu0
        %6018 = vmatprep.mubr.bf16.mxu0 0
        %6019 = vmatmul.mubr.bf16.gmra.mrb[0].mxu0 %v5836
        %v6020 = vpop.f32.mrb[0].mxu0
        %v6021 = vadd.f32 %v5864, %v6020
        %v6022 = vpop.f32.mrb[0].mxu0
        %v6023 = vpop.f32.mrb[0].mxu0
        %v6024 = vadd.f32 %v5864, %v6023
        %v6025 = vpop.f32.mrb[0].mxu0
        %6026 = vmatprep.mubr.bf16.mxu0 0
        %6027 = vmatmul.mubr.bf16.gmra.mrb[0].mxu0 %v5837
        %v6028 = vpop.f32.mrb[0].mxu0
        %v6029 = vadd.f32 %v5864, %v6028
        %v6030 = vpop.f32.mrb[0].mxu0
        %v6031 = vpop.f32.mrb[0].mxu0
        %v6032 = vadd.f32 %v5864, %v6031
        %v6033 = vpop.f32.mrb[0].mxu0
        %6034 = vmatprep.mubr.bf16.mxu0 0
        %6035 = vmatmul.mubr.bf16.gmra.mrb[0].mxu0 %v5838
        %v6036 = vpop.f32.mrb[0].mxu0
        %v6037 = vadd.f32 %v5864, %v6036
        %v6038 = vpop.f32.mrb[0].mxu0
        %v6039 = vpop.f32.mrb[0].mxu0
        %v6040 = vadd.f32 %v5864, %v6039
        %v6041 = vpop.f32.mrb[0].mxu0
        %6042 = vmatprep.mubr.bf16.mxu0 0
        %6043 = vmatmul.mubr.bf16.gmra.mrb[0].mxu0 %v5839
        %v6044 = vpop.f32.mrb[0].mxu0
        %v6045 = vadd.f32 %v5864, %v6044
        %v6046 = vpop.f32.mrb[0].mxu0
        %v6047 = vpop.f32.mrb[0].mxu0
        %v6048 = vadd.f32 %v5864, %v6047
        %v6049 = vpop.f32.mrb[0].mxu0
        %6050 = vmatprep.mubr.bf16.mxu0 0
        %6051 = vmatmul.mubr.bf16.gmra.mrb[0].mxu0 %v5840
        %v6052 = vpop.f32.mrb[0].mxu0
        %v6053 = vadd.f32 %v5864, %v6052
        %v6054 = vpop.f32.mrb[0].mxu0
        %v6055 = vpop.f32.mrb[0].mxu0
        %v6056 = vadd.f32 %v5864, %v6055
        %v6057 = vpop.f32.mrb[0].mxu0
        %6058 = vmatprep.mubr.bf16.mxu0 0
        %6059 = vmatmul.mubr.bf16.gmra.mrb[0].mxu0 %v5841
        %v6060 = vpop.f32.mrb[0].mxu0
        %v6061 = vadd.f32 %v5864, %v6060
        %v6062 = vpop.f32.mrb[0].mxu0
        %v6063 = vpop.f32.mrb[0].mxu0
        %v6064 = vadd.f32 %v5864, %v6063
        %v6065 = vpop.f32.mrb[0].mxu0
        %6066 = vmatprep.mubr.bf16.mxu0 0
        %6067 = vmatmul.mubr.bf16.gmra.mrb[0].mxu0 %v5842
        %v6068 = vpop.f32.mrb[0].mxu0
        %v6069 = vadd.f32 %v5864, %v6068
        %v6070 = vpop.f32.mrb[0].mxu0
        %v6071 = vpop.f32.mrb[0].mxu0
        %v6072 = vadd.f32 %v5864, %v6071
        %v6073 = vpop.f32.mrb[0].mxu0
        %6074 = vdwg.mxu0
        %v6075 = vld [vmem:[%s9] sm:$0x1]
        %v6077 = vlaneseq
        %v6078 = vshrl.u32 %v6077, 7
        %v6079 = vsub.s32 0, %v6078
        %v6080 = vrot.slane %v6075, %v6079
        %v6082 = vmul.f32 %v6080, %v5949
        %v6083 = vmul.f32 %v6080, %v5952
        %v6084 = vmul.f32 %v6080, %v5957
        %v6085 = vmul.f32 %v6080, %v5960
        %v6086 = vmul.f32 %v6080, %v5965
        %v6087 = vmul.f32 %v6080, %v5968
        %v6088 = vmul.f32 %v6080, %v5973
        %v6089 = vmul.f32 %v6080, %v5976
        %v6090 = vmul.f32 %v6080, %v5981
        %v6091 = vmul.f32 %v6080, %v5984
        %v6092 = vmul.f32 %v6080, %v5989
        %v6093 = vmul.f32 %v6080, %v5992
        %v6094 = vmul.f32 %v6080, %v5997
        %v6095 = vmul.f32 %v6080, %v6000
        %v6096 = vmul.f32 %v6080, %v6005
        %v6097 = vmul.f32 %v6080, %v6008
        %v6098 = vmul.f32 %v6080, %v6013
        %v6099 = vmul.f32 %v6080, %v6016
        %v6100 = vmul.f32 %v6080, %v6021
        %v6101 = vmul.f32 %v6080, %v6024
        %v6102 = vmul.f32 %v6080, %v6029
        %v6103 = vmul.f32 %v6080, %v6032
        %v6104 = vmul.f32 %v6080, %v6037
        %v6105 = vmul.f32 %v6080, %v6040
        %v6106 = vmul.f32 %v6080, %v6045
        %v6107 = vmul.f32 %v6080, %v6048
        %v6108 = vmul.f32 %v6080, %v6053
        %v6109 = vmul.f32 %v6080, %v6056
        %v6110 = vmul.f32 %v6080, %v6061
        %v6111 = vmul.f32 %v6080, %v6064
        %v6112 = vmul.f32 %v6080, %v6069
        %v6113 = vmul.f32 %v6080, %v6072
        %v6114 = vadd.f32 %v379, %v6082
        %v6115 = vadd.f32 %v380, %v6083
        %v6116 = vadd.f32 %v381, %v6084
        %v6117 = vadd.f32 %v382, %v6085
        %v6118 = vadd.f32 %v383, %v6086
        %v6119 = vadd.f32 %v384, %v6087
        %v6120 = vadd.f32 %v385, %v6088
        %v6121 = vadd.f32 %v386, %v6089
        %v6122 = vadd.f32 %v387, %v6090
        %v6123 = vadd.f32 %v388, %v6091
        %v6124 = vadd.f32 %v389, %v6092
        %v6125 = vadd.f32 %v390, %v6093
        %v6126 = vadd.f32 %v391, %v6094
        %v6127 = vadd.f32 %v392, %v6095
        %v6128 = vadd.f32 %v393, %v6096
        %v6129 = vadd.f32 %v394, %v6097
        %v6130 = vadd.f32 %v395, %v6098
        %v6131 = vadd.f32 %v396, %v6099
        %v6132 = vadd.f32 %v397, %v6100
        %v6133 = vadd.f32 %v398, %v6101
        %v6134 = vadd.f32 %v399, %v6102
        %v6135 = vadd.f32 %v400, %v6103
        %v6136 = vadd.f32 %v401, %v6104
        %v6137 = vadd.f32 %v402, %v6105
        %v6138 = vadd.f32 %v403, %v6106
        %v6139 = vadd.f32 %v404, %v6107
        %v6140 = vadd.f32 %v405, %v6108
        %v6141 = vadd.f32 %v406, %v6109
        %v6142 = vadd.f32 %v407, %v6110
        %v6143 = vadd.f32 %v408, %v6111
        %v6144 = vadd.f32 %v409, %v6112
        %v6145 = vadd.f32 %v410, %v6113
        %6146 = vst.msk [vmem:[%s377] sm:$0xff] %vm411, %v6114
        %6147 = vst.msk [vmem:[%s377 + $0x8] sm:$0xff] %vm411, %v6115
        %6148 = vst.msk [vmem:[%s377 + $0x10] sm:$0xff] %vm411, %v6116
        %6149 = vst.msk [vmem:[%s377 + $0x18] sm:$0xff] %vm411, %v6117
        %6150 = vst.msk [vmem:[%s377 + $0x20] sm:$0xff] %vm411, %v6118
        %6151 = vst.msk [vmem:[%s377 + $0x28] sm:$0xff] %vm411, %v6119
        %6152 = vst.msk [vmem:[%s377 + $0x30] sm:$0xff] %vm411, %v6120
        %6153 = vst.msk [vmem:[%s377 + $0x38] sm:$0xff] %vm411, %v6121
        %6154 = vst.msk [vmem:[%s377 + $0x40] sm:$0xff] %vm411, %v6122
        %6155 = vst.msk [vmem:[%s377 + $0x48] sm:$0xff] %vm411, %v6123
        %6156 = vst.msk [vmem:[%s377 + $0x50] sm:$0xff] %vm411, %v6124
        %6157 = vst.msk [vmem:[%s377 + $0x58] sm:$0xff] %vm411, %v6125
        %6158 = vst.msk [vmem:[%s377 + $0x60] sm:$0xff] %vm411, %v6126
        %6159 = vst.msk [vmem:[%s377 + $0x68] sm:$0xff] %vm411, %v6127
        %6160 = vst.msk [vmem:[%s377 + $0x70] sm:$0xff] %vm411, %v6128
        %6161 = vst.msk [vmem:[%s377 + $0x78] sm:$0xff] %vm411, %v6129
        %6162 = vst.msk [vmem:[%s377 + $0x80] sm:$0xff] %vm411, %v6130
        %6163 = vst.msk [vmem:[%s377 + $0x88] sm:$0xff] %vm411, %v6131
        %6164 = vst.msk [vmem:[%s377 + $0x90] sm:$0xff] %vm411, %v6132
        %6165 = vst.msk [vmem:[%s377 + $0x98] sm:$0xff] %vm411, %v6133
        %6166 = vst.msk [vmem:[%s377 + $0xa0] sm:$0xff] %vm411, %v6134
        %6167 = vst.msk [vmem:[%s377 + $0xa8] sm:$0xff] %vm411, %v6135
        %6168 = vst.msk [vmem:[%s377 + $0xb0] sm:$0xff] %vm411, %v6136
        %6169 = vst.msk [vmem:[%s377 + $0xb8] sm:$0xff] %vm411, %v6137
        %6170 = vst.msk [vmem:[%s377 + $0xc0] sm:$0xff] %vm411, %v6138
        %6171 = vst.msk [vmem:[%s377 + $0xc8] sm:$0xff] %vm411, %v6139
        %6172 = vst.msk [vmem:[%s377 + $0xd0] sm:$0xff] %vm411, %v6140
        %6173 = vst.msk [vmem:[%s377 + $0xd8] sm:$0xff] %vm411, %v6141
        %6174 = vst.msk [vmem:[%s377 + $0xe0] sm:$0xff] %vm411, %v6142
        %6175 = vst.msk [vmem:[%s377 + $0xe8] sm:$0xff] %vm411, %v6143
        %6176 = vst.msk [vmem:[%s377 + $0xf0] sm:$0xff] %vm411, %v6144
        %6177 = vst.msk [vmem:[%s377 + $0xf8] sm:$0xff] %vm411, %v6145
        %s6178 = sand.u32 %s250, 1
        %s6179 = scalar_lea.sflag [#allocation5], %s6178
        %s6180 = sand.u32 %s250, 1
        %s6181 = smul.addr %s6180, 256
        %s6182 = scalar_lea.vmem [#allocation6], %s6181
        // Predicated region
        $region65: #{tpu_custom_call.1} parent=59 // pred_check
          %p6183 = pneg %p260
        $region66: #{tpu_custom_call.1} parent=59 // pred_check_branch
          %6185 = sbr.rel (%p6183) target = $region68
        $region67: #{tpu_custom_call.1} parent=59 // pred_region
          %s6187 = ssub.s32 4096, 4096
          %6188 = vsyncadd %s6179, %s6187
          %s6189 = smul.addr %s27, 32
          %s6190 = smul.addr %s6189, 128
          %s6191 = scalar_lea.hbm %s10, %s6190
          %s6192 = sshll.u32 %s6182, 4
          %s6193 = int_to_ptr.vmem [resolvable:$true] %s6192
          %6198 = dma.vmem_to_hbm [thread:$0]  %s6193, 4096, %s6191, %s6179, 128, 128, 8
        $region68: #{tpu_custom_call.1} parent=59 // pred_fallthru
          _
      $region60: #{tpu_custom_call.1} parent=5 // pred_fallthru
        _
      %p6199 = scmp.le.s32.totalorder 2, %s22
      // Predicated region
      $region69: #{tpu_custom_call.1} parent=5 // pred_check
        %p6200 = pneg %p6199
      $region70: #{tpu_custom_call.1} parent=5 // pred_check_branch
        %6202 = sbr.rel (%p6200) target = $region72
      $region71: #{tpu_custom_call.1} parent=5 // pred_region
        %s6203 = ssub.s32 %s22, 2
        // Predicated region
        $region73: #{tpu_custom_call.1} parent=71 // pred_check
          %p6204 = pneg %p266
        $region74: #{tpu_custom_call.1} parent=71 // pred_check_branch
          %6206 = sbr.rel (%p6204) target = $region76
        $region75: #{tpu_custom_call.1} parent=71 // pred_region
          %s6207 = sand.u32 %s251, 1
          %s6208 = scalar_lea.sflag [#allocation5], %s6207
          %s6209 = sand.u32 %s251, 1
          %s6210 = smul.addr %s6209, 256
          %s6211 = scalar_lea.vmem [#allocation6], %s6210
          %6212 = dma.done %s6208, 4096
        $region76: #{tpu_custom_call.1} parent=71 // pred_fallthru
          _
      $region72: #{tpu_custom_call.1} parent=5 // pred_fallthru
        _
    $region6: #{tpu_custom_call.1} parent=1 // loop_footer
      %s26 = sadd.s32 1, %s22
    $region7: #{tpu_custom_call.1} parent=1 // loop_footer_branch
      %21 = sbr.rel target = $region3
    $region8: #{tpu_custom_call.1} parent=1 // loop_exit
      _
    %6213 = vsyncpa [#allocation4], 1
    %s6214 = scalar_lea.sflag [#allocation4], 1
    %6215 = vsyncpa %s6214, 1
    %6216 = vsyncpa [#allocation5], 1
    %s6217 = scalar_lea.sflag [#allocation5], 1
    %6218 = vsyncpa %s6217, 1

</llo_original>
